<compile_context>
chip_gen: v7x
topology: tpu7x:2x2x1
jax: 0.10.0
libtpu: 0.0.40
codegen_flags: <defaults>
</compile_context>

<pallas_src>
import numpy as np
import jax
import jax.numpy as jnp
from jax import lax
from jax.experimental import pallas as pl
from jax.experimental.pallas import tpu as pltpu

HIDDEN = 32
NHEAD = 4
HEAD_DIM = HIDDEN // NHEAD
FFN_DIM = 2048          # PyTorch TransformerEncoderLayer default dim_feedforward
NUM_LAYERS = 4
LN_EPS = 1e-5
MASK_NEG = -1e9


def _round_up(n, m):
    return ((n + m - 1) // m) * m


def _ln(x, w, b):
    mu = jnp.mean(x, axis=-1, keepdims=True)
    var = jnp.mean(jnp.square(x - mu), axis=-1, keepdims=True)
    return (x - mu) * lax.rsqrt(var + LN_EPS) * w + b


# ---------------------------------------------------------------------------
# Fused kernel: grid=(NUM_LAYERS,), per-layer weights pipelined into VMEM.
# ---------------------------------------------------------------------------
def _make_kernel(B, S, num_layers, has_doc):
    BS = B * S
    scale = HEAD_DIM ** -0.5
    f32 = jnp.float32
    bf16 = jnp.bfloat16

    def kernel(x_ref, pos_ref, scat_ref, keyb_ref, pool_ref, doc_ref,
               win_ref, bin_ref,
               wdoc_ref, bdoc_ref, flnw_ref, flnb_ref, wf_ref, bf_ref,
               wt_ref, bt_ref, wtm_ref, btm_ref,
               wqkv_ref, bqkv_ref, wo_ref, bo_ref,
               w1_ref, b1_ref, w2_ref, b2_ref,
               n1w_ref, n1b_ref, n2w_ref, n2b_ref,
               task_ref, time_ref,
               xs_ref):
        l = pl.program_id(0)

        # ---- prologue (first grid step): input proj + ReLU + pos-emb, then
        # group/pad nodes to [B*S, H] with a one-hot scatter matmul (padded
        # rows come out exactly zero, as in the reference).
        @pl.when(l == 0)
        def _prologue():
            h = jnp.dot(x_ref[...], win_ref[...],
                        preferred_element_type=f32) + bin_ref[...]
            h = jnp.maximum(h, 0.0) + pos_ref[...]
            xs_ref[...] = jnp.dot(scat_ref[...], h, preferred_element_type=f32)

        # ---- one post-norm TransformerEncoderLayer (weights of layer `l`
        # have been DMA'd into VMEM by the grid pipeline).
        xs = xs_ref[...]                                   # [BS, H] f32
        xcast = xs.astype(bf16)
        bqkv = bqkv_ref[...]                               # [3, H] f32
        q = jnp.dot(xcast, wqkv_ref[0], preferred_element_type=f32) + bqkv[0:1]
        k = jnp.dot(xcast, wqkv_ref[1], preferred_element_type=f32) + bqkv[1:2]
        v = jnp.dot(xcast, wqkv_ref[2], preferred_element_type=f32) + bqkv[2:3]
        q3 = q.reshape(B, S, HIDDEN)                       # graph-batched views
        k3 = k.reshape(B, S, HIDDEN)
        v3 = v.reshape(B, S, HIDDEN)
        keyb = keyb_ref[...].reshape(1, 1, S)              # masks only alignment pad

        head_outs = []
        for hd in range(NHEAD):                            # static, 4 iters
            lo = hd * HEAD_DIM
            q_h = q3[:, :, lo:lo + HEAD_DIM]
            k_h = k3[:, :, lo:lo + HEAD_DIM]
            v_h = v3[:, :, lo:lo + HEAD_DIM]
            s = jnp.einsum('bqd,bkd->bqk', q_h, k_h,
                           preferred_element_type=f32) * scale + keyb
            s = s - jnp.max(s, axis=-1, keepdims=True)
            p = jnp.exp(s)
            p = p * pl.reciprocal(jnp.sum(p, axis=-1, keepdims=True), approx=False)
            head_outs.append(jnp.einsum('bqk,bkd->bqd', p, v_h,
                                        preferred_element_type=f32))
        attn = jnp.concatenate(head_outs, axis=-1).reshape(BS, HIDDEN)
        attn = jnp.dot(attn.astype(bf16), wo_ref[...],
                       preferred_element_type=f32) + bo_ref[...]
        x1 = _ln(xs + attn, n1w_ref[...], n1b_ref[...])
        ff = jnp.maximum(jnp.dot(x1.astype(bf16), w1_ref[...],
                                 preferred_element_type=f32) + b1_ref[...], 0.0)
        ff = jnp.dot(ff.astype(bf16), w2_ref[...],
                     preferred_element_type=f32) + b2_ref[...]
        xs_new = _ln(x1 + ff, n2w_ref[...], n2b_ref[...])
        xs_ref[...] = xs_new

        # ---- epilogue (last grid step): mean pool, doc branch, fusion, heads
        @pl.when(l == num_layers - 1)
        def _epilogue():
            xg = jnp.dot(pool_ref[...], xs_new, preferred_element_type=f32)  # [B,H]
            if has_doc:
                de = jnp.maximum(
                    jnp.dot(doc_ref[...], wdoc_ref[...],
                            preferred_element_type=f32) + bdoc_ref[...], 0.0)
            else:
                de = jnp.zeros((B, HIDDEN), f32)
            fusion = jnp.concatenate([xg, de], axis=-1)                      # [B,2H]
            fusion = _ln(fusion, flnw_ref[...], flnb_ref[...])
            fusion = jnp.maximum(
                jnp.dot(fusion, wf_ref[...], preferred_element_type=f32)
                + bf_ref[...], 0.0)
            task_ref[...] = (jnp.dot(fusion, wt_ref[...], preferred_element_type=f32)
                             + bt_ref[...]).astype(task_ref.dtype)
            time_ref[...] = (jnp.dot(fusion, wtm_ref[...], preferred_element_type=f32)
                             + btm_ref[...]).astype(time_ref.dtype)

    return kernel


def _full_spec(arr):
    nd = arr.ndim
    return pl.BlockSpec(tuple(arr.shape), lambda l, _n=nd: (0,) * _n)


def _layer_spec(arr):
    nd = arr.ndim
    rest = tuple(arr.shape[1:])
    return pl.BlockSpec((None,) + rest, lambda l, _n=nd: (l,) + (0,) * (_n - 1))


# ---------------------------------------------------------------------------
# Parameter init (deterministic synthetic; layer params stacked on axis 0;
# large matrices stored bf16).
# ---------------------------------------------------------------------------
def init_params(key, input_dim, hidden_dim, output_dim, doc_dim, num_positions):
    keys = iter(jax.random.split(key, 64))

    def w(shape, dtype=jnp.float32, scale=0.02):
        return (scale * jax.random.normal(next(keys), shape, jnp.float32)).astype(dtype)

    def stack(shape, dtype=jnp.float32):
        return jnp.stack([w(shape, dtype) for _ in range(NUM_LAYERS)], axis=0)

    return {
        "input_proj_w": w((input_dim, hidden_dim)),
        "input_proj_b": w((1, hidden_dim)),
        "pos_emb": w((num_positions, hidden_dim)),
        "doc_fc_w": w((doc_dim, hidden_dim)),
        "doc_fc_b": w((1, hidden_dim)),
        "fusion_ln_w": jnp.ones((1, 2 * hidden_dim), jnp.float32),
        "fusion_ln_b": jnp.zeros((1, 2 * hidden_dim), jnp.float32),
        "fusion_fc_w": w((2 * hidden_dim, hidden_dim)),
        "fusion_fc_b": w((1, hidden_dim)),
        "task_w": w((hidden_dim, output_dim)),
        "task_b": w((1, output_dim)),
        "time_w": w((hidden_dim, 1)),
        "time_b": w((1, 1)),
        # transformer encoder layers (leading layer axis; big mats in bf16)
        "wqkv": stack((3, hidden_dim, hidden_dim), jnp.bfloat16),
        "bqkv": stack((3, hidden_dim)),
        "wo":   stack((hidden_dim, hidden_dim), jnp.bfloat16),
        "bo":   stack((1, hidden_dim)),
        "w1":   stack((hidden_dim, FFN_DIM), jnp.bfloat16),
        "b1":   stack((1, FFN_DIM)),
        "w2":   stack((FFN_DIM, hidden_dim), jnp.bfloat16),
        "b2":   stack((1, hidden_dim)),
        "ln1w": jnp.ones((NUM_LAYERS, 1, hidden_dim), jnp.float32),
        "ln1b": jnp.zeros((NUM_LAYERS, 1, hidden_dim), jnp.float32),
        "ln2w": jnp.ones((NUM_LAYERS, 1, hidden_dim), jnp.float32),
        "ln2b": jnp.zeros((NUM_LAYERS, 1, hidden_dim), jnp.float32),
    }


# ---------------------------------------------------------------------------
# Forward wrapper: host-side integer bookkeeping only, one fused pallas_call.
# ---------------------------------------------------------------------------
def graphormer_pr_forward(params, x, batch_np, doc_features, num_positions):
    x = jnp.asarray(x, jnp.float32)
    N = int(x.shape[0])
    if batch_np is None:
        batch_np = np.zeros((N,), np.int64)
    batch_np = np.asarray(batch_np)

    uniq, counts = np.unique(batch_np, return_counts=True)
    B = int(len(uniq))
    S_true = int(counts.max())                     # reference max_len
    S = _round_up(max(S_true, 1), 8)               # sublane-aligned seq length
    BS = B * S
    N_pad = _round_up(max(N, 1), 8)

    graph_idx = np.searchsorted(uniq, batch_np)
    pos_in_graph = np.zeros(N, np.int64)
    seen = {}
    for i, g in enumerate(graph_idx):
        g = int(g)
        pos_in_graph[i] = seen.get(g, 0)
        seen[g] = seen.get(g, 0) + 1
    dest = graph_idx * S + pos_in_graph

    # one-hot scatter: output row (graph, pos) <- node i; padded rows stay 0.
    # TODO(synk): replace with a scalar-prefetched index scatter for large N.
    scat = np.zeros((BS, N_pad), np.float32)
    scat[dest, np.arange(N)] = 1.0

    # mean pool over the first S_true rows of each graph (reference divides by
    # max_len and includes reference-padded rows).
    pool = np.zeros((B, BS), np.float32)
    for b in range(B):
        pool[b, b * S: b * S + S_true] = 1.0 / float(S_true)

    # keys beyond max_len exist only for sublane alignment -> mask them out.
    keyb = np.where(np.arange(S)[None, :] < S_true, 0.0, MASK_NEG).astype(np.float32)

    # positional embedding: global node index % num_positions (as reference)
    pos_ids = np.arange(N_pad) % num_positions
    pos_nodes = jnp.take(params["pos_emb"], jnp.asarray(pos_ids, jnp.int32), axis=0)

    x_pad = jnp.zeros((N_pad, x.shape[1]), jnp.float32).at[:N].set(x)

    has_doc = doc_features is not None
    doc_dim = params["doc_fc_w"].shape[0]
    doc = (jnp.asarray(doc_features, jnp.float32) if has_doc
           else jnp.zeros((B, doc_dim), jnp.float32))

    out_dim = params["task_w"].shape[1]
    kernel = _make_kernel(B, S, NUM_LAYERS, has_doc)

    args = (
        x_pad, pos_nodes, jnp.asarray(scat), jnp.asarray(keyb),
        jnp.asarray(pool), doc,
        params["input_proj_w"], params["input_proj_b"],
        params["doc_fc_w"], params["doc_fc_b"],
        params["fusion_ln_w"], params["fusion_ln_b"],
        params["fusion_fc_w"], params["fusion_fc_b"],
        params["task_w"], params["task_b"],
        params["time_w"], params["time_b"],
        params["wqkv"], params["bqkv"], params["wo"], params["bo"],
        params["w1"], params["b1"], params["w2"], params["b2"],
        params["ln1w"], params["ln1b"], params["ln2w"], params["ln2b"],
    )
    n_shared = 18
    in_specs = ([_full_spec(a) for a in args[:n_shared]]
                + [_layer_spec(a) for a in args[n_shared:]])

    task_out, time_out = pl.pallas_call(
        kernel,
        out_shape=(jax.ShapeDtypeStruct((B, out_dim), jnp.float32),
                   jax.ShapeDtypeStruct((B, 1), jnp.float32)),
        grid_spec=pltpu.PrefetchScalarGridSpec(
            num_scalar_prefetch=0,
            grid=(NUM_LAYERS,),
            in_specs=in_specs,
            out_specs=(pl.BlockSpec((B, out_dim), lambda l: (0, 0)),
                       pl.BlockSpec((B, 1), lambda l: (0, 0))),
            scratch_shapes=[pltpu.VMEM((BS, HIDDEN), jnp.float32)]),
        compiler_params=pltpu.CompilerParams(
            dimension_semantics=("arbitrary",)),
    )(*args)
    return task_out, time_out


if __name__ == "__main__":
    key = jax.random.PRNGKey(0)
    kx, kdoc, kp = jax.random.split(key, 3)

    input_dim, hidden_dim, output_dim, doc_dim = 12, HIDDEN, 5, 16
    num_positions = 64          # "num_nodes" constructor arg (max positions)

    params = init_params(kp, input_dim, hidden_dim, output_dim, doc_dim, num_positions)

    # synthetic torch_geometric-like batch: 14 nodes in 2 graphs (9 + 5 nodes)
    N = 14
    x = jax.random.normal(kx, (N, input_dim), jnp.float32)
    batch_np = np.array([0] * 9 + [1] * 5, dtype=np.int32)
    doc_features = jax.random.normal(kdoc, (2, doc_dim), jnp.float32)

    task_out, time_out = graphormer_pr_forward(params, x, batch_np, doc_features,
                                               num_positions)
    jax.block_until_ready((task_out, time_out))

    assert task_out.shape == (2, output_dim)
    assert time_out.shape == (2, 1)
    assert bool(jnp.all(jnp.isfinite(task_out))) and bool(jnp.all(jnp.isfinite(time_out)))
    print("KERNEL_OK")
</pallas_src>

<mosaic_0001>
module attributes {stable_mosaic.version = 11 : i64} {
  func.func @kernel(%arg0: i32, %arg1: memref<16x12xf32, #tpu.memory_space<vmem>>, %arg2: memref<16x32xf32, #tpu.memory_space<vmem>>, %arg3: memref<32x16xf32, #tpu.memory_space<vmem>>, %arg4: memref<1x16xf32, #tpu.memory_space<vmem>>, %arg5: memref<2x32xf32, #tpu.memory_space<vmem>>, %arg6: memref<2x16xf32, #tpu.memory_space<vmem>>, %arg7: memref<12x32xf32, #tpu.memory_space<vmem>>, %arg8: memref<1x32xf32, #tpu.memory_space<vmem>>, %arg9: memref<16x32xf32, #tpu.memory_space<vmem>>, %arg10: memref<1x32xf32, #tpu.memory_space<vmem>>, %arg11: memref<1x64xf32, #tpu.memory_space<vmem>>, %arg12: memref<1x64xf32, #tpu.memory_space<vmem>>, %arg13: memref<64x32xf32, #tpu.memory_space<vmem>>, %arg14: memref<1x32xf32, #tpu.memory_space<vmem>>, %arg15: memref<32x5xf32, #tpu.memory_space<vmem>>, %arg16: memref<1x5xf32, #tpu.memory_space<vmem>>, %arg17: memref<32x1xf32, #tpu.memory_space<vmem>>, %arg18: memref<1x1xf32, #tpu.memory_space<vmem>>, %arg19: memref<1x3x32x32xbf16, #tpu.memory_space<vmem>>, %arg20: memref<1x3x32xf32, #tpu.memory_space<vmem>>, %arg21: memref<1x32x32xbf16, #tpu.memory_space<vmem>>, %arg22: memref<1x1x32xf32, #tpu.memory_space<vmem>>, %arg23: memref<1x32x2048xbf16, #tpu.memory_space<vmem>>, %arg24: memref<1x1x2048xf32, #tpu.memory_space<vmem>>, %arg25: memref<1x2048x32xbf16, #tpu.memory_space<vmem>>, %arg26: memref<1x1x32xf32, #tpu.memory_space<vmem>>, %arg27: memref<1x1x32xf32, #tpu.memory_space<vmem>>, %arg28: memref<1x1x32xf32, #tpu.memory_space<vmem>>, %arg29: memref<1x1x32xf32, #tpu.memory_space<vmem>>, %arg30: memref<1x1x32xf32, #tpu.memory_space<vmem>>, %arg31: memref<2x5xf32, #tpu.memory_space<vmem>>, %arg32: memref<2x1xf32, #tpu.memory_space<vmem>>, %arg33: memref<32x32xf32, #tpu.memory_space<vmem>>) attributes {dimension_semantics = [#tpu.dimension_semantics<arbitrary>], iteration_bounds = array<i64: 4>, scalar_prefetch = 0 : i64, scratch_operands = 1 : i64, tpu.core_type = #tpu.core_type<tc>, window_params = [{pipeline_mode = #tpu.pipeline_mode<synchronous>, transform_indices = @transform_0, window_bounds = array<i64: 16, 12>}, {pipeline_mode = #tpu.pipeline_mode<synchronous>, transform_indices = @transform_1, window_bounds = array<i64: 16, 32>}, {pipeline_mode = #tpu.pipeline_mode<synchronous>, transform_indices = @transform_2, window_bounds = array<i64: 32, 16>}, {pipeline_mode = #tpu.pipeline_mode<synchronous>, transform_indices = @transform_3, window_bounds = array<i64: 1, 16>}, {pipeline_mode = #tpu.pipeline_mode<synchronous>, transform_indices = @transform_4, window_bounds = array<i64: 2, 32>}, {pipeline_mode = #tpu.pipeline_mode<synchronous>, transform_indices = @transform_5, window_bounds = array<i64: 2, 16>}, {pipeline_mode = #tpu.pipeline_mode<synchronous>, transform_indices = @transform_6, window_bounds = array<i64: 12, 32>}, {pipeline_mode = #tpu.pipeline_mode<synchronous>, transform_indices = @transform_7, window_bounds = array<i64: 1, 32>}, {pipeline_mode = #tpu.pipeline_mode<synchronous>, transform_indices = @transform_8, window_bounds = array<i64: 16, 32>}, {pipeline_mode = #tpu.pipeline_mode<synchronous>, transform_indices = @transform_9, window_bounds = array<i64: 1, 32>}, {pipeline_mode = #tpu.pipeline_mode<synchronous>, transform_indices = @transform_10, window_bounds = array<i64: 1, 64>}, {pipeline_mode = #tpu.pipeline_mode<synchronous>, transform_indices = @transform_11, window_bounds = array<i64: 1, 64>}, {pipeline_mode = #tpu.pipeline_mode<synchronous>, transform_indices = @transform_12, window_bounds = array<i64: 64, 32>}, {pipeline_mode = #tpu.pipeline_mode<synchronous>, transform_indices = @transform_13, window_bounds = array<i64: 1, 32>}, {pipeline_mode = #tpu.pipeline_mode<synchronous>, transform_indices = @transform_14, window_bounds = array<i64: 32, 5>}, {pipeline_mode = #tpu.pipeline_mode<synchronous>, transform_indices = @transform_15, window_bounds = array<i64: 1, 5>}, {pipeline_mode = #tpu.pipeline_mode<synchronous>, transform_indices = @transform_16, window_bounds = array<i64: 32, 1>}, {pipeline_mode = #tpu.pipeline_mode<synchronous>, transform_indices = @transform_17, window_bounds = array<i64: 1, 1>}, {transform_indices = @transform_18, window_bounds = array<i64: 1, 3, 32, 32>}, {transform_indices = @transform_19, window_bounds = array<i64: 1, 3, 32>}, {transform_indices = @transform_20, window_bounds = array<i64: 1, 32, 32>}, {transform_indices = @transform_21, window_bounds = array<i64: 1, 1, 32>}, {transform_indices = @transform_22, window_bounds = array<i64: 1, 32, 2048>}, {transform_indices = @transform_23, window_bounds = array<i64: 1, 1, 2048>}, {transform_indices = @transform_24, window_bounds = array<i64: 1, 2048, 32>}, {transform_indices = @transform_25, window_bounds = array<i64: 1, 1, 32>}, {transform_indices = @transform_26, window_bounds = array<i64: 1, 1, 32>}, {transform_indices = @transform_27, window_bounds = array<i64: 1, 1, 32>}, {transform_indices = @transform_28, window_bounds = array<i64: 1, 1, 32>}, {transform_indices = @transform_29, window_bounds = array<i64: 1, 1, 32>}, {pipeline_mode = #tpu.pipeline_mode<synchronous>, transform_indices = @transform_30, window_bounds = array<i64: 2, 5>}, {pipeline_mode = #tpu.pipeline_mode<synchronous>, transform_indices = @transform_31, window_bounds = array<i64: 2, 1>}]} {
    %c0_i32 = arith.constant 0 : i32
    %0 = arith.cmpi eq, %arg0, %c0_i32 : i32
    %1 = arith.extui %0 : i1 to i32
    %c0_i32_0 = arith.constant 0 : i32
    %2 = arith.cmpi ne, %1, %c0_i32_0 : i32
    scf.if %2 {
      %c0_86 = arith.constant 0 : index
      %c0_87 = arith.constant 0 : index
      %192 = vector.load %arg1[%c0_86, %c0_87] : memref<16x12xf32, #tpu.memory_space<vmem>>, vector<16x12xf32>
      %c0_88 = arith.constant 0 : index
      %c0_89 = arith.constant 0 : index
      %193 = vector.load %arg7[%c0_88, %c0_89] : memref<12x32xf32, #tpu.memory_space<vmem>>, vector<12x32xf32>
      %cst_90 = arith.constant dense<0.000000e+00> : vector<16x32xf32>
      %194 = tpu.matmul %192, %193, %cst_90 {dimension_numbers = #tpu.dot_dimension_numbers<[1], [0], [0], [1], [0, 0, 1, 1], [], []>} : vector<16x12xf32>, vector<12x32xf32>, vector<16x32xf32> -> vector<16x32xf32>
      %c0_91 = arith.constant 0 : index
      %c0_92 = arith.constant 0 : index
      %195 = vector.load %arg8[%c0_91, %c0_92] : memref<1x32xf32, #tpu.memory_space<vmem>>, vector<1x32xf32>
      %196 = vector.broadcast %195 : vector<1x32xf32> to vector<16x32xf32>
      %197 = arith.addf %194, %196 : vector<16x32xf32>
      %cst_93 = arith.constant 0.000000e+00 : f32
      %198 = vector.broadcast %cst_93 : f32 to vector<16x32xf32>
      %199 = arith.maximumf %197, %198 : vector<16x32xf32>
      %c0_94 = arith.constant 0 : index
      %c0_95 = arith.constant 0 : index
      %200 = vector.load %arg2[%c0_94, %c0_95] : memref<16x32xf32, #tpu.memory_space<vmem>>, vector<16x32xf32>
      %201 = arith.addf %199, %200 : vector<16x32xf32>
      %c0_96 = arith.constant 0 : index
      %c0_97 = arith.constant 0 : index
      %202 = vector.load %arg3[%c0_96, %c0_97] : memref<32x16xf32, #tpu.memory_space<vmem>>, vector<32x16xf32>
      %cst_98 = arith.constant dense<0.000000e+00> : vector<32x32xf32>
      %203 = tpu.matmul %202, %201, %cst_98 {dimension_numbers = #tpu.dot_dimension_numbers<[1], [0], [0], [1], [0, 0, 1, 1], [], []>} : vector<32x16xf32>, vector<16x32xf32>, vector<32x32xf32> -> vector<32x32xf32>
      %c0_99 = arith.constant 0 : index
      %c0_100 = arith.constant 0 : index
      %204 = vector.load %arg33[%c0_99, %c0_100] : memref<32x32xf32, #tpu.memory_space<vmem>>, vector<32x32xf32>
      tpu.vector_store %arg33[%c0_99, %c0_100], %203 {strides = array<i32>} : memref<32x32xf32, #tpu.memory_space<vmem>>, vector<32x32xf32>,
    } else {
    }
    %c0 = arith.constant 0 : index
    %c0_1 = arith.constant 0 : index
    %3 = vector.load %arg33[%c0, %c0_1] : memref<32x32xf32, #tpu.memory_space<vmem>>, vector<32x32xf32>
    %4 = arith.truncf %3 : vector<32x32xf32> to vector<32x32xbf16>
    %c0_2 = arith.constant 0 : index
    %c0_3 = arith.constant 0 : index
    %c0_4 = arith.constant 0 : index
    %5 = vector.load %arg20[%c0_2, %c0_3, %c0_4] : memref<1x3x32xf32, #tpu.memory_space<vmem>>, vector<1x3x32xf32>
    %6 = vector.shape_cast %5 : vector<1x3x32xf32> to vector<3x32xf32>
    %c0_5 = arith.constant 0 : index
    %c0_6 = arith.constant 0 : index
    %c0_7 = arith.constant 0 : index
    %c0_8 = arith.constant 0 : index
    %7 = vector.load %arg19[%c0_5, %c0_6, %c0_7, %c0_8] : memref<1x3x32x32xbf16, #tpu.memory_space<vmem>>, vector<1x1x32x32xbf16>
    %8 = vector.shape_cast %7 : vector<1x1x32x32xbf16> to vector<32x32xbf16>
    %cst = arith.constant dense<0.000000e+00> : vector<32x32xf32>
    %9 = tpu.matmul %4, %8, %cst {dimension_numbers = #tpu.dot_dimension_numbers<[1], [0], [0], [1], [0, 0, 1, 1], [], []>} : vector<32x32xbf16>, vector<32x32xbf16>, vector<32x32xf32> -> vector<32x32xf32>
    %10 = vector.extract_strided_slice %6 {offsets = [0, 0], sizes = [1, 32], strides = [1, 1]} : vector<3x32xf32> to vector<1x32xf32>
    %11 = vector.broadcast %10 : vector<1x32xf32> to vector<32x32xf32>
    %12 = arith.addf %9, %11 : vector<32x32xf32>
    %c0_9 = arith.constant 0 : index
    %c1 = arith.constant 1 : index
    %c0_10 = arith.constant 0 : index
    %c0_11 = arith.constant 0 : index
    %13 = vector.load %arg19[%c0_9, %c1, %c0_10, %c0_11] : memref<1x3x32x32xbf16, #tpu.memory_space<vmem>>, vector<1x1x32x32xbf16>
    %14 = vector.shape_cast %13 : vector<1x1x32x32xbf16> to vector<32x32xbf16>
    %cst_12 = arith.constant dense<0.000000e+00> : vector<32x32xf32>
    %15 = tpu.matmul %4, %14, %cst_12 {dimension_numbers = #tpu.dot_dimension_numbers<[1], [0], [0], [1], [0, 0, 1, 1], [], []>} : vector<32x32xbf16>, vector<32x32xbf16>, vector<32x32xf32> -> vector<32x32xf32>
    %16 = vector.extract_strided_slice %6 {offsets = [1, 0], sizes = [1, 32], strides = [1, 1]} : vector<3x32xf32> to vector<1x32xf32>
    %17 = vector.broadcast %16 : vector<1x32xf32> to vector<32x32xf32>
    %18 = arith.addf %15, %17 : vector<32x32xf32>
    %c0_13 = arith.constant 0 : index
    %c2 = arith.constant 2 : index
    %c0_14 = arith.constant 0 : index
    %c0_15 = arith.constant 0 : index
    %19 = vector.load %arg19[%c0_13, %c2, %c0_14, %c0_15] : memref<1x3x32x32xbf16, #tpu.memory_space<vmem>>, vector<1x1x32x32xbf16>
    %20 = vector.shape_cast %19 : vector<1x1x32x32xbf16> to vector<32x32xbf16>
    %cst_16 = arith.constant dense<0.000000e+00> : vector<32x32xf32>
    %21 = tpu.matmul %4, %20, %cst_16 {dimension_numbers = #tpu.dot_dimension_numbers<[1], [0], [0], [1], [0, 0, 1, 1], [], []>} : vector<32x32xbf16>, vector<32x32xbf16>, vector<32x32xf32> -> vector<32x32xf32>
    %22 = vector.extract_strided_slice %6 {offsets = [2, 0], sizes = [1, 32], strides = [1, 1]} : vector<3x32xf32> to vector<1x32xf32>
    %23 = vector.broadcast %22 : vector<1x32xf32> to vector<32x32xf32>
    %24 = arith.addf %21, %23 : vector<32x32xf32>
    %25 = vector.shape_cast %12 : vector<32x32xf32> to vector<2x16x32xf32>
    %26 = vector.shape_cast %18 : vector<32x32xf32> to vector<2x16x32xf32>
    %27 = vector.shape_cast %24 : vector<32x32xf32> to vector<2x16x32xf32>
    %c0_17 = arith.constant 0 : index
    %c0_18 = arith.constant 0 : index
    %28 = vector.load %arg4[%c0_17, %c0_18] : memref<1x16xf32, #tpu.memory_space<vmem>>, vector<1x16xf32>
    %29 = vector.shape_cast %28 : vector<1x16xf32> to vector<1x1x16xf32>
    %30 = vector.extract_strided_slice %25 {offsets = [0, 0, 0], sizes = [2, 16, 8], strides = [1, 1, 1]} : vector<2x16x32xf32> to vector<2x16x8xf32>
    %31 = vector.extract_strided_slice %26 {offsets = [0, 0, 0], sizes = [2, 16, 8], strides = [1, 1, 1]} : vector<2x16x32xf32> to vector<2x16x8xf32>
    %32 = vector.extract_strided_slice %27 {offsets = [0, 0, 0], sizes = [2, 16, 8], strides = [1, 1, 1]} : vector<2x16x32xf32> to vector<2x16x8xf32>
    "tpu.trace_start"() <{level = 10 : i32, message = "bqd,bkd->bqk"}> : () -> ()
    %cst_19 = arith.constant dense<0.000000e+00> : vector<2x16x16xf32>
    %33 = tpu.matmul %30, %31, %cst_19 {dimension_numbers = #tpu.dot_dimension_numbers<[2], [2], [1], [1], [0, 0, 0, 1, 1, 1], [0], [0]>} : vector<2x16x8xf32>, vector<2x16x8xf32>, vector<2x16x16xf32> -> vector<2x16x16xf32>
    "tpu.trace_stop"() : () -> ()
    %cst_20 = arith.constant 0.353553385 : f32
    %34 = vector.broadcast %cst_20 : f32 to vector<2x16x16xf32>
    %35 = arith.mulf %33, %34 : vector<2x16x16xf32>
    %36 = vector.broadcast %29 : vector<1x1x16xf32> to vector<2x16x16xf32>
    %37 = arith.addf %35, %36 : vector<2x16x16xf32>
    %cst_21 = arith.constant dense<0xFF800000> : vector<2x16xf32>
    %38 = vector.multi_reduction <maximumf>, %37, %cst_21 [2] : vector<2x16x16xf32> to vector<2x16xf32>
    %39 = vector.shape_cast %38 : vector<2x16xf32> to vector<2x16x1xf32>
    %40 = vector.broadcast %39 : vector<2x16x1xf32> to vector<2x16x16xf32>
    %41 = arith.subf %37, %40 : vector<2x16x16xf32>
    %42 = math.exp %41 : vector<2x16x16xf32>
    %cst_22 = arith.constant dense<0.000000e+00> : vector<2x16xf32>
    %43 = vector.multi_reduction <add>, %42, %cst_22 [2] : vector<2x16x16xf32> to vector<2x16xf32>
    %44 = vector.shape_cast %43 : vector<2x16xf32> to vector<2x16x1xf32>
    %45 = tpu.reciprocal %44 : vector<2x16x1xf32> -> vector<2x16x1xf32>
    %46 = vector.broadcast %45 : vector<2x16x1xf32> to vector<2x16x16xf32>
    %47 = arith.mulf %42, %46 : vector<2x16x16xf32>
    "tpu.trace_start"() <{level = 10 : i32, message = "bqk,bkd->bqd"}> : () -> ()
    %cst_23 = arith.constant dense<0.000000e+00> : vector<2x16x8xf32>
    %48 = tpu.matmul %47, %32, %cst_23 {dimension_numbers = #tpu.dot_dimension_numbers<[2], [1], [1], [2], [0, 0, 0, 1, 1, 2], [0], [0]>} : vector<2x16x16xf32>, vector<2x16x8xf32>, vector<2x16x8xf32> -> vector<2x16x8xf32>
    "tpu.trace_stop"() : () -> ()
    %49 = vector.extract_strided_slice %25 {offsets = [0, 0, 8], sizes = [2, 16, 8], strides = [1, 1, 1]} : vector<2x16x32xf32> to vector<2x16x8xf32>
    %50 = vector.extract_strided_slice %26 {offsets = [0, 0, 8], sizes = [2, 16, 8], strides = [1, 1, 1]} : vector<2x16x32xf32> to vector<2x16x8xf32>
    %51 = vector.extract_strided_slice %27 {offsets = [0, 0, 8], sizes = [2, 16, 8], strides = [1, 1, 1]} : vector<2x16x32xf32> to vector<2x16x8xf32>
    "tpu.trace_start"() <{level = 10 : i32, message = "bqd,bkd->bqk"}> : () -> ()
    %cst_24 = arith.constant dense<0.000000e+00> : vector<2x16x16xf32>
    %52 = tpu.matmul %49, %50, %cst_24 {dimension_numbers = #tpu.dot_dimension_numbers<[2], [2], [1], [1], [0, 0, 0, 1, 1, 1], [0], [0]>} : vector<2x16x8xf32>, vector<2x16x8xf32>, vector<2x16x16xf32> -> vector<2x16x16xf32>
    "tpu.trace_stop"() : () -> ()
    %cst_25 = arith.constant 0.353553385 : f32
    %53 = vector.broadcast %cst_25 : f32 to vector<2x16x16xf32>
    %54 = arith.mulf %52, %53 : vector<2x16x16xf32>
    %55 = vector.broadcast %29 : vector<1x1x16xf32> to vector<2x16x16xf32>
    %56 = arith.addf %54, %55 : vector<2x16x16xf32>
    %cst_26 = arith.constant dense<0xFF800000> : vector<2x16xf32>
    %57 = vector.multi_reduction <maximumf>, %56, %cst_26 [2] : vector<2x16x16xf32> to vector<2x16xf32>
    %58 = vector.shape_cast %57 : vector<2x16xf32> to vector<2x16x1xf32>
    %59 = vector.broadcast %58 : vector<2x16x1xf32> to vector<2x16x16xf32>
    %60 = arith.subf %56, %59 : vector<2x16x16xf32>
    %61 = math.exp %60 : vector<2x16x16xf32>
    %cst_27 = arith.constant dense<0.000000e+00> : vector<2x16xf32>
    %62 = vector.multi_reduction <add>, %61, %cst_27 [2] : vector<2x16x16xf32> to vector<2x16xf32>
    %63 = vector.shape_cast %62 : vector<2x16xf32> to vector<2x16x1xf32>
    %64 = tpu.reciprocal %63 : vector<2x16x1xf32> -> vector<2x16x1xf32>
    %65 = vector.broadcast %64 : vector<2x16x1xf32> to vector<2x16x16xf32>
    %66 = arith.mulf %61, %65 : vector<2x16x16xf32>
    "tpu.trace_start"() <{level = 10 : i32, message = "bqk,bkd->bqd"}> : () -> ()
    %cst_28 = arith.constant dense<0.000000e+00> : vector<2x16x8xf32>
    %67 = tpu.matmul %66, %51, %cst_28 {dimension_numbers = #tpu.dot_dimension_numbers<[2], [1], [1], [2], [0, 0, 0, 1, 1, 2], [0], [0]>} : vector<2x16x16xf32>, vector<2x16x8xf32>, vector<2x16x8xf32> -> vector<2x16x8xf32>
    "tpu.trace_stop"() : () -> ()
    %68 = vector.extract_strided_slice %25 {offsets = [0, 0, 16], sizes = [2, 16, 8], strides = [1, 1, 1]} : vector<2x16x32xf32> to vector<2x16x8xf32>
    %69 = vector.extract_strided_slice %26 {offsets = [0, 0, 16], sizes = [2, 16, 8], strides = [1, 1, 1]} : vector<2x16x32xf32> to vector<2x16x8xf32>
    %70 = vector.extract_strided_slice %27 {offsets = [0, 0, 16], sizes = [2, 16, 8], strides = [1, 1, 1]} : vector<2x16x32xf32> to vector<2x16x8xf32>
    "tpu.trace_start"() <{level = 10 : i32, message = "bqd,bkd->bqk"}> : () -> ()
    %cst_29 = arith.constant dense<0.000000e+00> : vector<2x16x16xf32>
    %71 = tpu.matmul %68, %69, %cst_29 {dimension_numbers = #tpu.dot_dimension_numbers<[2], [2], [1], [1], [0, 0, 0, 1, 1, 1], [0], [0]>} : vector<2x16x8xf32>, vector<2x16x8xf32>, vector<2x16x16xf32> -> vector<2x16x16xf32>
    "tpu.trace_stop"() : () -> ()
    %cst_30 = arith.constant 0.353553385 : f32
    %72 = vector.broadcast %cst_30 : f32 to vector<2x16x16xf32>
    %73 = arith.mulf %71, %72 : vector<2x16x16xf32>
    %74 = vector.broadcast %29 : vector<1x1x16xf32> to vector<2x16x16xf32>
    %75 = arith.addf %73, %74 : vector<2x16x16xf32>
    %cst_31 = arith.constant dense<0xFF800000> : vector<2x16xf32>
    %76 = vector.multi_reduction <maximumf>, %75, %cst_31 [2] : vector<2x16x16xf32> to vector<2x16xf32>
    %77 = vector.shape_cast %76 : vector<2x16xf32> to vector<2x16x1xf32>
    %78 = vector.broadcast %77 : vector<2x16x1xf32> to vector<2x16x16xf32>
    %79 = arith.subf %75, %78 : vector<2x16x16xf32>
    %80 = math.exp %79 : vector<2x16x16xf32>
    %cst_32 = arith.constant dense<0.000000e+00> : vector<2x16xf32>
    %81 = vector.multi_reduction <add>, %80, %cst_32 [2] : vector<2x16x16xf32> to vector<2x16xf32>
    %82 = vector.shape_cast %81 : vector<2x16xf32> to vector<2x16x1xf32>
    %83 = tpu.reciprocal %82 : vector<2x16x1xf32> -> vector<2x16x1xf32>
    %84 = vector.broadcast %83 : vector<2x16x1xf32> to vector<2x16x16xf32>
    %85 = arith.mulf %80, %84 : vector<2x16x16xf32>
    "tpu.trace_start"() <{level = 10 : i32, message = "bqk,bkd->bqd"}> : () -> ()
    %cst_33 = arith.constant dense<0.000000e+00> : vector<2x16x8xf32>
    %86 = tpu.matmul %85, %70, %cst_33 {dimension_numbers = #tpu.dot_dimension_numbers<[2], [1], [1], [2], [0, 0, 0, 1, 1, 2], [0], [0]>} : vector<2x16x16xf32>, vector<2x16x8xf32>, vector<2x16x8xf32> -> vector<2x16x8xf32>
    "tpu.trace_stop"() : () -> ()
    %87 = vector.extract_strided_slice %25 {offsets = [0, 0, 24], sizes = [2, 16, 8], strides = [1, 1, 1]} : vector<2x16x32xf32> to vector<2x16x8xf32>
    %88 = vector.extract_strided_slice %26 {offsets = [0, 0, 24], sizes = [2, 16, 8], strides = [1, 1, 1]} : vector<2x16x32xf32> to vector<2x16x8xf32>
    %89 = vector.extract_strided_slice %27 {offsets = [0, 0, 24], sizes = [2, 16, 8], strides = [1, 1, 1]} : vector<2x16x32xf32> to vector<2x16x8xf32>
    "tpu.trace_start"() <{level = 10 : i32, message = "bqd,bkd->bqk"}> : () -> ()
    %cst_34 = arith.constant dense<0.000000e+00> : vector<2x16x16xf32>
    %90 = tpu.matmul %87, %88, %cst_34 {dimension_numbers = #tpu.dot_dimension_numbers<[2], [2], [1], [1], [0, 0, 0, 1, 1, 1], [0], [0]>} : vector<2x16x8xf32>, vector<2x16x8xf32>, vector<2x16x16xf32> -> vector<2x16x16xf32>
    "tpu.trace_stop"() : () -> ()
    %cst_35 = arith.constant 0.353553385 : f32
    %91 = vector.broadcast %cst_35 : f32 to vector<2x16x16xf32>
    %92 = arith.mulf %90, %91 : vector<2x16x16xf32>
    %93 = vector.broadcast %29 : vector<1x1x16xf32> to vector<2x16x16xf32>
    %94 = arith.addf %92, %93 : vector<2x16x16xf32>
    %cst_36 = arith.constant dense<0xFF800000> : vector<2x16xf32>
    %95 = vector.multi_reduction <maximumf>, %94, %cst_36 [2] : vector<2x16x16xf32> to vector<2x16xf32>
    %96 = vector.shape_cast %95 : vector<2x16xf32> to vector<2x16x1xf32>
    %97 = vector.broadcast %96 : vector<2x16x1xf32> to vector<2x16x16xf32>
    %98 = arith.subf %94, %97 : vector<2x16x16xf32>
    %99 = math.exp %98 : vector<2x16x16xf32>
    %cst_37 = arith.constant dense<0.000000e+00> : vector<2x16xf32>
    %100 = vector.multi_reduction <add>, %99, %cst_37 [2] : vector<2x16x16xf32> to vector<2x16xf32>
    %101 = vector.shape_cast %100 : vector<2x16xf32> to vector<2x16x1xf32>
    %102 = tpu.reciprocal %101 : vector<2x16x1xf32> -> vector<2x16x1xf32>
    %103 = vector.broadcast %102 : vector<2x16x1xf32> to vector<2x16x16xf32>
    %104 = arith.mulf %99, %103 : vector<2x16x16xf32>
    "tpu.trace_start"() <{level = 10 : i32, message = "bqk,bkd->bqd"}> : () -> ()
    %cst_38 = arith.constant dense<0.000000e+00> : vector<2x16x8xf32>
    %105 = tpu.matmul %104, %89, %cst_38 {dimension_numbers = #tpu.dot_dimension_numbers<[2], [1], [1], [2], [0, 0, 0, 1, 1, 2], [0], [0]>} : vector<2x16x16xf32>, vector<2x16x8xf32>, vector<2x16x8xf32> -> vector<2x16x8xf32>
    "tpu.trace_stop"() : () -> ()
    %106 = tpu.concatenate %48, %67, %86, %105 in 2 : vector<2x16x8xf32>, vector<2x16x8xf32>, vector<2x16x8xf32>, vector<2x16x8xf32> -> vector<2x16x32xf32>
    %107 = vector.shape_cast %106 : vector<2x16x32xf32> to vector<32x32xf32>
    %108 = arith.truncf %107 : vector<32x32xf32> to vector<32x32xbf16>
    %c0_39 = arith.constant 0 : index
    %c0_40 = arith.constant 0 : index
    %c0_41 = arith.constant 0 : index
    %109 = vector.load %arg21[%c0_39, %c0_40, %c0_41] : memref<1x32x32xbf16, #tpu.memory_space<vmem>>, vector<1x32x32xbf16>
    %110 = vector.shape_cast %109 : vector<1x32x32xbf16> to vector<32x32xbf16>
    %cst_42 = arith.constant dense<0.000000e+00> : vector<32x32xf32>
    %111 = tpu.matmul %108, %110, %cst_42 {dimension_numbers = #tpu.dot_dimension_numbers<[1], [0], [0], [1], [0, 0, 1, 1], [], []>} : vector<32x32xbf16>, vector<32x32xbf16>, vector<32x32xf32> -> vector<32x32xf32>
    %c0_43 = arith.constant 0 : index
    %c0_44 = arith.constant 0 : index
    %c0_45 = arith.constant 0 : index
    %112 = vector.load %arg22[%c0_43, %c0_44, %c0_45] : memref<1x1x32xf32, #tpu.memory_space<vmem>>, vector<1x1x32xf32>
    %113 = vector.shape_cast %112 : vector<1x1x32xf32> to vector<1x32xf32>
    %114 = vector.broadcast %113 : vector<1x32xf32> to vector<32x32xf32>
    %115 = arith.addf %111, %114 : vector<32x32xf32>
    %116 = arith.addf %3, %115 : vector<32x32xf32>
    %c0_46 = arith.constant 0 : index
    %c0_47 = arith.constant 0 : index
    %c0_48 = arith.constant 0 : index
    %117 = vector.load %arg27[%c0_46, %c0_47, %c0_48] : memref<1x1x32xf32, #tpu.memory_space<vmem>>, vector<1x1x32xf32>
    %118 = vector.shape_cast %117 : vector<1x1x32xf32> to vector<1x32xf32>
    %c0_49 = arith.constant 0 : index
    %c0_50 = arith.constant 0 : index
    %c0_51 = arith.constant 0 : index
    %119 = vector.load %arg28[%c0_49, %c0_50, %c0_51] : memref<1x1x32xf32, #tpu.memory_space<vmem>>, vector<1x1x32xf32>
    %120 = vector.shape_cast %119 : vector<1x1x32xf32> to vector<1x32xf32>
    %cst_52 = arith.constant dense<0.000000e+00> : vector<32xf32>
    %121 = vector.multi_reduction <add>, %116, %cst_52 [1] : vector<32x32xf32> to vector<32xf32>
    %122 = vector.shape_cast %121 : vector<32xf32> to vector<32x1xf32>
    %cst_53 = arith.constant 3.200000e+01 : f32
    %123 = vector.broadcast %cst_53 : f32 to vector<32x1xf32>
    %124 = arith.divf %122, %123 : vector<32x1xf32>
    %125 = vector.broadcast %124 : vector<32x1xf32> to vector<32x32xf32>
    %126 = arith.subf %116, %125 : vector<32x32xf32>
    %127 = arith.mulf %126, %126 : vector<32x32xf32>
    %cst_54 = arith.constant dense<0.000000e+00> : vector<32xf32>
    %128 = vector.multi_reduction <add>, %127, %cst_54 [1] : vector<32x32xf32> to vector<32xf32>
    %129 = vector.shape_cast %128 : vector<32xf32> to vector<32x1xf32>
    %cst_55 = arith.constant 3.200000e+01 : f32
    %130 = vector.broadcast %cst_55 : f32 to vector<32x1xf32>
    %131 = arith.divf %129, %130 : vector<32x1xf32>
    %132 = vector.broadcast %124 : vector<32x1xf32> to vector<32x32xf32>
    %133 = arith.subf %116, %132 : vector<32x32xf32>
    %cst_56 = arith.constant 9.99999974E-6 : f32
    %134 = vector.broadcast %cst_56 : f32 to vector<32x1xf32>
    %135 = arith.addf %131, %134 : vector<32x1xf32>
    %136 = math.rsqrt %135 : vector<32x1xf32>
    %137 = vector.broadcast %136 : vector<32x1xf32> to vector<32x32xf32>
    %138 = arith.mulf %133, %137 : vector<32x32xf32>
    %139 = vector.broadcast %118 : vector<1x32xf32> to vector<32x32xf32>
    %140 = arith.mulf %138, %139 : vector<32x32xf32>
    %141 = vector.broadcast %120 : vector<1x32xf32> to vector<32x32xf32>
    %142 = arith.addf %140, %141 : vector<32x32xf32>
    %143 = arith.truncf %142 : vector<32x32xf32> to vector<32x32xbf16>
    %c0_57 = arith.constant 0 : index
    %c0_58 = arith.constant 0 : index
    %c0_59 = arith.constant 0 : index
    %144 = vector.load %arg23[%c0_57, %c0_58, %c0_59] : memref<1x32x2048xbf16, #tpu.memory_space<vmem>>, vector<1x32x2048xbf16>
    %145 = vector.shape_cast %144 : vector<1x32x2048xbf16> to vector<32x2048xbf16>
    %cst_60 = arith.constant dense<0.000000e+00> : vector<32x2048xf32>
    %146 = tpu.matmul %143, %145, %cst_60 {dimension_numbers = #tpu.dot_dimension_numbers<[1], [0], [0], [1], [0, 0, 1, 1], [], []>} : vector<32x32xbf16>, vector<32x2048xbf16>, vector<32x2048xf32> -> vector<32x2048xf32>
    %c0_61 = arith.constant 0 : index
    %c0_62 = arith.constant 0 : index
    %c0_63 = arith.constant 0 : index
    %147 = vector.load %arg24[%c0_61, %c0_62, %c0_63] : memref<1x1x2048xf32, #tpu.memory_space<vmem>>, vector<1x1x2048xf32>
    %148 = vector.shape_cast %147 : vector<1x1x2048xf32> to vector<1x2048xf32>
    %149 = vector.broadcast %148 : vector<1x2048xf32> to vector<32x2048xf32>
    %150 = arith.addf %146, %149 : vector<32x2048xf32>
    %cst_64 = arith.constant 0.000000e+00 : f32
    %151 = vector.broadcast %cst_64 : f32 to vector<32x2048xf32>
    %152 = arith.maximumf %150, %151 : vector<32x2048xf32>
    %153 = arith.truncf %152 : vector<32x2048xf32> to vector<32x2048xbf16>
    %c0_65 = arith.constant 0 : index
    %c0_66 = arith.constant 0 : index
    %c0_67 = arith.constant 0 : index
    %154 = vector.load %arg25[%c0_65, %c0_66, %c0_67] : memref<1x2048x32xbf16, #tpu.memory_space<vmem>>, vector<1x2048x32xbf16>
    %155 = vector.shape_cast %154 : vector<1x2048x32xbf16> to vector<2048x32xbf16>
    %cst_68 = arith.constant dense<0.000000e+00> : vector<32x32xf32>
    %156 = tpu.matmul %153, %155, %cst_68 {dimension_numbers = #tpu.dot_dimension_numbers<[1], [0], [0], [1], [0, 0, 1, 1], [], []>} : vector<32x2048xbf16>, vector<2048x32xbf16>, vector<32x32xf32> -> vector<32x32xf32>
    %c0_69 = arith.constant 0 : index
    %c0_70 = arith.constant 0 : index
    %c0_71 = arith.constant 0 : index
    %157 = vector.load %arg26[%c0_69, %c0_70, %c0_71] : memref<1x1x32xf32, #tpu.memory_space<vmem>>, vector<1x1x32xf32>
    %158 = vector.shape_cast %157 : vector<1x1x32xf32> to vector<1x32xf32>
    %159 = vector.broadcast %158 : vector<1x32xf32> to vector<32x32xf32>
    %160 = arith.addf %156, %159 : vector<32x32xf32>
    %161 = arith.addf %142, %160 : vector<32x32xf32>
    %c0_72 = arith.constant 0 : index
    %c0_73 = arith.constant 0 : index
    %c0_74 = arith.constant 0 : index
    %162 = vector.load %arg29[%c0_72, %c0_73, %c0_74] : memref<1x1x32xf32, #tpu.memory_space<vmem>>, vector<1x1x32xf32>
    %163 = vector.shape_cast %162 : vector<1x1x32xf32> to vector<1x32xf32>
    %c0_75 = arith.constant 0 : index
    %c0_76 = arith.constant 0 : index
    %c0_77 = arith.constant 0 : index
    %164 = vector.load %arg30[%c0_75, %c0_76, %c0_77] : memref<1x1x32xf32, #tpu.memory_space<vmem>>, vector<1x1x32xf32>
    %165 = vector.shape_cast %164 : vector<1x1x32xf32> to vector<1x32xf32>
    %cst_78 = arith.constant dense<0.000000e+00> : vector<32xf32>
    %166 = vector.multi_reduction <add>, %161, %cst_78 [1] : vector<32x32xf32> to vector<32xf32>
    %167 = vector.shape_cast %166 : vector<32xf32> to vector<32x1xf32>
    %cst_79 = arith.constant 3.200000e+01 : f32
    %168 = vector.broadcast %cst_79 : f32 to vector<32x1xf32>
    %169 = arith.divf %167, %168 : vector<32x1xf32>
    %170 = vector.broadcast %169 : vector<32x1xf32> to vector<32x32xf32>
    %171 = arith.subf %161, %170 : vector<32x32xf32>
    %172 = arith.mulf %171, %171 : vector<32x32xf32>
    %cst_80 = arith.constant dense<0.000000e+00> : vector<32xf32>
    %173 = vector.multi_reduction <add>, %172, %cst_80 [1] : vector<32x32xf32> to vector<32xf32>
    %174 = vector.shape_cast %173 : vector<32xf32> to vector<32x1xf32>
    %cst_81 = arith.constant 3.200000e+01 : f32
    %175 = vector.broadcast %cst_81 : f32 to vector<32x1xf32>
    %176 = arith.divf %174, %175 : vector<32x1xf32>
    %177 = vector.broadcast %169 : vector<32x1xf32> to vector<32x32xf32>
    %178 = arith.subf %161, %177 : vector<32x32xf32>
    %cst_82 = arith.constant 9.99999974E-6 : f32
    %179 = vector.broadcast %cst_82 : f32 to vector<32x1xf32>
    %180 = arith.addf %176, %179 : vector<32x1xf32>
    %181 = math.rsqrt %180 : vector<32x1xf32>
    %182 = vector.broadcast %181 : vector<32x1xf32> to vector<32x32xf32>
    %183 = arith.mulf %178, %182 : vector<32x32xf32>
    %184 = vector.broadcast %163 : vector<1x32xf32> to vector<32x32xf32>
    %185 = arith.mulf %183, %184 : vector<32x32xf32>
    %186 = vector.broadcast %165 : vector<1x32xf32> to vector<32x32xf32>
    %187 = arith.addf %185, %186 : vector<32x32xf32>
    %c0_83 = arith.constant 0 : index
    %c0_84 = arith.constant 0 : index
    %188 = vector.load %arg33[%c0_83, %c0_84] : memref<32x32xf32, #tpu.memory_space<vmem>>, vector<32x32xf32>
    tpu.vector_store %arg33[%c0_83, %c0_84], %187 {strides = array<i32>} : memref<32x32xf32, #tpu.memory_space<vmem>>, vector<32x32xf32>,
    %c3_i32 = arith.constant 3 : i32
    %189 = arith.cmpi eq, %arg0, %c3_i32 : i32
    %190 = arith.extui %189 : i1 to i32
    %c0_i32_85 = arith.constant 0 : i32
    %191 = arith.cmpi ne, %190, %c0_i32_85 : i32
    scf.if %191 {
      %c0_86 = arith.constant 0 : index
      %c0_87 = arith.constant 0 : index
      %192 = vector.load %arg5[%c0_86, %c0_87] : memref<2x32xf32, #tpu.memory_space<vmem>>, vector<2x32xf32>
      %cst_88 = arith.constant dense<0.000000e+00> : vector<2x32xf32>
      %193 = tpu.matmul %192, %187, %cst_88 {dimension_numbers = #tpu.dot_dimension_numbers<[1], [0], [0], [1], [0, 0, 1, 1], [], []>} : vector<2x32xf32>, vector<32x32xf32>, vector<2x32xf32> -> vector<2x32xf32>
      %c0_89 = arith.constant 0 : index
      %c0_90 = arith.constant 0 : index
      %194 = vector.load %arg6[%c0_89, %c0_90] : memref<2x16xf32, #tpu.memory_space<vmem>>, vector<2x16xf32>
      %c0_91 = arith.constant 0 : index
      %c0_92 = arith.constant 0 : index
      %195 = vector.load %arg9[%c0_91, %c0_92] : memref<16x32xf32, #tpu.memory_space<vmem>>, vector<16x32xf32>
      %cst_93 = arith.constant dense<0.000000e+00> : vector<2x32xf32>
      %196 = tpu.matmul %194, %195, %cst_93 {dimension_numbers = #tpu.dot_dimension_numbers<[1], [0], [0], [1], [0, 0, 1, 1], [], []>} : vector<2x16xf32>, vector<16x32xf32>, vector<2x32xf32> -> vector<2x32xf32>
      %c0_94 = arith.constant 0 : index
      %c0_95 = arith.constant 0 : index
      %197 = vector.load %arg10[%c0_94, %c0_95] : memref<1x32xf32, #tpu.memory_space<vmem>>, vector<1x32xf32>
      %198 = vector.broadcast %197 : vector<1x32xf32> to vector<2x32xf32>
      %199 = arith.addf %196, %198 : vector<2x32xf32>
      %cst_96 = arith.constant 0.000000e+00 : f32
      %200 = vector.broadcast %cst_96 : f32 to vector<2x32xf32>
      %201 = arith.maximumf %199, %200 : vector<2x32xf32>
      %202 = tpu.concatenate %193, %201 in 1 : vector<2x32xf32>, vector<2x32xf32> -> vector<2x64xf32>
      %c0_97 = arith.constant 0 : index
      %c0_98 = arith.constant 0 : index
      %203 = vector.load %arg11[%c0_97, %c0_98] : memref<1x64xf32, #tpu.memory_space<vmem>>, vector<1x64xf32>
      %c0_99 = arith.constant 0 : index
      %c0_100 = arith.constant 0 : index
      %204 = vector.load %arg12[%c0_99, %c0_100] : memref<1x64xf32, #tpu.memory_space<vmem>>, vector<1x64xf32>
      %cst_101 = arith.constant dense<0.000000e+00> : vector<2xf32>
      %205 = vector.multi_reduction <add>, %202, %cst_101 [1] : vector<2x64xf32> to vector<2xf32>
      %206 = vector.shape_cast %205 : vector<2xf32> to vector<2x1xf32>
      %cst_102 = arith.constant 6.400000e+01 : f32
      %207 = vector.broadcast %cst_102 : f32 to vector<2x1xf32>
      %208 = arith.divf %206, %207 : vector<2x1xf32>
      %209 = vector.broadcast %208 : vector<2x1xf32> to vector<2x64xf32>
      %210 = arith.subf %202, %209 : vector<2x64xf32>
      %211 = arith.mulf %210, %210 : vector<2x64xf32>
      %cst_103 = arith.constant dense<0.000000e+00> : vector<2xf32>
      %212 = vector.multi_reduction <add>, %211, %cst_103 [1] : vector<2x64xf32> to vector<2xf32>
      %213 = vector.shape_cast %212 : vector<2xf32> to vector<2x1xf32>
      %cst_104 = arith.constant 6.400000e+01 : f32
      %214 = vector.broadcast %cst_104 : f32 to vector<2x1xf32>
      %215 = arith.divf %213, %214 : vector<2x1xf32>
      %216 = vector.broadcast %208 : vector<2x1xf32> to vector<2x64xf32>
      %217 = arith.subf %202, %216 : vector<2x64xf32>
      %cst_105 = arith.constant 9.99999974E-6 : f32
      %218 = vector.broadcast %cst_105 : f32 to vector<2x1xf32>
      %219 = arith.addf %215, %218 : vector<2x1xf32>
      %220 = math.rsqrt %219 : vector<2x1xf32>
      %221 = vector.broadcast %220 : vector<2x1xf32> to vector<2x64xf32>
      %222 = arith.mulf %217, %221 : vector<2x64xf32>
      %223 = vector.broadcast %203 : vector<1x64xf32> to vector<2x64xf32>
      %224 = arith.mulf %222, %223 : vector<2x64xf32>
      %225 = vector.broadcast %204 : vector<1x64xf32> to vector<2x64xf32>
      %226 = arith.addf %224, %225 : vector<2x64xf32>
      %c0_106 = arith.constant 0 : index
      %c0_107 = arith.constant 0 : index
      %227 = vector.load %arg13[%c0_106, %c0_107] : memref<64x32xf32, #tpu.memory_space<vmem>>, vector<64x32xf32>
      %cst_108 = arith.constant dense<0.000000e+00> : vector<2x32xf32>
      %228 = tpu.matmul %226, %227, %cst_108 {dimension_numbers = #tpu.dot_dimension_numbers<[1], [0], [0], [1], [0, 0, 1, 1], [], []>} : vector<2x64xf32>, vector<64x32xf32>, vector<2x32xf32> -> vector<2x32xf32>
      %c0_109 = arith.constant 0 : index
      %c0_110 = arith.constant 0 : index
      %229 = vector.load %arg14[%c0_109, %c0_110] : memref<1x32xf32, #tpu.memory_space<vmem>>, vector<1x32xf32>
      %230 = vector.broadcast %229 : vector<1x32xf32> to vector<2x32xf32>
      %231 = arith.addf %228, %230 : vector<2x32xf32>
      %cst_111 = arith.constant 0.000000e+00 : f32
      %232 = vector.broadcast %cst_111 : f32 to vector<2x32xf32>
      %233 = arith.maximumf %231, %232 : vector<2x32xf32>
      %c0_112 = arith.constant 0 : index
      %c0_113 = arith.constant 0 : index
      %234 = vector.load %arg15[%c0_112, %c0_113] : memref<32x5xf32, #tpu.memory_space<vmem>>, vector<32x5xf32>
      %cst_114 = arith.constant dense<0.000000e+00> : vector<2x5xf32>
      %235 = tpu.matmul %233, %234, %cst_114 {dimension_numbers = #tpu.dot_dimension_numbers<[1], [0], [0], [1], [0, 0, 1, 1], [], []>} : vector<2x32xf32>, vector<32x5xf32>, vector<2x5xf32> -> vector<2x5xf32>
      %c0_115 = arith.constant 0 : index
      %c0_116 = arith.constant 0 : index
      %236 = vector.load %arg16[%c0_115, %c0_116] : memref<1x5xf32, #tpu.memory_space<vmem>>, vector<1x5xf32>
      %237 = vector.broadcast %236 : vector<1x5xf32> to vector<2x5xf32>
      %238 = arith.addf %235, %237 : vector<2x5xf32>
      %c0_117 = arith.constant 0 : index
      %c0_118 = arith.constant 0 : index
      %239 = vector.load %arg31[%c0_117, %c0_118] : memref<2x5xf32, #tpu.memory_space<vmem>>, vector<2x5xf32>
      tpu.vector_store %arg31[%c0_117, %c0_118], %238 {strides = array<i32>} : memref<2x5xf32, #tpu.memory_space<vmem>>, vector<2x5xf32>,
      %c0_119 = arith.constant 0 : index
      %c0_120 = arith.constant 0 : index
      %240 = vector.load %arg17[%c0_119, %c0_120] : memref<32x1xf32, #tpu.memory_space<vmem>>, vector<32x1xf32>
      %cst_121 = arith.constant dense<0.000000e+00> : vector<2x1xf32>
      %241 = tpu.matmul %233, %240, %cst_121 {dimension_numbers = #tpu.dot_dimension_numbers<[1], [0], [0], [1], [0, 0, 1, 1], [], []>} : vector<2x32xf32>, vector<32x1xf32>, vector<2x1xf32> -> vector<2x1xf32>
      %c0_122 = arith.constant 0 : index
      %c0_123 = arith.constant 0 : index
      %242 = vector.load %arg18[%c0_122, %c0_123] : memref<1x1xf32, #tpu.memory_space<vmem>>, vector<1x1xf32>
      %243 = vector.broadcast %242 : vector<1x1xf32> to vector<2x1xf32>
      %244 = arith.addf %241, %243 : vector<2x1xf32>
      %c0_124 = arith.constant 0 : index
      %c0_125 = arith.constant 0 : index
      %245 = vector.load %arg32[%c0_124, %c0_125] : memref<2x1xf32, #tpu.memory_space<vmem>>, vector<2x1xf32>
      tpu.vector_store %arg32[%c0_124, %c0_125], %244 {strides = array<i32>} : memref<2x1xf32, #tpu.memory_space<vmem>>, vector<2x1xf32>,
    } else {
    }
    return
  }
  func.func @transform_0(%arg0: i32) -> (i32, i32) {
    %c0_i32 = arith.constant 0 : i32
    %c0_i32_0 = arith.constant 0 : i32
    %c0_i32_1 = arith.constant 0 : i32
    return %c0_i32, %c0_i32_0 : i32, i32
  }
  func.func @transform_1(%arg0: i32) -> (i32, i32) {
    %c0_i32 = arith.constant 0 : i32
    %c0_i32_0 = arith.constant 0 : i32
    %c0_i32_1 = arith.constant 0 : i32
    return %c0_i32, %c0_i32_0 : i32, i32
  }
  func.func @transform_2(%arg0: i32) -> (i32, i32) {
    %c0_i32 = arith.constant 0 : i32
    %c0_i32_0 = arith.constant 0 : i32
    %c0_i32_1 = arith.constant 0 : i32
    return %c0_i32, %c0_i32_0 : i32, i32
  }
  func.func @transform_3(%arg0: i32) -> (i32, i32) {
    %c0_i32 = arith.constant 0 : i32
    %c0_i32_0 = arith.constant 0 : i32
    %c0_i32_1 = arith.constant 0 : i32
    return %c0_i32, %c0_i32_0 : i32, i32
  }
  func.func @transform_4(%arg0: i32) -> (i32, i32) {
    %c0_i32 = arith.constant 0 : i32
    %c0_i32_0 = arith.constant 0 : i32
    %c0_i32_1 = arith.constant 0 : i32
    return %c0_i32, %c0_i32_0 : i32, i32
  }
  func.func @transform_5(%arg0: i32) -> (i32, i32) {
    %c0_i32 = arith.constant 0 : i32
    %c0_i32_0 = arith.constant 0 : i32
    %c0_i32_1 = arith.constant 0 : i32
    return %c0_i32, %c0_i32_0 : i32, i32
  }
  func.func @transform_6(%arg0: i32) -> (i32, i32) {
    %c0_i32 = arith.constant 0 : i32
    %c0_i32_0 = arith.constant 0 : i32
    %c0_i32_1 = arith.constant 0 : i32
    return %c0_i32, %c0_i32_0 : i32, i32
  }
  func.func @transform_7(%arg0: i32) -> (i32, i32) {
    %c0_i32 = arith.constant 0 : i32
    %c0_i32_0 = arith.constant 0 : i32
    %c0_i32_1 = arith.constant 0 : i32
    return %c0_i32, %c0_i32_0 : i32, i32
  }
  func.func @transform_8(%arg0: i32) -> (i32, i32) {
    %c0_i32 = arith.constant 0 : i32
    %c0_i32_0 = arith.constant 0 : i32
    %c0_i32_1 = arith.constant 0 : i32
    return %c0_i32, %c0_i32_0 : i32, i32
  }
  func.func @transform_9(%arg0: i32) -> (i32, i32) {
    %c0_i32 = arith.constant 0 : i32
    %c0_i32_0 = arith.constant 0 : i32
    %c0_i32_1 = arith.constant 0 : i32
    return %c0_i32, %c0_i32_0 : i32, i32
  }
  func.func @transform_10(%arg0: i32) -> (i32, i32) {
    %c0_i32 = arith.constant 0 : i32
    %c0_i32_0 = arith.constant 0 : i32
    %c0_i32_1 = arith.constant 0 : i32
    return %c0_i32, %c0_i32_0 : i32, i32
  }
  func.func @transform_11(%arg0: i32) -> (i32, i32) {
    %c0_i32 = arith.constant 0 : i32
    %c0_i32_0 = arith.constant 0 : i32
    %c0_i32_1 = arith.constant 0 : i32
    return %c0_i32, %c0_i32_0 : i32, i32
  }
  func.func @transform_12(%arg0: i32) -> (i32, i32) {
    %c0_i32 = arith.constant 0 : i32
    %c0_i32_0 = arith.constant 0 : i32
    %c0_i32_1 = arith.constant 0 : i32
    return %c0_i32, %c0_i32_0 : i32, i32
  }
  func.func @transform_13(%arg0: i32) -> (i32, i32) {
    %c0_i32 = arith.constant 0 : i32
    %c0_i32_0 = arith.constant 0 : i32
    %c0_i32_1 = arith.constant 0 : i32
    return %c0_i32, %c0_i32_0 : i32, i32
  }
  func.func @transform_14(%arg0: i32) -> (i32, i32) {
    %c0_i32 = arith.constant 0 : i32
    %c0_i32_0 = arith.constant 0 : i32
    %c0_i32_1 = arith.constant 0 : i32
    return %c0_i32, %c0_i32_0 : i32, i32
  }
  func.func @transform_15(%arg0: i32) -> (i32, i32) {
    %c0_i32 = arith.constant 0 : i32
    %c0_i32_0 = arith.constant 0 : i32
    %c0_i32_1 = arith.constant 0 : i32
    return %c0_i32, %c0_i32_0 : i32, i32
  }
  func.func @transform_16(%arg0: i32) -> (i32, i32) {
    %c0_i32 = arith.constant 0 : i32
    %c0_i32_0 = arith.constant 0 : i32
    %c0_i32_1 = arith.constant 0 : i32
    return %c0_i32, %c0_i32_0 : i32, i32
  }
  func.func @transform_17(%arg0: i32) -> (i32, i32) {
    %c0_i32 = arith.constant 0 : i32
    %c0_i32_0 = arith.constant 0 : i32
    %c0_i32_1 = arith.constant 0 : i32
    return %c0_i32, %c0_i32_0 : i32, i32
  }
  func.func @transform_18(%arg0: i32) -> (i32, i32, i32, i32) {
    %c0_i32 = arith.constant 0 : i32
    %c0_i32_0 = arith.constant 0 : i32
    %c0_i32_1 = arith.constant 0 : i32
    %c0_i32_2 = arith.constant 0 : i32
    return %arg0, %c0_i32, %c0_i32_0, %c0_i32_1 : i32, i32, i32, i32
  }
  func.func @transform_19(%arg0: i32) -> (i32, i32, i32) {
    %c0_i32 = arith.constant 0 : i32
    %c0_i32_0 = arith.constant 0 : i32
    %c0_i32_1 = arith.constant 0 : i32
    return %arg0, %c0_i32, %c0_i32_0 : i32, i32, i32
  }
  func.func @transform_20(%arg0: i32) -> (i32, i32, i32) {
    %c0_i32 = arith.constant 0 : i32
    %c0_i32_0 = arith.constant 0 : i32
    %c0_i32_1 = arith.constant 0 : i32
    return %arg0, %c0_i32, %c0_i32_0 : i32, i32, i32
  }
  func.func @transform_21(%arg0: i32) -> (i32, i32, i32) {
    %c0_i32 = arith.constant 0 : i32
    %c0_i32_0 = arith.constant 0 : i32
    %c0_i32_1 = arith.constant 0 : i32
    return %arg0, %c0_i32, %c0_i32_0 : i32, i32, i32
  }
  func.func @transform_22(%arg0: i32) -> (i32, i32, i32) {
    %c0_i32 = arith.constant 0 : i32
    %c0_i32_0 = arith.constant 0 : i32
    %c0_i32_1 = arith.constant 0 : i32
    return %arg0, %c0_i32, %c0_i32_0 : i32, i32, i32
  }
  func.func @transform_23(%arg0: i32) -> (i32, i32, i32) {
    %c0_i32 = arith.constant 0 : i32
    %c0_i32_0 = arith.constant 0 : i32
    %c0_i32_1 = arith.constant 0 : i32
    return %arg0, %c0_i32, %c0_i32_0 : i32, i32, i32
  }
  func.func @transform_24(%arg0: i32) -> (i32, i32, i32) {
    %c0_i32 = arith.constant 0 : i32
    %c0_i32_0 = arith.constant 0 : i32
    %c0_i32_1 = arith.constant 0 : i32
    return %arg0, %c0_i32, %c0_i32_0 : i32, i32, i32
  }
  func.func @transform_25(%arg0: i32) -> (i32, i32, i32) {
    %c0_i32 = arith.constant 0 : i32
    %c0_i32_0 = arith.constant 0 : i32
    %c0_i32_1 = arith.constant 0 : i32
    return %arg0, %c0_i32, %c0_i32_0 : i32, i32, i32
  }
  func.func @transform_26(%arg0: i32) -> (i32, i32, i32) {
    %c0_i32 = arith.constant 0 : i32
    %c0_i32_0 = arith.constant 0 : i32
    %c0_i32_1 = arith.constant 0 : i32
    return %arg0, %c0_i32, %c0_i32_0 : i32, i32, i32
  }
  func.func @transform_27(%arg0: i32) -> (i32, i32, i32) {
    %c0_i32 = arith.constant 0 : i32
    %c0_i32_0 = arith.constant 0 : i32
    %c0_i32_1 = arith.constant 0 : i32
    return %arg0, %c0_i32, %c0_i32_0 : i32, i32, i32
  }
  func.func @transform_28(%arg0: i32) -> (i32, i32, i32) {
    %c0_i32 = arith.constant 0 : i32
    %c0_i32_0 = arith.constant 0 : i32
    %c0_i32_1 = arith.constant 0 : i32
    return %arg0, %c0_i32, %c0_i32_0 : i32, i32, i32
  }
  func.func @transform_29(%arg0: i32) -> (i32, i32, i32) {
    %c0_i32 = arith.constant 0 : i32
    %c0_i32_0 = arith.constant 0 : i32
    %c0_i32_1 = arith.constant 0 : i32
    return %arg0, %c0_i32, %c0_i32_0 : i32, i32, i32
  }
  func.func @transform_30(%arg0: i32) -> (i32, i32) {
    %c0_i32 = arith.constant 0 : i32
    %c0_i32_0 = arith.constant 0 : i32
    %c0_i32_1 = arith.constant 0 : i32
    return %c0_i32, %c0_i32_0 : i32, i32
  }
  func.func @transform_31(%arg0: i32) -> (i32, i32) {
    %c0_i32 = arith.constant 0 : i32
    %c0_i32_0 = arith.constant 0 : i32
    %c0_i32_1 = arith.constant 0 : i32
    return %c0_i32, %c0_i32_0 : i32, i32
  }
}

</mosaic_0001>

<llo_original>
// kernel: tpu_custom_call.1
$region0: #{tpu_custom_call.1}
  #allocation0 [shape = 'u32[]', space=smem, size = 0x4, offset = 0x4, fixed_abs, tag = 'smem constant byte address 0x4 - core index']
  #allocation1 [shape = 'u32[144,128]{1,0:T(1,128)}', space=vmem, size = 0x12000, scoped, tag = 'internal scratch']
  #allocation2 [shape = 'f32[32,32]{1,0:T(8,128)}', space=vmem, size = 0x4000, scoped, tag = 'scratch operand']
  #allocation3 [shape = 'f32[1,1]{1,0:T(1,128)S(1)}', space=vmem, size = 0x200, scoped, tag = 'scoped memory for tpu_custom_call.1']
  %s0 = inlined_call_operand.smem [shape: u32[32], index: -1, kind: input, shape index: {}]
  %s1 = sld [smem:[%s0]]
  %s2 = scalar_lea.smem %s0, 1
  %s3 = sld [smem:[%s2]]
  %s4 = scalar_lea.smem %s0, 2
  %s5 = sld [smem:[%s4]]
  %s6 = scalar_lea.smem %s0, 3
  %s7 = sld [smem:[%s6]]
  %s8 = scalar_lea.smem %s0, 4
  %s9 = sld [smem:[%s8]]
  %s10 = scalar_lea.smem %s0, 5
  %s11 = sld [smem:[%s10]]
  %s12 = scalar_lea.smem %s0, 6
  %s13 = sld [smem:[%s12]]
  %s14 = scalar_lea.smem %s0, 7
  %s15 = sld [smem:[%s14]]
  %s16 = scalar_lea.smem %s0, 8
  %s17 = sld [smem:[%s16]]
  %s18 = scalar_lea.smem %s0, 9
  %s19 = sld [smem:[%s18]]
  %s20 = scalar_lea.smem %s0, 10
  %s21 = sld [smem:[%s20]]
  %s22 = scalar_lea.smem %s0, 11
  %s23 = sld [smem:[%s22]]
  %s24 = scalar_lea.smem %s0, 12
  %s25 = sld [smem:[%s24]]
  %s26 = scalar_lea.smem %s0, 13
  %s27 = sld [smem:[%s26]]
  %s28 = scalar_lea.smem %s0, 14
  %s29 = sld [smem:[%s28]]
  %s30 = scalar_lea.smem %s0, 15
  %s31 = sld [smem:[%s30]]
  %s32 = scalar_lea.smem %s0, 16
  %s33 = sld [smem:[%s32]]
  %s34 = scalar_lea.smem %s0, 17
  %s35 = sld [smem:[%s34]]
  %s36 = scalar_lea.smem %s0, 18
  %s37 = sld [smem:[%s36]]
  %s38 = scalar_lea.smem %s0, 19
  %s39 = sld [smem:[%s38]]
  %s40 = scalar_lea.smem %s0, 20
  %s41 = sld [smem:[%s40]]
  %s42 = scalar_lea.smem %s0, 21
  %s43 = sld [smem:[%s42]]
  %s44 = scalar_lea.smem %s0, 22
  %s45 = sld [smem:[%s44]]
  %s46 = scalar_lea.smem %s0, 23
  %s47 = sld [smem:[%s46]]
  %s48 = scalar_lea.smem %s0, 24
  %s49 = sld [smem:[%s48]]
  %s50 = scalar_lea.smem %s0, 25
  %s51 = sld [smem:[%s50]]
  %s52 = scalar_lea.smem %s0, 26
  %s53 = sld [smem:[%s52]]
  %s54 = scalar_lea.smem %s0, 27
  %s55 = sld [smem:[%s54]]
  %s56 = scalar_lea.smem %s0, 28
  %s57 = sld [smem:[%s56]]
  %s58 = scalar_lea.smem %s0, 29
  %s59 = sld [smem:[%s58]]
  %s60 = scalar_lea.smem %s0, 30
  %s61 = sld [smem:[%s60]]
  %s62 = scalar_lea.smem %s0, 31
  %s63 = sld [smem:[%s62]]
  %64 = xla_tuple %s61, %s63
  %s65 = sld [smem:[#allocation0]]
  $region169: #{tpu_custom_call.1} parent=0
    _
  %s67 = ssub.s32 1, %s65
  %s68 = scalar_select 0, %s67, %s65
  %v69 = vstv %s35
  %70 = vst [vmem:[#allocation3] sm:$0x1] %v69
  $region1: #{tpu_custom_call.1} parent=0
    #allocation4 [shape = 'u8[1024]{0}', space=vmem, size = 0x400, scoped, tag = 'output window, operand 0, single buffered']
    #allocation5 [shape = 's32[2]{0}', space=sflag, size = 0x8, scoped, tag = 'scoped memory for tpu_custom_call.1']
    %71 = vsyncpa [#allocation5], 0
    loop: start=0, step=1, limit=6
    $region2: #{tpu_custom_call.1} parent=1 // loop_pre_header
      _
    $region3: #{tpu_custom_call.1} parent=1 // loop_header
      %s73 = sphi 0, %s77
      %p74 = scmp.ge.s32.totalorder %s73, 6
      %s81 = sphi 0, %s81
      %s83 = sphi 0, %s81
      %s84 = sphi 0, %s83
      %s98 = sphi 0, %s84
      %s102 = sphi 0, %s102
      %s104 = sphi 0, %s102
      %s105 = sphi 0, %s104
      %s119 = sphi 0, %s105
      %s123 = sphi 0, %s123
      %s125 = sphi 0, %s123
      %s126 = sphi 0, %s125
      %s140 = sphi 0, %s126
      %s144 = sphi 0, %s144
      %s146 = sphi 0, %s144
      %s147 = sphi 0, %s146
      %s161 = sphi 0, %s147
      %s165 = sphi 0, %s165
      %s167 = sphi 0, %s165
      %s168 = sphi 0, %s167
      %s182 = sphi 0, %s168
      %s186 = sphi 0, %s186
      %s188 = sphi 0, %s186
      %s189 = sphi 0, %s188
      %s203 = sphi 0, %s189
      %s207 = sphi 0, %s207
      %s209 = sphi 0, %s207
      %s210 = sphi 0, %s209
      %s224 = sphi 0, %s210
      %s228 = sphi 0, %s228
      %s230 = sphi 0, %s228
      %s231 = sphi 0, %s230
      %s245 = sphi 0, %s231
      %s249 = sphi 0, %s249
      %s251 = sphi 0, %s249
      %s252 = sphi 0, %s251
      %s266 = sphi 0, %s252
      %s270 = sphi 0, %s270
      %s272 = sphi 0, %s270
      %s273 = sphi 0, %s272
      %s287 = sphi 0, %s273
      %s291 = sphi 0, %s291
      %s293 = sphi 0, %s291
      %s294 = sphi 0, %s293
      %s308 = sphi 0, %s294
      %s312 = sphi 0, %s312
      %s314 = sphi 0, %s312
      %s315 = sphi 0, %s314
      %s329 = sphi 0, %s315
      %s333 = sphi 0, %s333
      %s335 = sphi 0, %s333
      %s336 = sphi 0, %s335
      %s350 = sphi 0, %s336
      %s354 = sphi 0, %s354
      %s356 = sphi 0, %s354
      %s357 = sphi 0, %s356
      %s371 = sphi 0, %s357
      %s375 = sphi 0, %s375
      %s377 = sphi 0, %s375
      %s378 = sphi 0, %s377
      %s392 = sphi 0, %s378
      %s396 = sphi 0, %s396
      %s398 = sphi 0, %s396
      %s399 = sphi 0, %s398
      %s413 = sphi 0, %s399
      %s417 = sphi 0, %s417
      %s419 = sphi 0, %s417
      %s420 = sphi 0, %s419
      %s434 = sphi 0, %s420
      %s438 = sphi 0, %s438
      %s440 = sphi 0, %s438
      %s441 = sphi 0, %s440
      %s455 = sphi 0, %s441
      %s461 = sphi 0, %s463
      %s464 = sphi 0, %s461
      %s465 = sphi 0, %s464
      %s481 = sphi 0, %s465
      %s487 = sphi 0, %s489
      %s490 = sphi 0, %s487
      %s491 = sphi 0, %s490
      %s507 = sphi 0, %s491
      %s513 = sphi 0, %s515
      %s516 = sphi 0, %s513
      %s517 = sphi 0, %s516
      %s533 = sphi 0, %s517
      %s539 = sphi 0, %s541
      %s542 = sphi 0, %s539
      %s543 = sphi 0, %s542
      %s559 = sphi 0, %s543
      %s565 = sphi 0, %s567
      %s568 = sphi 0, %s565
      %s569 = sphi 0, %s568
      %s585 = sphi 0, %s569
      %s591 = sphi 0, %s593
      %s594 = sphi 0, %s591
      %s595 = sphi 0, %s594
      %s611 = sphi 0, %s595
      %s617 = sphi 0, %s619
      %s620 = sphi 0, %s617
      %s621 = sphi 0, %s620
      %s637 = sphi 0, %s621
      %s643 = sphi 0, %s645
      %s646 = sphi 0, %s643
      %s647 = sphi 0, %s646
      %s663 = sphi 0, %s647
      %s669 = sphi 0, %s671
      %s672 = sphi 0, %s669
      %s673 = sphi 0, %s672
      %s689 = sphi 0, %s673
      %s695 = sphi 0, %s697
      %s698 = sphi 0, %s695
      %s699 = sphi 0, %s698
      %s715 = sphi 0, %s699
      %s721 = sphi 0, %s723
      %s724 = sphi 0, %s721
      %s725 = sphi 0, %s724
      %s741 = sphi 0, %s725
      %s747 = sphi 0, %s749
      %s750 = sphi 0, %s747
      %s751 = sphi 0, %s750
      %s767 = sphi 0, %s751
      %s771 = sphi 0, %s771
      %s773 = sphi 0, %s771
      %s774 = sphi 0, %s773
      %s788 = sphi 0, %s774
      %s792 = sphi 0, %s792
      %s794 = sphi 0, %s792
      %s795 = sphi 0, %s794
      %s809 = sphi 0, %s795
    $region4: #{tpu_custom_call.1} parent=1 // loop_header_branch
      %76 = sbr.rel (%p74) target = $region8
    $region5: #{tpu_custom_call.1} parent=1 // loop_body
      %s78 = ssub.s32 %s73, 1
      %s79 = ssub.s32 %s73, 2
      %s80 = sadd.s32 %s73, 1
      %s82 = sadd.s32 %s81, 1
      %p85 = scmp.eq.s32.totalorder %s73, 3
      %p86 = scmp.ne.s32.totalorder %s81, %s83
      %p87 = scmp.eq.s32.totalorder %s73, 0
      %p88 = por %p86, %p87
      %p89 = scmp.ne.s32.totalorder %s81, %s83
      %p90 = scmp.eq.s32.totalorder %s78, 3
      %p91 = por %p89, %p90
      %p92 = scmp.ne.s32.totalorder %s83, %s84
      %p93 = scmp.eq.s32.totalorder %s78, 0
      %p94 = por %p92, %p93
      %p95 = scmp.ne.s32.totalorder %s83, %s84
      %p96 = scmp.eq.s32.totalorder %s79, 3
      %p97 = por %p95, %p96
      %p99 = scmp.ne.s32.totalorder %s84, %s98
      %p100 = scmp.eq.s32.totalorder %s79, 0
      %p101 = por %p99, %p100
      %s103 = sadd.s32 %s102, 1
      %p106 = scmp.eq.s32.totalorder %s73, 3
      %p107 = scmp.ne.s32.totalorder %s102, %s104
      %p108 = scmp.eq.s32.totalorder %s73, 0
      %p109 = por %p107, %p108
      %p110 = scmp.ne.s32.totalorder %s102, %s104
      %p111 = scmp.eq.s32.totalorder %s78, 3
      %p112 = por %p110, %p111
      %p113 = scmp.ne.s32.totalorder %s104, %s105
      %p114 = scmp.eq.s32.totalorder %s78, 0
      %p115 = por %p113, %p114
      %p116 = scmp.ne.s32.totalorder %s104, %s105
      %p117 = scmp.eq.s32.totalorder %s79, 3
      %p118 = por %p116, %p117
      %p120 = scmp.ne.s32.totalorder %s105, %s119
      %p121 = scmp.eq.s32.totalorder %s79, 0
      %p122 = por %p120, %p121
      %s124 = sadd.s32 %s123, 1
      %p127 = scmp.eq.s32.totalorder %s73, 3
      %p128 = scmp.ne.s32.totalorder %s123, %s125
      %p129 = scmp.eq.s32.totalorder %s73, 0
      %p130 = por %p128, %p129
      %p131 = scmp.ne.s32.totalorder %s123, %s125
      %p132 = scmp.eq.s32.totalorder %s78, 3
      %p133 = por %p131, %p132
      %p134 = scmp.ne.s32.totalorder %s125, %s126
      %p135 = scmp.eq.s32.totalorder %s78, 0
      %p136 = por %p134, %p135
      %p137 = scmp.ne.s32.totalorder %s125, %s126
      %p138 = scmp.eq.s32.totalorder %s79, 3
      %p139 = por %p137, %p138
      %p141 = scmp.ne.s32.totalorder %s126, %s140
      %p142 = scmp.eq.s32.totalorder %s79, 0
      %p143 = por %p141, %p142
      %s145 = sadd.s32 %s144, 1
      %p148 = scmp.eq.s32.totalorder %s73, 3
      %p149 = scmp.ne.s32.totalorder %s144, %s146
      %p150 = scmp.eq.s32.totalorder %s73, 0
      %p151 = por %p149, %p150
      %p152 = scmp.ne.s32.totalorder %s144, %s146
      %p153 = scmp.eq.s32.totalorder %s78, 3
      %p154 = por %p152, %p153
      %p155 = scmp.ne.s32.totalorder %s146, %s147
      %p156 = scmp.eq.s32.totalorder %s78, 0
      %p157 = por %p155, %p156
      %p158 = scmp.ne.s32.totalorder %s146, %s147
      %p159 = scmp.eq.s32.totalorder %s79, 3
      %p160 = por %p158, %p159
      %p162 = scmp.ne.s32.totalorder %s147, %s161
      %p163 = scmp.eq.s32.totalorder %s79, 0
      %p164 = por %p162, %p163
      %s166 = sadd.s32 %s165, 1
      %p169 = scmp.eq.s32.totalorder %s73, 3
      %p170 = scmp.ne.s32.totalorder %s165, %s167
      %p171 = scmp.eq.s32.totalorder %s73, 0
      %p172 = por %p170, %p171
      %p173 = scmp.ne.s32.totalorder %s165, %s167
      %p174 = scmp.eq.s32.totalorder %s78, 3
      %p175 = por %p173, %p174
      %p176 = scmp.ne.s32.totalorder %s167, %s168
      %p177 = scmp.eq.s32.totalorder %s78, 0
      %p178 = por %p176, %p177
      %p179 = scmp.ne.s32.totalorder %s167, %s168
      %p180 = scmp.eq.s32.totalorder %s79, 3
      %p181 = por %p179, %p180
      %p183 = scmp.ne.s32.totalorder %s168, %s182
      %p184 = scmp.eq.s32.totalorder %s79, 0
      %p185 = por %p183, %p184
      %s187 = sadd.s32 %s186, 1
      %p190 = scmp.eq.s32.totalorder %s73, 3
      %p191 = scmp.ne.s32.totalorder %s186, %s188
      %p192 = scmp.eq.s32.totalorder %s73, 0
      %p193 = por %p191, %p192
      %p194 = scmp.ne.s32.totalorder %s186, %s188
      %p195 = scmp.eq.s32.totalorder %s78, 3
      %p196 = por %p194, %p195
      %p197 = scmp.ne.s32.totalorder %s188, %s189
      %p198 = scmp.eq.s32.totalorder %s78, 0
      %p199 = por %p197, %p198
      %p200 = scmp.ne.s32.totalorder %s188, %s189
      %p201 = scmp.eq.s32.totalorder %s79, 3
      %p202 = por %p200, %p201
      %p204 = scmp.ne.s32.totalorder %s189, %s203
      %p205 = scmp.eq.s32.totalorder %s79, 0
      %p206 = por %p204, %p205
      %s208 = sadd.s32 %s207, 1
      %p211 = scmp.eq.s32.totalorder %s73, 3
      %p212 = scmp.ne.s32.totalorder %s207, %s209
      %p213 = scmp.eq.s32.totalorder %s73, 0
      %p214 = por %p212, %p213
      %p215 = scmp.ne.s32.totalorder %s207, %s209
      %p216 = scmp.eq.s32.totalorder %s78, 3
      %p217 = por %p215, %p216
      %p218 = scmp.ne.s32.totalorder %s209, %s210
      %p219 = scmp.eq.s32.totalorder %s78, 0
      %p220 = por %p218, %p219
      %p221 = scmp.ne.s32.totalorder %s209, %s210
      %p222 = scmp.eq.s32.totalorder %s79, 3
      %p223 = por %p221, %p222
      %p225 = scmp.ne.s32.totalorder %s210, %s224
      %p226 = scmp.eq.s32.totalorder %s79, 0
      %p227 = por %p225, %p226
      %s229 = sadd.s32 %s228, 1
      %p232 = scmp.eq.s32.totalorder %s73, 3
      %p233 = scmp.ne.s32.totalorder %s228, %s230
      %p234 = scmp.eq.s32.totalorder %s73, 0
      %p235 = por %p233, %p234
      %p236 = scmp.ne.s32.totalorder %s228, %s230
      %p237 = scmp.eq.s32.totalorder %s78, 3
      %p238 = por %p236, %p237
      %p239 = scmp.ne.s32.totalorder %s230, %s231
      %p240 = scmp.eq.s32.totalorder %s78, 0
      %p241 = por %p239, %p240
      %p242 = scmp.ne.s32.totalorder %s230, %s231
      %p243 = scmp.eq.s32.totalorder %s79, 3
      %p244 = por %p242, %p243
      %p246 = scmp.ne.s32.totalorder %s231, %s245
      %p247 = scmp.eq.s32.totalorder %s79, 0
      %p248 = por %p246, %p247
      %s250 = sadd.s32 %s249, 1
      %p253 = scmp.eq.s32.totalorder %s73, 3
      %p254 = scmp.ne.s32.totalorder %s249, %s251
      %p255 = scmp.eq.s32.totalorder %s73, 0
      %p256 = por %p254, %p255
      %p257 = scmp.ne.s32.totalorder %s249, %s251
      %p258 = scmp.eq.s32.totalorder %s78, 3
      %p259 = por %p257, %p258
      %p260 = scmp.ne.s32.totalorder %s251, %s252
      %p261 = scmp.eq.s32.totalorder %s78, 0
      %p262 = por %p260, %p261
      %p263 = scmp.ne.s32.totalorder %s251, %s252
      %p264 = scmp.eq.s32.totalorder %s79, 3
      %p265 = por %p263, %p264
      %p267 = scmp.ne.s32.totalorder %s252, %s266
      %p268 = scmp.eq.s32.totalorder %s79, 0
      %p269 = por %p267, %p268
      %s271 = sadd.s32 %s270, 1
      %p274 = scmp.eq.s32.totalorder %s73, 3
      %p275 = scmp.ne.s32.totalorder %s270, %s272
      %p276 = scmp.eq.s32.totalorder %s73, 0
      %p277 = por %p275, %p276
      %p278 = scmp.ne.s32.totalorder %s270, %s272
      %p279 = scmp.eq.s32.totalorder %s78, 3
      %p280 = por %p278, %p279
      %p281 = scmp.ne.s32.totalorder %s272, %s273
      %p282 = scmp.eq.s32.totalorder %s78, 0
      %p283 = por %p281, %p282
      %p284 = scmp.ne.s32.totalorder %s272, %s273
      %p285 = scmp.eq.s32.totalorder %s79, 3
      %p286 = por %p284, %p285
      %p288 = scmp.ne.s32.totalorder %s273, %s287
      %p289 = scmp.eq.s32.totalorder %s79, 0
      %p290 = por %p288, %p289
      %s292 = sadd.s32 %s291, 1
      %p295 = scmp.eq.s32.totalorder %s73, 3
      %p296 = scmp.ne.s32.totalorder %s291, %s293
      %p297 = scmp.eq.s32.totalorder %s73, 0
      %p298 = por %p296, %p297
      %p299 = scmp.ne.s32.totalorder %s291, %s293
      %p300 = scmp.eq.s32.totalorder %s78, 3
      %p301 = por %p299, %p300
      %p302 = scmp.ne.s32.totalorder %s293, %s294
      %p303 = scmp.eq.s32.totalorder %s78, 0
      %p304 = por %p302, %p303
      %p305 = scmp.ne.s32.totalorder %s293, %s294
      %p306 = scmp.eq.s32.totalorder %s79, 3
      %p307 = por %p305, %p306
      %p309 = scmp.ne.s32.totalorder %s294, %s308
      %p310 = scmp.eq.s32.totalorder %s79, 0
      %p311 = por %p309, %p310
      %s313 = sadd.s32 %s312, 1
      %p316 = scmp.eq.s32.totalorder %s73, 3
      %p317 = scmp.ne.s32.totalorder %s312, %s314
      %p318 = scmp.eq.s32.totalorder %s73, 0
      %p319 = por %p317, %p318
      %p320 = scmp.ne.s32.totalorder %s312, %s314
      %p321 = scmp.eq.s32.totalorder %s78, 3
      %p322 = por %p320, %p321
      %p323 = scmp.ne.s32.totalorder %s314, %s315
      %p324 = scmp.eq.s32.totalorder %s78, 0
      %p325 = por %p323, %p324
      %p326 = scmp.ne.s32.totalorder %s314, %s315
      %p327 = scmp.eq.s32.totalorder %s79, 3
      %p328 = por %p326, %p327
      %p330 = scmp.ne.s32.totalorder %s315, %s329
      %p331 = scmp.eq.s32.totalorder %s79, 0
      %p332 = por %p330, %p331
      %s334 = sadd.s32 %s333, 1
      %p337 = scmp.eq.s32.totalorder %s73, 3
      %p338 = scmp.ne.s32.totalorder %s333, %s335
      %p339 = scmp.eq.s32.totalorder %s73, 0
      %p340 = por %p338, %p339
      %p341 = scmp.ne.s32.totalorder %s333, %s335
      %p342 = scmp.eq.s32.totalorder %s78, 3
      %p343 = por %p341, %p342
      %p344 = scmp.ne.s32.totalorder %s335, %s336
      %p345 = scmp.eq.s32.totalorder %s78, 0
      %p346 = por %p344, %p345
      %p347 = scmp.ne.s32.totalorder %s335, %s336
      %p348 = scmp.eq.s32.totalorder %s79, 3
      %p349 = por %p347, %p348
      %p351 = scmp.ne.s32.totalorder %s336, %s350
      %p352 = scmp.eq.s32.totalorder %s79, 0
      %p353 = por %p351, %p352
      %s355 = sadd.s32 %s354, 1
      %p358 = scmp.eq.s32.totalorder %s73, 3
      %p359 = scmp.ne.s32.totalorder %s354, %s356
      %p360 = scmp.eq.s32.totalorder %s73, 0
      %p361 = por %p359, %p360
      %p362 = scmp.ne.s32.totalorder %s354, %s356
      %p363 = scmp.eq.s32.totalorder %s78, 3
      %p364 = por %p362, %p363
      %p365 = scmp.ne.s32.totalorder %s356, %s357
      %p366 = scmp.eq.s32.totalorder %s78, 0
      %p367 = por %p365, %p366
      %p368 = scmp.ne.s32.totalorder %s356, %s357
      %p369 = scmp.eq.s32.totalorder %s79, 3
      %p370 = por %p368, %p369
      %p372 = scmp.ne.s32.totalorder %s357, %s371
      %p373 = scmp.eq.s32.totalorder %s79, 0
      %p374 = por %p372, %p373
      %s376 = sadd.s32 %s375, 1
      %p379 = scmp.eq.s32.totalorder %s73, 3
      %p380 = scmp.ne.s32.totalorder %s375, %s377
      %p381 = scmp.eq.s32.totalorder %s73, 0
      %p382 = por %p380, %p381
      %p383 = scmp.ne.s32.totalorder %s375, %s377
      %p384 = scmp.eq.s32.totalorder %s78, 3
      %p385 = por %p383, %p384
      %p386 = scmp.ne.s32.totalorder %s377, %s378
      %p387 = scmp.eq.s32.totalorder %s78, 0
      %p388 = por %p386, %p387
      %p389 = scmp.ne.s32.totalorder %s377, %s378
      %p390 = scmp.eq.s32.totalorder %s79, 3
      %p391 = por %p389, %p390
      %p393 = scmp.ne.s32.totalorder %s378, %s392
      %p394 = scmp.eq.s32.totalorder %s79, 0
      %p395 = por %p393, %p394
      %s397 = sadd.s32 %s396, 1
      %p400 = scmp.eq.s32.totalorder %s73, 3
      %p401 = scmp.ne.s32.totalorder %s396, %s398
      %p402 = scmp.eq.s32.totalorder %s73, 0
      %p403 = por %p401, %p402
      %p404 = scmp.ne.s32.totalorder %s396, %s398
      %p405 = scmp.eq.s32.totalorder %s78, 3
      %p406 = por %p404, %p405
      %p407 = scmp.ne.s32.totalorder %s398, %s399
      %p408 = scmp.eq.s32.totalorder %s78, 0
      %p409 = por %p407, %p408
      %p410 = scmp.ne.s32.totalorder %s398, %s399
      %p411 = scmp.eq.s32.totalorder %s79, 3
      %p412 = por %p410, %p411
      %p414 = scmp.ne.s32.totalorder %s399, %s413
      %p415 = scmp.eq.s32.totalorder %s79, 0
      %p416 = por %p414, %p415
      %s418 = sadd.s32 %s417, 1
      %p421 = scmp.eq.s32.totalorder %s73, 3
      %p422 = scmp.ne.s32.totalorder %s417, %s419
      %p423 = scmp.eq.s32.totalorder %s73, 0
      %p424 = por %p422, %p423
      %p425 = scmp.ne.s32.totalorder %s417, %s419
      %p426 = scmp.eq.s32.totalorder %s78, 3
      %p427 = por %p425, %p426
      %p428 = scmp.ne.s32.totalorder %s419, %s420
      %p429 = scmp.eq.s32.totalorder %s78, 0
      %p430 = por %p428, %p429
      %p431 = scmp.ne.s32.totalorder %s419, %s420
      %p432 = scmp.eq.s32.totalorder %s79, 3
      %p433 = por %p431, %p432
      %p435 = scmp.ne.s32.totalorder %s420, %s434
      %p436 = scmp.eq.s32.totalorder %s79, 0
      %p437 = por %p435, %p436
      %s439 = sadd.s32 %s438, 1
      %p442 = scmp.eq.s32.totalorder %s73, 3
      %p443 = scmp.ne.s32.totalorder %s438, %s440
      %p444 = scmp.eq.s32.totalorder %s73, 0
      %p445 = por %p443, %p444
      %p446 = scmp.ne.s32.totalorder %s438, %s440
      %p447 = scmp.eq.s32.totalorder %s78, 3
      %p448 = por %p446, %p447
      %p449 = scmp.ne.s32.totalorder %s440, %s441
      %p450 = scmp.eq.s32.totalorder %s78, 0
      %p451 = por %p449, %p450
      %p452 = scmp.ne.s32.totalorder %s440, %s441
      %p453 = scmp.eq.s32.totalorder %s79, 3
      %p454 = por %p452, %p453
      %p456 = scmp.ne.s32.totalorder %s441, %s455
      %p457 = scmp.eq.s32.totalorder %s79, 0
      %p458 = por %p456, %p457
      %s459 = ssub.s32 %s73, %s80
      %p460 = scmp.eq.s32.totalorder %s459, 0
      %s462 = sadd.s32 %s461, 1
      %s463 = scalar_select %p460, %s461, %s462
      %p466 = pneg %p460
      %p467 = scmp.eq.s32.totalorder %s73, 3
      %p468 = por %p466, %p467
      %p469 = scmp.ne.s32.totalorder %s461, %s464
      %p470 = scmp.eq.s32.totalorder %s73, 0
      %p471 = por %p469, %p470
      %p472 = scmp.ne.s32.totalorder %s461, %s464
      %p473 = scmp.eq.s32.totalorder %s78, 3
      %p474 = por %p472, %p473
      %p475 = scmp.ne.s32.totalorder %s464, %s465
      %p476 = scmp.eq.s32.totalorder %s78, 0
      %p477 = por %p475, %p476
      %p478 = scmp.ne.s32.totalorder %s464, %s465
      %p479 = scmp.eq.s32.totalorder %s79, 3
      %p480 = por %p478, %p479
      %p482 = scmp.ne.s32.totalorder %s465, %s481
      %p483 = scmp.eq.s32.totalorder %s79, 0
      %p484 = por %p482, %p483
      %s485 = ssub.s32 %s73, %s80
      %p486 = scmp.eq.s32.totalorder %s485, 0
      %s488 = sadd.s32 %s487, 1
      %s489 = scalar_select %p486, %s487, %s488
      %p492 = pneg %p486
      %p493 = scmp.eq.s32.totalorder %s73, 3
      %p494 = por %p492, %p493
      %p495 = scmp.ne.s32.totalorder %s487, %s490
      %p496 = scmp.eq.s32.totalorder %s73, 0
      %p497 = por %p495, %p496
      %p498 = scmp.ne.s32.totalorder %s487, %s490
      %p499 = scmp.eq.s32.totalorder %s78, 3
      %p500 = por %p498, %p499
      %p501 = scmp.ne.s32.totalorder %s490, %s491
      %p502 = scmp.eq.s32.totalorder %s78, 0
      %p503 = por %p501, %p502
      %p504 = scmp.ne.s32.totalorder %s490, %s491
      %p505 = scmp.eq.s32.totalorder %s79, 3
      %p506 = por %p504, %p505
      %p508 = scmp.ne.s32.totalorder %s491, %s507
      %p509 = scmp.eq.s32.totalorder %s79, 0
      %p510 = por %p508, %p509
      %s511 = ssub.s32 %s73, %s80
      %p512 = scmp.eq.s32.totalorder %s511, 0
      %s514 = sadd.s32 %s513, 1
      %s515 = scalar_select %p512, %s513, %s514
      %p518 = pneg %p512
      %p519 = scmp.eq.s32.totalorder %s73, 3
      %p520 = por %p518, %p519
      %p521 = scmp.ne.s32.totalorder %s513, %s516
      %p522 = scmp.eq.s32.totalorder %s73, 0
      %p523 = por %p521, %p522
      %p524 = scmp.ne.s32.totalorder %s513, %s516
      %p525 = scmp.eq.s32.totalorder %s78, 3
      %p526 = por %p524, %p525
      %p527 = scmp.ne.s32.totalorder %s516, %s517
      %p528 = scmp.eq.s32.totalorder %s78, 0
      %p529 = por %p527, %p528
      %p530 = scmp.ne.s32.totalorder %s516, %s517
      %p531 = scmp.eq.s32.totalorder %s79, 3
      %p532 = por %p530, %p531
      %p534 = scmp.ne.s32.totalorder %s517, %s533
      %p535 = scmp.eq.s32.totalorder %s79, 0
      %p536 = por %p534, %p535
      %s537 = ssub.s32 %s73, %s80
      %p538 = scmp.eq.s32.totalorder %s537, 0
      %s540 = sadd.s32 %s539, 1
      %s541 = scalar_select %p538, %s539, %s540
      %p544 = pneg %p538
      %p545 = scmp.eq.s32.totalorder %s73, 3
      %p546 = por %p544, %p545
      %p547 = scmp.ne.s32.totalorder %s539, %s542
      %p548 = scmp.eq.s32.totalorder %s73, 0
      %p549 = por %p547, %p548
      %p550 = scmp.ne.s32.totalorder %s539, %s542
      %p551 = scmp.eq.s32.totalorder %s78, 3
      %p552 = por %p550, %p551
      %p553 = scmp.ne.s32.totalorder %s542, %s543
      %p554 = scmp.eq.s32.totalorder %s78, 0
      %p555 = por %p553, %p554
      %p556 = scmp.ne.s32.totalorder %s542, %s543
      %p557 = scmp.eq.s32.totalorder %s79, 3
      %p558 = por %p556, %p557
      %p560 = scmp.ne.s32.totalorder %s543, %s559
      %p561 = scmp.eq.s32.totalorder %s79, 0
      %p562 = por %p560, %p561
      %s563 = ssub.s32 %s73, %s80
      %p564 = scmp.eq.s32.totalorder %s563, 0
      %s566 = sadd.s32 %s565, 1
      %s567 = scalar_select %p564, %s565, %s566
      %p570 = pneg %p564
      %p571 = scmp.eq.s32.totalorder %s73, 3
      %p572 = por %p570, %p571
      %p573 = scmp.ne.s32.totalorder %s565, %s568
      %p574 = scmp.eq.s32.totalorder %s73, 0
      %p575 = por %p573, %p574
      %p576 = scmp.ne.s32.totalorder %s565, %s568
      %p577 = scmp.eq.s32.totalorder %s78, 3
      %p578 = por %p576, %p577
      %p579 = scmp.ne.s32.totalorder %s568, %s569
      %p580 = scmp.eq.s32.totalorder %s78, 0
      %p581 = por %p579, %p580
      %p582 = scmp.ne.s32.totalorder %s568, %s569
      %p583 = scmp.eq.s32.totalorder %s79, 3
      %p584 = por %p582, %p583
      %p586 = scmp.ne.s32.totalorder %s569, %s585
      %p587 = scmp.eq.s32.totalorder %s79, 0
      %p588 = por %p586, %p587
      %s589 = ssub.s32 %s73, %s80
      %p590 = scmp.eq.s32.totalorder %s589, 0
      %s592 = sadd.s32 %s591, 1
      %s593 = scalar_select %p590, %s591, %s592
      %p596 = pneg %p590
      %p597 = scmp.eq.s32.totalorder %s73, 3
      %p598 = por %p596, %p597
      %p599 = scmp.ne.s32.totalorder %s591, %s594
      %p600 = scmp.eq.s32.totalorder %s73, 0
      %p601 = por %p599, %p600
      %p602 = scmp.ne.s32.totalorder %s591, %s594
      %p603 = scmp.eq.s32.totalorder %s78, 3
      %p604 = por %p602, %p603
      %p605 = scmp.ne.s32.totalorder %s594, %s595
      %p606 = scmp.eq.s32.totalorder %s78, 0
      %p607 = por %p605, %p606
      %p608 = scmp.ne.s32.totalorder %s594, %s595
      %p609 = scmp.eq.s32.totalorder %s79, 3
      %p610 = por %p608, %p609
      %p612 = scmp.ne.s32.totalorder %s595, %s611
      %p613 = scmp.eq.s32.totalorder %s79, 0
      %p614 = por %p612, %p613
      %s615 = ssub.s32 %s73, %s80
      %p616 = scmp.eq.s32.totalorder %s615, 0
      %s618 = sadd.s32 %s617, 1
      %s619 = scalar_select %p616, %s617, %s618
      %p622 = pneg %p616
      %p623 = scmp.eq.s32.totalorder %s73, 3
      %p624 = por %p622, %p623
      %p625 = scmp.ne.s32.totalorder %s617, %s620
      %p626 = scmp.eq.s32.totalorder %s73, 0
      %p627 = por %p625, %p626
      %p628 = scmp.ne.s32.totalorder %s617, %s620
      %p629 = scmp.eq.s32.totalorder %s78, 3
      %p630 = por %p628, %p629
      %p631 = scmp.ne.s32.totalorder %s620, %s621
      %p632 = scmp.eq.s32.totalorder %s78, 0
      %p633 = por %p631, %p632
      %p634 = scmp.ne.s32.totalorder %s620, %s621
      %p635 = scmp.eq.s32.totalorder %s79, 3
      %p636 = por %p634, %p635
      %p638 = scmp.ne.s32.totalorder %s621, %s637
      %p639 = scmp.eq.s32.totalorder %s79, 0
      %p640 = por %p638, %p639
      %s641 = ssub.s32 %s73, %s80
      %p642 = scmp.eq.s32.totalorder %s641, 0
      %s644 = sadd.s32 %s643, 1
      %s645 = scalar_select %p642, %s643, %s644
      %p648 = pneg %p642
      %p649 = scmp.eq.s32.totalorder %s73, 3
      %p650 = por %p648, %p649
      %p651 = scmp.ne.s32.totalorder %s643, %s646
      %p652 = scmp.eq.s32.totalorder %s73, 0
      %p653 = por %p651, %p652
      %p654 = scmp.ne.s32.totalorder %s643, %s646
      %p655 = scmp.eq.s32.totalorder %s78, 3
      %p656 = por %p654, %p655
      %p657 = scmp.ne.s32.totalorder %s646, %s647
      %p658 = scmp.eq.s32.totalorder %s78, 0
      %p659 = por %p657, %p658
      %p660 = scmp.ne.s32.totalorder %s646, %s647
      %p661 = scmp.eq.s32.totalorder %s79, 3
      %p662 = por %p660, %p661
      %p664 = scmp.ne.s32.totalorder %s647, %s663
      %p665 = scmp.eq.s32.totalorder %s79, 0
      %p666 = por %p664, %p665
      %s667 = ssub.s32 %s73, %s80
      %p668 = scmp.eq.s32.totalorder %s667, 0
      %s670 = sadd.s32 %s669, 1
      %s671 = scalar_select %p668, %s669, %s670
      %p674 = pneg %p668
      %p675 = scmp.eq.s32.totalorder %s73, 3
      %p676 = por %p674, %p675
      %p677 = scmp.ne.s32.totalorder %s669, %s672
      %p678 = scmp.eq.s32.totalorder %s73, 0
      %p679 = por %p677, %p678
      %p680 = scmp.ne.s32.totalorder %s669, %s672
      %p681 = scmp.eq.s32.totalorder %s78, 3
      %p682 = por %p680, %p681
      %p683 = scmp.ne.s32.totalorder %s672, %s673
      %p684 = scmp.eq.s32.totalorder %s78, 0
      %p685 = por %p683, %p684
      %p686 = scmp.ne.s32.totalorder %s672, %s673
      %p687 = scmp.eq.s32.totalorder %s79, 3
      %p688 = por %p686, %p687
      %p690 = scmp.ne.s32.totalorder %s673, %s689
      %p691 = scmp.eq.s32.totalorder %s79, 0
      %p692 = por %p690, %p691
      %s693 = ssub.s32 %s73, %s80
      %p694 = scmp.eq.s32.totalorder %s693, 0
      %s696 = sadd.s32 %s695, 1
      %s697 = scalar_select %p694, %s695, %s696
      %p700 = pneg %p694
      %p701 = scmp.eq.s32.totalorder %s73, 3
      %p702 = por %p700, %p701
      %p703 = scmp.ne.s32.totalorder %s695, %s698
      %p704 = scmp.eq.s32.totalorder %s73, 0
      %p705 = por %p703, %p704
      %p706 = scmp.ne.s32.totalorder %s695, %s698
      %p707 = scmp.eq.s32.totalorder %s78, 3
      %p708 = por %p706, %p707
      %p709 = scmp.ne.s32.totalorder %s698, %s699
      %p710 = scmp.eq.s32.totalorder %s78, 0
      %p711 = por %p709, %p710
      %p712 = scmp.ne.s32.totalorder %s698, %s699
      %p713 = scmp.eq.s32.totalorder %s79, 3
      %p714 = por %p712, %p713
      %p716 = scmp.ne.s32.totalorder %s699, %s715
      %p717 = scmp.eq.s32.totalorder %s79, 0
      %p718 = por %p716, %p717
      %s719 = ssub.s32 %s73, %s80
      %p720 = scmp.eq.s32.totalorder %s719, 0
      %s722 = sadd.s32 %s721, 1
      %s723 = scalar_select %p720, %s721, %s722
      %p726 = pneg %p720
      %p727 = scmp.eq.s32.totalorder %s73, 3
      %p728 = por %p726, %p727
      %p729 = scmp.ne.s32.totalorder %s721, %s724
      %p730 = scmp.eq.s32.totalorder %s73, 0
      %p731 = por %p729, %p730
      %p732 = scmp.ne.s32.totalorder %s721, %s724
      %p733 = scmp.eq.s32.totalorder %s78, 3
      %p734 = por %p732, %p733
      %p735 = scmp.ne.s32.totalorder %s724, %s725
      %p736 = scmp.eq.s32.totalorder %s78, 0
      %p737 = por %p735, %p736
      %p738 = scmp.ne.s32.totalorder %s724, %s725
      %p739 = scmp.eq.s32.totalorder %s79, 3
      %p740 = por %p738, %p739
      %p742 = scmp.ne.s32.totalorder %s725, %s741
      %p743 = scmp.eq.s32.totalorder %s79, 0
      %p744 = por %p742, %p743
      %s745 = ssub.s32 %s73, %s80
      %p746 = scmp.eq.s32.totalorder %s745, 0
      %s748 = sadd.s32 %s747, 1
      %s749 = scalar_select %p746, %s747, %s748
      %p752 = pneg %p746
      %p753 = scmp.eq.s32.totalorder %s73, 3
      %p754 = por %p752, %p753
      %p755 = scmp.ne.s32.totalorder %s747, %s750
      %p756 = scmp.eq.s32.totalorder %s73, 0
      %p757 = por %p755, %p756
      %p758 = scmp.ne.s32.totalorder %s747, %s750
      %p759 = scmp.eq.s32.totalorder %s78, 3
      %p760 = por %p758, %p759
      %p761 = scmp.ne.s32.totalorder %s750, %s751
      %p762 = scmp.eq.s32.totalorder %s78, 0
      %p763 = por %p761, %p762
      %p764 = scmp.ne.s32.totalorder %s750, %s751
      %p765 = scmp.eq.s32.totalorder %s79, 3
      %p766 = por %p764, %p765
      %p768 = scmp.ne.s32.totalorder %s751, %s767
      %p769 = scmp.eq.s32.totalorder %s79, 0
      %p770 = por %p768, %p769
      %s772 = sadd.s32 %s771, 1
      %p775 = scmp.eq.s32.totalorder %s73, 3
      %p776 = scmp.ne.s32.totalorder %s771, %s773
      %p777 = scmp.eq.s32.totalorder %s73, 0
      %p778 = por %p776, %p777
      %p779 = scmp.ne.s32.totalorder %s771, %s773
      %p780 = scmp.eq.s32.totalorder %s78, 3
      %p781 = por %p779, %p780
      %p782 = scmp.ne.s32.totalorder %s773, %s774
      %p783 = scmp.eq.s32.totalorder %s78, 0
      %p784 = por %p782, %p783
      %p785 = scmp.ne.s32.totalorder %s773, %s774
      %p786 = scmp.eq.s32.totalorder %s79, 3
      %p787 = por %p785, %p786
      %p789 = scmp.ne.s32.totalorder %s774, %s788
      %p790 = scmp.eq.s32.totalorder %s79, 0
      %p791 = por %p789, %p790
      %s793 = sadd.s32 %s792, 1
      %p796 = scmp.eq.s32.totalorder %s73, 3
      %p797 = scmp.ne.s32.totalorder %s792, %s794
      %p798 = scmp.eq.s32.totalorder %s73, 0
      %p799 = por %p797, %p798
      %p800 = scmp.ne.s32.totalorder %s792, %s794
      %p801 = scmp.eq.s32.totalorder %s78, 3
      %p802 = por %p800, %p801
      %p803 = scmp.ne.s32.totalorder %s794, %s795
      %p804 = scmp.eq.s32.totalorder %s78, 0
      %p805 = por %p803, %p804
      %p806 = scmp.ne.s32.totalorder %s794, %s795
      %p807 = scmp.eq.s32.totalorder %s79, 3
      %p808 = por %p806, %p807
      %p810 = scmp.ne.s32.totalorder %s795, %s809
      %p811 = scmp.eq.s32.totalorder %s79, 0
      %p812 = por %p810, %p811
      %p813 = scmp.le.s32.totalorder 1, %s73
      %p814 = scmp.lt.s32.totalorder %s73, 5
      %p815 = pnand %p813, %p814
      %p816 = pneg %p815
      // Predicated region
      $region9: #{tpu_custom_call.1} parent=5 // pred_check
        _
      $region10: #{tpu_custom_call.1} parent=5 // pred_check_branch
        %818 = sbr.rel (%p815) target = $region12
      $region11: #{tpu_custom_call.1} parent=5 // pred_region
        %s819 = ssub.s32 %s73, 1
        // Predicated region
        $region13: #{tpu_custom_call.1} parent=11 // pred_check
          %p820 = pneg %p94
        $region14: #{tpu_custom_call.1} parent=11 // pred_check_branch
          %822 = sbr.rel (%p820) target = $region16
        $region15: #{tpu_custom_call.1} parent=11 // pred_region
          _
        $region16: #{tpu_custom_call.1} parent=11 // pred_fallthru
          _
        // Predicated region
        $region17: #{tpu_custom_call.1} parent=11 // pred_check
          %p823 = pneg %p115
        $region18: #{tpu_custom_call.1} parent=11 // pred_check_branch
          %825 = sbr.rel (%p823) target = $region20
        $region19: #{tpu_custom_call.1} parent=11 // pred_region
          _
        $region20: #{tpu_custom_call.1} parent=11 // pred_fallthru
          _
        // Predicated region
        $region21: #{tpu_custom_call.1} parent=11 // pred_check
          %p826 = pneg %p136
        $region22: #{tpu_custom_call.1} parent=11 // pred_check_branch
          %828 = sbr.rel (%p826) target = $region24
        $region23: #{tpu_custom_call.1} parent=11 // pred_region
          _
        $region24: #{tpu_custom_call.1} parent=11 // pred_fallthru
          _
        // Predicated region
        $region25: #{tpu_custom_call.1} parent=11 // pred_check
          %p829 = pneg %p157
        $region26: #{tpu_custom_call.1} parent=11 // pred_check_branch
          %831 = sbr.rel (%p829) target = $region28
        $region27: #{tpu_custom_call.1} parent=11 // pred_region
          _
        $region28: #{tpu_custom_call.1} parent=11 // pred_fallthru
          _
        // Predicated region
        $region29: #{tpu_custom_call.1} parent=11 // pred_check
          %p832 = pneg %p178
        $region30: #{tpu_custom_call.1} parent=11 // pred_check_branch
          %834 = sbr.rel (%p832) target = $region32
        $region31: #{tpu_custom_call.1} parent=11 // pred_region
          _
        $region32: #{tpu_custom_call.1} parent=11 // pred_fallthru
          _
        // Predicated region
        $region33: #{tpu_custom_call.1} parent=11 // pred_check
          %p835 = pneg %p199
        $region34: #{tpu_custom_call.1} parent=11 // pred_check_branch
          %837 = sbr.rel (%p835) target = $region36
        $region35: #{tpu_custom_call.1} parent=11 // pred_region
          _
        $region36: #{tpu_custom_call.1} parent=11 // pred_fallthru
          _
        // Predicated region
        $region37: #{tpu_custom_call.1} parent=11 // pred_check
          %p838 = pneg %p220
        $region38: #{tpu_custom_call.1} parent=11 // pred_check_branch
          %840 = sbr.rel (%p838) target = $region40
        $region39: #{tpu_custom_call.1} parent=11 // pred_region
          _
        $region40: #{tpu_custom_call.1} parent=11 // pred_fallthru
          _
        // Predicated region
        $region41: #{tpu_custom_call.1} parent=11 // pred_check
          %p841 = pneg %p241
        $region42: #{tpu_custom_call.1} parent=11 // pred_check_branch
          %843 = sbr.rel (%p841) target = $region44
        $region43: #{tpu_custom_call.1} parent=11 // pred_region
          _
        $region44: #{tpu_custom_call.1} parent=11 // pred_fallthru
          _
        // Predicated region
        $region45: #{tpu_custom_call.1} parent=11 // pred_check
          %p844 = pneg %p262
        $region46: #{tpu_custom_call.1} parent=11 // pred_check_branch
          %846 = sbr.rel (%p844) target = $region48
        $region47: #{tpu_custom_call.1} parent=11 // pred_region
          _
        $region48: #{tpu_custom_call.1} parent=11 // pred_fallthru
          _
        // Predicated region
        $region49: #{tpu_custom_call.1} parent=11 // pred_check
          %p847 = pneg %p283
        $region50: #{tpu_custom_call.1} parent=11 // pred_check_branch
          %849 = sbr.rel (%p847) target = $region52
        $region51: #{tpu_custom_call.1} parent=11 // pred_region
          _
        $region52: #{tpu_custom_call.1} parent=11 // pred_fallthru
          _
        // Predicated region
        $region53: #{tpu_custom_call.1} parent=11 // pred_check
          %p850 = pneg %p304
        $region54: #{tpu_custom_call.1} parent=11 // pred_check_branch
          %852 = sbr.rel (%p850) target = $region56
        $region55: #{tpu_custom_call.1} parent=11 // pred_region
          _
        $region56: #{tpu_custom_call.1} parent=11 // pred_fallthru
          _
        // Predicated region
        $region57: #{tpu_custom_call.1} parent=11 // pred_check
          %p853 = pneg %p325
        $region58: #{tpu_custom_call.1} parent=11 // pred_check_branch
          %855 = sbr.rel (%p853) target = $region60
        $region59: #{tpu_custom_call.1} parent=11 // pred_region
          _
        $region60: #{tpu_custom_call.1} parent=11 // pred_fallthru
          _
        // Predicated region
        $region61: #{tpu_custom_call.1} parent=11 // pred_check
          %p856 = pneg %p346
        $region62: #{tpu_custom_call.1} parent=11 // pred_check_branch
          %858 = sbr.rel (%p856) target = $region64
        $region63: #{tpu_custom_call.1} parent=11 // pred_region
          _
        $region64: #{tpu_custom_call.1} parent=11 // pred_fallthru
          _
        // Predicated region
        $region65: #{tpu_custom_call.1} parent=11 // pred_check
          %p859 = pneg %p367
        $region66: #{tpu_custom_call.1} parent=11 // pred_check_branch
          %861 = sbr.rel (%p859) target = $region68
        $region67: #{tpu_custom_call.1} parent=11 // pred_region
          _
        $region68: #{tpu_custom_call.1} parent=11 // pred_fallthru
          _
        // Predicated region
        $region69: #{tpu_custom_call.1} parent=11 // pred_check
          %p862 = pneg %p388
        $region70: #{tpu_custom_call.1} parent=11 // pred_check_branch
          %864 = sbr.rel (%p862) target = $region72
        $region71: #{tpu_custom_call.1} parent=11 // pred_region
          _
        $region72: #{tpu_custom_call.1} parent=11 // pred_fallthru
          _
        // Predicated region
        $region73: #{tpu_custom_call.1} parent=11 // pred_check
          %p865 = pneg %p409
        $region74: #{tpu_custom_call.1} parent=11 // pred_check_branch
          %867 = sbr.rel (%p865) target = $region76
        $region75: #{tpu_custom_call.1} parent=11 // pred_region
          _
        $region76: #{tpu_custom_call.1} parent=11 // pred_fallthru
          _
        // Predicated region
        $region77: #{tpu_custom_call.1} parent=11 // pred_check
          %p868 = pneg %p430
        $region78: #{tpu_custom_call.1} parent=11 // pred_check_branch
          %870 = sbr.rel (%p868) target = $region80
        $region79: #{tpu_custom_call.1} parent=11 // pred_region
          _
        $region80: #{tpu_custom_call.1} parent=11 // pred_fallthru
          _
        // Predicated region
        $region81: #{tpu_custom_call.1} parent=11 // pred_check
          %p871 = pneg %p451
        $region82: #{tpu_custom_call.1} parent=11 // pred_check_branch
          %873 = sbr.rel (%p871) target = $region84
        $region83: #{tpu_custom_call.1} parent=11 // pred_region
          _
        $region84: #{tpu_custom_call.1} parent=11 // pred_fallthru
          _
      $region12: #{tpu_custom_call.1} parent=5 // pred_fallthru
        _
      %p874 = scmp.lt.s32.totalorder %s73, 4
      // Predicated region
      $region85: #{tpu_custom_call.1} parent=5 // pred_check
        %p875 = pneg %p874
      $region86: #{tpu_custom_call.1} parent=5 // pred_check_branch
        %877 = sbr.rel (%p875) target = $region88
      $region87: #{tpu_custom_call.1} parent=5 // pred_region
        // Predicated region
        $region89: #{tpu_custom_call.1} parent=87 // pred_check
          %p878 = pneg %p471
        $region90: #{tpu_custom_call.1} parent=87 // pred_check_branch
          %880 = sbr.rel (%p878) target = $region92
        $region91: #{tpu_custom_call.1} parent=87 // pred_region
          %p881 = scmp.lt.s32.totalorder %s73, 3
          %s882 = scalar_select %p881, %s73, 3
          %s883 = smul.addr %s882, 12
          %s884 = smul.addr %s883, 4
          %s885 = scalar_lea.vmem %s37, %s884
        $region92: #{tpu_custom_call.1} parent=87 // pred_fallthru
          _
        // Predicated region
        $region93: #{tpu_custom_call.1} parent=87 // pred_check
          %p886 = pneg %p497
        $region94: #{tpu_custom_call.1} parent=87 // pred_check_branch
          %888 = sbr.rel (%p886) target = $region96
        $region95: #{tpu_custom_call.1} parent=87 // pred_region
          %p889 = scmp.lt.s32.totalorder %s73, 3
          %s890 = scalar_select %p889, %s73, 3
          %s891 = smul.addr %s890, 4
          %s892 = scalar_lea.vmem %s39, %s891
        $region96: #{tpu_custom_call.1} parent=87 // pred_fallthru
          _
        // Predicated region
        $region97: #{tpu_custom_call.1} parent=87 // pred_check
          %p893 = pneg %p523
        $region98: #{tpu_custom_call.1} parent=87 // pred_check_branch
          %895 = sbr.rel (%p893) target = $region100
        $region99: #{tpu_custom_call.1} parent=87 // pred_region
          %p896 = scmp.lt.s32.totalorder %s73, 3
          %s897 = scalar_select %p896, %s73, 3
          %s898 = smul.addr %s897, 4
          %s899 = smul.addr %s898, 4
          %s900 = scalar_lea.vmem %s41, %s899
        $region100: #{tpu_custom_call.1} parent=87 // pred_fallthru
          _
        // Predicated region
        $region101: #{tpu_custom_call.1} parent=87 // pred_check
          %p901 = pneg %p549
        $region102: #{tpu_custom_call.1} parent=87 // pred_check_branch
          %903 = sbr.rel (%p901) target = $region104
        $region103: #{tpu_custom_call.1} parent=87 // pred_region
          %p904 = scmp.lt.s32.totalorder %s73, 3
          %s905 = scalar_select %p904, %s73, 3
          %s906 = scalar_lea.vmem %s43, %s905
        $region104: #{tpu_custom_call.1} parent=87 // pred_fallthru
          _
        // Predicated region
        $region105: #{tpu_custom_call.1} parent=87 // pred_check
          %p907 = pneg %p575
        $region106: #{tpu_custom_call.1} parent=87 // pred_check_branch
          %909 = sbr.rel (%p907) target = $region108
        $region107: #{tpu_custom_call.1} parent=87 // pred_region
          %p910 = scmp.lt.s32.totalorder %s73, 3
          %s911 = scalar_select %p910, %s73, 3
          %s912 = smul.addr %s911, 64
          %s913 = smul.addr %s912, 4
          %s914 = scalar_lea.vmem %s45, %s913
        $region108: #{tpu_custom_call.1} parent=87 // pred_fallthru
          _
        // Predicated region
        $region109: #{tpu_custom_call.1} parent=87 // pred_check
          %p915 = pneg %p601
        $region110: #{tpu_custom_call.1} parent=87 // pred_check_branch
          %917 = sbr.rel (%p915) target = $region112
        $region111: #{tpu_custom_call.1} parent=87 // pred_region
          %p918 = scmp.lt.s32.totalorder %s73, 3
          %s919 = scalar_select %p918, %s73, 3
          %s920 = smul.addr %s919, 16
          %s921 = scalar_lea.vmem %s47, %s920
        $region112: #{tpu_custom_call.1} parent=87 // pred_fallthru
          _
        // Predicated region
        $region113: #{tpu_custom_call.1} parent=87 // pred_check
          %p922 = pneg %p627
        $region114: #{tpu_custom_call.1} parent=87 // pred_check_branch
          %924 = sbr.rel (%p922) target = $region116
        $region115: #{tpu_custom_call.1} parent=87 // pred_region
          %p925 = scmp.lt.s32.totalorder %s73, 3
          %s926 = scalar_select %p925, %s73, 3
          %s927 = smul.addr %s926, 256
          %s928 = smul.addr %s927, 4
          %s929 = scalar_lea.vmem %s49, %s928
        $region116: #{tpu_custom_call.1} parent=87 // pred_fallthru
          _
        // Predicated region
        $region117: #{tpu_custom_call.1} parent=87 // pred_check
          %p930 = pneg %p653
        $region118: #{tpu_custom_call.1} parent=87 // pred_check_branch
          %932 = sbr.rel (%p930) target = $region120
        $region119: #{tpu_custom_call.1} parent=87 // pred_region
          %p933 = scmp.lt.s32.totalorder %s73, 3
          %s934 = scalar_select %p933, %s73, 3
          %s935 = scalar_lea.vmem %s51, %s934
        $region120: #{tpu_custom_call.1} parent=87 // pred_fallthru
          _
        // Predicated region
        $region121: #{tpu_custom_call.1} parent=87 // pred_check
          %p936 = pneg %p679
        $region122: #{tpu_custom_call.1} parent=87 // pred_check_branch
          %938 = sbr.rel (%p936) target = $region124
        $region123: #{tpu_custom_call.1} parent=87 // pred_region
          %p939 = scmp.lt.s32.totalorder %s73, 3
          %s940 = scalar_select %p939, %s73, 3
          %s941 = scalar_lea.vmem %s53, %s940
        $region124: #{tpu_custom_call.1} parent=87 // pred_fallthru
          _
        // Predicated region
        $region125: #{tpu_custom_call.1} parent=87 // pred_check
          %p942 = pneg %p705
        $region126: #{tpu_custom_call.1} parent=87 // pred_check_branch
          %944 = sbr.rel (%p942) target = $region128
        $region127: #{tpu_custom_call.1} parent=87 // pred_region
          %p945 = scmp.lt.s32.totalorder %s73, 3
          %s946 = scalar_select %p945, %s73, 3
          %s947 = scalar_lea.vmem %s55, %s946
        $region128: #{tpu_custom_call.1} parent=87 // pred_fallthru
          _
        // Predicated region
        $region129: #{tpu_custom_call.1} parent=87 // pred_check
          %p948 = pneg %p731
        $region130: #{tpu_custom_call.1} parent=87 // pred_check_branch
          %950 = sbr.rel (%p948) target = $region132
        $region131: #{tpu_custom_call.1} parent=87 // pred_region
          %p951 = scmp.lt.s32.totalorder %s73, 3
          %s952 = scalar_select %p951, %s73, 3
          %s953 = scalar_lea.vmem %s57, %s952
        $region132: #{tpu_custom_call.1} parent=87 // pred_fallthru
          _
        // Predicated region
        $region133: #{tpu_custom_call.1} parent=87 // pred_check
          %p954 = pneg %p757
        $region134: #{tpu_custom_call.1} parent=87 // pred_check_branch
          %956 = sbr.rel (%p954) target = $region136
        $region135: #{tpu_custom_call.1} parent=87 // pred_region
          %p957 = scmp.lt.s32.totalorder %s73, 3
          %s958 = scalar_select %p957, %s73, 3
          %s959 = scalar_lea.vmem %s59, %s958
        $region136: #{tpu_custom_call.1} parent=87 // pred_fallthru
          _
      $region88: #{tpu_custom_call.1} parent=5 // pred_fallthru
        _
      %p960 = scmp.le.s32.totalorder 1, %s73
      %p961 = scmp.lt.s32.totalorder %s73, 5
      %p962 = pnand %p960, %p961
      %p963 = pneg %p962
      // Predicated region
      $region137: #{tpu_custom_call.1} parent=5 // pred_check
        _
      $region138: #{tpu_custom_call.1} parent=5 // pred_check_branch
        %965 = sbr.rel (%p962) target = $region140
      $region139: #{tpu_custom_call.1} parent=5 // pred_region
        %s966 = ssub.s32 %s73, 1
        %p967 = pneg %p94
        %p968 = pneg %p91
        %p969 = pneg %p115
        %p970 = pneg %p112
        %p971 = pneg %p136
        %p972 = pneg %p133
        %p973 = pneg %p157
        %p974 = pneg %p154
        %p975 = pneg %p178
        %p976 = pneg %p175
        %p977 = pneg %p199
        %p978 = pneg %p196
        %p979 = pneg %p220
        %p980 = pneg %p217
        %p981 = pneg %p241
        %p982 = pneg %p238
        %p983 = pneg %p262
        %p984 = pneg %p259
        %p985 = pneg %p283
        %p986 = pneg %p280
        %p987 = pneg %p304
        %p988 = pneg %p301
        %p989 = pneg %p325
        %p990 = pneg %p322
        %p991 = pneg %p346
        %p992 = pneg %p343
        %p993 = pneg %p367
        %p994 = pneg %p364
        %p995 = pneg %p388
        %p996 = pneg %p385
        %p997 = pneg %p409
        %p998 = pneg %p406
        %p999 = pneg %p430
        %p1000 = pneg %p427
        %p1001 = pneg %p451
        %p1002 = pneg %p448
        %p1003 = scmp.lt.s32.totalorder %s78, 3
        %s1004 = scalar_select %p1003, %s78, 3
        %s1005 = smul.addr %s1004, 12
        %s1006 = smul.addr %s1005, 4
        %s1007 = scalar_lea.vmem %s37, %s1006
        %p1008 = pneg %p477
        %p1009 = pneg %p474
        %p1010 = scmp.lt.s32.totalorder %s78, 3
        %s1011 = scalar_select %p1010, %s78, 3
        %s1012 = smul.addr %s1011, 4
        %s1013 = scalar_lea.vmem %s39, %s1012
        %p1014 = pneg %p503
        %p1015 = pneg %p500
        %p1016 = scmp.lt.s32.totalorder %s78, 3
        %s1017 = scalar_select %p1016, %s78, 3
        %s1018 = smul.addr %s1017, 4
        %s1019 = smul.addr %s1018, 4
        %s1020 = scalar_lea.vmem %s41, %s1019
        %p1021 = pneg %p529
        %p1022 = pneg %p526
        %p1023 = scmp.lt.s32.totalorder %s78, 3
        %s1024 = scalar_select %p1023, %s78, 3
        %s1025 = scalar_lea.vmem %s43, %s1024
        %p1026 = pneg %p555
        %p1027 = pneg %p552
        %p1028 = scmp.lt.s32.totalorder %s78, 3
        %s1029 = scalar_select %p1028, %s78, 3
        %s1030 = smul.addr %s1029, 64
        %s1031 = smul.addr %s1030, 4
        %s1032 = scalar_lea.vmem %s45, %s1031
        %p1033 = pneg %p581
        %p1034 = pneg %p578
        %p1035 = scmp.lt.s32.totalorder %s78, 3
        %s1036 = scalar_select %p1035, %s78, 3
        %s1037 = smul.addr %s1036, 16
        %s1038 = scalar_lea.vmem %s47, %s1037
        %p1039 = pneg %p607
        %p1040 = pneg %p604
        %p1041 = scmp.lt.s32.totalorder %s78, 3
        %s1042 = scalar_select %p1041, %s78, 3
        %s1043 = smul.addr %s1042, 256
        %s1044 = smul.addr %s1043, 4
        %s1045 = scalar_lea.vmem %s49, %s1044
        %p1046 = pneg %p633
        %p1047 = pneg %p630
        %p1048 = scmp.lt.s32.totalorder %s78, 3
        %s1049 = scalar_select %p1048, %s78, 3
        %s1050 = scalar_lea.vmem %s51, %s1049
        %p1051 = pneg %p659
        %p1052 = pneg %p656
        %p1053 = scmp.lt.s32.totalorder %s78, 3
        %s1054 = scalar_select %p1053, %s78, 3
        %s1055 = scalar_lea.vmem %s53, %s1054
        %p1056 = pneg %p685
        %p1057 = pneg %p682
        %p1058 = scmp.lt.s32.totalorder %s78, 3
        %s1059 = scalar_select %p1058, %s78, 3
        %s1060 = scalar_lea.vmem %s55, %s1059
        %p1061 = pneg %p711
        %p1062 = pneg %p708
        %p1063 = scmp.lt.s32.totalorder %s78, 3
        %s1064 = scalar_select %p1063, %s78, 3
        %s1065 = scalar_lea.vmem %s57, %s1064
        %p1066 = pneg %p737
        %p1067 = pneg %p734
        %p1068 = scmp.lt.s32.totalorder %s78, 3
        %s1069 = scalar_select %p1068, %s78, 3
        %s1070 = scalar_lea.vmem %s59, %s1069
        %p1071 = pneg %p763
        %p1072 = pneg %p760
        %p1073 = pneg %p784
        %p1074 = pneg %p781
        %p1075 = pneg %p805
        %p1076 = pneg %p802
        %p1077 = scmp.lt.s32.totalorder %s78, 3
        %s1078 = scalar_select %p1077, %s78, 3
        %s1079 = smul.addr %s1078, 12
        %s1080 = smul.addr %s1079, 4
        %s1081 = scalar_lea.vmem %s37, %s1080
        %p1082 = scmp.lt.s32.totalorder %s78, 3
        %s1083 = scalar_select %p1082, %s78, 3
        %s1084 = smul.addr %s1083, 4
        %s1085 = scalar_lea.vmem %s39, %s1084
        %p1086 = scmp.lt.s32.totalorder %s78, 3
        %s1087 = scalar_select %p1086, %s78, 3
        %s1088 = smul.addr %s1087, 4
        %s1089 = smul.addr %s1088, 4
        %s1090 = scalar_lea.vmem %s41, %s1089
        %p1091 = scmp.lt.s32.totalorder %s78, 3
        %s1092 = scalar_select %p1091, %s78, 3
        %s1093 = scalar_lea.vmem %s43, %s1092
        %p1094 = scmp.lt.s32.totalorder %s78, 3
        %s1095 = scalar_select %p1094, %s78, 3
        %s1096 = smul.addr %s1095, 64
        %s1097 = smul.addr %s1096, 4
        %s1098 = scalar_lea.vmem %s45, %s1097
        %p1099 = scmp.lt.s32.totalorder %s78, 3
        %s1100 = scalar_select %p1099, %s78, 3
        %s1101 = smul.addr %s1100, 16
        %s1102 = scalar_lea.vmem %s47, %s1101
        %p1103 = scmp.lt.s32.totalorder %s78, 3
        %s1104 = scalar_select %p1103, %s78, 3
        %s1105 = smul.addr %s1104, 256
        %s1106 = smul.addr %s1105, 4
        %s1107 = scalar_lea.vmem %s49, %s1106
        %p1108 = scmp.lt.s32.totalorder %s78, 3
        %s1109 = scalar_select %p1108, %s78, 3
        %s1110 = scalar_lea.vmem %s51, %s1109
        %p1111 = scmp.lt.s32.totalorder %s78, 3
        %s1112 = scalar_select %p1111, %s78, 3
        %s1113 = scalar_lea.vmem %s53, %s1112
        %p1114 = scmp.lt.s32.totalorder %s78, 3
        %s1115 = scalar_select %p1114, %s78, 3
        %s1116 = scalar_lea.vmem %s55, %s1115
        %p1117 = scmp.lt.s32.totalorder %s78, 3
        %s1118 = scalar_select %p1117, %s78, 3
        %s1119 = scalar_lea.vmem %s57, %s1118
        %p1120 = scmp.lt.s32.totalorder %s78, 3
        %s1121 = scalar_select %p1120, %s78, 3
        %s1122 = scalar_lea.vmem %s59, %s1121
        %p1124 = scmp.eq.s32.totalorder %s78, 0
        // Predicated region
        $region141: #{tpu_custom_call.1} parent=139 // pred_check
          %p1125 = pneg %p1124
        $region142: #{tpu_custom_call.1} parent=139 // pred_check_branch
          %1127 = sbr.rel (%p1125) target = $region144
        $region143: #{tpu_custom_call.1} parent=139 // pred_region
          %v1128 = vld [vmem:[%s1] sm:$0xff]
          %v1129 = vld [vmem:[%s1 + $0x8] sm:$0xff]
          %v1130 = vld [vmem:[%s13] sm:$0xff]
          %v1131 = vld [vmem:[%s13 + $0x8] sm:$0xf]
          %v1132 = vld [vmem:[%s15] sm:$0x1]
          %v1134 = vlaneseq
          %v1135 = vshrl.u32 %v1134, 7
          %v1136 = vsub.s32 0, %v1135
          %v1137 = vrot.slane %v1132, %v1136
          %vm1139 = vcmask 97280
          %v1141 = vsel %vm1139, %v1128, 0
          %v1144 = vsel %vm1139, %v1129, 0
          %vm1146 = vcmask 1043456
          %v1148 = vsel %vm1146, %v1131, 0
          %1150 = vmatprep.subr.mxu0 0.0
          %1151 = vmatpush1.msra.mxu0 %v1130
          %1152 = vmatprep.subr.mxu0 0.0
          %1153 = vmatpush1.msra.mxu0 %v1148
          %1154 = vmatprep.subr.mxu0 0.0
          %1155 = vmatpush1.msra.mxu0 0.0
          %1156 = vmatprep.subr.mxu0 0.0
          %1157 = vmatpush1.msra.mxu0 0.0
          %1158 = vmatprep.subr.mxu0 0.0
          %1159 = vmatpush1.msra.mxu0 0.0
          %1160 = vmatprep.subr.mxu0 0.0
          %1161 = vmatpush1.msra.mxu0 0.0
          %1162 = vmatprep.subr.mxu0 0.0
          %1163 = vmatpush1.msra.mxu0 0.0
          %1164 = vmatprep.subr.mxu0 0.0
          %1165 = vmatpush1.msra.mxu0 0.0
          %1166 = vmatprep.subr.mxu0 0.0
          %1167 = vmatpush1.msra.mxu0 0.0
          %1168 = vmatprep.subr.mxu0 0.0
          %1169 = vmatpush1.msra.mxu0 0.0
          %1170 = vmatprep.subr.mxu0 0.0
          %1171 = vmatpush1.msra.mxu0 0.0
          %1172 = vmatprep.subr.mxu0 0.0
          %1173 = vmatpush1.msra.mxu0 0.0
          %1174 = vmatprep.subr.mxu0 0.0
          %1175 = vmatpush1.msra.mxu0 0.0
          %1176 = vmatprep.subr.mxu0 0.0
          %1177 = vmatpush1.msra.mxu0 0.0
          %1178 = vmatprep.subr.mxu0 0.0
          %1179 = vmatpush1.msra.mxu0 0.0
          %1180 = vmatprep.subr.mxu0 0.0
          %1181 = vmatpush1.msra.mxu0 0.0
          %1182 = vmatprep.subr.mxu0 0.0
          %1183 = vmatpush1.msra.mxu0 0.0
          %1184 = vmatprep.subr.mxu0 0.0
          %1185 = vmatpush1.msra.mxu0 0.0
          %1186 = vmatprep.subr.mxu0 0.0
          %1187 = vmatpush1.msra.mxu0 0.0
          %1188 = vmatprep.subr.mxu0 0.0
          %1189 = vmatpush1.msra.mxu0 0.0
          %1190 = vmatprep.subr.mxu0 0.0
          %1191 = vmatpush1.msra.mxu0 0.0
          %1192 = vmatprep.subr.mxu0 0.0
          %1193 = vmatpush1.msra.mxu0 0.0
          %1194 = vmatprep.subr.mxu0 0.0
          %1195 = vmatpush1.msra.mxu0 0.0
          %1196 = vmatprep.subr.mxu0 0.0
          %1197 = vmatpush1.msra.mxu0 0.0
          %1198 = vmatprep.subr.mxu0 0.0
          %1199 = vmatpush1.msra.mxu0 0.0
          %1200 = vmatprep.subr.mxu0 0.0
          %1201 = vmatpush1.msra.mxu0 0.0
          %1202 = vmatprep.subr.mxu0 0.0
          %1203 = vmatpush1.msra.mxu0 0.0
          %1204 = vmatprep.subr.mxu0 0.0
          %1205 = vmatpush1.msra.mxu0 0.0
          %1206 = vmatprep.subr.mxu0 0.0
          %1207 = vmatpush1.msra.mxu0 0.0
          %1208 = vmatprep.subr.mxu0 0.0
          %1209 = vmatpush1.msra.mxu0 0.0
          %1210 = vmatprep.subr.mxu0 0.0
          %1211 = vmatpush1.msra.mxu0 0.0
          %1212 = vmatprep.subr.mxu0 0.0
          %1213 = vmatpush1.msra.mxu0 0.0
          %1214 = vmatprep.mubr.f32.mxu0 0.0
          %1215 = vmatmul.mubr.f32.gmra.mrb[0].mxu0 %v1141
          %v1216 = vpop.f32.mrb[0].mxu0
          %v1217 = vadd.f32 %v1137, %v1216
          %v1218 = vpop.f32.mrb[0].mxu0
          %1219 = vmatprep.mubr.f32.mxu0 0.0
          %1220 = vmatmul.mubr.f32.gmra.mrb[0].mxu0 %v1144
          %v1221 = vpop.f32.mrb[0].mxu0
          %v1222 = vadd.f32 %v1137, %v1221
          %v1223 = vpop.f32.mrb[0].mxu0
          %1224 = vdwg.mxu0
          %v1225 = vmax.f32 %v1217, 0.0
          %v1226 = vmax.f32 %v1222, 0.0
          %v1227 = vld [vmem:[%s3] sm:$0xff]
          %v1228 = vld [vmem:[%s3 + $0x8] sm:$0xff]
          %v1229 = vadd.f32 %v1225, %v1227
          %v1230 = vadd.f32 %v1226, %v1228
          %v1231 = vld [vmem:[%s5] sm:$0xff]
          %v1232 = vld [vmem:[%s5 + $0x8] sm:$0xff]
          %v1233 = vld [vmem:[%s5 + $0x10] sm:$0xff]
          %v1234 = vld [vmem:[%s5 + $0x18] sm:$0xff]
          %vm1235 = vcmask 130048
          %v1237 = vsel %vm1235, %v1231, 0
          %v1240 = vsel %vm1235, %v1232, 0
          %v1243 = vsel %vm1235, %v1233, 0
          %v1246 = vsel %vm1235, %v1234, 0
          %1248 = vmatprep.subr.mxu0 0.0
          %1249 = vmatpush1.msra.mxu0 %v1229
          %1250 = vmatprep.subr.mxu0 0.0
          %1251 = vmatpush1.msra.mxu0 %v1230
          %1252 = vmatprep.subr.mxu0 0.0
          %1253 = vmatpush1.msra.mxu0 0.0
          %1254 = vmatprep.subr.mxu0 0.0
          %1255 = vmatpush1.msra.mxu0 0.0
          %1256 = vmatprep.subr.mxu0 0.0
          %1257 = vmatpush1.msra.mxu0 0.0
          %1258 = vmatprep.subr.mxu0 0.0
          %1259 = vmatpush1.msra.mxu0 0.0
          %1260 = vmatprep.subr.mxu0 0.0
          %1261 = vmatpush1.msra.mxu0 0.0
          %1262 = vmatprep.subr.mxu0 0.0
          %1263 = vmatpush1.msra.mxu0 0.0
          %1264 = vmatprep.subr.mxu0 0.0
          %1265 = vmatpush1.msra.mxu0 0.0
          %1266 = vmatprep.subr.mxu0 0.0
          %1267 = vmatpush1.msra.mxu0 0.0
          %1268 = vmatprep.subr.mxu0 0.0
          %1269 = vmatpush1.msra.mxu0 0.0
          %1270 = vmatprep.subr.mxu0 0.0
          %1271 = vmatpush1.msra.mxu0 0.0
          %1272 = vmatprep.subr.mxu0 0.0
          %1273 = vmatpush1.msra.mxu0 0.0
          %1274 = vmatprep.subr.mxu0 0.0
          %1275 = vmatpush1.msra.mxu0 0.0
          %1276 = vmatprep.subr.mxu0 0.0
          %1277 = vmatpush1.msra.mxu0 0.0
          %1278 = vmatprep.subr.mxu0 0.0
          %1279 = vmatpush1.msra.mxu0 0.0
          %1280 = vmatprep.subr.mxu0 0.0
          %1281 = vmatpush1.msra.mxu0 0.0
          %1282 = vmatprep.subr.mxu0 0.0
          %1283 = vmatpush1.msra.mxu0 0.0
          %1284 = vmatprep.subr.mxu0 0.0
          %1285 = vmatpush1.msra.mxu0 0.0
          %1286 = vmatprep.subr.mxu0 0.0
          %1287 = vmatpush1.msra.mxu0 0.0
          %1288 = vmatprep.subr.mxu0 0.0
          %1289 = vmatpush1.msra.mxu0 0.0
          %1290 = vmatprep.subr.mxu0 0.0
          %1291 = vmatpush1.msra.mxu0 0.0
          %1292 = vmatprep.subr.mxu0 0.0
          %1293 = vmatpush1.msra.mxu0 0.0
          %1294 = vmatprep.subr.mxu0 0.0
          %1295 = vmatpush1.msra.mxu0 0.0
          %1296 = vmatprep.subr.mxu0 0.0
          %1297 = vmatpush1.msra.mxu0 0.0
          %1298 = vmatprep.subr.mxu0 0.0
          %1299 = vmatpush1.msra.mxu0 0.0
          %1300 = vmatprep.subr.mxu0 0.0
          %1301 = vmatpush1.msra.mxu0 0.0
          %1302 = vmatprep.subr.mxu0 0.0
          %1303 = vmatpush1.msra.mxu0 0.0
          %1304 = vmatprep.subr.mxu0 0.0
          %1305 = vmatpush1.msra.mxu0 0.0
          %1306 = vmatprep.subr.mxu0 0.0
          %1307 = vmatpush1.msra.mxu0 0.0
          %1308 = vmatprep.subr.mxu0 0.0
          %1309 = vmatpush1.msra.mxu0 0.0
          %1310 = vmatprep.subr.mxu0 0.0
          %1311 = vmatpush1.msra.mxu0 0.0
          %1312 = vmatprep.mubr.f32.mxu0 0.0
          %1313 = vmatmul.mubr.f32.gmra.mrb[0].mxu0 %v1237
          %v1314 = vpop.f32.mrb[0].mxu0
          %v1315 = vadd.f32 0.0, %v1314
          %v1316 = vpop.f32.mrb[0].mxu0
          %1317 = vmatprep.mubr.f32.mxu0 0.0
          %1318 = vmatmul.mubr.f32.gmra.mrb[0].mxu0 %v1240
          %v1319 = vpop.f32.mrb[0].mxu0
          %v1320 = vadd.f32 0.0, %v1319
          %v1321 = vpop.f32.mrb[0].mxu0
          %1322 = vmatprep.mubr.f32.mxu0 0.0
          %1323 = vmatmul.mubr.f32.gmra.mrb[0].mxu0 %v1243
          %v1324 = vpop.f32.mrb[0].mxu0
          %v1325 = vadd.f32 0.0, %v1324
          %v1326 = vpop.f32.mrb[0].mxu0
          %1327 = vmatprep.mubr.f32.mxu0 0.0
          %1328 = vmatmul.mubr.f32.gmra.mrb[0].mxu0 %v1246
          %v1329 = vpop.f32.mrb[0].mxu0
          %v1330 = vadd.f32 0.0, %v1329
          %v1331 = vpop.f32.mrb[0].mxu0
          %1332 = vdwg.mxu0
          %vm1333 = vcmask 261120
          %1334 = vst.msk [vmem:[#allocation2] sm:$0xff] %vm1333, %v1315
          %1335 = vst.msk [vmem:[#allocation2 + $0x8] sm:$0xff] %vm1333, %v1320
          %1336 = vst.msk [vmem:[#allocation2 + $0x10] sm:$0xff] %vm1333, %v1325
          %1337 = vst.msk [vmem:[#allocation2 + $0x18] sm:$0xff] %vm1333, %v1330
        $region144: #{tpu_custom_call.1} parent=139 // pred_fallthru
          _
        %v1338 = vld [vmem:[#allocation2] sm:$0xff]
        %v1339 = vld [vmem:[#allocation2 + $0x8] sm:$0xff]
        %v1340 = vld [vmem:[#allocation2 + $0x10] sm:$0xff]
        %v1341 = vld [vmem:[#allocation2 + $0x18] sm:$0xff]
        %v1342 = vpack.c.bf16 %v1339, %v1338
        %v1343 = vpack.c.bf16 %v1341, %v1340
        %v1344 = vld [vmem:[%s1085] sm:$0x7]
        %v1345 = vld [vmem:[%s1081] sm:$0xf]
        %v1346 = vld [vmem:[%s1081 + $0x4] sm:$0xf]
        %v1347 = vld [vmem:[%s1081 + $0x8] sm:$0xf]
        %v1348 = vld [vmem:[%s1081 + $0xc] sm:$0xf]
        %v1349 = vlaneseq
        %v1350 = vshrl.u32 %v1349, 7
        %v1351 = vsub.s32 0, %v1350
        %v1352 = vrot.slane %v1344, %v1351
        %v1357 = vunpack.c.l.b16 %v1345
        %v1358 = vunpack.c.l.b16 %v1346
        %v1359 = vunpack.c.l.b16 %v1347
        %v1360 = vunpack.c.l.b16 %v1348
        %v1361 = vpack.c.b16 %v1358, %v1357
        %v1362 = vpack.c.b16 %v1360, %v1359
        %vm1365 = vcmask 261120
        %v1367 = vsel %vm1365, %v1342, 0
        %v1370 = vsel %vm1365, %v1343, 0
        %1372 = vmatprep.subr.bf16.mxu0 0
        %1373 = vmatpush1.bf16.msra.mxu0 %v1361
        %1374 = vmatprep.subr.bf16.mxu0 0
        %1375 = vmatpush1.bf16.msra.mxu0 %v1362
        %1376 = vmatprep.subr.bf16.mxu0 0
        %1377 = vmatpush1.bf16.msra.mxu0 0
        %1378 = vmatprep.subr.bf16.mxu0 0
        %1379 = vmatpush1.bf16.msra.mxu0 0
        %1380 = vmatprep.subr.bf16.mxu0 0
        %1381 = vmatpush1.bf16.msra.mxu0 0
        %1382 = vmatprep.subr.bf16.mxu0 0
        %1383 = vmatpush1.bf16.msra.mxu0 0
        %1384 = vmatprep.subr.bf16.mxu0 0
        %1385 = vmatpush1.bf16.msra.mxu0 0
        %1386 = vmatprep.subr.bf16.mxu0 0
        %1387 = vmatpush1.bf16.msra.mxu0 0
        %1388 = vmatprep.subr.bf16.mxu0 0
        %1389 = vmatpush1.bf16.msra.mxu0 0
        %1390 = vmatprep.subr.bf16.mxu0 0
        %1391 = vmatpush1.bf16.msra.mxu0 0
        %1392 = vmatprep.subr.bf16.mxu0 0
        %1393 = vmatpush1.bf16.msra.mxu0 0
        %1394 = vmatprep.subr.bf16.mxu0 0
        %1395 = vmatpush1.bf16.msra.mxu0 0
        %1396 = vmatprep.subr.bf16.mxu0 0
        %1397 = vmatpush1.bf16.msra.mxu0 0
        %1398 = vmatprep.subr.bf16.mxu0 0
        %1399 = vmatpush1.bf16.msra.mxu0 0
        %1400 = vmatprep.subr.bf16.mxu0 0
        %1401 = vmatpush1.bf16.msra.mxu0 0
        %1402 = vmatprep.subr.bf16.mxu0 0
        %1403 = vmatpush1.bf16.msra.mxu0 0
        %1404 = vmatprep.mubr.bf16.mxu0 0
        %1405 = vmatmul.mubr.bf16.gmra.mrb[0].mxu0 %v1367
        %v1406 = vpop.f32.mrb[0].mxu0
        %v1407 = vadd.f32 %v1352, %v1406
        %v1408 = vpop.f32.mrb[0].mxu0
        %v1409 = vpop.f32.mrb[0].mxu0
        %v1410 = vadd.f32 %v1352, %v1409
        %v1411 = vpop.f32.mrb[0].mxu0
        %1412 = vmatprep.mubr.bf16.mxu0 0
        %1413 = vmatmul.mubr.bf16.gmra.mrb[0].mxu0 %v1370
        %v1414 = vpop.f32.mrb[0].mxu0
        %v1415 = vadd.f32 %v1352, %v1414
        %v1416 = vpop.f32.mrb[0].mxu0
        %v1417 = vpop.f32.mrb[0].mxu0
        %v1418 = vadd.f32 %v1352, %v1417
        %v1419 = vpop.f32.mrb[0].mxu0
        %1420 = vdwg.mxu0
        %s1421 = scalar_lea.vmem %s1081, 16
        %v1422 = vld [vmem:[%s1421] sm:$0xf]
        %v1423 = vld [vmem:[%s1421 + $0x4] sm:$0xf]
        %v1424 = vld [vmem:[%s1421 + $0x8] sm:$0xf]
        %v1425 = vld [vmem:[%s1421 + $0xc] sm:$0xf]
        %v1426 = vlaneseq
        %v1427 = vshrl.u32 %v1426, 7
        %v1428 = vsub.s32 1, %v1427
        %v1429 = vrot.slane %v1344, %v1428
        %v1434 = vunpack.c.l.b16 %v1422
        %v1435 = vunpack.c.l.b16 %v1423
        %v1436 = vunpack.c.l.b16 %v1424
        %v1437 = vunpack.c.l.b16 %v1425
        %v1438 = vpack.c.b16 %v1435, %v1434
        %v1439 = vpack.c.b16 %v1437, %v1436
        %1442 = vmatprep.subr.bf16.mxu0 0
        %1443 = vmatpush1.bf16.msra.mxu0 %v1438
        %1444 = vmatprep.subr.bf16.mxu0 0
        %1445 = vmatpush1.bf16.msra.mxu0 %v1439
        %1446 = vmatprep.subr.bf16.mxu0 0
        %1447 = vmatpush1.bf16.msra.mxu0 0
        %1448 = vmatprep.subr.bf16.mxu0 0
        %1449 = vmatpush1.bf16.msra.mxu0 0
        %1450 = vmatprep.subr.bf16.mxu0 0
        %1451 = vmatpush1.bf16.msra.mxu0 0
        %1452 = vmatprep.subr.bf16.mxu0 0
        %1453 = vmatpush1.bf16.msra.mxu0 0
        %1454 = vmatprep.subr.bf16.mxu0 0
        %1455 = vmatpush1.bf16.msra.mxu0 0
        %1456 = vmatprep.subr.bf16.mxu0 0
        %1457 = vmatpush1.bf16.msra.mxu0 0
        %1458 = vmatprep.subr.bf16.mxu0 0
        %1459 = vmatpush1.bf16.msra.mxu0 0
        %1460 = vmatprep.subr.bf16.mxu0 0
        %1461 = vmatpush1.bf16.msra.mxu0 0
        %1462 = vmatprep.subr.bf16.mxu0 0
        %1463 = vmatpush1.bf16.msra.mxu0 0
        %1464 = vmatprep.subr.bf16.mxu0 0
        %1465 = vmatpush1.bf16.msra.mxu0 0
        %1466 = vmatprep.subr.bf16.mxu0 0
        %1467 = vmatpush1.bf16.msra.mxu0 0
        %1468 = vmatprep.subr.bf16.mxu0 0
        %1469 = vmatpush1.bf16.msra.mxu0 0
        %1470 = vmatprep.subr.bf16.mxu0 0
        %1471 = vmatpush1.bf16.msra.mxu0 0
        %1472 = vmatprep.subr.bf16.mxu0 0
        %1473 = vmatpush1.bf16.msra.mxu0 0
        %1474 = vmatprep.mubr.bf16.mxu0 0
        %1475 = vmatmul.mubr.bf16.gmra.mrb[0].mxu0 %v1367
        %v1476 = vpop.f32.mrb[0].mxu0
        %v1477 = vadd.f32 %v1429, %v1476
        %v1478 = vpop.f32.mrb[0].mxu0
        %v1479 = vpop.f32.mrb[0].mxu0
        %v1480 = vadd.f32 %v1429, %v1479
        %v1481 = vpop.f32.mrb[0].mxu0
        %1482 = vmatprep.mubr.bf16.mxu0 0
        %1483 = vmatmul.mubr.bf16.gmra.mrb[0].mxu0 %v1370
        %v1484 = vpop.f32.mrb[0].mxu0
        %v1485 = vadd.f32 %v1429, %v1484
        %v1486 = vpop.f32.mrb[0].mxu0
        %v1487 = vpop.f32.mrb[0].mxu0
        %v1488 = vadd.f32 %v1429, %v1487
        %v1489 = vpop.f32.mrb[0].mxu0
        %1490 = vdwg.mxu0
        %s1491 = scalar_lea.vmem %s1081, 32
        %v1492 = vld [vmem:[%s1491] sm:$0xf]
        %v1493 = vld [vmem:[%s1491 + $0x4] sm:$0xf]
        %v1494 = vld [vmem:[%s1491 + $0x8] sm:$0xf]
        %v1495 = vld [vmem:[%s1491 + $0xc] sm:$0xf]
        %v1496 = vlaneseq
        %v1497 = vshrl.u32 %v1496, 7
        %v1498 = vsub.s32 2, %v1497
        %v1499 = vrot.slane %v1344, %v1498
        %v1504 = vunpack.c.l.b16 %v1492
        %v1505 = vunpack.c.l.b16 %v1493
        %v1506 = vunpack.c.l.b16 %v1494
        %v1507 = vunpack.c.l.b16 %v1495
        %v1508 = vpack.c.b16 %v1505, %v1504
        %v1509 = vpack.c.b16 %v1507, %v1506
        %1512 = vmatprep.subr.bf16.mxu0 0
        %1513 = vmatpush1.bf16.msra.mxu0 %v1508
        %1514 = vmatprep.subr.bf16.mxu0 0
        %1515 = vmatpush1.bf16.msra.mxu0 %v1509
        %1516 = vmatprep.subr.bf16.mxu0 0
        %1517 = vmatpush1.bf16.msra.mxu0 0
        %1518 = vmatprep.subr.bf16.mxu0 0
        %1519 = vmatpush1.bf16.msra.mxu0 0
        %1520 = vmatprep.subr.bf16.mxu0 0
        %1521 = vmatpush1.bf16.msra.mxu0 0
        %1522 = vmatprep.subr.bf16.mxu0 0
        %1523 = vmatpush1.bf16.msra.mxu0 0
        %1524 = vmatprep.subr.bf16.mxu0 0
        %1525 = vmatpush1.bf16.msra.mxu0 0
        %1526 = vmatprep.subr.bf16.mxu0 0
        %1527 = vmatpush1.bf16.msra.mxu0 0
        %1528 = vmatprep.subr.bf16.mxu0 0
        %1529 = vmatpush1.bf16.msra.mxu0 0
        %1530 = vmatprep.subr.bf16.mxu0 0
        %1531 = vmatpush1.bf16.msra.mxu0 0
        %1532 = vmatprep.subr.bf16.mxu0 0
        %1533 = vmatpush1.bf16.msra.mxu0 0
        %1534 = vmatprep.subr.bf16.mxu0 0
        %1535 = vmatpush1.bf16.msra.mxu0 0
        %1536 = vmatprep.subr.bf16.mxu0 0
        %1537 = vmatpush1.bf16.msra.mxu0 0
        %1538 = vmatprep.subr.bf16.mxu0 0
        %1539 = vmatpush1.bf16.msra.mxu0 0
        %1540 = vmatprep.subr.bf16.mxu0 0
        %1541 = vmatpush1.bf16.msra.mxu0 0
        %1542 = vmatprep.subr.bf16.mxu0 0
        %1543 = vmatpush1.bf16.msra.mxu0 0
        %1544 = vmatprep.mubr.bf16.mxu0 0
        %1545 = vmatmul.mubr.bf16.gmra.mrb[0].mxu0 %v1367
        %v1546 = vpop.f32.mrb[0].mxu0
        %v1547 = vadd.f32 %v1499, %v1546
        %v1548 = vpop.f32.mrb[0].mxu0
        %v1549 = vpop.f32.mrb[0].mxu0
        %v1550 = vadd.f32 %v1499, %v1549
        %v1551 = vpop.f32.mrb[0].mxu0
        %1552 = vmatprep.mubr.bf16.mxu0 0
        %1553 = vmatmul.mubr.bf16.gmra.mrb[0].mxu0 %v1370
        %v1554 = vpop.f32.mrb[0].mxu0
        %v1555 = vadd.f32 %v1499, %v1554
        %v1556 = vpop.f32.mrb[0].mxu0
        %v1557 = vpop.f32.mrb[0].mxu0
        %v1558 = vadd.f32 %v1499, %v1557
        %v1559 = vpop.f32.mrb[0].mxu0
        %1560 = vdwg.mxu0
        %v1561 = vld [vmem:[%s7] sm:$0x1]
        %vm1562 = vcmask 64512
        %v1564 = vsel %vm1562, %v1407, 0
        %v1567 = vsel %vm1562, %v1410, 0
        %v1570 = vsel %vm1562, %v1477, 0
        %v1573 = vsel %vm1562, %v1480, 0
        %1575 = vmatprep.subr.mxu0 0.0
        %1576 = vmatpush1.xpose.msra.mxu0 %v1570
        %1577 = vmatprep.subr.mxu0 0.0
        %1578 = vmatpush1.xpose.msra.mxu0 %v1573
        %1579 = vmatprep.subr.mxu0 0.0
        %1580 = vmatpush1.xpose.msra.mxu0 0.0
        %1581 = vmatprep.subr.mxu0 0.0
        %1582 = vmatpush1.xpose.msra.mxu0 0.0
        %1583 = vmatprep.subr.mxu0 0.0
        %1584 = vmatpush1.xpose.msra.mxu0 0.0
        %1585 = vmatprep.subr.mxu0 0.0
        %1586 = vmatpush1.xpose.msra.mxu0 0.0
        %1587 = vmatprep.subr.mxu0 0.0
        %1588 = vmatpush1.xpose.msra.mxu0 0.0
        %1589 = vmatprep.subr.mxu0 0.0
        %1590 = vmatpush1.xpose.msra.mxu0 0.0
        %1591 = vmatprep.subr.mxu0 0.0
        %1592 = vmatpush1.xpose.msra.mxu0 0.0
        %1593 = vmatprep.subr.mxu0 0.0
        %1594 = vmatpush1.xpose.msra.mxu0 0.0
        %1595 = vmatprep.subr.mxu0 0.0
        %1596 = vmatpush1.xpose.msra.mxu0 0.0
        %1597 = vmatprep.subr.mxu0 0.0
        %1598 = vmatpush1.xpose.msra.mxu0 0.0
        %1599 = vmatprep.subr.mxu0 0.0
        %1600 = vmatpush1.xpose.msra.mxu0 0.0
        %1601 = vmatprep.subr.mxu0 0.0
        %1602 = vmatpush1.xpose.msra.mxu0 0.0
        %1603 = vmatprep.subr.mxu0 0.0
        %1604 = vmatpush1.xpose.msra.mxu0 0.0
        %1605 = vmatprep.subr.mxu0 0.0
        %1606 = vmatpush1.xpose.msra.mxu0 0.0
        %1607 = vmatprep.subr.mxu0 0.0
        %1608 = vmatpush1.xpose.msra.mxu0 0.0
        %1609 = vmatprep.subr.mxu0 0.0
        %1610 = vmatpush1.xpose.msra.mxu0 0.0
        %1611 = vmatprep.subr.mxu0 0.0
        %1612 = vmatpush1.xpose.msra.mxu0 0.0
        %1613 = vmatprep.subr.mxu0 0.0
        %1614 = vmatpush1.xpose.msra.mxu0 0.0
        %1615 = vmatprep.subr.mxu0 0.0
        %1616 = vmatpush1.xpose.msra.mxu0 0.0
        %1617 = vmatprep.subr.mxu0 0.0
        %1618 = vmatpush1.xpose.msra.mxu0 0.0
        %1619 = vmatprep.subr.mxu0 0.0
        %1620 = vmatpush1.xpose.msra.mxu0 0.0
        %1621 = vmatprep.subr.mxu0 0.0
        %1622 = vmatpush1.xpose.msra.mxu0 0.0
        %1623 = vmatprep.subr.mxu0 0.0
        %1624 = vmatpush1.xpose.msra.mxu0 0.0
        %1625 = vmatprep.subr.mxu0 0.0
        %1626 = vmatpush1.xpose.msra.mxu0 0.0
        %1627 = vmatprep.subr.mxu0 0.0
        %1628 = vmatpush1.xpose.msra.mxu0 0.0
        %1629 = vmatprep.subr.mxu0 0.0
        %1630 = vmatpush1.xpose.msra.mxu0 0.0
        %1631 = vmatprep.subr.mxu0 0.0
        %1632 = vmatpush1.xpose.msra.mxu0 0.0
        %1633 = vmatprep.subr.mxu0 0.0
        %1634 = vmatpush1.xpose.msra.mxu0 0.0
        %1635 = vmatprep.subr.mxu0 0.0
        %1636 = vmatpush1.xpose.msra.mxu0 0.0
        %1637 = vmatprep.subr.mxu0 0.0
        %1638 = vmatpush1.xpose.msra.mxu0 0.0
        %1639 = vmatprep.mubr.f32.mxu0 0.0
        %1640 = vmatmul.mubr.f32.gmra.mrb[0].mxu0 %v1564
        %v1641 = vpop.f32.mrb[0].mxu0
        %v1642 = vadd.f32 0.0, %v1641
        %v1643 = vpop.f32.mrb[0].mxu0
        %1644 = vmatprep.mubr.f32.mxu0 0.0
        %1645 = vmatmul.mubr.f32.gmra.mrb[0].mxu0 %v1567
        %v1646 = vpop.f32.mrb[0].mxu0
        %v1647 = vadd.f32 0.0, %v1646
        %v1648 = vpop.f32.mrb[0].mxu0
        %1649 = vdwg.mxu0
        %v1651 = vsel %vm1562, %v1415, 0
        %v1654 = vsel %vm1562, %v1418, 0
        %v1657 = vsel %vm1562, %v1485, 0
        %v1660 = vsel %vm1562, %v1488, 0
        %1662 = vmatprep.subr.mxu0 0.0
        %1663 = vmatpush1.xpose.msra.mxu0 %v1657
        %1664 = vmatprep.subr.mxu0 0.0
        %1665 = vmatpush1.xpose.msra.mxu0 %v1660
        %1666 = vmatprep.subr.mxu0 0.0
        %1667 = vmatpush1.xpose.msra.mxu0 0.0
        %1668 = vmatprep.subr.mxu0 0.0
        %1669 = vmatpush1.xpose.msra.mxu0 0.0
        %1670 = vmatprep.subr.mxu0 0.0
        %1671 = vmatpush1.xpose.msra.mxu0 0.0
        %1672 = vmatprep.subr.mxu0 0.0
        %1673 = vmatpush1.xpose.msra.mxu0 0.0
        %1674 = vmatprep.subr.mxu0 0.0
        %1675 = vmatpush1.xpose.msra.mxu0 0.0
        %1676 = vmatprep.subr.mxu0 0.0
        %1677 = vmatpush1.xpose.msra.mxu0 0.0
        %1678 = vmatprep.subr.mxu0 0.0
        %1679 = vmatpush1.xpose.msra.mxu0 0.0
        %1680 = vmatprep.subr.mxu0 0.0
        %1681 = vmatpush1.xpose.msra.mxu0 0.0
        %1682 = vmatprep.subr.mxu0 0.0
        %1683 = vmatpush1.xpose.msra.mxu0 0.0
        %1684 = vmatprep.subr.mxu0 0.0
        %1685 = vmatpush1.xpose.msra.mxu0 0.0
        %1686 = vmatprep.subr.mxu0 0.0
        %1687 = vmatpush1.xpose.msra.mxu0 0.0
        %1688 = vmatprep.subr.mxu0 0.0
        %1689 = vmatpush1.xpose.msra.mxu0 0.0
        %1690 = vmatprep.subr.mxu0 0.0
        %1691 = vmatpush1.xpose.msra.mxu0 0.0
        %1692 = vmatprep.subr.mxu0 0.0
        %1693 = vmatpush1.xpose.msra.mxu0 0.0
        %1694 = vmatprep.subr.mxu0 0.0
        %1695 = vmatpush1.xpose.msra.mxu0 0.0
        %1696 = vmatprep.subr.mxu0 0.0
        %1697 = vmatpush1.xpose.msra.mxu0 0.0
        %1698 = vmatprep.subr.mxu0 0.0
        %1699 = vmatpush1.xpose.msra.mxu0 0.0
        %1700 = vmatprep.subr.mxu0 0.0
        %1701 = vmatpush1.xpose.msra.mxu0 0.0
        %1702 = vmatprep.subr.mxu0 0.0
        %1703 = vmatpush1.xpose.msra.mxu0 0.0
        %1704 = vmatprep.subr.mxu0 0.0
        %1705 = vmatpush1.xpose.msra.mxu0 0.0
        %1706 = vmatprep.subr.mxu0 0.0
        %1707 = vmatpush1.xpose.msra.mxu0 0.0
        %1708 = vmatprep.subr.mxu0 0.0
        %1709 = vmatpush1.xpose.msra.mxu0 0.0
        %1710 = vmatprep.subr.mxu0 0.0
        %1711 = vmatpush1.xpose.msra.mxu0 0.0
        %1712 = vmatprep.subr.mxu0 0.0
        %1713 = vmatpush1.xpose.msra.mxu0 0.0
        %1714 = vmatprep.subr.mxu0 0.0
        %1715 = vmatpush1.xpose.msra.mxu0 0.0
        %1716 = vmatprep.subr.mxu0 0.0
        %1717 = vmatpush1.xpose.msra.mxu0 0.0
        %1718 = vmatprep.subr.mxu0 0.0
        %1719 = vmatpush1.xpose.msra.mxu0 0.0
        %1720 = vmatprep.subr.mxu0 0.0
        %1721 = vmatpush1.xpose.msra.mxu0 0.0
        %1722 = vmatprep.subr.mxu0 0.0
        %1723 = vmatpush1.xpose.msra.mxu0 0.0
        %1724 = vmatprep.subr.mxu0 0.0
        %1725 = vmatpush1.xpose.msra.mxu0 0.0
        %1726 = vmatprep.mubr.f32.mxu0 0.0
        %1727 = vmatmul.mubr.f32.gmra.mrb[0].mxu0 %v1651
        %v1728 = vpop.f32.mrb[0].mxu0
        %v1729 = vadd.f32 0.0, %v1728
        %v1730 = vpop.f32.mrb[0].mxu0
        %1731 = vmatprep.mubr.f32.mxu0 0.0
        %1732 = vmatmul.mubr.f32.gmra.mrb[0].mxu0 %v1654
        %v1733 = vpop.f32.mrb[0].mxu0
        %v1734 = vadd.f32 0.0, %v1733
        %v1735 = vpop.f32.mrb[0].mxu0
        %1736 = vdwg.mxu0
        %v1737 = vmul.f32 %v1642, 0.35355338
        %v1738 = vmul.f32 %v1647, 0.35355338
        %v1739 = vmul.f32 %v1729, 0.35355338
        %v1740 = vmul.f32 %v1734, 0.35355338
        %v1742 = vlaneseq
        %v1743 = vshrl.u32 %v1742, 7
        %v1744 = vsub.s32 0, %v1743
        %v1745 = vrot.slane %v1561, %v1744
        %v1747 = vadd.f32 %v1737, %v1745
        %v1748 = vadd.f32 %v1738, %v1745
        %v1749 = vadd.f32 %v1739, %v1745
        %v1750 = vadd.f32 %v1740, %v1745
        %vm1751 = vcmask 130048
        %v1752 = vsel %vm1751, %v1747, -inf
        %1753 = vmax.xlane.f32.xlu0 %v1752
        %v1754 = vpop.xlane.xlu0 %1753
        %v1755 = vsel %vm1751, %v1748, -inf
        %1756 = vmax.xlane.f32.xlu0 %v1755
        %v1757 = vpop.xlane.xlu0 %1756
        %v1758 = vsel %vm1751, %v1749, -inf
        %1759 = vmax.xlane.f32.xlu0 %v1758
        %v1760 = vpop.xlane.xlu0 %1759
        %v1761 = vsel %vm1751, %v1750, -inf
        %1762 = vmax.xlane.f32.xlu0 %v1761
        %v1763 = vpop.xlane.xlu0 %1762
        %v1764 = vsub.f32 %v1747, %v1754
        %v1765 = vsub.f32 %v1748, %v1757
        %v1766 = vsub.f32 %v1749, %v1760
        %v1767 = vsub.f32 %v1750, %v1763
        %v1768 = vmul.f32 %v1764, 1.442695
        %v1769 = vpow.pop %v1768
        %v1770 = vmul.f32 %v1765, 1.442695
        %v1771 = vpow.pop %v1770
        %v1772 = vmul.f32 %v1766, 1.442695
        %v1773 = vpow.pop %v1772
        %v1774 = vmul.f32 %v1767, 1.442695
        %v1775 = vpow.pop %v1774
        %v1776 = vsel %vm1751, %v1769, 0.0
        %1777 = vadd.xlane.f32.xlu0 %v1776
        %v1778 = vpop.xlane.xlu0 %1777
        %v1779 = vsel %vm1751, %v1771, 0.0
        %1780 = vadd.xlane.f32.xlu0 %v1779
        %v1781 = vpop.xlane.xlu0 %1780
        %v1782 = vsel %vm1751, %v1773, 0.0
        %1783 = vadd.xlane.f32.xlu0 %v1782
        %v1784 = vpop.xlane.xlu0 %1783
        %v1785 = vsel %vm1751, %v1775, 0.0
        %1786 = vadd.xlane.f32.xlu0 %v1785
        %v1787 = vpop.xlane.xlu0 %1786
        %v1788 = vrcp.pop %v1778
        %v1789 = vrcp.pop %v1781
        %v1790 = vrcp.pop %v1784
        %v1791 = vrcp.pop %v1787
        %v1792 = vmul.f32 %v1769, %v1788
        %v1793 = vmul.f32 %v1771, %v1789
        %v1794 = vmul.f32 %v1773, %v1790
        %v1795 = vmul.f32 %v1775, %v1791
        %v1797 = vsel %vm1751, %v1792, 0
        %v1800 = vsel %vm1751, %v1793, 0
        %1802 = vmatprep.subr.mxu0 0.0
        %1803 = vmatpush1.msra.mxu0 %v1547
        %1804 = vmatprep.subr.mxu0 0.0
        %1805 = vmatpush1.msra.mxu0 %v1550
        %1806 = vmatprep.subr.mxu0 0.0
        %1807 = vmatpush1.msra.mxu0 0.0
        %1808 = vmatprep.subr.mxu0 0.0
        %1809 = vmatpush1.msra.mxu0 0.0
        %1810 = vmatprep.subr.mxu0 0.0
        %1811 = vmatpush1.msra.mxu0 0.0
        %1812 = vmatprep.subr.mxu0 0.0
        %1813 = vmatpush1.msra.mxu0 0.0
        %1814 = vmatprep.subr.mxu0 0.0
        %1815 = vmatpush1.msra.mxu0 0.0
        %1816 = vmatprep.subr.mxu0 0.0
        %1817 = vmatpush1.msra.mxu0 0.0
        %1818 = vmatprep.subr.mxu0 0.0
        %1819 = vmatpush1.msra.mxu0 0.0
        %1820 = vmatprep.subr.mxu0 0.0
        %1821 = vmatpush1.msra.mxu0 0.0
        %1822 = vmatprep.subr.mxu0 0.0
        %1823 = vmatpush1.msra.mxu0 0.0
        %1824 = vmatprep.subr.mxu0 0.0
        %1825 = vmatpush1.msra.mxu0 0.0
        %1826 = vmatprep.subr.mxu0 0.0
        %1827 = vmatpush1.msra.mxu0 0.0
        %1828 = vmatprep.subr.mxu0 0.0
        %1829 = vmatpush1.msra.mxu0 0.0
        %1830 = vmatprep.subr.mxu0 0.0
        %1831 = vmatpush1.msra.mxu0 0.0
        %1832 = vmatprep.subr.mxu0 0.0
        %1833 = vmatpush1.msra.mxu0 0.0
        %1834 = vmatprep.subr.mxu0 0.0
        %1835 = vmatpush1.msra.mxu0 0.0
        %1836 = vmatprep.subr.mxu0 0.0
        %1837 = vmatpush1.msra.mxu0 0.0
        %1838 = vmatprep.subr.mxu0 0.0
        %1839 = vmatpush1.msra.mxu0 0.0
        %1840 = vmatprep.subr.mxu0 0.0
        %1841 = vmatpush1.msra.mxu0 0.0
        %1842 = vmatprep.subr.mxu0 0.0
        %1843 = vmatpush1.msra.mxu0 0.0
        %1844 = vmatprep.subr.mxu0 0.0
        %1845 = vmatpush1.msra.mxu0 0.0
        %1846 = vmatprep.subr.mxu0 0.0
        %1847 = vmatpush1.msra.mxu0 0.0
        %1848 = vmatprep.subr.mxu0 0.0
        %1849 = vmatpush1.msra.mxu0 0.0
        %1850 = vmatprep.subr.mxu0 0.0
        %1851 = vmatpush1.msra.mxu0 0.0
        %1852 = vmatprep.subr.mxu0 0.0
        %1853 = vmatpush1.msra.mxu0 0.0
        %1854 = vmatprep.subr.mxu0 0.0
        %1855 = vmatpush1.msra.mxu0 0.0
        %1856 = vmatprep.subr.mxu0 0.0
        %1857 = vmatpush1.msra.mxu0 0.0
        %1858 = vmatprep.subr.mxu0 0.0
        %1859 = vmatpush1.msra.mxu0 0.0
        %1860 = vmatprep.subr.mxu0 0.0
        %1861 = vmatpush1.msra.mxu0 0.0
        %1862 = vmatprep.subr.mxu0 0.0
        %1863 = vmatpush1.msra.mxu0 0.0
        %1864 = vmatprep.subr.mxu0 0.0
        %1865 = vmatpush1.msra.mxu0 0.0
        %1866 = vmatprep.mubr.f32.mxu0 0.0
        %1867 = vmatmul.mubr.f32.gmra.mrb[0].mxu0 %v1797
        %v1868 = vpop.f32.mrb[0].mxu0
        %v1869 = vadd.f32 0.0, %v1868
        %v1870 = vpop.f32.mrb[0].mxu0
        %1871 = vmatprep.mubr.f32.mxu0 0.0
        %1872 = vmatmul.mubr.f32.gmra.mrb[0].mxu0 %v1800
        %v1873 = vpop.f32.mrb[0].mxu0
        %v1874 = vadd.f32 0.0, %v1873
        %v1875 = vpop.f32.mrb[0].mxu0
        %1876 = vdwg.mxu0
        %v1878 = vsel %vm1751, %v1794, 0
        %v1881 = vsel %vm1751, %v1795, 0
        %1883 = vmatprep.subr.mxu0 0.0
        %1884 = vmatpush1.msra.mxu0 %v1555
        %1885 = vmatprep.subr.mxu0 0.0
        %1886 = vmatpush1.msra.mxu0 %v1558
        %1887 = vmatprep.subr.mxu0 0.0
        %1888 = vmatpush1.msra.mxu0 0.0
        %1889 = vmatprep.subr.mxu0 0.0
        %1890 = vmatpush1.msra.mxu0 0.0
        %1891 = vmatprep.subr.mxu0 0.0
        %1892 = vmatpush1.msra.mxu0 0.0
        %1893 = vmatprep.subr.mxu0 0.0
        %1894 = vmatpush1.msra.mxu0 0.0
        %1895 = vmatprep.subr.mxu0 0.0
        %1896 = vmatpush1.msra.mxu0 0.0
        %1897 = vmatprep.subr.mxu0 0.0
        %1898 = vmatpush1.msra.mxu0 0.0
        %1899 = vmatprep.subr.mxu0 0.0
        %1900 = vmatpush1.msra.mxu0 0.0
        %1901 = vmatprep.subr.mxu0 0.0
        %1902 = vmatpush1.msra.mxu0 0.0
        %1903 = vmatprep.subr.mxu0 0.0
        %1904 = vmatpush1.msra.mxu0 0.0
        %1905 = vmatprep.subr.mxu0 0.0
        %1906 = vmatpush1.msra.mxu0 0.0
        %1907 = vmatprep.subr.mxu0 0.0
        %1908 = vmatpush1.msra.mxu0 0.0
        %1909 = vmatprep.subr.mxu0 0.0
        %1910 = vmatpush1.msra.mxu0 0.0
        %1911 = vmatprep.subr.mxu0 0.0
        %1912 = vmatpush1.msra.mxu0 0.0
        %1913 = vmatprep.subr.mxu0 0.0
        %1914 = vmatpush1.msra.mxu0 0.0
        %1915 = vmatprep.subr.mxu0 0.0
        %1916 = vmatpush1.msra.mxu0 0.0
        %1917 = vmatprep.subr.mxu0 0.0
        %1918 = vmatpush1.msra.mxu0 0.0
        %1919 = vmatprep.subr.mxu0 0.0
        %1920 = vmatpush1.msra.mxu0 0.0
        %1921 = vmatprep.subr.mxu0 0.0
        %1922 = vmatpush1.msra.mxu0 0.0
        %1923 = vmatprep.subr.mxu0 0.0
        %1924 = vmatpush1.msra.mxu0 0.0
        %1925 = vmatprep.subr.mxu0 0.0
        %1926 = vmatpush1.msra.mxu0 0.0
        %1927 = vmatprep.subr.mxu0 0.0
        %1928 = vmatpush1.msra.mxu0 0.0
        %1929 = vmatprep.subr.mxu0 0.0
        %1930 = vmatpush1.msra.mxu0 0.0
        %1931 = vmatprep.subr.mxu0 0.0
        %1932 = vmatpush1.msra.mxu0 0.0
        %1933 = vmatprep.subr.mxu0 0.0
        %1934 = vmatpush1.msra.mxu0 0.0
        %1935 = vmatprep.subr.mxu0 0.0
        %1936 = vmatpush1.msra.mxu0 0.0
        %1937 = vmatprep.subr.mxu0 0.0
        %1938 = vmatpush1.msra.mxu0 0.0
        %1939 = vmatprep.subr.mxu0 0.0
        %1940 = vmatpush1.msra.mxu0 0.0
        %1941 = vmatprep.subr.mxu0 0.0
        %1942 = vmatpush1.msra.mxu0 0.0
        %1943 = vmatprep.subr.mxu0 0.0
        %1944 = vmatpush1.msra.mxu0 0.0
        %1945 = vmatprep.subr.mxu0 0.0
        %1946 = vmatpush1.msra.mxu0 0.0
        %1947 = vmatprep.mubr.f32.mxu0 0.0
        %1948 = vmatmul.mubr.f32.gmra.mrb[0].mxu0 %v1878
        %v1949 = vpop.f32.mrb[0].mxu0
        %v1950 = vadd.f32 0.0, %v1949
        %v1951 = vpop.f32.mrb[0].mxu0
        %1952 = vmatprep.mubr.f32.mxu0 0.0
        %1953 = vmatmul.mubr.f32.gmra.mrb[0].mxu0 %v1881
        %v1954 = vpop.f32.mrb[0].mxu0
        %v1955 = vadd.f32 0.0, %v1954
        %v1956 = vpop.f32.mrb[0].mxu0
        %1957 = vdwg.mxu0
        %1958 = vrot.lane.b32.xlu0 %v1407, 120
        %v1959 = vpop.permute.xlu0 %1958
        %1960 = vrot.lane.b32.xlu0 %v1410, 120
        %v1961 = vpop.permute.xlu0 %1960
        %1962 = vrot.lane.b32.xlu0 %v1477, 120
        %v1963 = vpop.permute.xlu0 %1962
        %1964 = vrot.lane.b32.xlu0 %v1480, 120
        %v1965 = vpop.permute.xlu0 %1964
        %v1966 = vsel %vm1562, %v1959, 0
        %v1968 = vsel %vm1562, %v1961, 0
        %v1970 = vsel %vm1562, %v1963, 0
        %v1972 = vsel %vm1562, %v1965, 0
        %1974 = vmatprep.subr.mxu0 0.0
        %1975 = vmatpush1.xpose.msra.mxu0 %v1970
        %1976 = vmatprep.subr.mxu0 0.0
        %1977 = vmatpush1.xpose.msra.mxu0 %v1972
        %1978 = vmatprep.subr.mxu0 0.0
        %1979 = vmatpush1.xpose.msra.mxu0 0.0
        %1980 = vmatprep.subr.mxu0 0.0
        %1981 = vmatpush1.xpose.msra.mxu0 0.0
        %1982 = vmatprep.subr.mxu0 0.0
        %1983 = vmatpush1.xpose.msra.mxu0 0.0
        %1984 = vmatprep.subr.mxu0 0.0
        %1985 = vmatpush1.xpose.msra.mxu0 0.0
        %1986 = vmatprep.subr.mxu0 0.0
        %1987 = vmatpush1.xpose.msra.mxu0 0.0
        %1988 = vmatprep.subr.mxu0 0.0
        %1989 = vmatpush1.xpose.msra.mxu0 0.0
        %1990 = vmatprep.subr.mxu0 0.0
        %1991 = vmatpush1.xpose.msra.mxu0 0.0
        %1992 = vmatprep.subr.mxu0 0.0
        %1993 = vmatpush1.xpose.msra.mxu0 0.0
        %1994 = vmatprep.subr.mxu0 0.0
        %1995 = vmatpush1.xpose.msra.mxu0 0.0
        %1996 = vmatprep.subr.mxu0 0.0
        %1997 = vmatpush1.xpose.msra.mxu0 0.0
        %1998 = vmatprep.subr.mxu0 0.0
        %1999 = vmatpush1.xpose.msra.mxu0 0.0
        %2000 = vmatprep.subr.mxu0 0.0
        %2001 = vmatpush1.xpose.msra.mxu0 0.0
        %2002 = vmatprep.subr.mxu0 0.0
        %2003 = vmatpush1.xpose.msra.mxu0 0.0
        %2004 = vmatprep.subr.mxu0 0.0
        %2005 = vmatpush1.xpose.msra.mxu0 0.0
        %2006 = vmatprep.subr.mxu0 0.0
        %2007 = vmatpush1.xpose.msra.mxu0 0.0
        %2008 = vmatprep.subr.mxu0 0.0
        %2009 = vmatpush1.xpose.msra.mxu0 0.0
        %2010 = vmatprep.subr.mxu0 0.0
        %2011 = vmatpush1.xpose.msra.mxu0 0.0
        %2012 = vmatprep.subr.mxu0 0.0
        %2013 = vmatpush1.xpose.msra.mxu0 0.0
        %2014 = vmatprep.subr.mxu0 0.0
        %2015 = vmatpush1.xpose.msra.mxu0 0.0
        %2016 = vmatprep.subr.mxu0 0.0
        %2017 = vmatpush1.xpose.msra.mxu0 0.0
        %2018 = vmatprep.subr.mxu0 0.0
        %2019 = vmatpush1.xpose.msra.mxu0 0.0
        %2020 = vmatprep.subr.mxu0 0.0
        %2021 = vmatpush1.xpose.msra.mxu0 0.0
        %2022 = vmatprep.subr.mxu0 0.0
        %2023 = vmatpush1.xpose.msra.mxu0 0.0
        %2024 = vmatprep.subr.mxu0 0.0
        %2025 = vmatpush1.xpose.msra.mxu0 0.0
        %2026 = vmatprep.subr.mxu0 0.0
        %2027 = vmatpush1.xpose.msra.mxu0 0.0
        %2028 = vmatprep.subr.mxu0 0.0
        %2029 = vmatpush1.xpose.msra.mxu0 0.0
        %2030 = vmatprep.subr.mxu0 0.0
        %2031 = vmatpush1.xpose.msra.mxu0 0.0
        %2032 = vmatprep.subr.mxu0 0.0
        %2033 = vmatpush1.xpose.msra.mxu0 0.0
        %2034 = vmatprep.subr.mxu0 0.0
        %2035 = vmatpush1.xpose.msra.mxu0 0.0
        %2036 = vmatprep.subr.mxu0 0.0
        %2037 = vmatpush1.xpose.msra.mxu0 0.0
        %2038 = vmatprep.mubr.f32.mxu0 0.0
        %2039 = vmatmul.mubr.f32.gmra.mrb[0].mxu0 %v1966
        %v2040 = vpop.f32.mrb[0].mxu0
        %v2041 = vadd.f32 0.0, %v2040
        %v2042 = vpop.f32.mrb[0].mxu0
        %2043 = vmatprep.mubr.f32.mxu0 0.0
        %2044 = vmatmul.mubr.f32.gmra.mrb[0].mxu0 %v1968
        %v2045 = vpop.f32.mrb[0].mxu0
        %v2046 = vadd.f32 0.0, %v2045
        %v2047 = vpop.f32.mrb[0].mxu0
        %2048 = vdwg.mxu0
        %2049 = vrot.lane.b32.xlu0 %v1415, 120
        %v2050 = vpop.permute.xlu0 %2049
        %2051 = vrot.lane.b32.xlu0 %v1418, 120
        %v2052 = vpop.permute.xlu0 %2051
        %2053 = vrot.lane.b32.xlu0 %v1485, 120
        %v2054 = vpop.permute.xlu0 %2053
        %2055 = vrot.lane.b32.xlu0 %v1488, 120
        %v2056 = vpop.permute.xlu0 %2055
        %v2057 = vsel %vm1562, %v2050, 0
        %v2059 = vsel %vm1562, %v2052, 0
        %v2061 = vsel %vm1562, %v2054, 0
        %v2063 = vsel %vm1562, %v2056, 0
        %2065 = vmatprep.subr.mxu0 0.0
        %2066 = vmatpush1.xpose.msra.mxu0 %v2061
        %2067 = vmatprep.subr.mxu0 0.0
        %2068 = vmatpush1.xpose.msra.mxu0 %v2063
        %2069 = vmatprep.subr.mxu0 0.0
        %2070 = vmatpush1.xpose.msra.mxu0 0.0
        %2071 = vmatprep.subr.mxu0 0.0
        %2072 = vmatpush1.xpose.msra.mxu0 0.0
        %2073 = vmatprep.subr.mxu0 0.0
        %2074 = vmatpush1.xpose.msra.mxu0 0.0
        %2075 = vmatprep.subr.mxu0 0.0
        %2076 = vmatpush1.xpose.msra.mxu0 0.0
        %2077 = vmatprep.subr.mxu0 0.0
        %2078 = vmatpush1.xpose.msra.mxu0 0.0
        %2079 = vmatprep.subr.mxu0 0.0
        %2080 = vmatpush1.xpose.msra.mxu0 0.0
        %2081 = vmatprep.subr.mxu0 0.0
        %2082 = vmatpush1.xpose.msra.mxu0 0.0
        %2083 = vmatprep.subr.mxu0 0.0
        %2084 = vmatpush1.xpose.msra.mxu0 0.0
        %2085 = vmatprep.subr.mxu0 0.0
        %2086 = vmatpush1.xpose.msra.mxu0 0.0
        %2087 = vmatprep.subr.mxu0 0.0
        %2088 = vmatpush1.xpose.msra.mxu0 0.0
        %2089 = vmatprep.subr.mxu0 0.0
        %2090 = vmatpush1.xpose.msra.mxu0 0.0
        %2091 = vmatprep.subr.mxu0 0.0
        %2092 = vmatpush1.xpose.msra.mxu0 0.0
        %2093 = vmatprep.subr.mxu0 0.0
        %2094 = vmatpush1.xpose.msra.mxu0 0.0
        %2095 = vmatprep.subr.mxu0 0.0
        %2096 = vmatpush1.xpose.msra.mxu0 0.0
        %2097 = vmatprep.subr.mxu0 0.0
        %2098 = vmatpush1.xpose.msra.mxu0 0.0
        %2099 = vmatprep.subr.mxu0 0.0
        %2100 = vmatpush1.xpose.msra.mxu0 0.0
        %2101 = vmatprep.subr.mxu0 0.0
        %2102 = vmatpush1.xpose.msra.mxu0 0.0
        %2103 = vmatprep.subr.mxu0 0.0
        %2104 = vmatpush1.xpose.msra.mxu0 0.0
        %2105 = vmatprep.subr.mxu0 0.0
        %2106 = vmatpush1.xpose.msra.mxu0 0.0
        %2107 = vmatprep.subr.mxu0 0.0
        %2108 = vmatpush1.xpose.msra.mxu0 0.0
        %2109 = vmatprep.subr.mxu0 0.0
        %2110 = vmatpush1.xpose.msra.mxu0 0.0
        %2111 = vmatprep.subr.mxu0 0.0
        %2112 = vmatpush1.xpose.msra.mxu0 0.0
        %2113 = vmatprep.subr.mxu0 0.0
        %2114 = vmatpush1.xpose.msra.mxu0 0.0
        %2115 = vmatprep.subr.mxu0 0.0
        %2116 = vmatpush1.xpose.msra.mxu0 0.0
        %2117 = vmatprep.subr.mxu0 0.0
        %2118 = vmatpush1.xpose.msra.mxu0 0.0
        %2119 = vmatprep.subr.mxu0 0.0
        %2120 = vmatpush1.xpose.msra.mxu0 0.0
        %2121 = vmatprep.subr.mxu0 0.0
        %2122 = vmatpush1.xpose.msra.mxu0 0.0
        %2123 = vmatprep.subr.mxu0 0.0
        %2124 = vmatpush1.xpose.msra.mxu0 0.0
        %2125 = vmatprep.subr.mxu0 0.0
        %2126 = vmatpush1.xpose.msra.mxu0 0.0
        %2127 = vmatprep.subr.mxu0 0.0
        %2128 = vmatpush1.xpose.msra.mxu0 0.0
        %2129 = vmatprep.mubr.f32.mxu0 0.0
        %2130 = vmatmul.mubr.f32.gmra.mrb[0].mxu0 %v2057
        %v2131 = vpop.f32.mrb[0].mxu0
        %v2132 = vadd.f32 0.0, %v2131
        %v2133 = vpop.f32.mrb[0].mxu0
        %2134 = vmatprep.mubr.f32.mxu0 0.0
        %2135 = vmatmul.mubr.f32.gmra.mrb[0].mxu0 %v2059
        %v2136 = vpop.f32.mrb[0].mxu0
        %v2137 = vadd.f32 0.0, %v2136
        %v2138 = vpop.f32.mrb[0].mxu0
        %2139 = vdwg.mxu0
        %v2140 = vmul.f32 %v2041, 0.35355338
        %v2141 = vmul.f32 %v2046, 0.35355338
        %v2142 = vmul.f32 %v2132, 0.35355338
        %v2143 = vmul.f32 %v2137, 0.35355338
        %v2144 = vadd.f32 %v2140, %v1745
        %v2145 = vadd.f32 %v2141, %v1745
        %v2146 = vadd.f32 %v2142, %v1745
        %v2147 = vadd.f32 %v2143, %v1745
        %v2148 = vsel %vm1751, %v2144, -inf
        %2149 = vmax.xlane.f32.xlu0 %v2148
        %v2150 = vpop.xlane.xlu0 %2149
        %v2151 = vsel %vm1751, %v2145, -inf
        %2152 = vmax.xlane.f32.xlu0 %v2151
        %v2153 = vpop.xlane.xlu0 %2152
        %v2154 = vsel %vm1751, %v2146, -inf
        %2155 = vmax.xlane.f32.xlu0 %v2154
        %v2156 = vpop.xlane.xlu0 %2155
        %v2157 = vsel %vm1751, %v2147, -inf
        %2158 = vmax.xlane.f32.xlu0 %v2157
        %v2159 = vpop.xlane.xlu0 %2158
        %v2160 = vsub.f32 %v2144, %v2150
        %v2161 = vsub.f32 %v2145, %v2153
        %v2162 = vsub.f32 %v2146, %v2156
        %v2163 = vsub.f32 %v2147, %v2159
        %v2164 = vmul.f32 %v2160, 1.442695
        %v2165 = vpow.pop %v2164
        %v2166 = vmul.f32 %v2161, 1.442695
        %v2167 = vpow.pop %v2166
        %v2168 = vmul.f32 %v2162, 1.442695
        %v2169 = vpow.pop %v2168
        %v2170 = vmul.f32 %v2163, 1.442695
        %v2171 = vpow.pop %v2170
        %v2172 = vsel %vm1751, %v2165, 0.0
        %2173 = vadd.xlane.f32.xlu0 %v2172
        %v2174 = vpop.xlane.xlu0 %2173
        %v2175 = vsel %vm1751, %v2167, 0.0
        %2176 = vadd.xlane.f32.xlu0 %v2175
        %v2177 = vpop.xlane.xlu0 %2176
        %v2178 = vsel %vm1751, %v2169, 0.0
        %2179 = vadd.xlane.f32.xlu0 %v2178
        %v2180 = vpop.xlane.xlu0 %2179
        %v2181 = vsel %vm1751, %v2171, 0.0
        %2182 = vadd.xlane.f32.xlu0 %v2181
        %v2183 = vpop.xlane.xlu0 %2182
        %v2184 = vrcp.pop %v2174
        %v2185 = vrcp.pop %v2177
        %v2186 = vrcp.pop %v2180
        %v2187 = vrcp.pop %v2183
        %v2188 = vmul.f32 %v2165, %v2184
        %v2189 = vmul.f32 %v2167, %v2185
        %v2190 = vmul.f32 %v2169, %v2186
        %v2191 = vmul.f32 %v2171, %v2187
        %2194 = vrot.lane.b32.xlu0 %v1547, 120
        %v2195 = vpop.permute.xlu0 %2194
        %2196 = vrot.lane.b32.xlu0 %v1550, 120
        %v2197 = vpop.permute.xlu0 %2196
        %v2201 = vsel %vm1751, %v2188, 0
        %v2204 = vsel %vm1751, %v2189, 0
        %2206 = vmatprep.subr.mxu0 0.0
        %2207 = vmatpush1.msra.mxu0 %v2195
        %2208 = vmatprep.subr.mxu0 0.0
        %2209 = vmatpush1.msra.mxu0 %v2197
        %2210 = vmatprep.subr.mxu0 0.0
        %2211 = vmatpush1.msra.mxu0 0.0
        %2212 = vmatprep.subr.mxu0 0.0
        %2213 = vmatpush1.msra.mxu0 0.0
        %2214 = vmatprep.subr.mxu0 0.0
        %2215 = vmatpush1.msra.mxu0 0.0
        %2216 = vmatprep.subr.mxu0 0.0
        %2217 = vmatpush1.msra.mxu0 0.0
        %2218 = vmatprep.subr.mxu0 0.0
        %2219 = vmatpush1.msra.mxu0 0.0
        %2220 = vmatprep.subr.mxu0 0.0
        %2221 = vmatpush1.msra.mxu0 0.0
        %2222 = vmatprep.subr.mxu0 0.0
        %2223 = vmatpush1.msra.mxu0 0.0
        %2224 = vmatprep.subr.mxu0 0.0
        %2225 = vmatpush1.msra.mxu0 0.0
        %2226 = vmatprep.subr.mxu0 0.0
        %2227 = vmatpush1.msra.mxu0 0.0
        %2228 = vmatprep.subr.mxu0 0.0
        %2229 = vmatpush1.msra.mxu0 0.0
        %2230 = vmatprep.subr.mxu0 0.0
        %2231 = vmatpush1.msra.mxu0 0.0
        %2232 = vmatprep.subr.mxu0 0.0
        %2233 = vmatpush1.msra.mxu0 0.0
        %2234 = vmatprep.subr.mxu0 0.0
        %2235 = vmatpush1.msra.mxu0 0.0
        %2236 = vmatprep.subr.mxu0 0.0
        %2237 = vmatpush1.msra.mxu0 0.0
        %2238 = vmatprep.subr.mxu0 0.0
        %2239 = vmatpush1.msra.mxu0 0.0
        %2240 = vmatprep.subr.mxu0 0.0
        %2241 = vmatpush1.msra.mxu0 0.0
        %2242 = vmatprep.subr.mxu0 0.0
        %2243 = vmatpush1.msra.mxu0 0.0
        %2244 = vmatprep.subr.mxu0 0.0
        %2245 = vmatpush1.msra.mxu0 0.0
        %2246 = vmatprep.subr.mxu0 0.0
        %2247 = vmatpush1.msra.mxu0 0.0
        %2248 = vmatprep.subr.mxu0 0.0
        %2249 = vmatpush1.msra.mxu0 0.0
        %2250 = vmatprep.subr.mxu0 0.0
        %2251 = vmatpush1.msra.mxu0 0.0
        %2252 = vmatprep.subr.mxu0 0.0
        %2253 = vmatpush1.msra.mxu0 0.0
        %2254 = vmatprep.subr.mxu0 0.0
        %2255 = vmatpush1.msra.mxu0 0.0
        %2256 = vmatprep.subr.mxu0 0.0
        %2257 = vmatpush1.msra.mxu0 0.0
        %2258 = vmatprep.subr.mxu0 0.0
        %2259 = vmatpush1.msra.mxu0 0.0
        %2260 = vmatprep.subr.mxu0 0.0
        %2261 = vmatpush1.msra.mxu0 0.0
        %2262 = vmatprep.subr.mxu0 0.0
        %2263 = vmatpush1.msra.mxu0 0.0
        %2264 = vmatprep.subr.mxu0 0.0
        %2265 = vmatpush1.msra.mxu0 0.0
        %2266 = vmatprep.subr.mxu0 0.0
        %2267 = vmatpush1.msra.mxu0 0.0
        %2268 = vmatprep.subr.mxu0 0.0
        %2269 = vmatpush1.msra.mxu0 0.0
        %2270 = vmatprep.mubr.f32.mxu0 0.0
        %2271 = vmatmul.mubr.f32.gmra.mrb[0].mxu0 %v2201
        %v2272 = vpop.f32.mrb[0].mxu0
        %v2273 = vadd.f32 0.0, %v2272
        %v2274 = vpop.f32.mrb[0].mxu0
        %2275 = vmatprep.mubr.f32.mxu0 0.0
        %2276 = vmatmul.mubr.f32.gmra.mrb[0].mxu0 %v2204
        %v2277 = vpop.f32.mrb[0].mxu0
        %v2278 = vadd.f32 0.0, %v2277
        %v2279 = vpop.f32.mrb[0].mxu0
        %2280 = vdwg.mxu0
        %2283 = vrot.lane.b32.xlu0 %v1555, 120
        %v2284 = vpop.permute.xlu0 %2283
        %2285 = vrot.lane.b32.xlu0 %v1558, 120
        %v2286 = vpop.permute.xlu0 %2285
        %v2290 = vsel %vm1751, %v2190, 0
        %v2293 = vsel %vm1751, %v2191, 0
        %2295 = vmatprep.subr.mxu0 0.0
        %2296 = vmatpush1.msra.mxu0 %v2284
        %2297 = vmatprep.subr.mxu0 0.0
        %2298 = vmatpush1.msra.mxu0 %v2286
        %2299 = vmatprep.subr.mxu0 0.0
        %2300 = vmatpush1.msra.mxu0 0.0
        %2301 = vmatprep.subr.mxu0 0.0
        %2302 = vmatpush1.msra.mxu0 0.0
        %2303 = vmatprep.subr.mxu0 0.0
        %2304 = vmatpush1.msra.mxu0 0.0
        %2305 = vmatprep.subr.mxu0 0.0
        %2306 = vmatpush1.msra.mxu0 0.0
        %2307 = vmatprep.subr.mxu0 0.0
        %2308 = vmatpush1.msra.mxu0 0.0
        %2309 = vmatprep.subr.mxu0 0.0
        %2310 = vmatpush1.msra.mxu0 0.0
        %2311 = vmatprep.subr.mxu0 0.0
        %2312 = vmatpush1.msra.mxu0 0.0
        %2313 = vmatprep.subr.mxu0 0.0
        %2314 = vmatpush1.msra.mxu0 0.0
        %2315 = vmatprep.subr.mxu0 0.0
        %2316 = vmatpush1.msra.mxu0 0.0
        %2317 = vmatprep.subr.mxu0 0.0
        %2318 = vmatpush1.msra.mxu0 0.0
        %2319 = vmatprep.subr.mxu0 0.0
        %2320 = vmatpush1.msra.mxu0 0.0
        %2321 = vmatprep.subr.mxu0 0.0
        %2322 = vmatpush1.msra.mxu0 0.0
        %2323 = vmatprep.subr.mxu0 0.0
        %2324 = vmatpush1.msra.mxu0 0.0
        %2325 = vmatprep.subr.mxu0 0.0
        %2326 = vmatpush1.msra.mxu0 0.0
        %2327 = vmatprep.subr.mxu0 0.0
        %2328 = vmatpush1.msra.mxu0 0.0
        %2329 = vmatprep.subr.mxu0 0.0
        %2330 = vmatpush1.msra.mxu0 0.0
        %2331 = vmatprep.subr.mxu0 0.0
        %2332 = vmatpush1.msra.mxu0 0.0
        %2333 = vmatprep.subr.mxu0 0.0
        %2334 = vmatpush1.msra.mxu0 0.0
        %2335 = vmatprep.subr.mxu0 0.0
        %2336 = vmatpush1.msra.mxu0 0.0
        %2337 = vmatprep.subr.mxu0 0.0
        %2338 = vmatpush1.msra.mxu0 0.0
        %2339 = vmatprep.subr.mxu0 0.0
        %2340 = vmatpush1.msra.mxu0 0.0
        %2341 = vmatprep.subr.mxu0 0.0
        %2342 = vmatpush1.msra.mxu0 0.0
        %2343 = vmatprep.subr.mxu0 0.0
        %2344 = vmatpush1.msra.mxu0 0.0
        %2345 = vmatprep.subr.mxu0 0.0
        %2346 = vmatpush1.msra.mxu0 0.0
        %2347 = vmatprep.subr.mxu0 0.0
        %2348 = vmatpush1.msra.mxu0 0.0
        %2349 = vmatprep.subr.mxu0 0.0
        %2350 = vmatpush1.msra.mxu0 0.0
        %2351 = vmatprep.subr.mxu0 0.0
        %2352 = vmatpush1.msra.mxu0 0.0
        %2353 = vmatprep.subr.mxu0 0.0
        %2354 = vmatpush1.msra.mxu0 0.0
        %2355 = vmatprep.subr.mxu0 0.0
        %2356 = vmatpush1.msra.mxu0 0.0
        %2357 = vmatprep.subr.mxu0 0.0
        %2358 = vmatpush1.msra.mxu0 0.0
        %2359 = vmatprep.mubr.f32.mxu0 0.0
        %2360 = vmatmul.mubr.f32.gmra.mrb[0].mxu0 %v2290
        %v2361 = vpop.f32.mrb[0].mxu0
        %v2362 = vadd.f32 0.0, %v2361
        %v2363 = vpop.f32.mrb[0].mxu0
        %2364 = vmatprep.mubr.f32.mxu0 0.0
        %2365 = vmatmul.mubr.f32.gmra.mrb[0].mxu0 %v2293
        %v2366 = vpop.f32.mrb[0].mxu0
        %v2367 = vadd.f32 0.0, %v2366
        %v2368 = vpop.f32.mrb[0].mxu0
        %2369 = vdwg.mxu0
        %2370 = vrot.lane.b32.xlu0 %v1407, 112
        %v2371 = vpop.permute.xlu0 %2370
        %2372 = vrot.lane.b32.xlu0 %v1410, 112
        %v2373 = vpop.permute.xlu0 %2372
        %2374 = vrot.lane.b32.xlu0 %v1477, 112
        %v2375 = vpop.permute.xlu0 %2374
        %2376 = vrot.lane.b32.xlu0 %v1480, 112
        %v2377 = vpop.permute.xlu0 %2376
        %v2378 = vsel %vm1562, %v2371, 0
        %v2380 = vsel %vm1562, %v2373, 0
        %v2382 = vsel %vm1562, %v2375, 0
        %v2384 = vsel %vm1562, %v2377, 0
        %2386 = vmatprep.subr.mxu0 0.0
        %2387 = vmatpush1.xpose.msra.mxu0 %v2382
        %2388 = vmatprep.subr.mxu0 0.0
        %2389 = vmatpush1.xpose.msra.mxu0 %v2384
        %2390 = vmatprep.subr.mxu0 0.0
        %2391 = vmatpush1.xpose.msra.mxu0 0.0
        %2392 = vmatprep.subr.mxu0 0.0
        %2393 = vmatpush1.xpose.msra.mxu0 0.0
        %2394 = vmatprep.subr.mxu0 0.0
        %2395 = vmatpush1.xpose.msra.mxu0 0.0
        %2396 = vmatprep.subr.mxu0 0.0
        %2397 = vmatpush1.xpose.msra.mxu0 0.0
        %2398 = vmatprep.subr.mxu0 0.0
        %2399 = vmatpush1.xpose.msra.mxu0 0.0
        %2400 = vmatprep.subr.mxu0 0.0
        %2401 = vmatpush1.xpose.msra.mxu0 0.0
        %2402 = vmatprep.subr.mxu0 0.0
        %2403 = vmatpush1.xpose.msra.mxu0 0.0
        %2404 = vmatprep.subr.mxu0 0.0
        %2405 = vmatpush1.xpose.msra.mxu0 0.0
        %2406 = vmatprep.subr.mxu0 0.0
        %2407 = vmatpush1.xpose.msra.mxu0 0.0
        %2408 = vmatprep.subr.mxu0 0.0
        %2409 = vmatpush1.xpose.msra.mxu0 0.0
        %2410 = vmatprep.subr.mxu0 0.0
        %2411 = vmatpush1.xpose.msra.mxu0 0.0
        %2412 = vmatprep.subr.mxu0 0.0
        %2413 = vmatpush1.xpose.msra.mxu0 0.0
        %2414 = vmatprep.subr.mxu0 0.0
        %2415 = vmatpush1.xpose.msra.mxu0 0.0
        %2416 = vmatprep.subr.mxu0 0.0
        %2417 = vmatpush1.xpose.msra.mxu0 0.0
        %2418 = vmatprep.subr.mxu0 0.0
        %2419 = vmatpush1.xpose.msra.mxu0 0.0
        %2420 = vmatprep.subr.mxu0 0.0
        %2421 = vmatpush1.xpose.msra.mxu0 0.0
        %2422 = vmatprep.subr.mxu0 0.0
        %2423 = vmatpush1.xpose.msra.mxu0 0.0
        %2424 = vmatprep.subr.mxu0 0.0
        %2425 = vmatpush1.xpose.msra.mxu0 0.0
        %2426 = vmatprep.subr.mxu0 0.0
        %2427 = vmatpush1.xpose.msra.mxu0 0.0
        %2428 = vmatprep.subr.mxu0 0.0
        %2429 = vmatpush1.xpose.msra.mxu0 0.0
        %2430 = vmatprep.subr.mxu0 0.0
        %2431 = vmatpush1.xpose.msra.mxu0 0.0
        %2432 = vmatprep.subr.mxu0 0.0
        %2433 = vmatpush1.xpose.msra.mxu0 0.0
        %2434 = vmatprep.subr.mxu0 0.0
        %2435 = vmatpush1.xpose.msra.mxu0 0.0
        %2436 = vmatprep.subr.mxu0 0.0
        %2437 = vmatpush1.xpose.msra.mxu0 0.0
        %2438 = vmatprep.subr.mxu0 0.0
        %2439 = vmatpush1.xpose.msra.mxu0 0.0
        %2440 = vmatprep.subr.mxu0 0.0
        %2441 = vmatpush1.xpose.msra.mxu0 0.0
        %2442 = vmatprep.subr.mxu0 0.0
        %2443 = vmatpush1.xpose.msra.mxu0 0.0
        %2444 = vmatprep.subr.mxu0 0.0
        %2445 = vmatpush1.xpose.msra.mxu0 0.0
        %2446 = vmatprep.subr.mxu0 0.0
        %2447 = vmatpush1.xpose.msra.mxu0 0.0
        %2448 = vmatprep.subr.mxu0 0.0
        %2449 = vmatpush1.xpose.msra.mxu0 0.0
        %2450 = vmatprep.mubr.f32.mxu0 0.0
        %2451 = vmatmul.mubr.f32.gmra.mrb[0].mxu0 %v2378
        %v2452 = vpop.f32.mrb[0].mxu0
        %v2453 = vadd.f32 0.0, %v2452
        %v2454 = vpop.f32.mrb[0].mxu0
        %2455 = vmatprep.mubr.f32.mxu0 0.0
        %2456 = vmatmul.mubr.f32.gmra.mrb[0].mxu0 %v2380
        %v2457 = vpop.f32.mrb[0].mxu0
        %v2458 = vadd.f32 0.0, %v2457
        %v2459 = vpop.f32.mrb[0].mxu0
        %2460 = vdwg.mxu0
        %2461 = vrot.lane.b32.xlu0 %v1415, 112
        %v2462 = vpop.permute.xlu0 %2461
        %2463 = vrot.lane.b32.xlu0 %v1418, 112
        %v2464 = vpop.permute.xlu0 %2463
        %2465 = vrot.lane.b32.xlu0 %v1485, 112
        %v2466 = vpop.permute.xlu0 %2465
        %2467 = vrot.lane.b32.xlu0 %v1488, 112
        %v2468 = vpop.permute.xlu0 %2467
        %v2469 = vsel %vm1562, %v2462, 0
        %v2471 = vsel %vm1562, %v2464, 0
        %v2473 = vsel %vm1562, %v2466, 0
        %v2475 = vsel %vm1562, %v2468, 0
        %2477 = vmatprep.subr.mxu0 0.0
        %2478 = vmatpush1.xpose.msra.mxu0 %v2473
        %2479 = vmatprep.subr.mxu0 0.0
        %2480 = vmatpush1.xpose.msra.mxu0 %v2475
        %2481 = vmatprep.subr.mxu0 0.0
        %2482 = vmatpush1.xpose.msra.mxu0 0.0
        %2483 = vmatprep.subr.mxu0 0.0
        %2484 = vmatpush1.xpose.msra.mxu0 0.0
        %2485 = vmatprep.subr.mxu0 0.0
        %2486 = vmatpush1.xpose.msra.mxu0 0.0
        %2487 = vmatprep.subr.mxu0 0.0
        %2488 = vmatpush1.xpose.msra.mxu0 0.0
        %2489 = vmatprep.subr.mxu0 0.0
        %2490 = vmatpush1.xpose.msra.mxu0 0.0
        %2491 = vmatprep.subr.mxu0 0.0
        %2492 = vmatpush1.xpose.msra.mxu0 0.0
        %2493 = vmatprep.subr.mxu0 0.0
        %2494 = vmatpush1.xpose.msra.mxu0 0.0
        %2495 = vmatprep.subr.mxu0 0.0
        %2496 = vmatpush1.xpose.msra.mxu0 0.0
        %2497 = vmatprep.subr.mxu0 0.0
        %2498 = vmatpush1.xpose.msra.mxu0 0.0
        %2499 = vmatprep.subr.mxu0 0.0
        %2500 = vmatpush1.xpose.msra.mxu0 0.0
        %2501 = vmatprep.subr.mxu0 0.0
        %2502 = vmatpush1.xpose.msra.mxu0 0.0
        %2503 = vmatprep.subr.mxu0 0.0
        %2504 = vmatpush1.xpose.msra.mxu0 0.0
        %2505 = vmatprep.subr.mxu0 0.0
        %2506 = vmatpush1.xpose.msra.mxu0 0.0
        %2507 = vmatprep.subr.mxu0 0.0
        %2508 = vmatpush1.xpose.msra.mxu0 0.0
        %2509 = vmatprep.subr.mxu0 0.0
        %2510 = vmatpush1.xpose.msra.mxu0 0.0
        %2511 = vmatprep.subr.mxu0 0.0
        %2512 = vmatpush1.xpose.msra.mxu0 0.0
        %2513 = vmatprep.subr.mxu0 0.0
        %2514 = vmatpush1.xpose.msra.mxu0 0.0
        %2515 = vmatprep.subr.mxu0 0.0
        %2516 = vmatpush1.xpose.msra.mxu0 0.0
        %2517 = vmatprep.subr.mxu0 0.0
        %2518 = vmatpush1.xpose.msra.mxu0 0.0
        %2519 = vmatprep.subr.mxu0 0.0
        %2520 = vmatpush1.xpose.msra.mxu0 0.0
        %2521 = vmatprep.subr.mxu0 0.0
        %2522 = vmatpush1.xpose.msra.mxu0 0.0
        %2523 = vmatprep.subr.mxu0 0.0
        %2524 = vmatpush1.xpose.msra.mxu0 0.0
        %2525 = vmatprep.subr.mxu0 0.0
        %2526 = vmatpush1.xpose.msra.mxu0 0.0
        %2527 = vmatprep.subr.mxu0 0.0
        %2528 = vmatpush1.xpose.msra.mxu0 0.0
        %2529 = vmatprep.subr.mxu0 0.0
        %2530 = vmatpush1.xpose.msra.mxu0 0.0
        %2531 = vmatprep.subr.mxu0 0.0
        %2532 = vmatpush1.xpose.msra.mxu0 0.0
        %2533 = vmatprep.subr.mxu0 0.0
        %2534 = vmatpush1.xpose.msra.mxu0 0.0
        %2535 = vmatprep.subr.mxu0 0.0
        %2536 = vmatpush1.xpose.msra.mxu0 0.0
        %2537 = vmatprep.subr.mxu0 0.0
        %2538 = vmatpush1.xpose.msra.mxu0 0.0
        %2539 = vmatprep.subr.mxu0 0.0
        %2540 = vmatpush1.xpose.msra.mxu0 0.0
        %2541 = vmatprep.mubr.f32.mxu0 0.0
        %2542 = vmatmul.mubr.f32.gmra.mrb[0].mxu0 %v2469
        %v2543 = vpop.f32.mrb[0].mxu0
        %v2544 = vadd.f32 0.0, %v2543
        %v2545 = vpop.f32.mrb[0].mxu0
        %2546 = vmatprep.mubr.f32.mxu0 0.0
        %2547 = vmatmul.mubr.f32.gmra.mrb[0].mxu0 %v2471
        %v2548 = vpop.f32.mrb[0].mxu0
        %v2549 = vadd.f32 0.0, %v2548
        %v2550 = vpop.f32.mrb[0].mxu0
        %2551 = vdwg.mxu0
        %v2552 = vmul.f32 %v2453, 0.35355338
        %v2553 = vmul.f32 %v2458, 0.35355338
        %v2554 = vmul.f32 %v2544, 0.35355338
        %v2555 = vmul.f32 %v2549, 0.35355338
        %v2556 = vadd.f32 %v2552, %v1745
        %v2557 = vadd.f32 %v2553, %v1745
        %v2558 = vadd.f32 %v2554, %v1745
        %v2559 = vadd.f32 %v2555, %v1745
        %v2560 = vsel %vm1751, %v2556, -inf
        %2561 = vmax.xlane.f32.xlu0 %v2560
        %v2562 = vpop.xlane.xlu0 %2561
        %v2563 = vsel %vm1751, %v2557, -inf
        %2564 = vmax.xlane.f32.xlu0 %v2563
        %v2565 = vpop.xlane.xlu0 %2564
        %v2566 = vsel %vm1751, %v2558, -inf
        %2567 = vmax.xlane.f32.xlu0 %v2566
        %v2568 = vpop.xlane.xlu0 %2567
        %v2569 = vsel %vm1751, %v2559, -inf
        %2570 = vmax.xlane.f32.xlu0 %v2569
        %v2571 = vpop.xlane.xlu0 %2570
        %v2572 = vsub.f32 %v2556, %v2562
        %v2573 = vsub.f32 %v2557, %v2565
        %v2574 = vsub.f32 %v2558, %v2568
        %v2575 = vsub.f32 %v2559, %v2571
        %v2576 = vmul.f32 %v2572, 1.442695
        %v2577 = vpow.pop %v2576
        %v2578 = vmul.f32 %v2573, 1.442695
        %v2579 = vpow.pop %v2578
        %v2580 = vmul.f32 %v2574, 1.442695
        %v2581 = vpow.pop %v2580
        %v2582 = vmul.f32 %v2575, 1.442695
        %v2583 = vpow.pop %v2582
        %v2584 = vsel %vm1751, %v2577, 0.0
        %2585 = vadd.xlane.f32.xlu0 %v2584
        %v2586 = vpop.xlane.xlu0 %2585
        %v2587 = vsel %vm1751, %v2579, 0.0
        %2588 = vadd.xlane.f32.xlu0 %v2587
        %v2589 = vpop.xlane.xlu0 %2588
        %v2590 = vsel %vm1751, %v2581, 0.0
        %2591 = vadd.xlane.f32.xlu0 %v2590
        %v2592 = vpop.xlane.xlu0 %2591
        %v2593 = vsel %vm1751, %v2583, 0.0
        %2594 = vadd.xlane.f32.xlu0 %v2593
        %v2595 = vpop.xlane.xlu0 %2594
        %v2596 = vrcp.pop %v2586
        %v2597 = vrcp.pop %v2589
        %v2598 = vrcp.pop %v2592
        %v2599 = vrcp.pop %v2595
        %v2600 = vmul.f32 %v2577, %v2596
        %v2601 = vmul.f32 %v2579, %v2597
        %v2602 = vmul.f32 %v2581, %v2598
        %v2603 = vmul.f32 %v2583, %v2599
        %2604 = vrot.lane.b32.xlu0 %v1547, 112
        %v2605 = vpop.permute.xlu0 %2604
        %2606 = vrot.lane.b32.xlu0 %v1550, 112
        %v2607 = vpop.permute.xlu0 %2606
        %v2611 = vsel %vm1751, %v2600, 0
        %v2614 = vsel %vm1751, %v2601, 0
        %2616 = vmatprep.subr.mxu0 0.0
        %2617 = vmatpush1.msra.mxu0 %v2605
        %2618 = vmatprep.subr.mxu0 0.0
        %2619 = vmatpush1.msra.mxu0 %v2607
        %2620 = vmatprep.subr.mxu0 0.0
        %2621 = vmatpush1.msra.mxu0 0.0
        %2622 = vmatprep.subr.mxu0 0.0
        %2623 = vmatpush1.msra.mxu0 0.0
        %2624 = vmatprep.subr.mxu0 0.0
        %2625 = vmatpush1.msra.mxu0 0.0
        %2626 = vmatprep.subr.mxu0 0.0
        %2627 = vmatpush1.msra.mxu0 0.0
        %2628 = vmatprep.subr.mxu0 0.0
        %2629 = vmatpush1.msra.mxu0 0.0
        %2630 = vmatprep.subr.mxu0 0.0
        %2631 = vmatpush1.msra.mxu0 0.0
        %2632 = vmatprep.subr.mxu0 0.0
        %2633 = vmatpush1.msra.mxu0 0.0
        %2634 = vmatprep.subr.mxu0 0.0
        %2635 = vmatpush1.msra.mxu0 0.0
        %2636 = vmatprep.subr.mxu0 0.0
        %2637 = vmatpush1.msra.mxu0 0.0
        %2638 = vmatprep.subr.mxu0 0.0
        %2639 = vmatpush1.msra.mxu0 0.0
        %2640 = vmatprep.subr.mxu0 0.0
        %2641 = vmatpush1.msra.mxu0 0.0
        %2642 = vmatprep.subr.mxu0 0.0
        %2643 = vmatpush1.msra.mxu0 0.0
        %2644 = vmatprep.subr.mxu0 0.0
        %2645 = vmatpush1.msra.mxu0 0.0
        %2646 = vmatprep.subr.mxu0 0.0
        %2647 = vmatpush1.msra.mxu0 0.0
        %2648 = vmatprep.subr.mxu0 0.0
        %2649 = vmatpush1.msra.mxu0 0.0
        %2650 = vmatprep.subr.mxu0 0.0
        %2651 = vmatpush1.msra.mxu0 0.0
        %2652 = vmatprep.subr.mxu0 0.0
        %2653 = vmatpush1.msra.mxu0 0.0
        %2654 = vmatprep.subr.mxu0 0.0
        %2655 = vmatpush1.msra.mxu0 0.0
        %2656 = vmatprep.subr.mxu0 0.0
        %2657 = vmatpush1.msra.mxu0 0.0
        %2658 = vmatprep.subr.mxu0 0.0
        %2659 = vmatpush1.msra.mxu0 0.0
        %2660 = vmatprep.subr.mxu0 0.0
        %2661 = vmatpush1.msra.mxu0 0.0
        %2662 = vmatprep.subr.mxu0 0.0
        %2663 = vmatpush1.msra.mxu0 0.0
        %2664 = vmatprep.subr.mxu0 0.0
        %2665 = vmatpush1.msra.mxu0 0.0
        %2666 = vmatprep.subr.mxu0 0.0
        %2667 = vmatpush1.msra.mxu0 0.0
        %2668 = vmatprep.subr.mxu0 0.0
        %2669 = vmatpush1.msra.mxu0 0.0
        %2670 = vmatprep.subr.mxu0 0.0
        %2671 = vmatpush1.msra.mxu0 0.0
        %2672 = vmatprep.subr.mxu0 0.0
        %2673 = vmatpush1.msra.mxu0 0.0
        %2674 = vmatprep.subr.mxu0 0.0
        %2675 = vmatpush1.msra.mxu0 0.0
        %2676 = vmatprep.subr.mxu0 0.0
        %2677 = vmatpush1.msra.mxu0 0.0
        %2678 = vmatprep.subr.mxu0 0.0
        %2679 = vmatpush1.msra.mxu0 0.0
        %2680 = vmatprep.mubr.f32.mxu0 0.0
        %2681 = vmatmul.mubr.f32.gmra.mrb[0].mxu0 %v2611
        %v2682 = vpop.f32.mrb[0].mxu0
        %v2683 = vadd.f32 0.0, %v2682
        %v2684 = vpop.f32.mrb[0].mxu0
        %2685 = vmatprep.mubr.f32.mxu0 0.0
        %2686 = vmatmul.mubr.f32.gmra.mrb[0].mxu0 %v2614
        %v2687 = vpop.f32.mrb[0].mxu0
        %v2688 = vadd.f32 0.0, %v2687
        %v2689 = vpop.f32.mrb[0].mxu0
        %2690 = vdwg.mxu0
        %2691 = vrot.lane.b32.xlu0 %v1555, 112
        %v2692 = vpop.permute.xlu0 %2691
        %2693 = vrot.lane.b32.xlu0 %v1558, 112
        %v2694 = vpop.permute.xlu0 %2693
        %v2698 = vsel %vm1751, %v2602, 0
        %v2701 = vsel %vm1751, %v2603, 0
        %2703 = vmatprep.subr.mxu0 0.0
        %2704 = vmatpush1.msra.mxu0 %v2692
        %2705 = vmatprep.subr.mxu0 0.0
        %2706 = vmatpush1.msra.mxu0 %v2694
        %2707 = vmatprep.subr.mxu0 0.0
        %2708 = vmatpush1.msra.mxu0 0.0
        %2709 = vmatprep.subr.mxu0 0.0
        %2710 = vmatpush1.msra.mxu0 0.0
        %2711 = vmatprep.subr.mxu0 0.0
        %2712 = vmatpush1.msra.mxu0 0.0
        %2713 = vmatprep.subr.mxu0 0.0
        %2714 = vmatpush1.msra.mxu0 0.0
        %2715 = vmatprep.subr.mxu0 0.0
        %2716 = vmatpush1.msra.mxu0 0.0
        %2717 = vmatprep.subr.mxu0 0.0
        %2718 = vmatpush1.msra.mxu0 0.0
        %2719 = vmatprep.subr.mxu0 0.0
        %2720 = vmatpush1.msra.mxu0 0.0
        %2721 = vmatprep.subr.mxu0 0.0
        %2722 = vmatpush1.msra.mxu0 0.0
        %2723 = vmatprep.subr.mxu0 0.0
        %2724 = vmatpush1.msra.mxu0 0.0
        %2725 = vmatprep.subr.mxu0 0.0
        %2726 = vmatpush1.msra.mxu0 0.0
        %2727 = vmatprep.subr.mxu0 0.0
        %2728 = vmatpush1.msra.mxu0 0.0
        %2729 = vmatprep.subr.mxu0 0.0
        %2730 = vmatpush1.msra.mxu0 0.0
        %2731 = vmatprep.subr.mxu0 0.0
        %2732 = vmatpush1.msra.mxu0 0.0
        %2733 = vmatprep.subr.mxu0 0.0
        %2734 = vmatpush1.msra.mxu0 0.0
        %2735 = vmatprep.subr.mxu0 0.0
        %2736 = vmatpush1.msra.mxu0 0.0
        %2737 = vmatprep.subr.mxu0 0.0
        %2738 = vmatpush1.msra.mxu0 0.0
        %2739 = vmatprep.subr.mxu0 0.0
        %2740 = vmatpush1.msra.mxu0 0.0
        %2741 = vmatprep.subr.mxu0 0.0
        %2742 = vmatpush1.msra.mxu0 0.0
        %2743 = vmatprep.subr.mxu0 0.0
        %2744 = vmatpush1.msra.mxu0 0.0
        %2745 = vmatprep.subr.mxu0 0.0
        %2746 = vmatpush1.msra.mxu0 0.0
        %2747 = vmatprep.subr.mxu0 0.0
        %2748 = vmatpush1.msra.mxu0 0.0
        %2749 = vmatprep.subr.mxu0 0.0
        %2750 = vmatpush1.msra.mxu0 0.0
        %2751 = vmatprep.subr.mxu0 0.0
        %2752 = vmatpush1.msra.mxu0 0.0
        %2753 = vmatprep.subr.mxu0 0.0
        %2754 = vmatpush1.msra.mxu0 0.0
        %2755 = vmatprep.subr.mxu0 0.0
        %2756 = vmatpush1.msra.mxu0 0.0
        %2757 = vmatprep.subr.mxu0 0.0
        %2758 = vmatpush1.msra.mxu0 0.0
        %2759 = vmatprep.subr.mxu0 0.0
        %2760 = vmatpush1.msra.mxu0 0.0
        %2761 = vmatprep.subr.mxu0 0.0
        %2762 = vmatpush1.msra.mxu0 0.0
        %2763 = vmatprep.subr.mxu0 0.0
        %2764 = vmatpush1.msra.mxu0 0.0
        %2765 = vmatprep.subr.mxu0 0.0
        %2766 = vmatpush1.msra.mxu0 0.0
        %2767 = vmatprep.mubr.f32.mxu0 0.0
        %2768 = vmatmul.mubr.f32.gmra.mrb[0].mxu0 %v2698
        %v2769 = vpop.f32.mrb[0].mxu0
        %v2770 = vadd.f32 0.0, %v2769
        %v2771 = vpop.f32.mrb[0].mxu0
        %2772 = vmatprep.mubr.f32.mxu0 0.0
        %2773 = vmatmul.mubr.f32.gmra.mrb[0].mxu0 %v2701
        %v2774 = vpop.f32.mrb[0].mxu0
        %v2775 = vadd.f32 0.0, %v2774
        %v2776 = vpop.f32.mrb[0].mxu0
        %2777 = vdwg.mxu0
        %2778 = vrot.lane.b32.xlu0 %v1407, 104
        %v2779 = vpop.permute.xlu0 %2778
        %2780 = vrot.lane.b32.xlu0 %v1410, 104
        %v2781 = vpop.permute.xlu0 %2780
        %2782 = vrot.lane.b32.xlu0 %v1477, 104
        %v2783 = vpop.permute.xlu0 %2782
        %2784 = vrot.lane.b32.xlu0 %v1480, 104
        %v2785 = vpop.permute.xlu0 %2784
        %v2786 = vsel %vm1562, %v2779, 0
        %v2788 = vsel %vm1562, %v2781, 0
        %v2790 = vsel %vm1562, %v2783, 0
        %v2792 = vsel %vm1562, %v2785, 0
        %2794 = vmatprep.subr.mxu0 0.0
        %2795 = vmatpush1.xpose.msra.mxu0 %v2790
        %2796 = vmatprep.subr.mxu0 0.0
        %2797 = vmatpush1.xpose.msra.mxu0 %v2792
        %2798 = vmatprep.subr.mxu0 0.0
        %2799 = vmatpush1.xpose.msra.mxu0 0.0
        %2800 = vmatprep.subr.mxu0 0.0
        %2801 = vmatpush1.xpose.msra.mxu0 0.0
        %2802 = vmatprep.subr.mxu0 0.0
        %2803 = vmatpush1.xpose.msra.mxu0 0.0
        %2804 = vmatprep.subr.mxu0 0.0
        %2805 = vmatpush1.xpose.msra.mxu0 0.0
        %2806 = vmatprep.subr.mxu0 0.0
        %2807 = vmatpush1.xpose.msra.mxu0 0.0
        %2808 = vmatprep.subr.mxu0 0.0
        %2809 = vmatpush1.xpose.msra.mxu0 0.0
        %2810 = vmatprep.subr.mxu0 0.0
        %2811 = vmatpush1.xpose.msra.mxu0 0.0
        %2812 = vmatprep.subr.mxu0 0.0
        %2813 = vmatpush1.xpose.msra.mxu0 0.0
        %2814 = vmatprep.subr.mxu0 0.0
        %2815 = vmatpush1.xpose.msra.mxu0 0.0
        %2816 = vmatprep.subr.mxu0 0.0
        %2817 = vmatpush1.xpose.msra.mxu0 0.0
        %2818 = vmatprep.subr.mxu0 0.0
        %2819 = vmatpush1.xpose.msra.mxu0 0.0
        %2820 = vmatprep.subr.mxu0 0.0
        %2821 = vmatpush1.xpose.msra.mxu0 0.0
        %2822 = vmatprep.subr.mxu0 0.0
        %2823 = vmatpush1.xpose.msra.mxu0 0.0
        %2824 = vmatprep.subr.mxu0 0.0
        %2825 = vmatpush1.xpose.msra.mxu0 0.0
        %2826 = vmatprep.subr.mxu0 0.0
        %2827 = vmatpush1.xpose.msra.mxu0 0.0
        %2828 = vmatprep.subr.mxu0 0.0
        %2829 = vmatpush1.xpose.msra.mxu0 0.0
        %2830 = vmatprep.subr.mxu0 0.0
        %2831 = vmatpush1.xpose.msra.mxu0 0.0
        %2832 = vmatprep.subr.mxu0 0.0
        %2833 = vmatpush1.xpose.msra.mxu0 0.0
        %2834 = vmatprep.subr.mxu0 0.0
        %2835 = vmatpush1.xpose.msra.mxu0 0.0
        %2836 = vmatprep.subr.mxu0 0.0
        %2837 = vmatpush1.xpose.msra.mxu0 0.0
        %2838 = vmatprep.subr.mxu0 0.0
        %2839 = vmatpush1.xpose.msra.mxu0 0.0
        %2840 = vmatprep.subr.mxu0 0.0
        %2841 = vmatpush1.xpose.msra.mxu0 0.0
        %2842 = vmatprep.subr.mxu0 0.0
        %2843 = vmatpush1.xpose.msra.mxu0 0.0
        %2844 = vmatprep.subr.mxu0 0.0
        %2845 = vmatpush1.xpose.msra.mxu0 0.0
        %2846 = vmatprep.subr.mxu0 0.0
        %2847 = vmatpush1.xpose.msra.mxu0 0.0
        %2848 = vmatprep.subr.mxu0 0.0
        %2849 = vmatpush1.xpose.msra.mxu0 0.0
        %2850 = vmatprep.subr.mxu0 0.0
        %2851 = vmatpush1.xpose.msra.mxu0 0.0
        %2852 = vmatprep.subr.mxu0 0.0
        %2853 = vmatpush1.xpose.msra.mxu0 0.0
        %2854 = vmatprep.subr.mxu0 0.0
        %2855 = vmatpush1.xpose.msra.mxu0 0.0
        %2856 = vmatprep.subr.mxu0 0.0
        %2857 = vmatpush1.xpose.msra.mxu0 0.0
        %2858 = vmatprep.mubr.f32.mxu0 0.0
        %2859 = vmatmul.mubr.f32.gmra.mrb[0].mxu0 %v2786
        %v2860 = vpop.f32.mrb[0].mxu0
        %v2861 = vadd.f32 0.0, %v2860
        %v2862 = vpop.f32.mrb[0].mxu0
        %2863 = vmatprep.mubr.f32.mxu0 0.0
        %2864 = vmatmul.mubr.f32.gmra.mrb[0].mxu0 %v2788
        %v2865 = vpop.f32.mrb[0].mxu0
        %v2866 = vadd.f32 0.0, %v2865
        %v2867 = vpop.f32.mrb[0].mxu0
        %2868 = vdwg.mxu0
        %2869 = vrot.lane.b32.xlu0 %v1415, 104
        %v2870 = vpop.permute.xlu0 %2869
        %2871 = vrot.lane.b32.xlu0 %v1418, 104
        %v2872 = vpop.permute.xlu0 %2871
        %2873 = vrot.lane.b32.xlu0 %v1485, 104
        %v2874 = vpop.permute.xlu0 %2873
        %2875 = vrot.lane.b32.xlu0 %v1488, 104
        %v2876 = vpop.permute.xlu0 %2875
        %v2877 = vsel %vm1562, %v2870, 0
        %v2879 = vsel %vm1562, %v2872, 0
        %v2881 = vsel %vm1562, %v2874, 0
        %v2883 = vsel %vm1562, %v2876, 0
        %2885 = vmatprep.subr.mxu0 0.0
        %2886 = vmatpush1.xpose.msra.mxu0 %v2881
        %2887 = vmatprep.subr.mxu0 0.0
        %2888 = vmatpush1.xpose.msra.mxu0 %v2883
        %2889 = vmatprep.subr.mxu0 0.0
        %2890 = vmatpush1.xpose.msra.mxu0 0.0
        %2891 = vmatprep.subr.mxu0 0.0
        %2892 = vmatpush1.xpose.msra.mxu0 0.0
        %2893 = vmatprep.subr.mxu0 0.0
        %2894 = vmatpush1.xpose.msra.mxu0 0.0
        %2895 = vmatprep.subr.mxu0 0.0
        %2896 = vmatpush1.xpose.msra.mxu0 0.0
        %2897 = vmatprep.subr.mxu0 0.0
        %2898 = vmatpush1.xpose.msra.mxu0 0.0
        %2899 = vmatprep.subr.mxu0 0.0
        %2900 = vmatpush1.xpose.msra.mxu0 0.0
        %2901 = vmatprep.subr.mxu0 0.0
        %2902 = vmatpush1.xpose.msra.mxu0 0.0
        %2903 = vmatprep.subr.mxu0 0.0
        %2904 = vmatpush1.xpose.msra.mxu0 0.0
        %2905 = vmatprep.subr.mxu0 0.0
        %2906 = vmatpush1.xpose.msra.mxu0 0.0
        %2907 = vmatprep.subr.mxu0 0.0
        %2908 = vmatpush1.xpose.msra.mxu0 0.0
        %2909 = vmatprep.subr.mxu0 0.0
        %2910 = vmatpush1.xpose.msra.mxu0 0.0
        %2911 = vmatprep.subr.mxu0 0.0
        %2912 = vmatpush1.xpose.msra.mxu0 0.0
        %2913 = vmatprep.subr.mxu0 0.0
        %2914 = vmatpush1.xpose.msra.mxu0 0.0
        %2915 = vmatprep.subr.mxu0 0.0
        %2916 = vmatpush1.xpose.msra.mxu0 0.0
        %2917 = vmatprep.subr.mxu0 0.0
        %2918 = vmatpush1.xpose.msra.mxu0 0.0
        %2919 = vmatprep.subr.mxu0 0.0
        %2920 = vmatpush1.xpose.msra.mxu0 0.0
        %2921 = vmatprep.subr.mxu0 0.0
        %2922 = vmatpush1.xpose.msra.mxu0 0.0
        %2923 = vmatprep.subr.mxu0 0.0
        %2924 = vmatpush1.xpose.msra.mxu0 0.0
        %2925 = vmatprep.subr.mxu0 0.0
        %2926 = vmatpush1.xpose.msra.mxu0 0.0
        %2927 = vmatprep.subr.mxu0 0.0
        %2928 = vmatpush1.xpose.msra.mxu0 0.0
        %2929 = vmatprep.subr.mxu0 0.0
        %2930 = vmatpush1.xpose.msra.mxu0 0.0
        %2931 = vmatprep.subr.mxu0 0.0
        %2932 = vmatpush1.xpose.msra.mxu0 0.0
        %2933 = vmatprep.subr.mxu0 0.0
        %2934 = vmatpush1.xpose.msra.mxu0 0.0
        %2935 = vmatprep.subr.mxu0 0.0
        %2936 = vmatpush1.xpose.msra.mxu0 0.0
        %2937 = vmatprep.subr.mxu0 0.0
        %2938 = vmatpush1.xpose.msra.mxu0 0.0
        %2939 = vmatprep.subr.mxu0 0.0
        %2940 = vmatpush1.xpose.msra.mxu0 0.0
        %2941 = vmatprep.subr.mxu0 0.0
        %2942 = vmatpush1.xpose.msra.mxu0 0.0
        %2943 = vmatprep.subr.mxu0 0.0
        %2944 = vmatpush1.xpose.msra.mxu0 0.0
        %2945 = vmatprep.subr.mxu0 0.0
        %2946 = vmatpush1.xpose.msra.mxu0 0.0
        %2947 = vmatprep.subr.mxu0 0.0
        %2948 = vmatpush1.xpose.msra.mxu0 0.0
        %2949 = vmatprep.mubr.f32.mxu0 0.0
        %2950 = vmatmul.mubr.f32.gmra.mrb[0].mxu0 %v2877
        %v2951 = vpop.f32.mrb[0].mxu0
        %v2952 = vadd.f32 0.0, %v2951
        %v2953 = vpop.f32.mrb[0].mxu0
        %2954 = vmatprep.mubr.f32.mxu0 0.0
        %2955 = vmatmul.mubr.f32.gmra.mrb[0].mxu0 %v2879
        %v2956 = vpop.f32.mrb[0].mxu0
        %v2957 = vadd.f32 0.0, %v2956
        %v2958 = vpop.f32.mrb[0].mxu0
        %2959 = vdwg.mxu0
        %v2960 = vmul.f32 %v2861, 0.35355338
        %v2961 = vmul.f32 %v2866, 0.35355338
        %v2962 = vmul.f32 %v2952, 0.35355338
        %v2963 = vmul.f32 %v2957, 0.35355338
        %v2964 = vadd.f32 %v2960, %v1745
        %v2965 = vadd.f32 %v2961, %v1745
        %v2966 = vadd.f32 %v2962, %v1745
        %v2967 = vadd.f32 %v2963, %v1745
        %v2968 = vsel %vm1751, %v2964, -inf
        %2969 = vmax.xlane.f32.xlu0 %v2968
        %v2970 = vpop.xlane.xlu0 %2969
        %v2971 = vsel %vm1751, %v2965, -inf
        %2972 = vmax.xlane.f32.xlu0 %v2971
        %v2973 = vpop.xlane.xlu0 %2972
        %v2974 = vsel %vm1751, %v2966, -inf
        %2975 = vmax.xlane.f32.xlu0 %v2974
        %v2976 = vpop.xlane.xlu0 %2975
        %v2977 = vsel %vm1751, %v2967, -inf
        %2978 = vmax.xlane.f32.xlu0 %v2977
        %v2979 = vpop.xlane.xlu0 %2978
        %v2980 = vsub.f32 %v2964, %v2970
        %v2981 = vsub.f32 %v2965, %v2973
        %v2982 = vsub.f32 %v2966, %v2976
        %v2983 = vsub.f32 %v2967, %v2979
        %v2984 = vmul.f32 %v2980, 1.442695
        %v2985 = vpow.pop %v2984
        %v2986 = vmul.f32 %v2981, 1.442695
        %v2987 = vpow.pop %v2986
        %v2988 = vmul.f32 %v2982, 1.442695
        %v2989 = vpow.pop %v2988
        %v2990 = vmul.f32 %v2983, 1.442695
        %v2991 = vpow.pop %v2990
        %v2992 = vsel %vm1751, %v2985, 0.0
        %2993 = vadd.xlane.f32.xlu0 %v2992
        %v2994 = vpop.xlane.xlu0 %2993
        %v2995 = vsel %vm1751, %v2987, 0.0
        %2996 = vadd.xlane.f32.xlu0 %v2995
        %v2997 = vpop.xlane.xlu0 %2996
        %v2998 = vsel %vm1751, %v2989, 0.0
        %2999 = vadd.xlane.f32.xlu0 %v2998
        %v3000 = vpop.xlane.xlu0 %2999
        %v3001 = vsel %vm1751, %v2991, 0.0
        %3002 = vadd.xlane.f32.xlu0 %v3001
        %v3003 = vpop.xlane.xlu0 %3002
        %v3004 = vrcp.pop %v2994
        %v3005 = vrcp.pop %v2997
        %v3006 = vrcp.pop %v3000
        %v3007 = vrcp.pop %v3003
        %v3008 = vmul.f32 %v2985, %v3004
        %v3009 = vmul.f32 %v2987, %v3005
        %v3010 = vmul.f32 %v2989, %v3006
        %v3011 = vmul.f32 %v2991, %v3007
        %3012 = vrot.lane.b32.xlu0 %v1547, 104
        %v3013 = vpop.permute.xlu0 %3012
        %3014 = vrot.lane.b32.xlu0 %v1550, 104
        %v3015 = vpop.permute.xlu0 %3014
        %v3019 = vsel %vm1751, %v3008, 0
        %v3022 = vsel %vm1751, %v3009, 0
        %3024 = vmatprep.subr.mxu0 0.0
        %3025 = vmatpush1.msra.mxu0 %v3013
        %3026 = vmatprep.subr.mxu0 0.0
        %3027 = vmatpush1.msra.mxu0 %v3015
        %3028 = vmatprep.subr.mxu0 0.0
        %3029 = vmatpush1.msra.mxu0 0.0
        %3030 = vmatprep.subr.mxu0 0.0
        %3031 = vmatpush1.msra.mxu0 0.0
        %3032 = vmatprep.subr.mxu0 0.0
        %3033 = vmatpush1.msra.mxu0 0.0
        %3034 = vmatprep.subr.mxu0 0.0
        %3035 = vmatpush1.msra.mxu0 0.0
        %3036 = vmatprep.subr.mxu0 0.0
        %3037 = vmatpush1.msra.mxu0 0.0
        %3038 = vmatprep.subr.mxu0 0.0
        %3039 = vmatpush1.msra.mxu0 0.0
        %3040 = vmatprep.subr.mxu0 0.0
        %3041 = vmatpush1.msra.mxu0 0.0
        %3042 = vmatprep.subr.mxu0 0.0
        %3043 = vmatpush1.msra.mxu0 0.0
        %3044 = vmatprep.subr.mxu0 0.0
        %3045 = vmatpush1.msra.mxu0 0.0
        %3046 = vmatprep.subr.mxu0 0.0
        %3047 = vmatpush1.msra.mxu0 0.0
        %3048 = vmatprep.subr.mxu0 0.0
        %3049 = vmatpush1.msra.mxu0 0.0
        %3050 = vmatprep.subr.mxu0 0.0
        %3051 = vmatpush1.msra.mxu0 0.0
        %3052 = vmatprep.subr.mxu0 0.0
        %3053 = vmatpush1.msra.mxu0 0.0
        %3054 = vmatprep.subr.mxu0 0.0
        %3055 = vmatpush1.msra.mxu0 0.0
        %3056 = vmatprep.subr.mxu0 0.0
        %3057 = vmatpush1.msra.mxu0 0.0
        %3058 = vmatprep.subr.mxu0 0.0
        %3059 = vmatpush1.msra.mxu0 0.0
        %3060 = vmatprep.subr.mxu0 0.0
        %3061 = vmatpush1.msra.mxu0 0.0
        %3062 = vmatprep.subr.mxu0 0.0
        %3063 = vmatpush1.msra.mxu0 0.0
        %3064 = vmatprep.subr.mxu0 0.0
        %3065 = vmatpush1.msra.mxu0 0.0
        %3066 = vmatprep.subr.mxu0 0.0
        %3067 = vmatpush1.msra.mxu0 0.0
        %3068 = vmatprep.subr.mxu0 0.0
        %3069 = vmatpush1.msra.mxu0 0.0
        %3070 = vmatprep.subr.mxu0 0.0
        %3071 = vmatpush1.msra.mxu0 0.0
        %3072 = vmatprep.subr.mxu0 0.0
        %3073 = vmatpush1.msra.mxu0 0.0
        %3074 = vmatprep.subr.mxu0 0.0
        %3075 = vmatpush1.msra.mxu0 0.0
        %3076 = vmatprep.subr.mxu0 0.0
        %3077 = vmatpush1.msra.mxu0 0.0
        %3078 = vmatprep.subr.mxu0 0.0
        %3079 = vmatpush1.msra.mxu0 0.0
        %3080 = vmatprep.subr.mxu0 0.0
        %3081 = vmatpush1.msra.mxu0 0.0
        %3082 = vmatprep.subr.mxu0 0.0
        %3083 = vmatpush1.msra.mxu0 0.0
        %3084 = vmatprep.subr.mxu0 0.0
        %3085 = vmatpush1.msra.mxu0 0.0
        %3086 = vmatprep.subr.mxu0 0.0
        %3087 = vmatpush1.msra.mxu0 0.0
        %3088 = vmatprep.mubr.f32.mxu0 0.0
        %3089 = vmatmul.mubr.f32.gmra.mrb[0].mxu0 %v3019
        %v3090 = vpop.f32.mrb[0].mxu0
        %v3091 = vadd.f32 0.0, %v3090
        %v3092 = vpop.f32.mrb[0].mxu0
        %3093 = vmatprep.mubr.f32.mxu0 0.0
        %3094 = vmatmul.mubr.f32.gmra.mrb[0].mxu0 %v3022
        %v3095 = vpop.f32.mrb[0].mxu0
        %v3096 = vadd.f32 0.0, %v3095
        %v3097 = vpop.f32.mrb[0].mxu0
        %3098 = vdwg.mxu0
        %3099 = vrot.lane.b32.xlu0 %v1555, 104
        %v3100 = vpop.permute.xlu0 %3099
        %3101 = vrot.lane.b32.xlu0 %v1558, 104
        %v3102 = vpop.permute.xlu0 %3101
        %v3106 = vsel %vm1751, %v3010, 0
        %v3109 = vsel %vm1751, %v3011, 0
        %3111 = vmatprep.subr.mxu0 0.0
        %3112 = vmatpush1.msra.mxu0 %v3100
        %3113 = vmatprep.subr.mxu0 0.0
        %3114 = vmatpush1.msra.mxu0 %v3102
        %3115 = vmatprep.subr.mxu0 0.0
        %3116 = vmatpush1.msra.mxu0 0.0
        %3117 = vmatprep.subr.mxu0 0.0
        %3118 = vmatpush1.msra.mxu0 0.0
        %3119 = vmatprep.subr.mxu0 0.0
        %3120 = vmatpush1.msra.mxu0 0.0
        %3121 = vmatprep.subr.mxu0 0.0
        %3122 = vmatpush1.msra.mxu0 0.0
        %3123 = vmatprep.subr.mxu0 0.0
        %3124 = vmatpush1.msra.mxu0 0.0
        %3125 = vmatprep.subr.mxu0 0.0
        %3126 = vmatpush1.msra.mxu0 0.0
        %3127 = vmatprep.subr.mxu0 0.0
        %3128 = vmatpush1.msra.mxu0 0.0
        %3129 = vmatprep.subr.mxu0 0.0
        %3130 = vmatpush1.msra.mxu0 0.0
        %3131 = vmatprep.subr.mxu0 0.0
        %3132 = vmatpush1.msra.mxu0 0.0
        %3133 = vmatprep.subr.mxu0 0.0
        %3134 = vmatpush1.msra.mxu0 0.0
        %3135 = vmatprep.subr.mxu0 0.0
        %3136 = vmatpush1.msra.mxu0 0.0
        %3137 = vmatprep.subr.mxu0 0.0
        %3138 = vmatpush1.msra.mxu0 0.0
        %3139 = vmatprep.subr.mxu0 0.0
        %3140 = vmatpush1.msra.mxu0 0.0
        %3141 = vmatprep.subr.mxu0 0.0
        %3142 = vmatpush1.msra.mxu0 0.0
        %3143 = vmatprep.subr.mxu0 0.0
        %3144 = vmatpush1.msra.mxu0 0.0
        %3145 = vmatprep.subr.mxu0 0.0
        %3146 = vmatpush1.msra.mxu0 0.0
        %3147 = vmatprep.subr.mxu0 0.0
        %3148 = vmatpush1.msra.mxu0 0.0
        %3149 = vmatprep.subr.mxu0 0.0
        %3150 = vmatpush1.msra.mxu0 0.0
        %3151 = vmatprep.subr.mxu0 0.0
        %3152 = vmatpush1.msra.mxu0 0.0
        %3153 = vmatprep.subr.mxu0 0.0
        %3154 = vmatpush1.msra.mxu0 0.0
        %3155 = vmatprep.subr.mxu0 0.0
        %3156 = vmatpush1.msra.mxu0 0.0
        %3157 = vmatprep.subr.mxu0 0.0
        %3158 = vmatpush1.msra.mxu0 0.0
        %3159 = vmatprep.subr.mxu0 0.0
        %3160 = vmatpush1.msra.mxu0 0.0
        %3161 = vmatprep.subr.mxu0 0.0
        %3162 = vmatpush1.msra.mxu0 0.0
        %3163 = vmatprep.subr.mxu0 0.0
        %3164 = vmatpush1.msra.mxu0 0.0
        %3165 = vmatprep.subr.mxu0 0.0
        %3166 = vmatpush1.msra.mxu0 0.0
        %3167 = vmatprep.subr.mxu0 0.0
        %3168 = vmatpush1.msra.mxu0 0.0
        %3169 = vmatprep.subr.mxu0 0.0
        %3170 = vmatpush1.msra.mxu0 0.0
        %3171 = vmatprep.subr.mxu0 0.0
        %3172 = vmatpush1.msra.mxu0 0.0
        %3173 = vmatprep.subr.mxu0 0.0
        %3174 = vmatpush1.msra.mxu0 0.0
        %3175 = vmatprep.mubr.f32.mxu0 0.0
        %3176 = vmatmul.mubr.f32.gmra.mrb[0].mxu0 %v3106
        %v3177 = vpop.f32.mrb[0].mxu0
        %v3178 = vadd.f32 0.0, %v3177
        %v3179 = vpop.f32.mrb[0].mxu0
        %3180 = vmatprep.mubr.f32.mxu0 0.0
        %3181 = vmatmul.mubr.f32.gmra.mrb[0].mxu0 %v3109
        %v3182 = vpop.f32.mrb[0].mxu0
        %v3183 = vadd.f32 0.0, %v3182
        %v3184 = vpop.f32.mrb[0].mxu0
        %3185 = vdwg.mxu0
        %3190 = vrot.lane.b32.xlu0 %v2273, 8
        %v3191 = vpop.permute.xlu0 %3190
        %3192 = vrot.lane.b32.xlu0 %v2278, 8
        %v3193 = vpop.permute.xlu0 %3192
        %3194 = vrot.lane.b32.xlu0 %v2362, 8
        %v3195 = vpop.permute.xlu0 %3194
        %3196 = vrot.lane.b32.xlu0 %v2367, 8
        %v3197 = vpop.permute.xlu0 %3196
        %3206 = vrot.lane.b32.xlu0 %v2683, 16
        %v3207 = vpop.permute.xlu0 %3206
        %3208 = vrot.lane.b32.xlu0 %v2688, 16
        %v3209 = vpop.permute.xlu0 %3208
        %3210 = vrot.lane.b32.xlu0 %v2770, 16
        %v3211 = vpop.permute.xlu0 %3210
        %3212 = vrot.lane.b32.xlu0 %v2775, 16
        %v3213 = vpop.permute.xlu0 %3212
        %3222 = vrot.lane.b32.xlu0 %v3091, 24
        %v3223 = vpop.permute.xlu0 %3222
        %3224 = vrot.lane.b32.xlu0 %v3096, 24
        %v3225 = vpop.permute.xlu0 %3224
        %3226 = vrot.lane.b32.xlu0 %v3178, 24
        %v3227 = vpop.permute.xlu0 %3226
        %3228 = vrot.lane.b32.xlu0 %v3183, 24
        %v3229 = vpop.permute.xlu0 %3228
        %v3234 = vsel %vm1562, %v1869, %v3191
        %v3235 = vsel %vm1562, %v1874, %v3193
        %v3236 = vsel %vm1562, %v1950, %v3195
        %v3237 = vsel %vm1562, %v1955, %v3197
        %v3238 = vsel %vm1751, %v3234, %v3207
        %v3239 = vsel %vm1751, %v3235, %v3209
        %v3240 = vsel %vm1751, %v3236, %v3211
        %v3241 = vsel %vm1751, %v3237, %v3213
        %vm3242 = vcmask 195584
        %v3243 = vsel %vm3242, %v3238, %v3223
        %v3244 = vsel %vm3242, %v3239, %v3225
        %v3245 = vsel %vm3242, %v3240, %v3227
        %v3246 = vsel %vm3242, %v3241, %v3229
        %v3247 = vpack.c.bf16 %v3244, %v3243
        %v3248 = vpack.c.bf16 %v3246, %v3245
        %v3249 = vld [vmem:[%s1090] sm:$0xf]
        %v3250 = vld [vmem:[%s1090 + $0x4] sm:$0xf]
        %v3251 = vld [vmem:[%s1090 + $0x8] sm:$0xf]
        %v3252 = vld [vmem:[%s1090 + $0xc] sm:$0xf]
        %v3253 = vld [vmem:[%s1093] sm:$0x1]
        %v3255 = vlaneseq
        %v3256 = vshrl.u32 %v3255, 7
        %v3257 = vsub.s32 0, %v3256
        %v3258 = vrot.slane %v3253, %v3257
        %v3264 = vunpack.c.l.b16 %v3249
        %v3265 = vunpack.c.l.b16 %v3250
        %v3266 = vunpack.c.l.b16 %v3251
        %v3267 = vunpack.c.l.b16 %v3252
        %v3268 = vpack.c.b16 %v3265, %v3264
        %v3269 = vpack.c.b16 %v3267, %v3266
        %v3273 = vsel %vm1365, %v3247, 0
        %v3276 = vsel %vm1365, %v3248, 0
        %3278 = vmatprep.subr.bf16.mxu0 0
        %3279 = vmatpush1.bf16.msra.mxu0 %v3268
        %3280 = vmatprep.subr.bf16.mxu0 0
        %3281 = vmatpush1.bf16.msra.mxu0 %v3269
        %3282 = vmatprep.subr.bf16.mxu0 0
        %3283 = vmatpush1.bf16.msra.mxu0 0
        %3284 = vmatprep.subr.bf16.mxu0 0
        %3285 = vmatpush1.bf16.msra.mxu0 0
        %3286 = vmatprep.subr.bf16.mxu0 0
        %3287 = vmatpush1.bf16.msra.mxu0 0
        %3288 = vmatprep.subr.bf16.mxu0 0
        %3289 = vmatpush1.bf16.msra.mxu0 0
        %3290 = vmatprep.subr.bf16.mxu0 0
        %3291 = vmatpush1.bf16.msra.mxu0 0
        %3292 = vmatprep.subr.bf16.mxu0 0
        %3293 = vmatpush1.bf16.msra.mxu0 0
        %3294 = vmatprep.subr.bf16.mxu0 0
        %3295 = vmatpush1.bf16.msra.mxu0 0
        %3296 = vmatprep.subr.bf16.mxu0 0
        %3297 = vmatpush1.bf16.msra.mxu0 0
        %3298 = vmatprep.subr.bf16.mxu0 0
        %3299 = vmatpush1.bf16.msra.mxu0 0
        %3300 = vmatprep.subr.bf16.mxu0 0
        %3301 = vmatpush1.bf16.msra.mxu0 0
        %3302 = vmatprep.subr.bf16.mxu0 0
        %3303 = vmatpush1.bf16.msra.mxu0 0
        %3304 = vmatprep.subr.bf16.mxu0 0
        %3305 = vmatpush1.bf16.msra.mxu0 0
        %3306 = vmatprep.subr.bf16.mxu0 0
        %3307 = vmatpush1.bf16.msra.mxu0 0
        %3308 = vmatprep.subr.bf16.mxu0 0
        %3309 = vmatpush1.bf16.msra.mxu0 0
        %3310 = vmatprep.mubr.bf16.mxu0 0
        %3311 = vmatmul.mubr.bf16.gmra.mrb[0].mxu0 %v3273
        %v3312 = vpop.f32.mrb[0].mxu0
        %v3313 = vadd.f32 %v3258, %v3312
        %v3314 = vpop.f32.mrb[0].mxu0
        %v3315 = vpop.f32.mrb[0].mxu0
        %v3316 = vadd.f32 %v3258, %v3315
        %v3317 = vpop.f32.mrb[0].mxu0
        %3318 = vmatprep.mubr.bf16.mxu0 0
        %3319 = vmatmul.mubr.bf16.gmra.mrb[0].mxu0 %v3276
        %v3320 = vpop.f32.mrb[0].mxu0
        %v3321 = vadd.f32 %v3258, %v3320
        %v3322 = vpop.f32.mrb[0].mxu0
        %v3323 = vpop.f32.mrb[0].mxu0
        %v3324 = vadd.f32 %v3258, %v3323
        %v3325 = vpop.f32.mrb[0].mxu0
        %3326 = vdwg.mxu0
        %v3327 = vadd.f32 %v1338, %v3313
        %v3328 = vadd.f32 %v1339, %v3316
        %v3329 = vadd.f32 %v1340, %v3321
        %v3330 = vadd.f32 %v1341, %v3324
        %v3331 = vld [vmem:[%s1113] sm:$0x1]
        %v3332 = vld [vmem:[%s1116] sm:$0x1]
        %v3333 = vsel %vm1365, %v3327, 0.0
        %3334 = vadd.xlane.f32.xlu0 %v3333
        %v3335 = vpop.xlane.xlu0 %3334
        %v3336 = vsel %vm1365, %v3328, 0.0
        %3337 = vadd.xlane.f32.xlu0 %v3336
        %v3338 = vpop.xlane.xlu0 %3337
        %v3339 = vsel %vm1365, %v3329, 0.0
        %3340 = vadd.xlane.f32.xlu0 %v3339
        %v3341 = vpop.xlane.xlu0 %3340
        %v3342 = vsel %vm1365, %v3330, 0.0
        %3343 = vadd.xlane.f32.xlu0 %v3342
        %v3344 = vpop.xlane.xlu0 %3343
        %v3345 = vrcp.pop 32.0
        %v3346 = vmul.f32 %v3335, %v3345
        %v3347 = vmul.f32 %v3338, %v3345
        %v3348 = vmul.f32 %v3341, %v3345
        %v3349 = vmul.f32 %v3344, %v3345
        %v3350 = vsub.f32 %v3327, %v3346
        %v3351 = vsub.f32 %v3328, %v3347
        %v3352 = vsub.f32 %v3329, %v3348
        %v3353 = vsub.f32 %v3330, %v3349
        %v3354 = vmul.f32 %v3350, %v3350
        %v3355 = vmul.f32 %v3351, %v3351
        %v3356 = vmul.f32 %v3352, %v3352
        %v3357 = vmul.f32 %v3353, %v3353
        %v3358 = vsel %vm1365, %v3354, 0.0
        %3359 = vadd.xlane.f32.xlu0 %v3358
        %v3360 = vpop.xlane.xlu0 %3359
        %v3361 = vsel %vm1365, %v3355, 0.0
        %3362 = vadd.xlane.f32.xlu0 %v3361
        %v3363 = vpop.xlane.xlu0 %3362
        %v3364 = vsel %vm1365, %v3356, 0.0
        %3365 = vadd.xlane.f32.xlu0 %v3364
        %v3366 = vpop.xlane.xlu0 %3365
        %v3367 = vsel %vm1365, %v3357, 0.0
        %3368 = vadd.xlane.f32.xlu0 %v3367
        %v3369 = vpop.xlane.xlu0 %3368
        %v3370 = vmul.f32 %v3360, %v3345
        %v3371 = vmul.f32 %v3363, %v3345
        %v3372 = vmul.f32 %v3366, %v3345
        %v3373 = vmul.f32 %v3369, %v3345
        %v3374 = vadd.f32 %v3370, 1e-05
        %v3375 = vadd.f32 %v3371, 1e-05
        %v3376 = vadd.f32 %v3372, 1e-05
        %v3377 = vadd.f32 %v3373, 1e-05
        %v3378 = vrsqrt.pop %v3374
        %v3379 = vrsqrt.pop %v3375
        %v3380 = vrsqrt.pop %v3376
        %v3381 = vrsqrt.pop %v3377
        %v3382 = vmul.f32 %v3350, %v3378
        %v3383 = vmul.f32 %v3351, %v3379
        %v3384 = vmul.f32 %v3352, %v3380
        %v3385 = vmul.f32 %v3353, %v3381
        %v3387 = vlaneseq
        %v3388 = vshrl.u32 %v3387, 7
        %v3389 = vsub.s32 0, %v3388
        %v3390 = vrot.slane %v3331, %v3389
        %v3392 = vmul.f32 %v3382, %v3390
        %v3393 = vmul.f32 %v3383, %v3390
        %v3394 = vmul.f32 %v3384, %v3390
        %v3395 = vmul.f32 %v3385, %v3390
        %v3397 = vlaneseq
        %v3398 = vshrl.u32 %v3397, 7
        %v3399 = vsub.s32 0, %v3398
        %v3400 = vrot.slane %v3332, %v3399
        %v3402 = vadd.f32 %v3392, %v3400
        %v3403 = vadd.f32 %v3393, %v3400
        %v3404 = vadd.f32 %v3394, %v3400
        %v3405 = vadd.f32 %v3395, %v3400
        %v3406 = vpack.c.bf16 %v3403, %v3402
        %v3407 = vpack.c.bf16 %v3405, %v3404
        %v3408 = vld [vmem:[%s1098] sm:$0xff]
        %v3409 = vld [vmem:[%s1098 + $0x8] sm:$0xff]
        %v3410 = vld [vmem:[%s1098 + $0x10] sm:$0xff]
        %v3411 = vld [vmem:[%s1098 + $0x18] sm:$0xff]
        %v3412 = vld [vmem:[%s1098 + $0x20] sm:$0xff]
        %v3413 = vld [vmem:[%s1098 + $0x28] sm:$0xff]
        %v3414 = vld [vmem:[%s1098 + $0x30] sm:$0xff]
        %v3415 = vld [vmem:[%s1098 + $0x38] sm:$0xff]
        %v3416 = vld [vmem:[%s1098 + $0x40] sm:$0xff]
        %v3417 = vld [vmem:[%s1098 + $0x48] sm:$0xff]
        %v3418 = vld [vmem:[%s1098 + $0x50] sm:$0xff]
        %v3419 = vld [vmem:[%s1098 + $0x58] sm:$0xff]
        %v3420 = vld [vmem:[%s1098 + $0x60] sm:$0xff]
        %v3421 = vld [vmem:[%s1098 + $0x68] sm:$0xff]
        %v3422 = vld [vmem:[%s1098 + $0x70] sm:$0xff]
        %v3423 = vld [vmem:[%s1098 + $0x78] sm:$0xff]
        %v3424 = vld [vmem:[%s1098 + $0x80] sm:$0xff]
        %v3425 = vld [vmem:[%s1098 + $0x88] sm:$0xff]
        %v3426 = vld [vmem:[%s1098 + $0x90] sm:$0xff]
        %v3427 = vld [vmem:[%s1098 + $0x98] sm:$0xff]
        %v3428 = vld [vmem:[%s1098 + $0xa0] sm:$0xff]
        %v3429 = vld [vmem:[%s1098 + $0xa8] sm:$0xff]
        %v3430 = vld [vmem:[%s1098 + $0xb0] sm:$0xff]
        %v3431 = vld [vmem:[%s1098 + $0xb8] sm:$0xff]
        %v3432 = vld [vmem:[%s1098 + $0xc0] sm:$0xff]
        %v3433 = vld [vmem:[%s1098 + $0xc8] sm:$0xff]
        %v3434 = vld [vmem:[%s1098 + $0xd0] sm:$0xff]
        %v3435 = vld [vmem:[%s1098 + $0xd8] sm:$0xff]
        %v3436 = vld [vmem:[%s1098 + $0xe0] sm:$0xff]
        %v3437 = vld [vmem:[%s1098 + $0xe8] sm:$0xff]
        %v3438 = vld [vmem:[%s1098 + $0xf0] sm:$0xff]
        %v3439 = vld [vmem:[%s1098 + $0xf8] sm:$0xff]
        %v3440 = vld [vmem:[%s1102] sm:$0xff]
        %v3441 = vld [vmem:[%s1102 + $0x8] sm:$0xff]
        %v3444 = vlaneseq
        %v3445 = vshrl.u32 %v3444, 7
        %v3446 = vsub.s32 0, %v3445
        %v3447 = vrot.slane %v3440, %v3446
        %v3448 = vlaneseq
        %v3449 = vshrl.u32 %v3448, 7
        %v3450 = vsub.s32 1, %v3449
        %v3451 = vrot.slane %v3440, %v3450
        %v3452 = vlaneseq
        %v3453 = vshrl.u32 %v3452, 7
        %v3454 = vsub.s32 2, %v3453
        %v3455 = vrot.slane %v3440, %v3454
        %v3456 = vlaneseq
        %v3457 = vshrl.u32 %v3456, 7
        %v3458 = vsub.s32 3, %v3457
        %v3459 = vrot.slane %v3440, %v3458
        %v3460 = vlaneseq
        %v3461 = vshrl.u32 %v3460, 7
        %v3462 = vsub.s32 4, %v3461
        %v3463 = vrot.slane %v3440, %v3462
        %v3464 = vlaneseq
        %v3465 = vshrl.u32 %v3464, 7
        %v3466 = vsub.s32 5, %v3465
        %v3467 = vrot.slane %v3440, %v3466
        %v3468 = vlaneseq
        %v3469 = vshrl.u32 %v3468, 7
        %v3470 = vsub.s32 6, %v3469
        %v3471 = vrot.slane %v3440, %v3470
        %v3472 = vlaneseq
        %v3473 = vshrl.u32 %v3472, 7
        %v3474 = vsub.s32 7, %v3473
        %v3475 = vrot.slane %v3440, %v3474
        %v3476 = vlaneseq
        %v3477 = vshrl.u32 %v3476, 7
        %v3478 = vsub.s32 0, %v3477
        %v3479 = vrot.slane %v3441, %v3478
        %v3480 = vlaneseq
        %v3481 = vshrl.u32 %v3480, 7
        %v3482 = vsub.s32 1, %v3481
        %v3483 = vrot.slane %v3441, %v3482
        %v3484 = vlaneseq
        %v3485 = vshrl.u32 %v3484, 7
        %v3486 = vsub.s32 2, %v3485
        %v3487 = vrot.slane %v3441, %v3486
        %v3488 = vlaneseq
        %v3489 = vshrl.u32 %v3488, 7
        %v3490 = vsub.s32 3, %v3489
        %v3491 = vrot.slane %v3441, %v3490
        %v3492 = vlaneseq
        %v3493 = vshrl.u32 %v3492, 7
        %v3494 = vsub.s32 4, %v3493
        %v3495 = vrot.slane %v3441, %v3494
        %v3496 = vlaneseq
        %v3497 = vshrl.u32 %v3496, 7
        %v3498 = vsub.s32 5, %v3497
        %v3499 = vrot.slane %v3441, %v3498
        %v3500 = vlaneseq
        %v3501 = vshrl.u32 %v3500, 7
        %v3502 = vsub.s32 6, %v3501
        %v3503 = vrot.slane %v3441, %v3502
        %v3504 = vlaneseq
        %v3505 = vshrl.u32 %v3504, 7
        %v3506 = vsub.s32 7, %v3505
        %v3507 = vrot.slane %v3441, %v3506
        %v3556 = vunpack.c.l.b16 %v3408
        %v3557 = vunpack.c.h.b16 %v3408
        %v3558 = vunpack.c.l.b16 %v3409
        %v3559 = vunpack.c.h.b16 %v3409
        %v3560 = vunpack.c.l.b16 %v3410
        %v3561 = vunpack.c.h.b16 %v3410
        %v3562 = vunpack.c.l.b16 %v3411
        %v3563 = vunpack.c.h.b16 %v3411
        %v3564 = vunpack.c.l.b16 %v3412
        %v3565 = vunpack.c.h.b16 %v3412
        %v3566 = vunpack.c.l.b16 %v3413
        %v3567 = vunpack.c.h.b16 %v3413
        %v3568 = vunpack.c.l.b16 %v3414
        %v3569 = vunpack.c.h.b16 %v3414
        %v3570 = vunpack.c.l.b16 %v3415
        %v3571 = vunpack.c.h.b16 %v3415
        %v3572 = vunpack.c.l.b16 %v3416
        %v3573 = vunpack.c.h.b16 %v3416
        %v3574 = vunpack.c.l.b16 %v3417
        %v3575 = vunpack.c.h.b16 %v3417
        %v3576 = vunpack.c.l.b16 %v3418
        %v3577 = vunpack.c.h.b16 %v3418
        %v3578 = vunpack.c.l.b16 %v3419
        %v3579 = vunpack.c.h.b16 %v3419
        %v3580 = vunpack.c.l.b16 %v3420
        %v3581 = vunpack.c.h.b16 %v3420
        %v3582 = vunpack.c.l.b16 %v3421
        %v3583 = vunpack.c.h.b16 %v3421
        %v3584 = vunpack.c.l.b16 %v3422
        %v3585 = vunpack.c.h.b16 %v3422
        %v3586 = vunpack.c.l.b16 %v3423
        %v3587 = vunpack.c.h.b16 %v3423
        %v3588 = vunpack.c.l.b16 %v3424
        %v3589 = vunpack.c.h.b16 %v3424
        %v3590 = vunpack.c.l.b16 %v3425
        %v3591 = vunpack.c.h.b16 %v3425
        %v3592 = vunpack.c.l.b16 %v3426
        %v3593 = vunpack.c.h.b16 %v3426
        %v3594 = vunpack.c.l.b16 %v3427
        %v3595 = vunpack.c.h.b16 %v3427
        %v3596 = vunpack.c.l.b16 %v3428
        %v3597 = vunpack.c.h.b16 %v3428
        %v3598 = vunpack.c.l.b16 %v3429
        %v3599 = vunpack.c.h.b16 %v3429
        %v3600 = vunpack.c.l.b16 %v3430
        %v3601 = vunpack.c.h.b16 %v3430
        %v3602 = vunpack.c.l.b16 %v3431
        %v3603 = vunpack.c.h.b16 %v3431
        %v3604 = vunpack.c.l.b16 %v3432
        %v3605 = vunpack.c.h.b16 %v3432
        %v3606 = vunpack.c.l.b16 %v3433
        %v3607 = vunpack.c.h.b16 %v3433
        %v3608 = vunpack.c.l.b16 %v3434
        %v3609 = vunpack.c.h.b16 %v3434
        %v3610 = vunpack.c.l.b16 %v3435
        %v3611 = vunpack.c.h.b16 %v3435
        %v3612 = vunpack.c.l.b16 %v3436
        %v3613 = vunpack.c.h.b16 %v3436
        %v3614 = vunpack.c.l.b16 %v3437
        %v3615 = vunpack.c.h.b16 %v3437
        %v3616 = vunpack.c.l.b16 %v3438
        %v3617 = vunpack.c.h.b16 %v3438
        %v3618 = vunpack.c.l.b16 %v3439
        %v3619 = vunpack.c.h.b16 %v3439
        %v3620 = vpack.c.b16 %v3572, %v3556
        %v3621 = vpack.c.b16 %v3573, %v3557
        %v3622 = vpack.c.b16 %v3574, %v3558
        %v3623 = vpack.c.b16 %v3575, %v3559
        %v3624 = vpack.c.b16 %v3576, %v3560
        %v3625 = vpack.c.b16 %v3577, %v3561
        %v3626 = vpack.c.b16 %v3578, %v3562
        %v3627 = vpack.c.b16 %v3579, %v3563
        %v3628 = vpack.c.b16 %v3580, %v3564
        %v3629 = vpack.c.b16 %v3581, %v3565
        %v3630 = vpack.c.b16 %v3582, %v3566
        %v3631 = vpack.c.b16 %v3583, %v3567
        %v3632 = vpack.c.b16 %v3584, %v3568
        %v3633 = vpack.c.b16 %v3585, %v3569
        %v3634 = vpack.c.b16 %v3586, %v3570
        %v3635 = vpack.c.b16 %v3587, %v3571
        %v3636 = vpack.c.b16 %v3604, %v3588
        %v3637 = vpack.c.b16 %v3605, %v3589
        %v3638 = vpack.c.b16 %v3606, %v3590
        %v3639 = vpack.c.b16 %v3607, %v3591
        %v3640 = vpack.c.b16 %v3608, %v3592
        %v3641 = vpack.c.b16 %v3609, %v3593
        %v3642 = vpack.c.b16 %v3610, %v3594
        %v3643 = vpack.c.b16 %v3611, %v3595
        %v3644 = vpack.c.b16 %v3612, %v3596
        %v3645 = vpack.c.b16 %v3613, %v3597
        %v3646 = vpack.c.b16 %v3614, %v3598
        %v3647 = vpack.c.b16 %v3615, %v3599
        %v3648 = vpack.c.b16 %v3616, %v3600
        %v3649 = vpack.c.b16 %v3617, %v3601
        %v3650 = vpack.c.b16 %v3618, %v3602
        %v3651 = vpack.c.b16 %v3619, %v3603
        %v3685 = vsel %vm1365, %v3406, 0
        %v3688 = vsel %vm1365, %v3407, 0
        %3690 = vmatprep.subr.bf16.mxu0 %v3621
        %3691 = vmatpush1.bf16.msra.mxu0 %v3620
        %3692 = vmatprep.subr.bf16.mxu0 %v3637
        %3693 = vmatpush1.bf16.msra.mxu0 %v3636
        %3694 = vmatprep.subr.bf16.mxu0 0
        %3695 = vmatpush1.bf16.msra.mxu0 0
        %3696 = vmatprep.subr.bf16.mxu0 0
        %3697 = vmatpush1.bf16.msra.mxu0 0
        %3698 = vmatprep.subr.bf16.mxu0 0
        %3699 = vmatpush1.bf16.msra.mxu0 0
        %3700 = vmatprep.subr.bf16.mxu0 0
        %3701 = vmatpush1.bf16.msra.mxu0 0
        %3702 = vmatprep.subr.bf16.mxu0 0
        %3703 = vmatpush1.bf16.msra.mxu0 0
        %3704 = vmatprep.subr.bf16.mxu0 0
        %3705 = vmatpush1.bf16.msra.mxu0 0
        %3706 = vmatprep.subr.bf16.mxu0 0
        %3707 = vmatpush1.bf16.msra.mxu0 0
        %3708 = vmatprep.subr.bf16.mxu0 0
        %3709 = vmatpush1.bf16.msra.mxu0 0
        %3710 = vmatprep.subr.bf16.mxu0 0
        %3711 = vmatpush1.bf16.msra.mxu0 0
        %3712 = vmatprep.subr.bf16.mxu0 0
        %3713 = vmatpush1.bf16.msra.mxu0 0
        %3714 = vmatprep.subr.bf16.mxu0 0
        %3715 = vmatpush1.bf16.msra.mxu0 0
        %3716 = vmatprep.subr.bf16.mxu0 0
        %3717 = vmatpush1.bf16.msra.mxu0 0
        %3718 = vmatprep.subr.bf16.mxu0 0
        %3719 = vmatpush1.bf16.msra.mxu0 0
        %3720 = vmatprep.subr.bf16.mxu0 0
        %3721 = vmatpush1.bf16.msra.mxu0 0
        %3722 = vmatprep.mubr.bf16.mxu0 0
        %3723 = vmatmul.mubr.bf16.gmra.mrb[0].mxu0 %v3685
        %v3724 = vpop.f32.mrb[0].mxu0
        %v3725 = vadd.f32 %v3447, %v3724
        %v3726 = vpop.f32.mrb[0].mxu0
        %v3727 = vadd.f32 %v3451, %v3726
        %v3728 = vpop.f32.mrb[0].mxu0
        %v3729 = vadd.f32 %v3447, %v3728
        %v3730 = vpop.f32.mrb[0].mxu0
        %v3731 = vadd.f32 %v3451, %v3730
        %3732 = vmatprep.mubr.bf16.mxu0 0
        %3733 = vmatmul.mubr.bf16.gmra.mrb[0].mxu0 %v3688
        %v3734 = vpop.f32.mrb[0].mxu0
        %v3735 = vadd.f32 %v3447, %v3734
        %v3736 = vpop.f32.mrb[0].mxu0
        %v3737 = vadd.f32 %v3451, %v3736
        %v3738 = vpop.f32.mrb[0].mxu0
        %v3739 = vadd.f32 %v3447, %v3738
        %v3740 = vpop.f32.mrb[0].mxu0
        %v3741 = vadd.f32 %v3451, %v3740
        %3742 = vdwg.mxu0
        %3743 = vmatprep.subr.bf16.mxu0 %v3623
        %3744 = vmatpush1.bf16.msra.mxu0 %v3622
        %3745 = vmatprep.subr.bf16.mxu0 %v3639
        %3746 = vmatpush1.bf16.msra.mxu0 %v3638
        %3747 = vmatprep.subr.bf16.mxu0 0
        %3748 = vmatpush1.bf16.msra.mxu0 0
        %3749 = vmatprep.subr.bf16.mxu0 0
        %3750 = vmatpush1.bf16.msra.mxu0 0
        %3751 = vmatprep.subr.bf16.mxu0 0
        %3752 = vmatpush1.bf16.msra.mxu0 0
        %3753 = vmatprep.subr.bf16.mxu0 0
        %3754 = vmatpush1.bf16.msra.mxu0 0
        %3755 = vmatprep.subr.bf16.mxu0 0
        %3756 = vmatpush1.bf16.msra.mxu0 0
        %3757 = vmatprep.subr.bf16.mxu0 0
        %3758 = vmatpush1.bf16.msra.mxu0 0
        %3759 = vmatprep.subr.bf16.mxu0 0
        %3760 = vmatpush1.bf16.msra.mxu0 0
        %3761 = vmatprep.subr.bf16.mxu0 0
        %3762 = vmatpush1.bf16.msra.mxu0 0
        %3763 = vmatprep.subr.bf16.mxu0 0
        %3764 = vmatpush1.bf16.msra.mxu0 0
        %3765 = vmatprep.subr.bf16.mxu0 0
        %3766 = vmatpush1.bf16.msra.mxu0 0
        %3767 = vmatprep.subr.bf16.mxu0 0
        %3768 = vmatpush1.bf16.msra.mxu0 0
        %3769 = vmatprep.subr.bf16.mxu0 0
        %3770 = vmatpush1.bf16.msra.mxu0 0
        %3771 = vmatprep.subr.bf16.mxu0 0
        %3772 = vmatpush1.bf16.msra.mxu0 0
        %3773 = vmatprep.subr.bf16.mxu0 0
        %3774 = vmatpush1.bf16.msra.mxu0 0
        %3775 = vmatprep.mubr.bf16.mxu0 0
        %3776 = vmatmul.mubr.bf16.gmra.mrb[0].mxu0 %v3685
        %v3777 = vpop.f32.mrb[0].mxu0
        %v3778 = vadd.f32 %v3455, %v3777
        %v3779 = vpop.f32.mrb[0].mxu0
        %v3780 = vadd.f32 %v3459, %v3779
        %v3781 = vpop.f32.mrb[0].mxu0
        %v3782 = vadd.f32 %v3455, %v3781
        %v3783 = vpop.f32.mrb[0].mxu0
        %v3784 = vadd.f32 %v3459, %v3783
        %3785 = vmatprep.mubr.bf16.mxu0 0
        %3786 = vmatmul.mubr.bf16.gmra.mrb[0].mxu0 %v3688
        %v3787 = vpop.f32.mrb[0].mxu0
        %v3788 = vadd.f32 %v3455, %v3787
        %v3789 = vpop.f32.mrb[0].mxu0
        %v3790 = vadd.f32 %v3459, %v3789
        %v3791 = vpop.f32.mrb[0].mxu0
        %v3792 = vadd.f32 %v3455, %v3791
        %v3793 = vpop.f32.mrb[0].mxu0
        %v3794 = vadd.f32 %v3459, %v3793
        %3795 = vdwg.mxu0
        %3796 = vmatprep.subr.bf16.mxu0 %v3625
        %3797 = vmatpush1.bf16.msra.mxu0 %v3624
        %3798 = vmatprep.subr.bf16.mxu0 %v3641
        %3799 = vmatpush1.bf16.msra.mxu0 %v3640
        %3800 = vmatprep.subr.bf16.mxu0 0
        %3801 = vmatpush1.bf16.msra.mxu0 0
        %3802 = vmatprep.subr.bf16.mxu0 0
        %3803 = vmatpush1.bf16.msra.mxu0 0
        %3804 = vmatprep.subr.bf16.mxu0 0
        %3805 = vmatpush1.bf16.msra.mxu0 0
        %3806 = vmatprep.subr.bf16.mxu0 0
        %3807 = vmatpush1.bf16.msra.mxu0 0
        %3808 = vmatprep.subr.bf16.mxu0 0
        %3809 = vmatpush1.bf16.msra.mxu0 0
        %3810 = vmatprep.subr.bf16.mxu0 0
        %3811 = vmatpush1.bf16.msra.mxu0 0
        %3812 = vmatprep.subr.bf16.mxu0 0
        %3813 = vmatpush1.bf16.msra.mxu0 0
        %3814 = vmatprep.subr.bf16.mxu0 0
        %3815 = vmatpush1.bf16.msra.mxu0 0
        %3816 = vmatprep.subr.bf16.mxu0 0
        %3817 = vmatpush1.bf16.msra.mxu0 0
        %3818 = vmatprep.subr.bf16.mxu0 0
        %3819 = vmatpush1.bf16.msra.mxu0 0
        %3820 = vmatprep.subr.bf16.mxu0 0
        %3821 = vmatpush1.bf16.msra.mxu0 0
        %3822 = vmatprep.subr.bf16.mxu0 0
        %3823 = vmatpush1.bf16.msra.mxu0 0
        %3824 = vmatprep.subr.bf16.mxu0 0
        %3825 = vmatpush1.bf16.msra.mxu0 0
        %3826 = vmatprep.subr.bf16.mxu0 0
        %3827 = vmatpush1.bf16.msra.mxu0 0
        %3828 = vmatprep.mubr.bf16.mxu0 0
        %3829 = vmatmul.mubr.bf16.gmra.mrb[0].mxu0 %v3685
        %v3830 = vpop.f32.mrb[0].mxu0
        %v3831 = vadd.f32 %v3463, %v3830
        %v3832 = vpop.f32.mrb[0].mxu0
        %v3833 = vadd.f32 %v3467, %v3832
        %v3834 = vpop.f32.mrb[0].mxu0
        %v3835 = vadd.f32 %v3463, %v3834
        %v3836 = vpop.f32.mrb[0].mxu0
        %v3837 = vadd.f32 %v3467, %v3836
        %3838 = vmatprep.mubr.bf16.mxu0 0
        %3839 = vmatmul.mubr.bf16.gmra.mrb[0].mxu0 %v3688
        %v3840 = vpop.f32.mrb[0].mxu0
        %v3841 = vadd.f32 %v3463, %v3840
        %v3842 = vpop.f32.mrb[0].mxu0
        %v3843 = vadd.f32 %v3467, %v3842
        %v3844 = vpop.f32.mrb[0].mxu0
        %v3845 = vadd.f32 %v3463, %v3844
        %v3846 = vpop.f32.mrb[0].mxu0
        %v3847 = vadd.f32 %v3467, %v3846
        %3848 = vdwg.mxu0
        %3849 = vmatprep.subr.bf16.mxu0 %v3627
        %3850 = vmatpush1.bf16.msra.mxu0 %v3626
        %3851 = vmatprep.subr.bf16.mxu0 %v3643
        %3852 = vmatpush1.bf16.msra.mxu0 %v3642
        %3853 = vmatprep.subr.bf16.mxu0 0
        %3854 = vmatpush1.bf16.msra.mxu0 0
        %3855 = vmatprep.subr.bf16.mxu0 0
        %3856 = vmatpush1.bf16.msra.mxu0 0
        %3857 = vmatprep.subr.bf16.mxu0 0
        %3858 = vmatpush1.bf16.msra.mxu0 0
        %3859 = vmatprep.subr.bf16.mxu0 0
        %3860 = vmatpush1.bf16.msra.mxu0 0
        %3861 = vmatprep.subr.bf16.mxu0 0
        %3862 = vmatpush1.bf16.msra.mxu0 0
        %3863 = vmatprep.subr.bf16.mxu0 0
        %3864 = vmatpush1.bf16.msra.mxu0 0
        %3865 = vmatprep.subr.bf16.mxu0 0
        %3866 = vmatpush1.bf16.msra.mxu0 0
        %3867 = vmatprep.subr.bf16.mxu0 0
        %3868 = vmatpush1.bf16.msra.mxu0 0
        %3869 = vmatprep.subr.bf16.mxu0 0
        %3870 = vmatpush1.bf16.msra.mxu0 0
        %3871 = vmatprep.subr.bf16.mxu0 0
        %3872 = vmatpush1.bf16.msra.mxu0 0
        %3873 = vmatprep.subr.bf16.mxu0 0
        %3874 = vmatpush1.bf16.msra.mxu0 0
        %3875 = vmatprep.subr.bf16.mxu0 0
        %3876 = vmatpush1.bf16.msra.mxu0 0
        %3877 = vmatprep.subr.bf16.mxu0 0
        %3878 = vmatpush1.bf16.msra.mxu0 0
        %3879 = vmatprep.subr.bf16.mxu0 0
        %3880 = vmatpush1.bf16.msra.mxu0 0
        %3881 = vmatprep.mubr.bf16.mxu0 0
        %3882 = vmatmul.mubr.bf16.gmra.mrb[0].mxu0 %v3685
        %v3883 = vpop.f32.mrb[0].mxu0
        %v3884 = vadd.f32 %v3471, %v3883
        %v3885 = vpop.f32.mrb[0].mxu0
        %v3886 = vadd.f32 %v3475, %v3885
        %v3887 = vpop.f32.mrb[0].mxu0
        %v3888 = vadd.f32 %v3471, %v3887
        %v3889 = vpop.f32.mrb[0].mxu0
        %v3890 = vadd.f32 %v3475, %v3889
        %3891 = vmatprep.mubr.bf16.mxu0 0
        %3892 = vmatmul.mubr.bf16.gmra.mrb[0].mxu0 %v3688
        %v3893 = vpop.f32.mrb[0].mxu0
        %v3894 = vadd.f32 %v3471, %v3893
        %v3895 = vpop.f32.mrb[0].mxu0
        %v3896 = vadd.f32 %v3475, %v3895
        %v3897 = vpop.f32.mrb[0].mxu0
        %v3898 = vadd.f32 %v3471, %v3897
        %v3899 = vpop.f32.mrb[0].mxu0
        %v3900 = vadd.f32 %v3475, %v3899
        %3901 = vdwg.mxu0
        %3902 = vmatprep.subr.bf16.mxu0 %v3629
        %3903 = vmatpush1.bf16.msra.mxu0 %v3628
        %3904 = vmatprep.subr.bf16.mxu0 %v3645
        %3905 = vmatpush1.bf16.msra.mxu0 %v3644
        %3906 = vmatprep.subr.bf16.mxu0 0
        %3907 = vmatpush1.bf16.msra.mxu0 0
        %3908 = vmatprep.subr.bf16.mxu0 0
        %3909 = vmatpush1.bf16.msra.mxu0 0
        %3910 = vmatprep.subr.bf16.mxu0 0
        %3911 = vmatpush1.bf16.msra.mxu0 0
        %3912 = vmatprep.subr.bf16.mxu0 0
        %3913 = vmatpush1.bf16.msra.mxu0 0
        %3914 = vmatprep.subr.bf16.mxu0 0
        %3915 = vmatpush1.bf16.msra.mxu0 0
        %3916 = vmatprep.subr.bf16.mxu0 0
        %3917 = vmatpush1.bf16.msra.mxu0 0
        %3918 = vmatprep.subr.bf16.mxu0 0
        %3919 = vmatpush1.bf16.msra.mxu0 0
        %3920 = vmatprep.subr.bf16.mxu0 0
        %3921 = vmatpush1.bf16.msra.mxu0 0
        %3922 = vmatprep.subr.bf16.mxu0 0
        %3923 = vmatpush1.bf16.msra.mxu0 0
        %3924 = vmatprep.subr.bf16.mxu0 0
        %3925 = vmatpush1.bf16.msra.mxu0 0
        %3926 = vmatprep.subr.bf16.mxu0 0
        %3927 = vmatpush1.bf16.msra.mxu0 0
        %3928 = vmatprep.subr.bf16.mxu0 0
        %3929 = vmatpush1.bf16.msra.mxu0 0
        %3930 = vmatprep.subr.bf16.mxu0 0
        %3931 = vmatpush1.bf16.msra.mxu0 0
        %3932 = vmatprep.subr.bf16.mxu0 0
        %3933 = vmatpush1.bf16.msra.mxu0 0
        %3934 = vmatprep.mubr.bf16.mxu0 0
        %3935 = vmatmul.mubr.bf16.gmra.mrb[0].mxu0 %v3685
        %v3936 = vpop.f32.mrb[0].mxu0
        %v3937 = vadd.f32 %v3479, %v3936
        %v3938 = vpop.f32.mrb[0].mxu0
        %v3939 = vadd.f32 %v3483, %v3938
        %v3940 = vpop.f32.mrb[0].mxu0
        %v3941 = vadd.f32 %v3479, %v3940
        %v3942 = vpop.f32.mrb[0].mxu0
        %v3943 = vadd.f32 %v3483, %v3942
        %3944 = vmatprep.mubr.bf16.mxu0 0
        %3945 = vmatmul.mubr.bf16.gmra.mrb[0].mxu0 %v3688
        %v3946 = vpop.f32.mrb[0].mxu0
        %v3947 = vadd.f32 %v3479, %v3946
        %v3948 = vpop.f32.mrb[0].mxu0
        %v3949 = vadd.f32 %v3483, %v3948
        %v3950 = vpop.f32.mrb[0].mxu0
        %v3951 = vadd.f32 %v3479, %v3950
        %v3952 = vpop.f32.mrb[0].mxu0
        %v3953 = vadd.f32 %v3483, %v3952
        %3954 = vdwg.mxu0
        %3955 = vmatprep.subr.bf16.mxu0 %v3631
        %3956 = vmatpush1.bf16.msra.mxu0 %v3630
        %3957 = vmatprep.subr.bf16.mxu0 %v3647
        %3958 = vmatpush1.bf16.msra.mxu0 %v3646
        %3959 = vmatprep.subr.bf16.mxu0 0
        %3960 = vmatpush1.bf16.msra.mxu0 0
        %3961 = vmatprep.subr.bf16.mxu0 0
        %3962 = vmatpush1.bf16.msra.mxu0 0
        %3963 = vmatprep.subr.bf16.mxu0 0
        %3964 = vmatpush1.bf16.msra.mxu0 0
        %3965 = vmatprep.subr.bf16.mxu0 0
        %3966 = vmatpush1.bf16.msra.mxu0 0
        %3967 = vmatprep.subr.bf16.mxu0 0
        %3968 = vmatpush1.bf16.msra.mxu0 0
        %3969 = vmatprep.subr.bf16.mxu0 0
        %3970 = vmatpush1.bf16.msra.mxu0 0
        %3971 = vmatprep.subr.bf16.mxu0 0
        %3972 = vmatpush1.bf16.msra.mxu0 0
        %3973 = vmatprep.subr.bf16.mxu0 0
        %3974 = vmatpush1.bf16.msra.mxu0 0
        %3975 = vmatprep.subr.bf16.mxu0 0
        %3976 = vmatpush1.bf16.msra.mxu0 0
        %3977 = vmatprep.subr.bf16.mxu0 0
        %3978 = vmatpush1.bf16.msra.mxu0 0
        %3979 = vmatprep.subr.bf16.mxu0 0
        %3980 = vmatpush1.bf16.msra.mxu0 0
        %3981 = vmatprep.subr.bf16.mxu0 0
        %3982 = vmatpush1.bf16.msra.mxu0 0
        %3983 = vmatprep.subr.bf16.mxu0 0
        %3984 = vmatpush1.bf16.msra.mxu0 0
        %3985 = vmatprep.subr.bf16.mxu0 0
        %3986 = vmatpush1.bf16.msra.mxu0 0
        %3987 = vmatprep.mubr.bf16.mxu0 0
        %3988 = vmatmul.mubr.bf16.gmra.mrb[0].mxu0 %v3685
        %v3989 = vpop.f32.mrb[0].mxu0
        %v3990 = vadd.f32 %v3487, %v3989
        %v3991 = vpop.f32.mrb[0].mxu0
        %v3992 = vadd.f32 %v3491, %v3991
        %v3993 = vpop.f32.mrb[0].mxu0
        %v3994 = vadd.f32 %v3487, %v3993
        %v3995 = vpop.f32.mrb[0].mxu0
        %v3996 = vadd.f32 %v3491, %v3995
        %3997 = vmatprep.mubr.bf16.mxu0 0
        %3998 = vmatmul.mubr.bf16.gmra.mrb[0].mxu0 %v3688
        %v3999 = vpop.f32.mrb[0].mxu0
        %v4000 = vadd.f32 %v3487, %v3999
        %v4001 = vpop.f32.mrb[0].mxu0
        %v4002 = vadd.f32 %v3491, %v4001
        %v4003 = vpop.f32.mrb[0].mxu0
        %v4004 = vadd.f32 %v3487, %v4003
        %v4005 = vpop.f32.mrb[0].mxu0
        %v4006 = vadd.f32 %v3491, %v4005
        %4007 = vdwg.mxu0
        %4008 = vmatprep.subr.bf16.mxu0 %v3633
        %4009 = vmatpush1.bf16.msra.mxu0 %v3632
        %4010 = vmatprep.subr.bf16.mxu0 %v3649
        %4011 = vmatpush1.bf16.msra.mxu0 %v3648
        %4012 = vmatprep.subr.bf16.mxu0 0
        %4013 = vmatpush1.bf16.msra.mxu0 0
        %4014 = vmatprep.subr.bf16.mxu0 0
        %4015 = vmatpush1.bf16.msra.mxu0 0
        %4016 = vmatprep.subr.bf16.mxu0 0
        %4017 = vmatpush1.bf16.msra.mxu0 0
        %4018 = vmatprep.subr.bf16.mxu0 0
        %4019 = vmatpush1.bf16.msra.mxu0 0
        %4020 = vmatprep.subr.bf16.mxu0 0
        %4021 = vmatpush1.bf16.msra.mxu0 0
        %4022 = vmatprep.subr.bf16.mxu0 0
        %4023 = vmatpush1.bf16.msra.mxu0 0
        %4024 = vmatprep.subr.bf16.mxu0 0
        %4025 = vmatpush1.bf16.msra.mxu0 0
        %4026 = vmatprep.subr.bf16.mxu0 0
        %4027 = vmatpush1.bf16.msra.mxu0 0
        %4028 = vmatprep.subr.bf16.mxu0 0
        %4029 = vmatpush1.bf16.msra.mxu0 0
        %4030 = vmatprep.subr.bf16.mxu0 0
        %4031 = vmatpush1.bf16.msra.mxu0 0
        %4032 = vmatprep.subr.bf16.mxu0 0
        %4033 = vmatpush1.bf16.msra.mxu0 0
        %4034 = vmatprep.subr.bf16.mxu0 0
        %4035 = vmatpush1.bf16.msra.mxu0 0
        %4036 = vmatprep.subr.bf16.mxu0 0
        %4037 = vmatpush1.bf16.msra.mxu0 0
        %4038 = vmatprep.subr.bf16.mxu0 0
        %4039 = vmatpush1.bf16.msra.mxu0 0
        %4040 = vmatprep.mubr.bf16.mxu0 0
        %4041 = vmatmul.mubr.bf16.gmra.mrb[0].mxu0 %v3685
        %v4042 = vpop.f32.mrb[0].mxu0
        %v4043 = vadd.f32 %v3495, %v4042
        %v4044 = vpop.f32.mrb[0].mxu0
        %v4045 = vadd.f32 %v3499, %v4044
        %v4046 = vpop.f32.mrb[0].mxu0
        %v4047 = vadd.f32 %v3495, %v4046
        %v4048 = vpop.f32.mrb[0].mxu0
        %v4049 = vadd.f32 %v3499, %v4048
        %4050 = vmatprep.mubr.bf16.mxu0 0
        %4051 = vmatmul.mubr.bf16.gmra.mrb[0].mxu0 %v3688
        %v4052 = vpop.f32.mrb[0].mxu0
        %v4053 = vadd.f32 %v3495, %v4052
        %v4054 = vpop.f32.mrb[0].mxu0
        %v4055 = vadd.f32 %v3499, %v4054
        %v4056 = vpop.f32.mrb[0].mxu0
        %v4057 = vadd.f32 %v3495, %v4056
        %v4058 = vpop.f32.mrb[0].mxu0
        %v4059 = vadd.f32 %v3499, %v4058
        %4060 = vdwg.mxu0
        %4061 = vmatprep.subr.bf16.mxu0 %v3635
        %4062 = vmatpush1.bf16.msra.mxu0 %v3634
        %4063 = vmatprep.subr.bf16.mxu0 %v3651
        %4064 = vmatpush1.bf16.msra.mxu0 %v3650
        %4065 = vmatprep.subr.bf16.mxu0 0
        %4066 = vmatpush1.bf16.msra.mxu0 0
        %4067 = vmatprep.subr.bf16.mxu0 0
        %4068 = vmatpush1.bf16.msra.mxu0 0
        %4069 = vmatprep.subr.bf16.mxu0 0
        %4070 = vmatpush1.bf16.msra.mxu0 0
        %4071 = vmatprep.subr.bf16.mxu0 0
        %4072 = vmatpush1.bf16.msra.mxu0 0
        %4073 = vmatprep.subr.bf16.mxu0 0
        %4074 = vmatpush1.bf16.msra.mxu0 0
        %4075 = vmatprep.subr.bf16.mxu0 0
        %4076 = vmatpush1.bf16.msra.mxu0 0
        %4077 = vmatprep.subr.bf16.mxu0 0
        %4078 = vmatpush1.bf16.msra.mxu0 0
        %4079 = vmatprep.subr.bf16.mxu0 0
        %4080 = vmatpush1.bf16.msra.mxu0 0
        %4081 = vmatprep.subr.bf16.mxu0 0
        %4082 = vmatpush1.bf16.msra.mxu0 0
        %4083 = vmatprep.subr.bf16.mxu0 0
        %4084 = vmatpush1.bf16.msra.mxu0 0
        %4085 = vmatprep.subr.bf16.mxu0 0
        %4086 = vmatpush1.bf16.msra.mxu0 0
        %4087 = vmatprep.subr.bf16.mxu0 0
        %4088 = vmatpush1.bf16.msra.mxu0 0
        %4089 = vmatprep.subr.bf16.mxu0 0
        %4090 = vmatpush1.bf16.msra.mxu0 0
        %4091 = vmatprep.subr.bf16.mxu0 0
        %4092 = vmatpush1.bf16.msra.mxu0 0
        %4093 = vmatprep.mubr.bf16.mxu0 0
        %4094 = vmatmul.mubr.bf16.gmra.mrb[0].mxu0 %v3685
        %v4095 = vpop.f32.mrb[0].mxu0
        %v4096 = vadd.f32 %v3503, %v4095
        %v4097 = vpop.f32.mrb[0].mxu0
        %v4098 = vadd.f32 %v3507, %v4097
        %v4099 = vpop.f32.mrb[0].mxu0
        %v4100 = vadd.f32 %v3503, %v4099
        %v4101 = vpop.f32.mrb[0].mxu0
        %v4102 = vadd.f32 %v3507, %v4101
        %4103 = vmatprep.mubr.bf16.mxu0 0
        %4104 = vmatmul.mubr.bf16.gmra.mrb[0].mxu0 %v3688
        %v4105 = vpop.f32.mrb[0].mxu0
        %v4106 = vadd.f32 %v3503, %v4105
        %v4107 = vpop.f32.mrb[0].mxu0
        %v4108 = vadd.f32 %v3507, %v4107
        %v4109 = vpop.f32.mrb[0].mxu0
        %v4110 = vadd.f32 %v3503, %v4109
        %v4111 = vpop.f32.mrb[0].mxu0
        %v4112 = vadd.f32 %v3507, %v4111
        %4113 = vdwg.mxu0
        %v4114 = vmax.f32 %v3725, 0.0
        %v4115 = vmax.f32 %v3727, 0.0
        %v4116 = vmax.f32 %v3778, 0.0
        %v4117 = vmax.f32 %v3780, 0.0
        %v4118 = vmax.f32 %v3831, 0.0
        %v4119 = vmax.f32 %v3833, 0.0
        %v4120 = vmax.f32 %v3884, 0.0
        %v4121 = vmax.f32 %v3886, 0.0
        %v4122 = vmax.f32 %v3937, 0.0
        %v4123 = vmax.f32 %v3939, 0.0
        %v4124 = vmax.f32 %v3990, 0.0
        %v4125 = vmax.f32 %v3992, 0.0
        %v4126 = vmax.f32 %v4043, 0.0
        %v4127 = vmax.f32 %v4045, 0.0
        %v4128 = vmax.f32 %v4096, 0.0
        %v4129 = vmax.f32 %v4098, 0.0
        %v4130 = vmax.f32 %v3729, 0.0
        %v4131 = vmax.f32 %v3731, 0.0
        %v4132 = vmax.f32 %v3782, 0.0
        %v4133 = vmax.f32 %v3784, 0.0
        %v4134 = vmax.f32 %v3835, 0.0
        %v4135 = vmax.f32 %v3837, 0.0
        %v4136 = vmax.f32 %v3888, 0.0
        %v4137 = vmax.f32 %v3890, 0.0
        %v4138 = vmax.f32 %v3941, 0.0
        %v4139 = vmax.f32 %v3943, 0.0
        %v4140 = vmax.f32 %v3994, 0.0
        %v4141 = vmax.f32 %v3996, 0.0
        %v4142 = vmax.f32 %v4047, 0.0
        %v4143 = vmax.f32 %v4049, 0.0
        %v4144 = vmax.f32 %v4100, 0.0
        %v4145 = vmax.f32 %v4102, 0.0
        %v4146 = vmax.f32 %v3735, 0.0
        %v4147 = vmax.f32 %v3737, 0.0
        %v4148 = vmax.f32 %v3788, 0.0
        %v4149 = vmax.f32 %v3790, 0.0
        %v4150 = vmax.f32 %v3841, 0.0
        %v4151 = vmax.f32 %v3843, 0.0
        %v4152 = vmax.f32 %v3894, 0.0
        %v4153 = vmax.f32 %v3896, 0.0
        %v4154 = vmax.f32 %v3947, 0.0
        %v4155 = vmax.f32 %v3949, 0.0
        %v4156 = vmax.f32 %v4000, 0.0
        %v4157 = vmax.f32 %v4002, 0.0
        %v4158 = vmax.f32 %v4053, 0.0
        %v4159 = vmax.f32 %v4055, 0.0
        %v4160 = vmax.f32 %v4106, 0.0
        %v4161 = vmax.f32 %v4108, 0.0
        %v4162 = vmax.f32 %v3739, 0.0
        %v4163 = vmax.f32 %v3741, 0.0
        %v4164 = vmax.f32 %v3792, 0.0
        %v4165 = vmax.f32 %v3794, 0.0
        %v4166 = vmax.f32 %v3845, 0.0
        %v4167 = vmax.f32 %v3847, 0.0
        %v4168 = vmax.f32 %v3898, 0.0
        %v4169 = vmax.f32 %v3900, 0.0
        %v4170 = vmax.f32 %v3951, 0.0
        %v4171 = vmax.f32 %v3953, 0.0
        %v4172 = vmax.f32 %v4004, 0.0
        %v4173 = vmax.f32 %v4006, 0.0
        %v4174 = vmax.f32 %v4057, 0.0
        %v4175 = vmax.f32 %v4059, 0.0
        %v4176 = vmax.f32 %v4110, 0.0
        %v4177 = vmax.f32 %v4112, 0.0
        %v4178 = vpack.c.bf16 %v4130, %v4114
        %v4179 = vpack.c.bf16 %v4131, %v4115
        %v4180 = vpack.c.bf16 %v4132, %v4116
        %v4181 = vpack.c.bf16 %v4133, %v4117
        %v4182 = vpack.c.bf16 %v4134, %v4118
        %v4183 = vpack.c.bf16 %v4135, %v4119
        %v4184 = vpack.c.bf16 %v4136, %v4120
        %v4185 = vpack.c.bf16 %v4137, %v4121
        %v4186 = vpack.c.bf16 %v4138, %v4122
        %v4187 = vpack.c.bf16 %v4139, %v4123
        %v4188 = vpack.c.bf16 %v4140, %v4124
        %v4189 = vpack.c.bf16 %v4141, %v4125
        %v4190 = vpack.c.bf16 %v4142, %v4126
        %v4191 = vpack.c.bf16 %v4143, %v4127
        %v4192 = vpack.c.bf16 %v4144, %v4128
        %v4193 = vpack.c.bf16 %v4145, %v4129
        %v4194 = vpack.c.bf16 %v4162, %v4146
        %v4195 = vpack.c.bf16 %v4163, %v4147
        %v4196 = vpack.c.bf16 %v4164, %v4148
        %v4197 = vpack.c.bf16 %v4165, %v4149
        %v4198 = vpack.c.bf16 %v4166, %v4150
        %v4199 = vpack.c.bf16 %v4167, %v4151
        %v4200 = vpack.c.bf16 %v4168, %v4152
        %v4201 = vpack.c.bf16 %v4169, %v4153
        %v4202 = vpack.c.bf16 %v4170, %v4154
        %v4203 = vpack.c.bf16 %v4171, %v4155
        %v4204 = vpack.c.bf16 %v4172, %v4156
        %v4205 = vpack.c.bf16 %v4173, %v4157
        %v4206 = vpack.c.bf16 %v4174, %v4158
        %v4207 = vpack.c.bf16 %v4175, %v4159
        %v4208 = vpack.c.bf16 %v4176, %v4160
        %v4209 = vpack.c.bf16 %v4177, %v4161
        %v4210 = vld [vmem:[%s1107] sm:$0xf]
        %v4211 = vld [vmem:[%s1107 + $0x4] sm:$0xf]
        %v4212 = vld [vmem:[%s1107 + $0x8] sm:$0xf]
        %v4213 = vld [vmem:[%s1107 + $0xc] sm:$0xf]
        %v4214 = vld [vmem:[%s1107 + $0x10] sm:$0xf]
        %v4215 = vld [vmem:[%s1107 + $0x14] sm:$0xf]
        %v4216 = vld [vmem:[%s1107 + $0x18] sm:$0xf]
        %v4217 = vld [vmem:[%s1107 + $0x1c] sm:$0xf]
        %v4218 = vld [vmem:[%s1107 + $0x20] sm:$0xf]
        %v4219 = vld [vmem:[%s1107 + $0x24] sm:$0xf]
        %v4220 = vld [vmem:[%s1107 + $0x28] sm:$0xf]
        %v4221 = vld [vmem:[%s1107 + $0x2c] sm:$0xf]
        %v4222 = vld [vmem:[%s1107 + $0x30] sm:$0xf]
        %v4223 = vld [vmem:[%s1107 + $0x34] sm:$0xf]
        %v4224 = vld [vmem:[%s1107 + $0x38] sm:$0xf]
        %v4225 = vld [vmem:[%s1107 + $0x3c] sm:$0xf]
        %v4226 = vld [vmem:[%s1107 + $0x40] sm:$0xf]
        %v4227 = vld [vmem:[%s1107 + $0x44] sm:$0xf]
        %v4228 = vld [vmem:[%s1107 + $0x48] sm:$0xf]
        %v4229 = vld [vmem:[%s1107 + $0x4c] sm:$0xf]
        %v4230 = vld [vmem:[%s1107 + $0x50] sm:$0xf]
        %v4231 = vld [vmem:[%s1107 + $0x54] sm:$0xf]
        %v4232 = vld [vmem:[%s1107 + $0x58] sm:$0xf]
        %v4233 = vld [vmem:[%s1107 + $0x5c] sm:$0xf]
        %v4234 = vld [vmem:[%s1107 + $0x60] sm:$0xf]
        %v4235 = vld [vmem:[%s1107 + $0x64] sm:$0xf]
        %v4236 = vld [vmem:[%s1107 + $0x68] sm:$0xf]
        %v4237 = vld [vmem:[%s1107 + $0x6c] sm:$0xf]
        %v4238 = vld [vmem:[%s1107 + $0x70] sm:$0xf]
        %v4239 = vld [vmem:[%s1107 + $0x74] sm:$0xf]
        %v4240 = vld [vmem:[%s1107 + $0x78] sm:$0xf]
        %v4241 = vld [vmem:[%s1107 + $0x7c] sm:$0xf]
        %v4242 = vld [vmem:[%s1107 + $0x80] sm:$0xf]
        %v4243 = vld [vmem:[%s1107 + $0x84] sm:$0xf]
        %v4244 = vld [vmem:[%s1107 + $0x88] sm:$0xf]
        %v4245 = vld [vmem:[%s1107 + $0x8c] sm:$0xf]
        %v4246 = vld [vmem:[%s1107 + $0x90] sm:$0xf]
        %v4247 = vld [vmem:[%s1107 + $0x94] sm:$0xf]
        %v4248 = vld [vmem:[%s1107 + $0x98] sm:$0xf]
        %v4249 = vld [vmem:[%s1107 + $0x9c] sm:$0xf]
        %v4250 = vld [vmem:[%s1107 + $0xa0] sm:$0xf]
        %v4251 = vld [vmem:[%s1107 + $0xa4] sm:$0xf]
        %v4252 = vld [vmem:[%s1107 + $0xa8] sm:$0xf]
        %v4253 = vld [vmem:[%s1107 + $0xac] sm:$0xf]
        %v4254 = vld [vmem:[%s1107 + $0xb0] sm:$0xf]
        %v4255 = vld [vmem:[%s1107 + $0xb4] sm:$0xf]
        %v4256 = vld [vmem:[%s1107 + $0xb8] sm:$0xf]
        %v4257 = vld [vmem:[%s1107 + $0xbc] sm:$0xf]
        %v4258 = vld [vmem:[%s1107 + $0xc0] sm:$0xf]
        %v4259 = vld [vmem:[%s1107 + $0xc4] sm:$0xf]
        %v4260 = vld [vmem:[%s1107 + $0xc8] sm:$0xf]
        %v4261 = vld [vmem:[%s1107 + $0xcc] sm:$0xf]
        %v4262 = vld [vmem:[%s1107 + $0xd0] sm:$0xf]
        %v4263 = vld [vmem:[%s1107 + $0xd4] sm:$0xf]
        %v4264 = vld [vmem:[%s1107 + $0xd8] sm:$0xf]
        %v4265 = vld [vmem:[%s1107 + $0xdc] sm:$0xf]
        %v4266 = vld [vmem:[%s1107 + $0xe0] sm:$0xf]
        %v4267 = vld [vmem:[%s1107 + $0xe4] sm:$0xf]
        %v4268 = vld [vmem:[%s1107 + $0xe8] sm:$0xf]
        %v4269 = vld [vmem:[%s1107 + $0xec] sm:$0xf]
        %v4270 = vld [vmem:[%s1107 + $0xf0] sm:$0xf]
        %v4271 = vld [vmem:[%s1107 + $0xf4] sm:$0xf]
        %v4272 = vld [vmem:[%s1107 + $0xf8] sm:$0xf]
        %v4273 = vld [vmem:[%s1107 + $0xfc] sm:$0xf]
        %v4274 = vld [vmem:[%s1107 + $0x100] sm:$0xf]
        %v4275 = vld [vmem:[%s1107 + $0x104] sm:$0xf]
        %v4276 = vld [vmem:[%s1107 + $0x108] sm:$0xf]
        %v4277 = vld [vmem:[%s1107 + $0x10c] sm:$0xf]
        %v4278 = vld [vmem:[%s1107 + $0x110] sm:$0xf]
        %v4279 = vld [vmem:[%s1107 + $0x114] sm:$0xf]
        %v4280 = vld [vmem:[%s1107 + $0x118] sm:$0xf]
        %v4281 = vld [vmem:[%s1107 + $0x11c] sm:$0xf]
        %v4282 = vld [vmem:[%s1107 + $0x120] sm:$0xf]
        %v4283 = vld [vmem:[%s1107 + $0x124] sm:$0xf]
        %v4284 = vld [vmem:[%s1107 + $0x128] sm:$0xf]
        %v4285 = vld [vmem:[%s1107 + $0x12c] sm:$0xf]
        %v4286 = vld [vmem:[%s1107 + $0x130] sm:$0xf]
        %v4287 = vld [vmem:[%s1107 + $0x134] sm:$0xf]
        %v4288 = vld [vmem:[%s1107 + $0x138] sm:$0xf]
        %v4289 = vld [vmem:[%s1107 + $0x13c] sm:$0xf]
        %v4290 = vld [vmem:[%s1107 + $0x140] sm:$0xf]
        %v4291 = vld [vmem:[%s1107 + $0x144] sm:$0xf]
        %v4292 = vld [vmem:[%s1107 + $0x148] sm:$0xf]
        %v4293 = vld [vmem:[%s1107 + $0x14c] sm:$0xf]
        %v4294 = vld [vmem:[%s1107 + $0x150] sm:$0xf]
        %v4295 = vld [vmem:[%s1107 + $0x154] sm:$0xf]
        %v4296 = vld [vmem:[%s1107 + $0x158] sm:$0xf]
        %v4297 = vld [vmem:[%s1107 + $0x15c] sm:$0xf]
        %v4298 = vld [vmem:[%s1107 + $0x160] sm:$0xf]
        %v4299 = vld [vmem:[%s1107 + $0x164] sm:$0xf]
        %v4300 = vld [vmem:[%s1107 + $0x168] sm:$0xf]
        %v4301 = vld [vmem:[%s1107 + $0x16c] sm:$0xf]
        %v4302 = vld [vmem:[%s1107 + $0x170] sm:$0xf]
        %v4303 = vld [vmem:[%s1107 + $0x174] sm:$0xf]
        %v4304 = vld [vmem:[%s1107 + $0x178] sm:$0xf]
        %v4305 = vld [vmem:[%s1107 + $0x17c] sm:$0xf]
        %v4306 = vld [vmem:[%s1107 + $0x180] sm:$0xf]
        %v4307 = vld [vmem:[%s1107 + $0x184] sm:$0xf]
        %v4308 = vld [vmem:[%s1107 + $0x188] sm:$0xf]
        %v4309 = vld [vmem:[%s1107 + $0x18c] sm:$0xf]
        %v4310 = vld [vmem:[%s1107 + $0x190] sm:$0xf]
        %v4311 = vld [vmem:[%s1107 + $0x194] sm:$0xf]
        %v4312 = vld [vmem:[%s1107 + $0x198] sm:$0xf]
        %v4313 = vld [vmem:[%s1107 + $0x19c] sm:$0xf]
        %v4314 = vld [vmem:[%s1107 + $0x1a0] sm:$0xf]
        %v4315 = vld [vmem:[%s1107 + $0x1a4] sm:$0xf]
        %v4316 = vld [vmem:[%s1107 + $0x1a8] sm:$0xf]
        %v4317 = vld [vmem:[%s1107 + $0x1ac] sm:$0xf]
        %v4318 = vld [vmem:[%s1107 + $0x1b0] sm:$0xf]
        %v4319 = vld [vmem:[%s1107 + $0x1b4] sm:$0xf]
        %v4320 = vld [vmem:[%s1107 + $0x1b8] sm:$0xf]
        %v4321 = vld [vmem:[%s1107 + $0x1bc] sm:$0xf]
        %v4322 = vld [vmem:[%s1107 + $0x1c0] sm:$0xf]
        %v4323 = vld [vmem:[%s1107 + $0x1c4] sm:$0xf]
        %v4324 = vld [vmem:[%s1107 + $0x1c8] sm:$0xf]
        %v4325 = vld [vmem:[%s1107 + $0x1cc] sm:$0xf]
        %v4326 = vld [vmem:[%s1107 + $0x1d0] sm:$0xf]
        %v4327 = vld [vmem:[%s1107 + $0x1d4] sm:$0xf]
        %v4328 = vld [vmem:[%s1107 + $0x1d8] sm:$0xf]
        %v4329 = vld [vmem:[%s1107 + $0x1dc] sm:$0xf]
        %v4330 = vld [vmem:[%s1107 + $0x1e0] sm:$0xf]
        %v4331 = vld [vmem:[%s1107 + $0x1e4] sm:$0xf]
        %v4332 = vld [vmem:[%s1107 + $0x1e8] sm:$0xf]
        %v4333 = vld [vmem:[%s1107 + $0x1ec] sm:$0xf]
        %v4334 = vld [vmem:[%s1107 + $0x1f0] sm:$0xf]
        %v4335 = vld [vmem:[%s1107 + $0x1f4] sm:$0xf]
        %v4336 = vld [vmem:[%s1107 + $0x1f8] sm:$0xf]
        %v4337 = vld [vmem:[%s1107 + $0x1fc] sm:$0xf]
        %v4338 = vld [vmem:[%s1107 + $0x200] sm:$0xf]
        %v4339 = vld [vmem:[%s1107 + $0x204] sm:$0xf]
        %v4340 = vld [vmem:[%s1107 + $0x208] sm:$0xf]
        %v4341 = vld [vmem:[%s1107 + $0x20c] sm:$0xf]
        %v4342 = vld [vmem:[%s1107 + $0x210] sm:$0xf]
        %v4343 = vld [vmem:[%s1107 + $0x214] sm:$0xf]
        %v4344 = vld [vmem:[%s1107 + $0x218] sm:$0xf]
        %v4345 = vld [vmem:[%s1107 + $0x21c] sm:$0xf]
        %v4346 = vld [vmem:[%s1107 + $0x220] sm:$0xf]
        %v4347 = vld [vmem:[%s1107 + $0x224] sm:$0xf]
        %v4348 = vld [vmem:[%s1107 + $0x228] sm:$0xf]
        %v4349 = vld [vmem:[%s1107 + $0x22c] sm:$0xf]
        %v4350 = vld [vmem:[%s1107 + $0x230] sm:$0xf]
        %v4351 = vld [vmem:[%s1107 + $0x234] sm:$0xf]
        %v4352 = vld [vmem:[%s1107 + $0x238] sm:$0xf]
        %v4353 = vld [vmem:[%s1107 + $0x23c] sm:$0xf]
        %v4354 = vld [vmem:[%s1107 + $0x240] sm:$0xf]
        %v4355 = vld [vmem:[%s1107 + $0x244] sm:$0xf]
        %v4356 = vld [vmem:[%s1107 + $0x248] sm:$0xf]
        %v4357 = vld [vmem:[%s1107 + $0x24c] sm:$0xf]
        %v4358 = vld [vmem:[%s1107 + $0x250] sm:$0xf]
        %v4359 = vld [vmem:[%s1107 + $0x254] sm:$0xf]
        %v4360 = vld [vmem:[%s1107 + $0x258] sm:$0xf]
        %v4361 = vld [vmem:[%s1107 + $0x25c] sm:$0xf]
        %v4362 = vld [vmem:[%s1107 + $0x260] sm:$0xf]
        %v4363 = vld [vmem:[%s1107 + $0x264] sm:$0xf]
        %v4364 = vld [vmem:[%s1107 + $0x268] sm:$0xf]
        %v4365 = vld [vmem:[%s1107 + $0x26c] sm:$0xf]
        %v4366 = vld [vmem:[%s1107 + $0x270] sm:$0xf]
        %v4367 = vld [vmem:[%s1107 + $0x274] sm:$0xf]
        %v4368 = vld [vmem:[%s1107 + $0x278] sm:$0xf]
        %v4369 = vld [vmem:[%s1107 + $0x27c] sm:$0xf]
        %v4370 = vld [vmem:[%s1107 + $0x280] sm:$0xf]
        %v4371 = vld [vmem:[%s1107 + $0x284] sm:$0xf]
        %v4372 = vld [vmem:[%s1107 + $0x288] sm:$0xf]
        %v4373 = vld [vmem:[%s1107 + $0x28c] sm:$0xf]
        %v4374 = vld [vmem:[%s1107 + $0x290] sm:$0xf]
        %v4375 = vld [vmem:[%s1107 + $0x294] sm:$0xf]
        %v4376 = vld [vmem:[%s1107 + $0x298] sm:$0xf]
        %v4377 = vld [vmem:[%s1107 + $0x29c] sm:$0xf]
        %v4378 = vld [vmem:[%s1107 + $0x2a0] sm:$0xf]
        %v4379 = vld [vmem:[%s1107 + $0x2a4] sm:$0xf]
        %v4380 = vld [vmem:[%s1107 + $0x2a8] sm:$0xf]
        %v4381 = vld [vmem:[%s1107 + $0x2ac] sm:$0xf]
        %v4382 = vld [vmem:[%s1107 + $0x2b0] sm:$0xf]
        %v4383 = vld [vmem:[%s1107 + $0x2b4] sm:$0xf]
        %v4384 = vld [vmem:[%s1107 + $0x2b8] sm:$0xf]
        %v4385 = vld [vmem:[%s1107 + $0x2bc] sm:$0xf]
        %v4386 = vld [vmem:[%s1107 + $0x2c0] sm:$0xf]
        %v4387 = vld [vmem:[%s1107 + $0x2c4] sm:$0xf]
        %v4388 = vld [vmem:[%s1107 + $0x2c8] sm:$0xf]
        %v4389 = vld [vmem:[%s1107 + $0x2cc] sm:$0xf]
        %v4390 = vld [vmem:[%s1107 + $0x2d0] sm:$0xf]
        %v4391 = vld [vmem:[%s1107 + $0x2d4] sm:$0xf]
        %v4392 = vld [vmem:[%s1107 + $0x2d8] sm:$0xf]
        %v4393 = vld [vmem:[%s1107 + $0x2dc] sm:$0xf]
        %v4394 = vld [vmem:[%s1107 + $0x2e0] sm:$0xf]
        %v4395 = vld [vmem:[%s1107 + $0x2e4] sm:$0xf]
        %v4396 = vld [vmem:[%s1107 + $0x2e8] sm:$0xf]
        %v4397 = vld [vmem:[%s1107 + $0x2ec] sm:$0xf]
        %v4398 = vld [vmem:[%s1107 + $0x2f0] sm:$0xf]
        %v4399 = vld [vmem:[%s1107 + $0x2f4] sm:$0xf]
        %v4400 = vld [vmem:[%s1107 + $0x2f8] sm:$0xf]
        %v4401 = vld [vmem:[%s1107 + $0x2fc] sm:$0xf]
        %v4402 = vld [vmem:[%s1107 + $0x300] sm:$0xf]
        %v4403 = vld [vmem:[%s1107 + $0x304] sm:$0xf]
        %v4404 = vld [vmem:[%s1107 + $0x308] sm:$0xf]
        %v4405 = vld [vmem:[%s1107 + $0x30c] sm:$0xf]
        %v4406 = vld [vmem:[%s1107 + $0x310] sm:$0xf]
        %v4407 = vld [vmem:[%s1107 + $0x314] sm:$0xf]
        %v4408 = vld [vmem:[%s1107 + $0x318] sm:$0xf]
        %v4409 = vld [vmem:[%s1107 + $0x31c] sm:$0xf]
        %v4410 = vld [vmem:[%s1107 + $0x320] sm:$0xf]
        %v4411 = vld [vmem:[%s1107 + $0x324] sm:$0xf]
        %v4412 = vld [vmem:[%s1107 + $0x328] sm:$0xf]
        %v4413 = vld [vmem:[%s1107 + $0x32c] sm:$0xf]
        %v4414 = vld [vmem:[%s1107 + $0x330] sm:$0xf]
        %v4415 = vld [vmem:[%s1107 + $0x334] sm:$0xf]
        %v4416 = vld [vmem:[%s1107 + $0x338] sm:$0xf]
        %v4417 = vld [vmem:[%s1107 + $0x33c] sm:$0xf]
        %v4418 = vld [vmem:[%s1107 + $0x340] sm:$0xf]
        %v4419 = vld [vmem:[%s1107 + $0x344] sm:$0xf]
        %v4420 = vld [vmem:[%s1107 + $0x348] sm:$0xf]
        %v4421 = vld [vmem:[%s1107 + $0x34c] sm:$0xf]
        %v4422 = vld [vmem:[%s1107 + $0x350] sm:$0xf]
        %v4423 = vld [vmem:[%s1107 + $0x354] sm:$0xf]
        %v4424 = vld [vmem:[%s1107 + $0x358] sm:$0xf]
        %v4425 = vld [vmem:[%s1107 + $0x35c] sm:$0xf]
        %v4426 = vld [vmem:[%s1107 + $0x360] sm:$0xf]
        %v4427 = vld [vmem:[%s1107 + $0x364] sm:$0xf]
        %v4428 = vld [vmem:[%s1107 + $0x368] sm:$0xf]
        %v4429 = vld [vmem:[%s1107 + $0x36c] sm:$0xf]
        %v4430 = vld [vmem:[%s1107 + $0x370] sm:$0xf]
        %v4431 = vld [vmem:[%s1107 + $0x374] sm:$0xf]
        %v4432 = vld [vmem:[%s1107 + $0x378] sm:$0xf]
        %v4433 = vld [vmem:[%s1107 + $0x37c] sm:$0xf]
        %v4434 = vld [vmem:[%s1107 + $0x380] sm:$0xf]
        %v4435 = vld [vmem:[%s1107 + $0x384] sm:$0xf]
        %v4436 = vld [vmem:[%s1107 + $0x388] sm:$0xf]
        %v4437 = vld [vmem:[%s1107 + $0x38c] sm:$0xf]
        %v4438 = vld [vmem:[%s1107 + $0x390] sm:$0xf]
        %v4439 = vld [vmem:[%s1107 + $0x394] sm:$0xf]
        %v4440 = vld [vmem:[%s1107 + $0x398] sm:$0xf]
        %v4441 = vld [vmem:[%s1107 + $0x39c] sm:$0xf]
        %v4442 = vld [vmem:[%s1107 + $0x3a0] sm:$0xf]
        %v4443 = vld [vmem:[%s1107 + $0x3a4] sm:$0xf]
        %v4444 = vld [vmem:[%s1107 + $0x3a8] sm:$0xf]
        %v4445 = vld [vmem:[%s1107 + $0x3ac] sm:$0xf]
        %v4446 = vld [vmem:[%s1107 + $0x3b0] sm:$0xf]
        %v4447 = vld [vmem:[%s1107 + $0x3b4] sm:$0xf]
        %v4448 = vld [vmem:[%s1107 + $0x3b8] sm:$0xf]
        %v4449 = vld [vmem:[%s1107 + $0x3bc] sm:$0xf]
        %v4450 = vld [vmem:[%s1107 + $0x3c0] sm:$0xf]
        %v4451 = vld [vmem:[%s1107 + $0x3c4] sm:$0xf]
        %v4452 = vld [vmem:[%s1107 + $0x3c8] sm:$0xf]
        %v4453 = vld [vmem:[%s1107 + $0x3cc] sm:$0xf]
        %v4454 = vld [vmem:[%s1107 + $0x3d0] sm:$0xf]
        %v4455 = vld [vmem:[%s1107 + $0x3d4] sm:$0xf]
        %v4456 = vld [vmem:[%s1107 + $0x3d8] sm:$0xf]
        %v4457 = vld [vmem:[%s1107 + $0x3dc] sm:$0xf]
        %v4458 = vld [vmem:[%s1107 + $0x3e0] sm:$0xf]
        %v4459 = vld [vmem:[%s1107 + $0x3e4] sm:$0xf]
        %v4460 = vld [vmem:[%s1107 + $0x3e8] sm:$0xf]
        %v4461 = vld [vmem:[%s1107 + $0x3ec] sm:$0xf]
        %v4462 = vld [vmem:[%s1107 + $0x3f0] sm:$0xf]
        %v4463 = vld [vmem:[%s1107 + $0x3f4] sm:$0xf]
        %v4464 = vld [vmem:[%s1107 + $0x3f8] sm:$0xf]
        %v4465 = vld [vmem:[%s1107 + $0x3fc] sm:$0xf]
        %v4466 = vld [vmem:[%s1110] sm:$0x1]
        %v4468 = vlaneseq
        %v4469 = vshrl.u32 %v4468, 7
        %v4470 = vsub.s32 0, %v4469
        %v4471 = vrot.slane %v4466, %v4470
        %v4729 = vunpack.c.l.b16 %v4210
        %v4730 = vunpack.c.l.b16 %v4211
        %v4731 = vunpack.c.l.b16 %v4212
        %v4732 = vunpack.c.l.b16 %v4213
        %v4733 = vunpack.c.l.b16 %v4214
        %v4734 = vunpack.c.l.b16 %v4215
        %v4735 = vunpack.c.l.b16 %v4216
        %v4736 = vunpack.c.l.b16 %v4217
        %v4737 = vunpack.c.l.b16 %v4218
        %v4738 = vunpack.c.l.b16 %v4219
        %v4739 = vunpack.c.l.b16 %v4220
        %v4740 = vunpack.c.l.b16 %v4221
        %v4741 = vunpack.c.l.b16 %v4222
        %v4742 = vunpack.c.l.b16 %v4223
        %v4743 = vunpack.c.l.b16 %v4224
        %v4744 = vunpack.c.l.b16 %v4225
        %v4745 = vunpack.c.l.b16 %v4226
        %v4746 = vunpack.c.l.b16 %v4227
        %v4747 = vunpack.c.l.b16 %v4228
        %v4748 = vunpack.c.l.b16 %v4229
        %v4749 = vunpack.c.l.b16 %v4230
        %v4750 = vunpack.c.l.b16 %v4231
        %v4751 = vunpack.c.l.b16 %v4232
        %v4752 = vunpack.c.l.b16 %v4233
        %v4753 = vunpack.c.l.b16 %v4234
        %v4754 = vunpack.c.l.b16 %v4235
        %v4755 = vunpack.c.l.b16 %v4236
        %v4756 = vunpack.c.l.b16 %v4237
        %v4757 = vunpack.c.l.b16 %v4238
        %v4758 = vunpack.c.l.b16 %v4239
        %v4759 = vunpack.c.l.b16 %v4240
        %v4760 = vunpack.c.l.b16 %v4241
        %v4761 = vunpack.c.l.b16 %v4242
        %v4762 = vunpack.c.l.b16 %v4243
        %v4763 = vunpack.c.l.b16 %v4244
        %v4764 = vunpack.c.l.b16 %v4245
        %v4765 = vunpack.c.l.b16 %v4246
        %v4766 = vunpack.c.l.b16 %v4247
        %v4767 = vunpack.c.l.b16 %v4248
        %v4768 = vunpack.c.l.b16 %v4249
        %v4769 = vunpack.c.l.b16 %v4250
        %v4770 = vunpack.c.l.b16 %v4251
        %v4771 = vunpack.c.l.b16 %v4252
        %v4772 = vunpack.c.l.b16 %v4253
        %v4773 = vunpack.c.l.b16 %v4254
        %v4774 = vunpack.c.l.b16 %v4255
        %v4775 = vunpack.c.l.b16 %v4256
        %v4776 = vunpack.c.l.b16 %v4257
        %v4777 = vunpack.c.l.b16 %v4258
        %v4778 = vunpack.c.l.b16 %v4259
        %v4779 = vunpack.c.l.b16 %v4260
        %v4780 = vunpack.c.l.b16 %v4261
        %v4781 = vunpack.c.l.b16 %v4262
        %v4782 = vunpack.c.l.b16 %v4263
        %v4783 = vunpack.c.l.b16 %v4264
        %v4784 = vunpack.c.l.b16 %v4265
        %v4785 = vunpack.c.l.b16 %v4266
        %v4786 = vunpack.c.l.b16 %v4267
        %v4787 = vunpack.c.l.b16 %v4268
        %v4788 = vunpack.c.l.b16 %v4269
        %v4789 = vunpack.c.l.b16 %v4270
        %v4790 = vunpack.c.l.b16 %v4271
        %v4791 = vunpack.c.l.b16 %v4272
        %v4792 = vunpack.c.l.b16 %v4273
        %v4793 = vunpack.c.l.b16 %v4274
        %v4794 = vunpack.c.l.b16 %v4275
        %v4795 = vunpack.c.l.b16 %v4276
        %v4796 = vunpack.c.l.b16 %v4277
        %v4797 = vunpack.c.l.b16 %v4278
        %v4798 = vunpack.c.l.b16 %v4279
        %v4799 = vunpack.c.l.b16 %v4280
        %v4800 = vunpack.c.l.b16 %v4281
        %v4801 = vunpack.c.l.b16 %v4282
        %v4802 = vunpack.c.l.b16 %v4283
        %v4803 = vunpack.c.l.b16 %v4284
        %v4804 = vunpack.c.l.b16 %v4285
        %v4805 = vunpack.c.l.b16 %v4286
        %v4806 = vunpack.c.l.b16 %v4287
        %v4807 = vunpack.c.l.b16 %v4288
        %v4808 = vunpack.c.l.b16 %v4289
        %v4809 = vunpack.c.l.b16 %v4290
        %v4810 = vunpack.c.l.b16 %v4291
        %v4811 = vunpack.c.l.b16 %v4292
        %v4812 = vunpack.c.l.b16 %v4293
        %v4813 = vunpack.c.l.b16 %v4294
        %v4814 = vunpack.c.l.b16 %v4295
        %v4815 = vunpack.c.l.b16 %v4296
        %v4816 = vunpack.c.l.b16 %v4297
        %v4817 = vunpack.c.l.b16 %v4298
        %v4818 = vunpack.c.l.b16 %v4299
        %v4819 = vunpack.c.l.b16 %v4300
        %v4820 = vunpack.c.l.b16 %v4301
        %v4821 = vunpack.c.l.b16 %v4302
        %v4822 = vunpack.c.l.b16 %v4303
        %v4823 = vunpack.c.l.b16 %v4304
        %v4824 = vunpack.c.l.b16 %v4305
        %v4825 = vunpack.c.l.b16 %v4306
        %v4826 = vunpack.c.l.b16 %v4307
        %v4827 = vunpack.c.l.b16 %v4308
        %v4828 = vunpack.c.l.b16 %v4309
        %v4829 = vunpack.c.l.b16 %v4310
        %v4830 = vunpack.c.l.b16 %v4311
        %v4831 = vunpack.c.l.b16 %v4312
        %v4832 = vunpack.c.l.b16 %v4313
        %v4833 = vunpack.c.l.b16 %v4314
        %v4834 = vunpack.c.l.b16 %v4315
        %v4835 = vunpack.c.l.b16 %v4316
        %v4836 = vunpack.c.l.b16 %v4317
        %v4837 = vunpack.c.l.b16 %v4318
        %v4838 = vunpack.c.l.b16 %v4319
        %v4839 = vunpack.c.l.b16 %v4320
        %v4840 = vunpack.c.l.b16 %v4321
        %v4841 = vunpack.c.l.b16 %v4322
        %v4842 = vunpack.c.l.b16 %v4323
        %v4843 = vunpack.c.l.b16 %v4324
        %v4844 = vunpack.c.l.b16 %v4325
        %v4845 = vunpack.c.l.b16 %v4326
        %v4846 = vunpack.c.l.b16 %v4327
        %v4847 = vunpack.c.l.b16 %v4328
        %v4848 = vunpack.c.l.b16 %v4329
        %v4849 = vunpack.c.l.b16 %v4330
        %v4850 = vunpack.c.l.b16 %v4331
        %v4851 = vunpack.c.l.b16 %v4332
        %v4852 = vunpack.c.l.b16 %v4333
        %v4853 = vunpack.c.l.b16 %v4334
        %v4854 = vunpack.c.l.b16 %v4335
        %v4855 = vunpack.c.l.b16 %v4336
        %v4856 = vunpack.c.l.b16 %v4337
        %v4857 = vunpack.c.l.b16 %v4338
        %v4858 = vunpack.c.l.b16 %v4339
        %v4859 = vunpack.c.l.b16 %v4340
        %v4860 = vunpack.c.l.b16 %v4341
        %v4861 = vunpack.c.l.b16 %v4342
        %v4862 = vunpack.c.l.b16 %v4343
        %v4863 = vunpack.c.l.b16 %v4344
        %v4864 = vunpack.c.l.b16 %v4345
        %v4865 = vunpack.c.l.b16 %v4346
        %v4866 = vunpack.c.l.b16 %v4347
        %v4867 = vunpack.c.l.b16 %v4348
        %v4868 = vunpack.c.l.b16 %v4349
        %v4869 = vunpack.c.l.b16 %v4350
        %v4870 = vunpack.c.l.b16 %v4351
        %v4871 = vunpack.c.l.b16 %v4352
        %v4872 = vunpack.c.l.b16 %v4353
        %v4873 = vunpack.c.l.b16 %v4354
        %v4874 = vunpack.c.l.b16 %v4355
        %v4875 = vunpack.c.l.b16 %v4356
        %v4876 = vunpack.c.l.b16 %v4357
        %v4877 = vunpack.c.l.b16 %v4358
        %v4878 = vunpack.c.l.b16 %v4359
        %v4879 = vunpack.c.l.b16 %v4360
        %v4880 = vunpack.c.l.b16 %v4361
        %v4881 = vunpack.c.l.b16 %v4362
        %v4882 = vunpack.c.l.b16 %v4363
        %v4883 = vunpack.c.l.b16 %v4364
        %v4884 = vunpack.c.l.b16 %v4365
        %v4885 = vunpack.c.l.b16 %v4366
        %v4886 = vunpack.c.l.b16 %v4367
        %v4887 = vunpack.c.l.b16 %v4368
        %v4888 = vunpack.c.l.b16 %v4369
        %v4889 = vunpack.c.l.b16 %v4370
        %v4890 = vunpack.c.l.b16 %v4371
        %v4891 = vunpack.c.l.b16 %v4372
        %v4892 = vunpack.c.l.b16 %v4373
        %v4893 = vunpack.c.l.b16 %v4374
        %v4894 = vunpack.c.l.b16 %v4375
        %v4895 = vunpack.c.l.b16 %v4376
        %v4896 = vunpack.c.l.b16 %v4377
        %v4897 = vunpack.c.l.b16 %v4378
        %v4898 = vunpack.c.l.b16 %v4379
        %v4899 = vunpack.c.l.b16 %v4380
        %v4900 = vunpack.c.l.b16 %v4381
        %v4901 = vunpack.c.l.b16 %v4382
        %v4902 = vunpack.c.l.b16 %v4383
        %v4903 = vunpack.c.l.b16 %v4384
        %v4904 = vunpack.c.l.b16 %v4385
        %v4905 = vunpack.c.l.b16 %v4386
        %v4906 = vunpack.c.l.b16 %v4387
        %v4907 = vunpack.c.l.b16 %v4388
        %v4908 = vunpack.c.l.b16 %v4389
        %v4909 = vunpack.c.l.b16 %v4390
        %v4910 = vunpack.c.l.b16 %v4391
        %v4911 = vunpack.c.l.b16 %v4392
        %v4912 = vunpack.c.l.b16 %v4393
        %v4913 = vunpack.c.l.b16 %v4394
        %v4914 = vunpack.c.l.b16 %v4395
        %v4915 = vunpack.c.l.b16 %v4396
        %v4916 = vunpack.c.l.b16 %v4397
        %v4917 = vunpack.c.l.b16 %v4398
        %v4918 = vunpack.c.l.b16 %v4399
        %v4919 = vunpack.c.l.b16 %v4400
        %v4920 = vunpack.c.l.b16 %v4401
        %v4921 = vunpack.c.l.b16 %v4402
        %v4922 = vunpack.c.l.b16 %v4403
        %v4923 = vunpack.c.l.b16 %v4404
        %v4924 = vunpack.c.l.b16 %v4405
        %v4925 = vunpack.c.l.b16 %v4406
        %v4926 = vunpack.c.l.b16 %v4407
        %v4927 = vunpack.c.l.b16 %v4408
        %v4928 = vunpack.c.l.b16 %v4409
        %v4929 = vunpack.c.l.b16 %v4410
        %v4930 = vunpack.c.l.b16 %v4411
        %v4931 = vunpack.c.l.b16 %v4412
        %v4932 = vunpack.c.l.b16 %v4413
        %v4933 = vunpack.c.l.b16 %v4414
        %v4934 = vunpack.c.l.b16 %v4415
        %v4935 = vunpack.c.l.b16 %v4416
        %v4936 = vunpack.c.l.b16 %v4417
        %v4937 = vunpack.c.l.b16 %v4418
        %v4938 = vunpack.c.l.b16 %v4419
        %v4939 = vunpack.c.l.b16 %v4420
        %v4940 = vunpack.c.l.b16 %v4421
        %v4941 = vunpack.c.l.b16 %v4422
        %v4942 = vunpack.c.l.b16 %v4423
        %v4943 = vunpack.c.l.b16 %v4424
        %v4944 = vunpack.c.l.b16 %v4425
        %v4945 = vunpack.c.l.b16 %v4426
        %v4946 = vunpack.c.l.b16 %v4427
        %v4947 = vunpack.c.l.b16 %v4428
        %v4948 = vunpack.c.l.b16 %v4429
        %v4949 = vunpack.c.l.b16 %v4430
        %v4950 = vunpack.c.l.b16 %v4431
        %v4951 = vunpack.c.l.b16 %v4432
        %v4952 = vunpack.c.l.b16 %v4433
        %v4953 = vunpack.c.l.b16 %v4434
        %v4954 = vunpack.c.l.b16 %v4435
        %v4955 = vunpack.c.l.b16 %v4436
        %v4956 = vunpack.c.l.b16 %v4437
        %v4957 = vunpack.c.l.b16 %v4438
        %v4958 = vunpack.c.l.b16 %v4439
        %v4959 = vunpack.c.l.b16 %v4440
        %v4960 = vunpack.c.l.b16 %v4441
        %v4961 = vunpack.c.l.b16 %v4442
        %v4962 = vunpack.c.l.b16 %v4443
        %v4963 = vunpack.c.l.b16 %v4444
        %v4964 = vunpack.c.l.b16 %v4445
        %v4965 = vunpack.c.l.b16 %v4446
        %v4966 = vunpack.c.l.b16 %v4447
        %v4967 = vunpack.c.l.b16 %v4448
        %v4968 = vunpack.c.l.b16 %v4449
        %v4969 = vunpack.c.l.b16 %v4450
        %v4970 = vunpack.c.l.b16 %v4451
        %v4971 = vunpack.c.l.b16 %v4452
        %v4972 = vunpack.c.l.b16 %v4453
        %v4973 = vunpack.c.l.b16 %v4454
        %v4974 = vunpack.c.l.b16 %v4455
        %v4975 = vunpack.c.l.b16 %v4456
        %v4976 = vunpack.c.l.b16 %v4457
        %v4977 = vunpack.c.l.b16 %v4458
        %v4978 = vunpack.c.l.b16 %v4459
        %v4979 = vunpack.c.l.b16 %v4460
        %v4980 = vunpack.c.l.b16 %v4461
        %v4981 = vunpack.c.l.b16 %v4462
        %v4982 = vunpack.c.l.b16 %v4463
        %v4983 = vunpack.c.l.b16 %v4464
        %v4984 = vunpack.c.l.b16 %v4465
        %v4985 = vpack.c.b16 %v4730, %v4729
        %v4986 = vpack.c.b16 %v4732, %v4731
        %v4987 = vpack.c.b16 %v4734, %v4733
        %v4988 = vpack.c.b16 %v4736, %v4735
        %v4989 = vpack.c.b16 %v4738, %v4737
        %v4990 = vpack.c.b16 %v4740, %v4739
        %v4991 = vpack.c.b16 %v4742, %v4741
        %v4992 = vpack.c.b16 %v4744, %v4743
        %v4993 = vpack.c.b16 %v4746, %v4745
        %v4994 = vpack.c.b16 %v4748, %v4747
        %v4995 = vpack.c.b16 %v4750, %v4749
        %v4996 = vpack.c.b16 %v4752, %v4751
        %v4997 = vpack.c.b16 %v4754, %v4753
        %v4998 = vpack.c.b16 %v4756, %v4755
        %v4999 = vpack.c.b16 %v4758, %v4757
        %v5000 = vpack.c.b16 %v4760, %v4759
        %v5001 = vpack.c.b16 %v4762, %v4761
        %v5002 = vpack.c.b16 %v4764, %v4763
        %v5003 = vpack.c.b16 %v4766, %v4765
        %v5004 = vpack.c.b16 %v4768, %v4767
        %v5005 = vpack.c.b16 %v4770, %v4769
        %v5006 = vpack.c.b16 %v4772, %v4771
        %v5007 = vpack.c.b16 %v4774, %v4773
        %v5008 = vpack.c.b16 %v4776, %v4775
        %v5009 = vpack.c.b16 %v4778, %v4777
        %v5010 = vpack.c.b16 %v4780, %v4779
        %v5011 = vpack.c.b16 %v4782, %v4781
        %v5012 = vpack.c.b16 %v4784, %v4783
        %v5013 = vpack.c.b16 %v4786, %v4785
        %v5014 = vpack.c.b16 %v4788, %v4787
        %v5015 = vpack.c.b16 %v4790, %v4789
        %v5016 = vpack.c.b16 %v4792, %v4791
        %v5017 = vpack.c.b16 %v4794, %v4793
        %v5018 = vpack.c.b16 %v4796, %v4795
        %v5019 = vpack.c.b16 %v4798, %v4797
        %v5020 = vpack.c.b16 %v4800, %v4799
        %v5021 = vpack.c.b16 %v4802, %v4801
        %v5022 = vpack.c.b16 %v4804, %v4803
        %v5023 = vpack.c.b16 %v4806, %v4805
        %v5024 = vpack.c.b16 %v4808, %v4807
        %v5025 = vpack.c.b16 %v4810, %v4809
        %v5026 = vpack.c.b16 %v4812, %v4811
        %v5027 = vpack.c.b16 %v4814, %v4813
        %v5028 = vpack.c.b16 %v4816, %v4815
        %v5029 = vpack.c.b16 %v4818, %v4817
        %v5030 = vpack.c.b16 %v4820, %v4819
        %v5031 = vpack.c.b16 %v4822, %v4821
        %v5032 = vpack.c.b16 %v4824, %v4823
        %v5033 = vpack.c.b16 %v4826, %v4825
        %v5034 = vpack.c.b16 %v4828, %v4827
        %v5035 = vpack.c.b16 %v4830, %v4829
        %v5036 = vpack.c.b16 %v4832, %v4831
        %v5037 = vpack.c.b16 %v4834, %v4833
        %v5038 = vpack.c.b16 %v4836, %v4835
        %v5039 = vpack.c.b16 %v4838, %v4837
        %v5040 = vpack.c.b16 %v4840, %v4839
        %v5041 = vpack.c.b16 %v4842, %v4841
        %v5042 = vpack.c.b16 %v4844, %v4843
        %v5043 = vpack.c.b16 %v4846, %v4845
        %v5044 = vpack.c.b16 %v4848, %v4847
        %v5045 = vpack.c.b16 %v4850, %v4849
        %v5046 = vpack.c.b16 %v4852, %v4851
        %v5047 = vpack.c.b16 %v4854, %v4853
        %v5048 = vpack.c.b16 %v4856, %v4855
        %v5049 = vpack.c.b16 %v4858, %v4857
        %v5050 = vpack.c.b16 %v4860, %v4859
        %v5051 = vpack.c.b16 %v4862, %v4861
        %v5052 = vpack.c.b16 %v4864, %v4863
        %v5053 = vpack.c.b16 %v4866, %v4865
        %v5054 = vpack.c.b16 %v4868, %v4867
        %v5055 = vpack.c.b16 %v4870, %v4869
        %v5056 = vpack.c.b16 %v4872, %v4871
        %v5057 = vpack.c.b16 %v4874, %v4873
        %v5058 = vpack.c.b16 %v4876, %v4875
        %v5059 = vpack.c.b16 %v4878, %v4877
        %v5060 = vpack.c.b16 %v4880, %v4879
        %v5061 = vpack.c.b16 %v4882, %v4881
        %v5062 = vpack.c.b16 %v4884, %v4883
        %v5063 = vpack.c.b16 %v4886, %v4885
        %v5064 = vpack.c.b16 %v4888, %v4887
        %v5065 = vpack.c.b16 %v4890, %v4889
        %v5066 = vpack.c.b16 %v4892, %v4891
        %v5067 = vpack.c.b16 %v4894, %v4893
        %v5068 = vpack.c.b16 %v4896, %v4895
        %v5069 = vpack.c.b16 %v4898, %v4897
        %v5070 = vpack.c.b16 %v4900, %v4899
        %v5071 = vpack.c.b16 %v4902, %v4901
        %v5072 = vpack.c.b16 %v4904, %v4903
        %v5073 = vpack.c.b16 %v4906, %v4905
        %v5074 = vpack.c.b16 %v4908, %v4907
        %v5075 = vpack.c.b16 %v4910, %v4909
        %v5076 = vpack.c.b16 %v4912, %v4911
        %v5077 = vpack.c.b16 %v4914, %v4913
        %v5078 = vpack.c.b16 %v4916, %v4915
        %v5079 = vpack.c.b16 %v4918, %v4917
        %v5080 = vpack.c.b16 %v4920, %v4919
        %v5081 = vpack.c.b16 %v4922, %v4921
        %v5082 = vpack.c.b16 %v4924, %v4923
        %v5083 = vpack.c.b16 %v4926, %v4925
        %v5084 = vpack.c.b16 %v4928, %v4927
        %v5085 = vpack.c.b16 %v4930, %v4929
        %v5086 = vpack.c.b16 %v4932, %v4931
        %v5087 = vpack.c.b16 %v4934, %v4933
        %v5088 = vpack.c.b16 %v4936, %v4935
        %v5089 = vpack.c.b16 %v4938, %v4937
        %v5090 = vpack.c.b16 %v4940, %v4939
        %v5091 = vpack.c.b16 %v4942, %v4941
        %v5092 = vpack.c.b16 %v4944, %v4943
        %v5093 = vpack.c.b16 %v4946, %v4945
        %v5094 = vpack.c.b16 %v4948, %v4947
        %v5095 = vpack.c.b16 %v4950, %v4949
        %v5096 = vpack.c.b16 %v4952, %v4951
        %v5097 = vpack.c.b16 %v4954, %v4953
        %v5098 = vpack.c.b16 %v4956, %v4955
        %v5099 = vpack.c.b16 %v4958, %v4957
        %v5100 = vpack.c.b16 %v4960, %v4959
        %v5101 = vpack.c.b16 %v4962, %v4961
        %v5102 = vpack.c.b16 %v4964, %v4963
        %v5103 = vpack.c.b16 %v4966, %v4965
        %v5104 = vpack.c.b16 %v4968, %v4967
        %v5105 = vpack.c.b16 %v4970, %v4969
        %v5106 = vpack.c.b16 %v4972, %v4971
        %v5107 = vpack.c.b16 %v4974, %v4973
        %v5108 = vpack.c.b16 %v4976, %v4975
        %v5109 = vpack.c.b16 %v4978, %v4977
        %v5110 = vpack.c.b16 %v4980, %v4979
        %v5111 = vpack.c.b16 %v4982, %v4981
        %v5112 = vpack.c.b16 %v4984, %v4983
        %5241 = vmatprep.subr.bf16.mxu0 0
        %5242 = vmatpush1.bf16.msra.mxu0 %v4985
        %5243 = vmatprep.subr.bf16.mxu0 0
        %5244 = vmatpush1.bf16.msra.mxu0 %v4986
        %5245 = vmatprep.subr.bf16.mxu0 0
        %5246 = vmatpush1.bf16.msra.mxu0 %v4987
        %5247 = vmatprep.subr.bf16.mxu0 0
        %5248 = vmatpush1.bf16.msra.mxu0 %v4988
        %5249 = vmatprep.subr.bf16.mxu0 0
        %5250 = vmatpush1.bf16.msra.mxu0 %v4989
        %5251 = vmatprep.subr.bf16.mxu0 0
        %5252 = vmatpush1.bf16.msra.mxu0 %v4990
        %5253 = vmatprep.subr.bf16.mxu0 0
        %5254 = vmatpush1.bf16.msra.mxu0 %v4991
        %5255 = vmatprep.subr.bf16.mxu0 0
        %5256 = vmatpush1.bf16.msra.mxu0 %v4992
        %5257 = vmatprep.subr.bf16.mxu0 0
        %5258 = vmatpush1.bf16.msra.mxu0 %v4993
        %5259 = vmatprep.subr.bf16.mxu0 0
        %5260 = vmatpush1.bf16.msra.mxu0 %v4994
        %5261 = vmatprep.subr.bf16.mxu0 0
        %5262 = vmatpush1.bf16.msra.mxu0 %v4995
        %5263 = vmatprep.subr.bf16.mxu0 0
        %5264 = vmatpush1.bf16.msra.mxu0 %v4996
        %5265 = vmatprep.subr.bf16.mxu0 0
        %5266 = vmatpush1.bf16.msra.mxu0 %v4997
        %5267 = vmatprep.subr.bf16.mxu0 0
        %5268 = vmatpush1.bf16.msra.mxu0 %v4998
        %5269 = vmatprep.subr.bf16.mxu0 0
        %5270 = vmatpush1.bf16.msra.mxu0 %v4999
        %5271 = vmatprep.subr.bf16.mxu0 0
        %5272 = vmatpush1.bf16.msra.mxu0 %v5000
        %5273 = vmatprep.mubr.bf16.mxu0 %v4179
        %5274 = vmatmul.mubr.bf16.gmra.mrb[0].mxu0 %v4178
        %v5275 = vpop.f32.mrb[0].mxu0
        %v5276 = vadd.f32 %v4471, %v5275
        %v5277 = vpop.f32.mrb[0].mxu0
        %v5278 = vpop.f32.mrb[0].mxu0
        %v5279 = vadd.f32 %v4471, %v5278
        %v5280 = vpop.f32.mrb[0].mxu0
        %5281 = vmatprep.mubr.bf16.mxu0 %v4195
        %5282 = vmatmul.mubr.bf16.gmra.mrb[0].mxu0 %v4194
        %v5283 = vpop.f32.mrb[0].mxu0
        %v5284 = vadd.f32 %v4471, %v5283
        %v5285 = vpop.f32.mrb[0].mxu0
        %v5286 = vpop.f32.mrb[0].mxu0
        %v5287 = vadd.f32 %v4471, %v5286
        %v5288 = vpop.f32.mrb[0].mxu0
        %5289 = vdwg.mxu0
        %5290 = vmatprep.subr.bf16.mxu0 0
        %5291 = vmatpush1.bf16.msra.mxu0 %v5001
        %5292 = vmatprep.subr.bf16.mxu0 0
        %5293 = vmatpush1.bf16.msra.mxu0 %v5002
        %5294 = vmatprep.subr.bf16.mxu0 0
        %5295 = vmatpush1.bf16.msra.mxu0 %v5003
        %5296 = vmatprep.subr.bf16.mxu0 0
        %5297 = vmatpush1.bf16.msra.mxu0 %v5004
        %5298 = vmatprep.subr.bf16.mxu0 0
        %5299 = vmatpush1.bf16.msra.mxu0 %v5005
        %5300 = vmatprep.subr.bf16.mxu0 0
        %5301 = vmatpush1.bf16.msra.mxu0 %v5006
        %5302 = vmatprep.subr.bf16.mxu0 0
        %5303 = vmatpush1.bf16.msra.mxu0 %v5007
        %5304 = vmatprep.subr.bf16.mxu0 0
        %5305 = vmatpush1.bf16.msra.mxu0 %v5008
        %5306 = vmatprep.subr.bf16.mxu0 0
        %5307 = vmatpush1.bf16.msra.mxu0 %v5009
        %5308 = vmatprep.subr.bf16.mxu0 0
        %5309 = vmatpush1.bf16.msra.mxu0 %v5010
        %5310 = vmatprep.subr.bf16.mxu0 0
        %5311 = vmatpush1.bf16.msra.mxu0 %v5011
        %5312 = vmatprep.subr.bf16.mxu0 0
        %5313 = vmatpush1.bf16.msra.mxu0 %v5012
        %5314 = vmatprep.subr.bf16.mxu0 0
        %5315 = vmatpush1.bf16.msra.mxu0 %v5013
        %5316 = vmatprep.subr.bf16.mxu0 0
        %5317 = vmatpush1.bf16.msra.mxu0 %v5014
        %5318 = vmatprep.subr.bf16.mxu0 0
        %5319 = vmatpush1.bf16.msra.mxu0 %v5015
        %5320 = vmatprep.subr.bf16.mxu0 0
        %5321 = vmatpush1.bf16.msra.mxu0 %v5016
        %5322 = vmatprep.mubr.bf16.mxu0 %v4181
        %5323 = vmatmul.mubr.bf16.gmra.mrb[0].mxu0 %v4180
        %v5324 = vpop.f32.mrb[0].mxu0
        %v5325 = vadd.f32 %v5276, %v5324
        %v5326 = vpop.f32.mrb[0].mxu0
        %v5327 = vpop.f32.mrb[0].mxu0
        %v5328 = vadd.f32 %v5279, %v5327
        %v5329 = vpop.f32.mrb[0].mxu0
        %5330 = vmatprep.mubr.bf16.mxu0 %v4197
        %5331 = vmatmul.mubr.bf16.gmra.mrb[0].mxu0 %v4196
        %v5332 = vpop.f32.mrb[0].mxu0
        %v5333 = vadd.f32 %v5284, %v5332
        %v5334 = vpop.f32.mrb[0].mxu0
        %v5335 = vpop.f32.mrb[0].mxu0
        %v5336 = vadd.f32 %v5287, %v5335
        %v5337 = vpop.f32.mrb[0].mxu0
        %5338 = vdwg.mxu0
        %5339 = vmatprep.subr.bf16.mxu0 0
        %5340 = vmatpush1.bf16.msra.mxu0 %v5017
        %5341 = vmatprep.subr.bf16.mxu0 0
        %5342 = vmatpush1.bf16.msra.mxu0 %v5018
        %5343 = vmatprep.subr.bf16.mxu0 0
        %5344 = vmatpush1.bf16.msra.mxu0 %v5019
        %5345 = vmatprep.subr.bf16.mxu0 0
        %5346 = vmatpush1.bf16.msra.mxu0 %v5020
        %5347 = vmatprep.subr.bf16.mxu0 0
        %5348 = vmatpush1.bf16.msra.mxu0 %v5021
        %5349 = vmatprep.subr.bf16.mxu0 0
        %5350 = vmatpush1.bf16.msra.mxu0 %v5022
        %5351 = vmatprep.subr.bf16.mxu0 0
        %5352 = vmatpush1.bf16.msra.mxu0 %v5023
        %5353 = vmatprep.subr.bf16.mxu0 0
        %5354 = vmatpush1.bf16.msra.mxu0 %v5024
        %5355 = vmatprep.subr.bf16.mxu0 0
        %5356 = vmatpush1.bf16.msra.mxu0 %v5025
        %5357 = vmatprep.subr.bf16.mxu0 0
        %5358 = vmatpush1.bf16.msra.mxu0 %v5026
        %5359 = vmatprep.subr.bf16.mxu0 0
        %5360 = vmatpush1.bf16.msra.mxu0 %v5027
        %5361 = vmatprep.subr.bf16.mxu0 0
        %5362 = vmatpush1.bf16.msra.mxu0 %v5028
        %5363 = vmatprep.subr.bf16.mxu0 0
        %5364 = vmatpush1.bf16.msra.mxu0 %v5029
        %5365 = vmatprep.subr.bf16.mxu0 0
        %5366 = vmatpush1.bf16.msra.mxu0 %v5030
        %5367 = vmatprep.subr.bf16.mxu0 0
        %5368 = vmatpush1.bf16.msra.mxu0 %v5031
        %5369 = vmatprep.subr.bf16.mxu0 0
        %5370 = vmatpush1.bf16.msra.mxu0 %v5032
        %5371 = vmatprep.mubr.bf16.mxu0 %v4183
        %5372 = vmatmul.mubr.bf16.gmra.mrb[0].mxu0 %v4182
        %v5373 = vpop.f32.mrb[0].mxu0
        %v5374 = vadd.f32 %v5325, %v5373
        %v5375 = vpop.f32.mrb[0].mxu0
        %v5376 = vpop.f32.mrb[0].mxu0
        %v5377 = vadd.f32 %v5328, %v5376
        %v5378 = vpop.f32.mrb[0].mxu0
        %5379 = vmatprep.mubr.bf16.mxu0 %v4199
        %5380 = vmatmul.mubr.bf16.gmra.mrb[0].mxu0 %v4198
        %v5381 = vpop.f32.mrb[0].mxu0
        %v5382 = vadd.f32 %v5333, %v5381
        %v5383 = vpop.f32.mrb[0].mxu0
        %v5384 = vpop.f32.mrb[0].mxu0
        %v5385 = vadd.f32 %v5336, %v5384
        %v5386 = vpop.f32.mrb[0].mxu0
        %5387 = vdwg.mxu0
        %5388 = vmatprep.subr.bf16.mxu0 0
        %5389 = vmatpush1.bf16.msra.mxu0 %v5033
        %5390 = vmatprep.subr.bf16.mxu0 0
        %5391 = vmatpush1.bf16.msra.mxu0 %v5034
        %5392 = vmatprep.subr.bf16.mxu0 0
        %5393 = vmatpush1.bf16.msra.mxu0 %v5035
        %5394 = vmatprep.subr.bf16.mxu0 0
        %5395 = vmatpush1.bf16.msra.mxu0 %v5036
        %5396 = vmatprep.subr.bf16.mxu0 0
        %5397 = vmatpush1.bf16.msra.mxu0 %v5037
        %5398 = vmatprep.subr.bf16.mxu0 0
        %5399 = vmatpush1.bf16.msra.mxu0 %v5038
        %5400 = vmatprep.subr.bf16.mxu0 0
        %5401 = vmatpush1.bf16.msra.mxu0 %v5039
        %5402 = vmatprep.subr.bf16.mxu0 0
        %5403 = vmatpush1.bf16.msra.mxu0 %v5040
        %5404 = vmatprep.subr.bf16.mxu0 0
        %5405 = vmatpush1.bf16.msra.mxu0 %v5041
        %5406 = vmatprep.subr.bf16.mxu0 0
        %5407 = vmatpush1.bf16.msra.mxu0 %v5042
        %5408 = vmatprep.subr.bf16.mxu0 0
        %5409 = vmatpush1.bf16.msra.mxu0 %v5043
        %5410 = vmatprep.subr.bf16.mxu0 0
        %5411 = vmatpush1.bf16.msra.mxu0 %v5044
        %5412 = vmatprep.subr.bf16.mxu0 0
        %5413 = vmatpush1.bf16.msra.mxu0 %v5045
        %5414 = vmatprep.subr.bf16.mxu0 0
        %5415 = vmatpush1.bf16.msra.mxu0 %v5046
        %5416 = vmatprep.subr.bf16.mxu0 0
        %5417 = vmatpush1.bf16.msra.mxu0 %v5047
        %5418 = vmatprep.subr.bf16.mxu0 0
        %5419 = vmatpush1.bf16.msra.mxu0 %v5048
        %5420 = vmatprep.mubr.bf16.mxu0 %v4185
        %5421 = vmatmul.mubr.bf16.gmra.mrb[0].mxu0 %v4184
        %v5422 = vpop.f32.mrb[0].mxu0
        %v5423 = vadd.f32 %v5374, %v5422
        %v5424 = vpop.f32.mrb[0].mxu0
        %v5425 = vpop.f32.mrb[0].mxu0
        %v5426 = vadd.f32 %v5377, %v5425
        %v5427 = vpop.f32.mrb[0].mxu0
        %5428 = vmatprep.mubr.bf16.mxu0 %v4201
        %5429 = vmatmul.mubr.bf16.gmra.mrb[0].mxu0 %v4200
        %v5430 = vpop.f32.mrb[0].mxu0
        %v5431 = vadd.f32 %v5382, %v5430
        %v5432 = vpop.f32.mrb[0].mxu0
        %v5433 = vpop.f32.mrb[0].mxu0
        %v5434 = vadd.f32 %v5385, %v5433
        %v5435 = vpop.f32.mrb[0].mxu0
        %5436 = vdwg.mxu0
        %5437 = vmatprep.subr.bf16.mxu0 0
        %5438 = vmatpush1.bf16.msra.mxu0 %v5049
        %5439 = vmatprep.subr.bf16.mxu0 0
        %5440 = vmatpush1.bf16.msra.mxu0 %v5050
        %5441 = vmatprep.subr.bf16.mxu0 0
        %5442 = vmatpush1.bf16.msra.mxu0 %v5051
        %5443 = vmatprep.subr.bf16.mxu0 0
        %5444 = vmatpush1.bf16.msra.mxu0 %v5052
        %5445 = vmatprep.subr.bf16.mxu0 0
        %5446 = vmatpush1.bf16.msra.mxu0 %v5053
        %5447 = vmatprep.subr.bf16.mxu0 0
        %5448 = vmatpush1.bf16.msra.mxu0 %v5054
        %5449 = vmatprep.subr.bf16.mxu0 0
        %5450 = vmatpush1.bf16.msra.mxu0 %v5055
        %5451 = vmatprep.subr.bf16.mxu0 0
        %5452 = vmatpush1.bf16.msra.mxu0 %v5056
        %5453 = vmatprep.subr.bf16.mxu0 0
        %5454 = vmatpush1.bf16.msra.mxu0 %v5057
        %5455 = vmatprep.subr.bf16.mxu0 0
        %5456 = vmatpush1.bf16.msra.mxu0 %v5058
        %5457 = vmatprep.subr.bf16.mxu0 0
        %5458 = vmatpush1.bf16.msra.mxu0 %v5059
        %5459 = vmatprep.subr.bf16.mxu0 0
        %5460 = vmatpush1.bf16.msra.mxu0 %v5060
        %5461 = vmatprep.subr.bf16.mxu0 0
        %5462 = vmatpush1.bf16.msra.mxu0 %v5061
        %5463 = vmatprep.subr.bf16.mxu0 0
        %5464 = vmatpush1.bf16.msra.mxu0 %v5062
        %5465 = vmatprep.subr.bf16.mxu0 0
        %5466 = vmatpush1.bf16.msra.mxu0 %v5063
        %5467 = vmatprep.subr.bf16.mxu0 0
        %5468 = vmatpush1.bf16.msra.mxu0 %v5064
        %5469 = vmatprep.mubr.bf16.mxu0 %v4187
        %5470 = vmatmul.mubr.bf16.gmra.mrb[0].mxu0 %v4186
        %v5471 = vpop.f32.mrb[0].mxu0
        %v5472 = vadd.f32 %v5423, %v5471
        %v5473 = vpop.f32.mrb[0].mxu0
        %v5474 = vpop.f32.mrb[0].mxu0
        %v5475 = vadd.f32 %v5426, %v5474
        %v5476 = vpop.f32.mrb[0].mxu0
        %5477 = vmatprep.mubr.bf16.mxu0 %v4203
        %5478 = vmatmul.mubr.bf16.gmra.mrb[0].mxu0 %v4202
        %v5479 = vpop.f32.mrb[0].mxu0
        %v5480 = vadd.f32 %v5431, %v5479
        %v5481 = vpop.f32.mrb[0].mxu0
        %v5482 = vpop.f32.mrb[0].mxu0
        %v5483 = vadd.f32 %v5434, %v5482
        %v5484 = vpop.f32.mrb[0].mxu0
        %5485 = vdwg.mxu0
        %5486 = vmatprep.subr.bf16.mxu0 0
        %5487 = vmatpush1.bf16.msra.mxu0 %v5065
        %5488 = vmatprep.subr.bf16.mxu0 0
        %5489 = vmatpush1.bf16.msra.mxu0 %v5066
        %5490 = vmatprep.subr.bf16.mxu0 0
        %5491 = vmatpush1.bf16.msra.mxu0 %v5067
        %5492 = vmatprep.subr.bf16.mxu0 0
        %5493 = vmatpush1.bf16.msra.mxu0 %v5068
        %5494 = vmatprep.subr.bf16.mxu0 0
        %5495 = vmatpush1.bf16.msra.mxu0 %v5069
        %5496 = vmatprep.subr.bf16.mxu0 0
        %5497 = vmatpush1.bf16.msra.mxu0 %v5070
        %5498 = vmatprep.subr.bf16.mxu0 0
        %5499 = vmatpush1.bf16.msra.mxu0 %v5071
        %5500 = vmatprep.subr.bf16.mxu0 0
        %5501 = vmatpush1.bf16.msra.mxu0 %v5072
        %5502 = vmatprep.subr.bf16.mxu0 0
        %5503 = vmatpush1.bf16.msra.mxu0 %v5073
        %5504 = vmatprep.subr.bf16.mxu0 0
        %5505 = vmatpush1.bf16.msra.mxu0 %v5074
        %5506 = vmatprep.subr.bf16.mxu0 0
        %5507 = vmatpush1.bf16.msra.mxu0 %v5075
        %5508 = vmatprep.subr.bf16.mxu0 0
        %5509 = vmatpush1.bf16.msra.mxu0 %v5076
        %5510 = vmatprep.subr.bf16.mxu0 0
        %5511 = vmatpush1.bf16.msra.mxu0 %v5077
        %5512 = vmatprep.subr.bf16.mxu0 0
        %5513 = vmatpush1.bf16.msra.mxu0 %v5078
        %5514 = vmatprep.subr.bf16.mxu0 0
        %5515 = vmatpush1.bf16.msra.mxu0 %v5079
        %5516 = vmatprep.subr.bf16.mxu0 0
        %5517 = vmatpush1.bf16.msra.mxu0 %v5080
        %5518 = vmatprep.mubr.bf16.mxu0 %v4189
        %5519 = vmatmul.mubr.bf16.gmra.mrb[0].mxu0 %v4188
        %v5520 = vpop.f32.mrb[0].mxu0
        %v5521 = vadd.f32 %v5472, %v5520
        %v5522 = vpop.f32.mrb[0].mxu0
        %v5523 = vpop.f32.mrb[0].mxu0
        %v5524 = vadd.f32 %v5475, %v5523
        %v5525 = vpop.f32.mrb[0].mxu0
        %5526 = vmatprep.mubr.bf16.mxu0 %v4205
        %5527 = vmatmul.mubr.bf16.gmra.mrb[0].mxu0 %v4204
        %v5528 = vpop.f32.mrb[0].mxu0
        %v5529 = vadd.f32 %v5480, %v5528
        %v5530 = vpop.f32.mrb[0].mxu0
        %v5531 = vpop.f32.mrb[0].mxu0
        %v5532 = vadd.f32 %v5483, %v5531
        %v5533 = vpop.f32.mrb[0].mxu0
        %5534 = vdwg.mxu0
        %5535 = vmatprep.subr.bf16.mxu0 0
        %5536 = vmatpush1.bf16.msra.mxu0 %v5081
        %5537 = vmatprep.subr.bf16.mxu0 0
        %5538 = vmatpush1.bf16.msra.mxu0 %v5082
        %5539 = vmatprep.subr.bf16.mxu0 0
        %5540 = vmatpush1.bf16.msra.mxu0 %v5083
        %5541 = vmatprep.subr.bf16.mxu0 0
        %5542 = vmatpush1.bf16.msra.mxu0 %v5084
        %5543 = vmatprep.subr.bf16.mxu0 0
        %5544 = vmatpush1.bf16.msra.mxu0 %v5085
        %5545 = vmatprep.subr.bf16.mxu0 0
        %5546 = vmatpush1.bf16.msra.mxu0 %v5086
        %5547 = vmatprep.subr.bf16.mxu0 0
        %5548 = vmatpush1.bf16.msra.mxu0 %v5087
        %5549 = vmatprep.subr.bf16.mxu0 0
        %5550 = vmatpush1.bf16.msra.mxu0 %v5088
        %5551 = vmatprep.subr.bf16.mxu0 0
        %5552 = vmatpush1.bf16.msra.mxu0 %v5089
        %5553 = vmatprep.subr.bf16.mxu0 0
        %5554 = vmatpush1.bf16.msra.mxu0 %v5090
        %5555 = vmatprep.subr.bf16.mxu0 0
        %5556 = vmatpush1.bf16.msra.mxu0 %v5091
        %5557 = vmatprep.subr.bf16.mxu0 0
        %5558 = vmatpush1.bf16.msra.mxu0 %v5092
        %5559 = vmatprep.subr.bf16.mxu0 0
        %5560 = vmatpush1.bf16.msra.mxu0 %v5093
        %5561 = vmatprep.subr.bf16.mxu0 0
        %5562 = vmatpush1.bf16.msra.mxu0 %v5094
        %5563 = vmatprep.subr.bf16.mxu0 0
        %5564 = vmatpush1.bf16.msra.mxu0 %v5095
        %5565 = vmatprep.subr.bf16.mxu0 0
        %5566 = vmatpush1.bf16.msra.mxu0 %v5096
        %5567 = vmatprep.mubr.bf16.mxu0 %v4191
        %5568 = vmatmul.mubr.bf16.gmra.mrb[0].mxu0 %v4190
        %v5569 = vpop.f32.mrb[0].mxu0
        %v5570 = vadd.f32 %v5521, %v5569
        %v5571 = vpop.f32.mrb[0].mxu0
        %v5572 = vpop.f32.mrb[0].mxu0
        %v5573 = vadd.f32 %v5524, %v5572
        %v5574 = vpop.f32.mrb[0].mxu0
        %5575 = vmatprep.mubr.bf16.mxu0 %v4207
        %5576 = vmatmul.mubr.bf16.gmra.mrb[0].mxu0 %v4206
        %v5577 = vpop.f32.mrb[0].mxu0
        %v5578 = vadd.f32 %v5529, %v5577
        %v5579 = vpop.f32.mrb[0].mxu0
        %v5580 = vpop.f32.mrb[0].mxu0
        %v5581 = vadd.f32 %v5532, %v5580
        %v5582 = vpop.f32.mrb[0].mxu0
        %5583 = vdwg.mxu0
        %5584 = vmatprep.subr.bf16.mxu0 0
        %5585 = vmatpush1.bf16.msra.mxu0 %v5097
        %5586 = vmatprep.subr.bf16.mxu0 0
        %5587 = vmatpush1.bf16.msra.mxu0 %v5098
        %5588 = vmatprep.subr.bf16.mxu0 0
        %5589 = vmatpush1.bf16.msra.mxu0 %v5099
        %5590 = vmatprep.subr.bf16.mxu0 0
        %5591 = vmatpush1.bf16.msra.mxu0 %v5100
        %5592 = vmatprep.subr.bf16.mxu0 0
        %5593 = vmatpush1.bf16.msra.mxu0 %v5101
        %5594 = vmatprep.subr.bf16.mxu0 0
        %5595 = vmatpush1.bf16.msra.mxu0 %v5102
        %5596 = vmatprep.subr.bf16.mxu0 0
        %5597 = vmatpush1.bf16.msra.mxu0 %v5103
        %5598 = vmatprep.subr.bf16.mxu0 0
        %5599 = vmatpush1.bf16.msra.mxu0 %v5104
        %5600 = vmatprep.subr.bf16.mxu0 0
        %5601 = vmatpush1.bf16.msra.mxu0 %v5105
        %5602 = vmatprep.subr.bf16.mxu0 0
        %5603 = vmatpush1.bf16.msra.mxu0 %v5106
        %5604 = vmatprep.subr.bf16.mxu0 0
        %5605 = vmatpush1.bf16.msra.mxu0 %v5107
        %5606 = vmatprep.subr.bf16.mxu0 0
        %5607 = vmatpush1.bf16.msra.mxu0 %v5108
        %5608 = vmatprep.subr.bf16.mxu0 0
        %5609 = vmatpush1.bf16.msra.mxu0 %v5109
        %5610 = vmatprep.subr.bf16.mxu0 0
        %5611 = vmatpush1.bf16.msra.mxu0 %v5110
        %5612 = vmatprep.subr.bf16.mxu0 0
        %5613 = vmatpush1.bf16.msra.mxu0 %v5111
        %5614 = vmatprep.subr.bf16.mxu0 0
        %5615 = vmatpush1.bf16.msra.mxu0 %v5112
        %5616 = vmatprep.mubr.bf16.mxu0 %v4193
        %5617 = vmatmul.mubr.bf16.gmra.mrb[0].mxu0 %v4192
        %v5618 = vpop.f32.mrb[0].mxu0
        %v5619 = vadd.f32 %v5570, %v5618
        %v5620 = vpop.f32.mrb[0].mxu0
        %v5621 = vpop.f32.mrb[0].mxu0
        %v5622 = vadd.f32 %v5573, %v5621
        %v5623 = vpop.f32.mrb[0].mxu0
        %5624 = vmatprep.mubr.bf16.mxu0 %v4209
        %5625 = vmatmul.mubr.bf16.gmra.mrb[0].mxu0 %v4208
        %v5626 = vpop.f32.mrb[0].mxu0
        %v5627 = vadd.f32 %v5578, %v5626
        %v5628 = vpop.f32.mrb[0].mxu0
        %v5629 = vpop.f32.mrb[0].mxu0
        %v5630 = vadd.f32 %v5581, %v5629
        %v5631 = vpop.f32.mrb[0].mxu0
        %5632 = vdwg.mxu0
        %v5633 = vadd.f32 %v3402, %v5619
        %v5634 = vadd.f32 %v3403, %v5622
        %v5635 = vadd.f32 %v3404, %v5627
        %v5636 = vadd.f32 %v3405, %v5630
        %v5637 = vld [vmem:[%s1119] sm:$0x1]
        %v5638 = vld [vmem:[%s1122] sm:$0x1]
        %v5639 = vsel %vm1365, %v5633, 0.0
        %5640 = vadd.xlane.f32.xlu0 %v5639
        %v5641 = vpop.xlane.xlu0 %5640
        %v5642 = vsel %vm1365, %v5634, 0.0
        %5643 = vadd.xlane.f32.xlu0 %v5642
        %v5644 = vpop.xlane.xlu0 %5643
        %v5645 = vsel %vm1365, %v5635, 0.0
        %5646 = vadd.xlane.f32.xlu0 %v5645
        %v5647 = vpop.xlane.xlu0 %5646
        %v5648 = vsel %vm1365, %v5636, 0.0
        %5649 = vadd.xlane.f32.xlu0 %v5648
        %v5650 = vpop.xlane.xlu0 %5649
        %v5651 = vmul.f32 %v5641, %v3345
        %v5652 = vmul.f32 %v5644, %v3345
        %v5653 = vmul.f32 %v5647, %v3345
        %v5654 = vmul.f32 %v5650, %v3345
        %v5655 = vsub.f32 %v5633, %v5651
        %v5656 = vsub.f32 %v5634, %v5652
        %v5657 = vsub.f32 %v5635, %v5653
        %v5658 = vsub.f32 %v5636, %v5654
        %v5659 = vmul.f32 %v5655, %v5655
        %v5660 = vmul.f32 %v5656, %v5656
        %v5661 = vmul.f32 %v5657, %v5657
        %v5662 = vmul.f32 %v5658, %v5658
        %v5663 = vsel %vm1365, %v5659, 0.0
        %5664 = vadd.xlane.f32.xlu0 %v5663
        %v5665 = vpop.xlane.xlu0 %5664
        %v5666 = vsel %vm1365, %v5660, 0.0
        %5667 = vadd.xlane.f32.xlu0 %v5666
        %v5668 = vpop.xlane.xlu0 %5667
        %v5669 = vsel %vm1365, %v5661, 0.0
        %5670 = vadd.xlane.f32.xlu0 %v5669
        %v5671 = vpop.xlane.xlu0 %5670
        %v5672 = vsel %vm1365, %v5662, 0.0
        %5673 = vadd.xlane.f32.xlu0 %v5672
        %v5674 = vpop.xlane.xlu0 %5673
        %v5675 = vmul.f32 %v5665, %v3345
        %v5676 = vmul.f32 %v5668, %v3345
        %v5677 = vmul.f32 %v5671, %v3345
        %v5678 = vmul.f32 %v5674, %v3345
        %v5679 = vadd.f32 %v5675, 1e-05
        %v5680 = vadd.f32 %v5676, 1e-05
        %v5681 = vadd.f32 %v5677, 1e-05
        %v5682 = vadd.f32 %v5678, 1e-05
        %v5683 = vrsqrt.pop %v5679
        %v5684 = vrsqrt.pop %v5680
        %v5685 = vrsqrt.pop %v5681
        %v5686 = vrsqrt.pop %v5682
        %v5687 = vmul.f32 %v5655, %v5683
        %v5688 = vmul.f32 %v5656, %v5684
        %v5689 = vmul.f32 %v5657, %v5685
        %v5690 = vmul.f32 %v5658, %v5686
        %v5692 = vlaneseq
        %v5693 = vshrl.u32 %v5692, 7
        %v5694 = vsub.s32 0, %v5693
        %v5695 = vrot.slane %v5637, %v5694
        %v5697 = vmul.f32 %v5687, %v5695
        %v5698 = vmul.f32 %v5688, %v5695
        %v5699 = vmul.f32 %v5689, %v5695
        %v5700 = vmul.f32 %v5690, %v5695
        %v5702 = vlaneseq
        %v5703 = vshrl.u32 %v5702, 7
        %v5704 = vsub.s32 0, %v5703
        %v5705 = vrot.slane %v5638, %v5704
        %v5707 = vadd.f32 %v5697, %v5705
        %v5708 = vadd.f32 %v5698, %v5705
        %v5709 = vadd.f32 %v5699, %v5705
        %v5710 = vadd.f32 %v5700, %v5705
        %5711 = vst.msk [vmem:[#allocation2] sm:$0xff] %vm1365, %v5707
        %5712 = vst.msk [vmem:[#allocation2 + $0x8] sm:$0xff] %vm1365, %v5708
        %5713 = vst.msk [vmem:[#allocation2 + $0x10] sm:$0xff] %vm1365, %v5709
        %5714 = vst.msk [vmem:[#allocation2 + $0x18] sm:$0xff] %vm1365, %v5710
        %p5715 = scmp.eq.s32.totalorder %s78, 3
        // Predicated region
        $region145: #{tpu_custom_call.1} parent=139 // pred_check
          %p5716 = pneg %p5715
        $region146: #{tpu_custom_call.1} parent=139 // pred_check_branch
          %5718 = sbr.rel (%p5716) target = $region148
        $region147: #{tpu_custom_call.1} parent=139 // pred_region
          %v5719 = vld [vmem:[%s9] sm:$0x3]
          %v5721 = vsel %vm1365, %v5719, 0
          %5723 = vmatprep.subr.mxu0 0.0
          %5724 = vmatpush1.msra.mxu0 %v5707
          %5725 = vmatprep.subr.mxu0 0.0
          %5726 = vmatpush1.msra.mxu0 %v5708
          %5727 = vmatprep.subr.mxu0 0.0
          %5728 = vmatpush1.msra.mxu0 %v5709
          %5729 = vmatprep.subr.mxu0 0.0
          %5730 = vmatpush1.msra.mxu0 %v5710
          %5731 = vmatprep.subr.mxu0 0.0
          %5732 = vmatpush1.msra.mxu0 0.0
          %5733 = vmatprep.subr.mxu0 0.0
          %5734 = vmatpush1.msra.mxu0 0.0
          %5735 = vmatprep.subr.mxu0 0.0
          %5736 = vmatpush1.msra.mxu0 0.0
          %5737 = vmatprep.subr.mxu0 0.0
          %5738 = vmatpush1.msra.mxu0 0.0
          %5739 = vmatprep.subr.mxu0 0.0
          %5740 = vmatpush1.msra.mxu0 0.0
          %5741 = vmatprep.subr.mxu0 0.0
          %5742 = vmatpush1.msra.mxu0 0.0
          %5743 = vmatprep.subr.mxu0 0.0
          %5744 = vmatpush1.msra.mxu0 0.0
          %5745 = vmatprep.subr.mxu0 0.0
          %5746 = vmatpush1.msra.mxu0 0.0
          %5747 = vmatprep.subr.mxu0 0.0
          %5748 = vmatpush1.msra.mxu0 0.0
          %5749 = vmatprep.subr.mxu0 0.0
          %5750 = vmatpush1.msra.mxu0 0.0
          %5751 = vmatprep.subr.mxu0 0.0
          %5752 = vmatpush1.msra.mxu0 0.0
          %5753 = vmatprep.subr.mxu0 0.0
          %5754 = vmatpush1.msra.mxu0 0.0
          %5755 = vmatprep.subr.mxu0 0.0
          %5756 = vmatpush1.msra.mxu0 0.0
          %5757 = vmatprep.subr.mxu0 0.0
          %5758 = vmatpush1.msra.mxu0 0.0
          %5759 = vmatprep.subr.mxu0 0.0
          %5760 = vmatpush1.msra.mxu0 0.0
          %5761 = vmatprep.subr.mxu0 0.0
          %5762 = vmatpush1.msra.mxu0 0.0
          %5763 = vmatprep.subr.mxu0 0.0
          %5764 = vmatpush1.msra.mxu0 0.0
          %5765 = vmatprep.subr.mxu0 0.0
          %5766 = vmatpush1.msra.mxu0 0.0
          %5767 = vmatprep.subr.mxu0 0.0
          %5768 = vmatpush1.msra.mxu0 0.0
          %5769 = vmatprep.subr.mxu0 0.0
          %5770 = vmatpush1.msra.mxu0 0.0
          %5771 = vmatprep.subr.mxu0 0.0
          %5772 = vmatpush1.msra.mxu0 0.0
          %5773 = vmatprep.subr.mxu0 0.0
          %5774 = vmatpush1.msra.mxu0 0.0
          %5775 = vmatprep.subr.mxu0 0.0
          %5776 = vmatpush1.msra.mxu0 0.0
          %5777 = vmatprep.subr.mxu0 0.0
          %5778 = vmatpush1.msra.mxu0 0.0
          %5779 = vmatprep.subr.mxu0 0.0
          %5780 = vmatpush1.msra.mxu0 0.0
          %5781 = vmatprep.subr.mxu0 0.0
          %5782 = vmatpush1.msra.mxu0 0.0
          %5783 = vmatprep.subr.mxu0 0.0
          %5784 = vmatpush1.msra.mxu0 0.0
          %5785 = vmatprep.subr.mxu0 0.0
          %5786 = vmatpush1.msra.mxu0 0.0
          %5787 = vmatprep.mubr.f32.mxu0 0.0
          %5788 = vmatmul.mubr.f32.gmra.mrb[0].mxu0 %v5721
          %v5789 = vpop.f32.mrb[0].mxu0
          %v5790 = vadd.f32 0.0, %v5789
          %v5791 = vpop.f32.mrb[0].mxu0
          %5792 = vdwg.mxu0
          %v5793 = vld [vmem:[%s11] sm:$0x3]
          %v5794 = vld [vmem:[%s17] sm:$0xff]
          %v5795 = vld [vmem:[%s17 + $0x8] sm:$0xff]
          %v5796 = vld [vmem:[%s19] sm:$0x1]
          %v5798 = vlaneseq
          %v5799 = vshrl.u32 %v5798, 7
          %v5800 = vsub.s32 0, %v5799
          %v5801 = vrot.slane %v5796, %v5800
          %v5804 = vsel %vm1751, %v5793, 0
          %5806 = vmatprep.subr.mxu0 0.0
          %5807 = vmatpush1.msra.mxu0 %v5794
          %5808 = vmatprep.subr.mxu0 0.0
          %5809 = vmatpush1.msra.mxu0 %v5795
          %5810 = vmatprep.subr.mxu0 0.0
          %5811 = vmatpush1.msra.mxu0 0.0
          %5812 = vmatprep.subr.mxu0 0.0
          %5813 = vmatpush1.msra.mxu0 0.0
          %5814 = vmatprep.subr.mxu0 0.0
          %5815 = vmatpush1.msra.mxu0 0.0
          %5816 = vmatprep.subr.mxu0 0.0
          %5817 = vmatpush1.msra.mxu0 0.0
          %5818 = vmatprep.subr.mxu0 0.0
          %5819 = vmatpush1.msra.mxu0 0.0
          %5820 = vmatprep.subr.mxu0 0.0
          %5821 = vmatpush1.msra.mxu0 0.0
          %5822 = vmatprep.subr.mxu0 0.0
          %5823 = vmatpush1.msra.mxu0 0.0
          %5824 = vmatprep.subr.mxu0 0.0
          %5825 = vmatpush1.msra.mxu0 0.0
          %5826 = vmatprep.subr.mxu0 0.0
          %5827 = vmatpush1.msra.mxu0 0.0
          %5828 = vmatprep.subr.mxu0 0.0
          %5829 = vmatpush1.msra.mxu0 0.0
          %5830 = vmatprep.subr.mxu0 0.0
          %5831 = vmatpush1.msra.mxu0 0.0
          %5832 = vmatprep.subr.mxu0 0.0
          %5833 = vmatpush1.msra.mxu0 0.0
          %5834 = vmatprep.subr.mxu0 0.0
          %5835 = vmatpush1.msra.mxu0 0.0
          %5836 = vmatprep.subr.mxu0 0.0
          %5837 = vmatpush1.msra.mxu0 0.0
          %5838 = vmatprep.subr.mxu0 0.0
          %5839 = vmatpush1.msra.mxu0 0.0
          %5840 = vmatprep.subr.mxu0 0.0
          %5841 = vmatpush1.msra.mxu0 0.0
          %5842 = vmatprep.subr.mxu0 0.0
          %5843 = vmatpush1.msra.mxu0 0.0
          %5844 = vmatprep.subr.mxu0 0.0
          %5845 = vmatpush1.msra.mxu0 0.0
          %5846 = vmatprep.subr.mxu0 0.0
          %5847 = vmatpush1.msra.mxu0 0.0
          %5848 = vmatprep.subr.mxu0 0.0
          %5849 = vmatpush1.msra.mxu0 0.0
          %5850 = vmatprep.subr.mxu0 0.0
          %5851 = vmatpush1.msra.mxu0 0.0
          %5852 = vmatprep.subr.mxu0 0.0
          %5853 = vmatpush1.msra.mxu0 0.0
          %5854 = vmatprep.subr.mxu0 0.0
          %5855 = vmatpush1.msra.mxu0 0.0
          %5856 = vmatprep.subr.mxu0 0.0
          %5857 = vmatpush1.msra.mxu0 0.0
          %5858 = vmatprep.subr.mxu0 0.0
          %5859 = vmatpush1.msra.mxu0 0.0
          %5860 = vmatprep.subr.mxu0 0.0
          %5861 = vmatpush1.msra.mxu0 0.0
          %5862 = vmatprep.subr.mxu0 0.0
          %5863 = vmatpush1.msra.mxu0 0.0
          %5864 = vmatprep.subr.mxu0 0.0
          %5865 = vmatpush1.msra.mxu0 0.0
          %5866 = vmatprep.subr.mxu0 0.0
          %5867 = vmatpush1.msra.mxu0 0.0
          %5868 = vmatprep.subr.mxu0 0.0
          %5869 = vmatpush1.msra.mxu0 0.0
          %5870 = vmatprep.mubr.f32.mxu0 0.0
          %5871 = vmatmul.mubr.f32.gmra.mrb[0].mxu0 %v5804
          %v5872 = vpop.f32.mrb[0].mxu0
          %v5873 = vadd.f32 %v5801, %v5872
          %v5874 = vpop.f32.mrb[0].mxu0
          %5875 = vdwg.mxu0
          %v5876 = vmax.f32 %v5873, 0.0
          %5878 = vrot.lane.b32.xlu0 %v5876, 32
          %v5879 = vpop.permute.xlu0 %5878
          %v5881 = vsel %vm1365, %v5790, %v5879
          %v5882 = vld [vmem:[%s21] sm:$0x1]
          %v5883 = vld [vmem:[%s23] sm:$0x1]
          %vm5884 = vcmask 517120
          %v5885 = vsel %vm5884, %v5881, 0.0
          %5886 = vadd.xlane.f32.xlu0 %v5885
          %v5887 = vpop.xlane.xlu0 %5886
          %v5888 = vrcp.pop 64.0
          %v5889 = vmul.f32 %v5887, %v5888
          %v5890 = vsub.f32 %v5881, %v5889
          %v5891 = vmul.f32 %v5890, %v5890
          %v5892 = vsel %vm5884, %v5891, 0.0
          %5893 = vadd.xlane.f32.xlu0 %v5892
          %v5894 = vpop.xlane.xlu0 %5893
          %v5895 = vmul.f32 %v5894, %v5888
          %v5896 = vadd.f32 %v5895, 1e-05
          %v5897 = vrsqrt.pop %v5896
          %v5898 = vmul.f32 %v5890, %v5897
          %v5900 = vlaneseq
          %v5901 = vshrl.u32 %v5900, 7
          %v5902 = vsub.s32 0, %v5901
          %v5903 = vrot.slane %v5882, %v5902
          %v5905 = vmul.f32 %v5898, %v5903
          %v5907 = vlaneseq
          %v5908 = vshrl.u32 %v5907, 7
          %v5909 = vsub.s32 0, %v5908
          %v5910 = vrot.slane %v5883, %v5909
          %v5912 = vadd.f32 %v5905, %v5910
          %v5913 = vld [vmem:[%s25] sm:$0xff]
          %v5914 = vld [vmem:[%s25 + $0x8] sm:$0xff]
          %v5915 = vld [vmem:[%s25 + $0x10] sm:$0xff]
          %v5916 = vld [vmem:[%s25 + $0x18] sm:$0xff]
          %v5917 = vld [vmem:[%s25 + $0x20] sm:$0xff]
          %v5918 = vld [vmem:[%s25 + $0x28] sm:$0xff]
          %v5919 = vld [vmem:[%s25 + $0x30] sm:$0xff]
          %v5920 = vld [vmem:[%s25 + $0x38] sm:$0xff]
          %v5921 = vld [vmem:[%s27] sm:$0x1]
          %v5923 = vlaneseq
          %v5924 = vshrl.u32 %v5923, 7
          %v5925 = vsub.s32 0, %v5924
          %v5926 = vrot.slane %v5921, %v5925
          %vm5928 = vcmask 523264
          %v5930 = vsel %vm5928, %v5912, 0
          %5932 = vmatprep.subr.mxu0 0.0
          %5933 = vmatpush1.msra.mxu0 %v5913
          %5934 = vmatprep.subr.mxu0 0.0
          %5935 = vmatpush1.msra.mxu0 %v5914
          %5936 = vmatprep.subr.mxu0 0.0
          %5937 = vmatpush1.msra.mxu0 %v5915
          %5938 = vmatprep.subr.mxu0 0.0
          %5939 = vmatpush1.msra.mxu0 %v5916
          %5940 = vmatprep.subr.mxu0 0.0
          %5941 = vmatpush1.msra.mxu0 %v5917
          %5942 = vmatprep.subr.mxu0 0.0
          %5943 = vmatpush1.msra.mxu0 %v5918
          %5944 = vmatprep.subr.mxu0 0.0
          %5945 = vmatpush1.msra.mxu0 %v5919
          %5946 = vmatprep.subr.mxu0 0.0
          %5947 = vmatpush1.msra.mxu0 %v5920
          %5948 = vmatprep.subr.mxu0 0.0
          %5949 = vmatpush1.msra.mxu0 0.0
          %5950 = vmatprep.subr.mxu0 0.0
          %5951 = vmatpush1.msra.mxu0 0.0
          %5952 = vmatprep.subr.mxu0 0.0
          %5953 = vmatpush1.msra.mxu0 0.0
          %5954 = vmatprep.subr.mxu0 0.0
          %5955 = vmatpush1.msra.mxu0 0.0
          %5956 = vmatprep.subr.mxu0 0.0
          %5957 = vmatpush1.msra.mxu0 0.0
          %5958 = vmatprep.subr.mxu0 0.0
          %5959 = vmatpush1.msra.mxu0 0.0
          %5960 = vmatprep.subr.mxu0 0.0
          %5961 = vmatpush1.msra.mxu0 0.0
          %5962 = vmatprep.subr.mxu0 0.0
          %5963 = vmatpush1.msra.mxu0 0.0
          %5964 = vmatprep.subr.mxu0 0.0
          %5965 = vmatpush1.msra.mxu0 0.0
          %5966 = vmatprep.subr.mxu0 0.0
          %5967 = vmatpush1.msra.mxu0 0.0
          %5968 = vmatprep.subr.mxu0 0.0
          %5969 = vmatpush1.msra.mxu0 0.0
          %5970 = vmatprep.subr.mxu0 0.0
          %5971 = vmatpush1.msra.mxu0 0.0
          %5972 = vmatprep.subr.mxu0 0.0
          %5973 = vmatpush1.msra.mxu0 0.0
          %5974 = vmatprep.subr.mxu0 0.0
          %5975 = vmatpush1.msra.mxu0 0.0
          %5976 = vmatprep.subr.mxu0 0.0
          %5977 = vmatpush1.msra.mxu0 0.0
          %5978 = vmatprep.subr.mxu0 0.0
          %5979 = vmatpush1.msra.mxu0 0.0
          %5980 = vmatprep.subr.mxu0 0.0
          %5981 = vmatpush1.msra.mxu0 0.0
          %5982 = vmatprep.subr.mxu0 0.0
          %5983 = vmatpush1.msra.mxu0 0.0
          %5984 = vmatprep.subr.mxu0 0.0
          %5985 = vmatpush1.msra.mxu0 0.0
          %5986 = vmatprep.subr.mxu0 0.0
          %5987 = vmatpush1.msra.mxu0 0.0
          %5988 = vmatprep.subr.mxu0 0.0
          %5989 = vmatpush1.msra.mxu0 0.0
          %5990 = vmatprep.subr.mxu0 0.0
          %5991 = vmatpush1.msra.mxu0 0.0
          %5992 = vmatprep.subr.mxu0 0.0
          %5993 = vmatpush1.msra.mxu0 0.0
          %5994 = vmatprep.subr.mxu0 0.0
          %5995 = vmatpush1.msra.mxu0 0.0
          %5996 = vmatprep.mubr.f32.mxu0 0.0
          %5997 = vmatmul.mubr.f32.gmra.mrb[0].mxu0 %v5930
          %v5998 = vpop.f32.mrb[0].mxu0
          %v5999 = vadd.f32 %v5926, %v5998
          %v6000 = vpop.f32.mrb[0].mxu0
          %6001 = vdwg.mxu0
          %v6002 = vmax.f32 %v5999, 0.0
          %v6003 = vld [vmem:[%s29] sm:$0xff]
          %v6004 = vld [vmem:[%s29 + $0x8] sm:$0xff]
          %v6005 = vld [vmem:[%s29 + $0x10] sm:$0xff]
          %v6006 = vld [vmem:[%s29 + $0x18] sm:$0xff]
          %v6007 = vld [vmem:[%s31] sm:$0x1]
          %v6009 = vlaneseq
          %v6010 = vshrl.u32 %v6009, 7
          %v6011 = vsub.s32 0, %v6010
          %v6012 = vrot.slane %v6007, %v6011
          %v6015 = vsel %vm1365, %v6002, 0
          %6017 = vmatprep.subr.mxu0 0.0
          %6018 = vmatpush1.msra.mxu0 %v6003
          %6019 = vmatprep.subr.mxu0 0.0
          %6020 = vmatpush1.msra.mxu0 %v6004
          %6021 = vmatprep.subr.mxu0 0.0
          %6022 = vmatpush1.msra.mxu0 %v6005
          %6023 = vmatprep.subr.mxu0 0.0
          %6024 = vmatpush1.msra.mxu0 %v6006
          %6025 = vmatprep.subr.mxu0 0.0
          %6026 = vmatpush1.msra.mxu0 0.0
          %6027 = vmatprep.subr.mxu0 0.0
          %6028 = vmatpush1.msra.mxu0 0.0
          %6029 = vmatprep.subr.mxu0 0.0
          %6030 = vmatpush1.msra.mxu0 0.0
          %6031 = vmatprep.subr.mxu0 0.0
          %6032 = vmatpush1.msra.mxu0 0.0
          %6033 = vmatprep.subr.mxu0 0.0
          %6034 = vmatpush1.msra.mxu0 0.0
          %6035 = vmatprep.subr.mxu0 0.0
          %6036 = vmatpush1.msra.mxu0 0.0
          %6037 = vmatprep.subr.mxu0 0.0
          %6038 = vmatpush1.msra.mxu0 0.0
          %6039 = vmatprep.subr.mxu0 0.0
          %6040 = vmatpush1.msra.mxu0 0.0
          %6041 = vmatprep.subr.mxu0 0.0
          %6042 = vmatpush1.msra.mxu0 0.0
          %6043 = vmatprep.subr.mxu0 0.0
          %6044 = vmatpush1.msra.mxu0 0.0
          %6045 = vmatprep.subr.mxu0 0.0
          %6046 = vmatpush1.msra.mxu0 0.0
          %6047 = vmatprep.subr.mxu0 0.0
          %6048 = vmatpush1.msra.mxu0 0.0
          %6049 = vmatprep.subr.mxu0 0.0
          %6050 = vmatpush1.msra.mxu0 0.0
          %6051 = vmatprep.subr.mxu0 0.0
          %6052 = vmatpush1.msra.mxu0 0.0
          %6053 = vmatprep.subr.mxu0 0.0
          %6054 = vmatpush1.msra.mxu0 0.0
          %6055 = vmatprep.subr.mxu0 0.0
          %6056 = vmatpush1.msra.mxu0 0.0
          %6057 = vmatprep.subr.mxu0 0.0
          %6058 = vmatpush1.msra.mxu0 0.0
          %6059 = vmatprep.subr.mxu0 0.0
          %6060 = vmatpush1.msra.mxu0 0.0
          %6061 = vmatprep.subr.mxu0 0.0
          %6062 = vmatpush1.msra.mxu0 0.0
          %6063 = vmatprep.subr.mxu0 0.0
          %6064 = vmatpush1.msra.mxu0 0.0
          %6065 = vmatprep.subr.mxu0 0.0
          %6066 = vmatpush1.msra.mxu0 0.0
          %6067 = vmatprep.subr.mxu0 0.0
          %6068 = vmatpush1.msra.mxu0 0.0
          %6069 = vmatprep.subr.mxu0 0.0
          %6070 = vmatpush1.msra.mxu0 0.0
          %6071 = vmatprep.subr.mxu0 0.0
          %6072 = vmatpush1.msra.mxu0 0.0
          %6073 = vmatprep.subr.mxu0 0.0
          %6074 = vmatpush1.msra.mxu0 0.0
          %6075 = vmatprep.subr.mxu0 0.0
          %6076 = vmatpush1.msra.mxu0 0.0
          %6077 = vmatprep.subr.mxu0 0.0
          %6078 = vmatpush1.msra.mxu0 0.0
          %6079 = vmatprep.subr.mxu0 0.0
          %6080 = vmatpush1.msra.mxu0 0.0
          %6081 = vmatprep.mubr.f32.mxu0 0.0
          %6082 = vmatmul.mubr.f32.gmra.mrb[0].mxu0 %v6015
          %v6083 = vpop.f32.mrb[0].mxu0
          %v6084 = vadd.f32 %v6012, %v6083
          %v6085 = vpop.f32.mrb[0].mxu0
          %6086 = vdwg.mxu0
          %vm6087 = vcmask 33792
          %6088 = vst.msk [vmem:[#allocation4] sm:$0x3] %vm6087, %v6084
          %v6089 = vld [vmem:[%s33] sm:$0xff]
          %v6090 = vld [vmem:[%s33 + $0x8] sm:$0xff]
          %v6091 = vld [vmem:[%s33 + $0x10] sm:$0xff]
          %v6092 = vld [vmem:[%s33 + $0x18] sm:$0xff]
          %v6093 = vld [vmem:[#allocation3] sm:$0x1]
          %v6095 = vlaneseq
          %v6096 = vshrl.u32 %v6095, 7
          %v6097 = vsub.s32 0, %v6096
          %v6098 = vrot.slane %v6093, %v6097
          %6100 = vmatprep.subr.mxu0 0.0
          %6101 = vmatpush1.msra.mxu0 %v6089
          %6102 = vmatprep.subr.mxu0 0.0
          %6103 = vmatpush1.msra.mxu0 %v6090
          %6104 = vmatprep.subr.mxu0 0.0
          %6105 = vmatpush1.msra.mxu0 %v6091
          %6106 = vmatprep.subr.mxu0 0.0
          %6107 = vmatpush1.msra.mxu0 %v6092
          %6108 = vmatprep.subr.mxu0 0.0
          %6109 = vmatpush1.msra.mxu0 0.0
          %6110 = vmatprep.subr.mxu0 0.0
          %6111 = vmatpush1.msra.mxu0 0.0
          %6112 = vmatprep.subr.mxu0 0.0
          %6113 = vmatpush1.msra.mxu0 0.0
          %6114 = vmatprep.subr.mxu0 0.0
          %6115 = vmatpush1.msra.mxu0 0.0
          %6116 = vmatprep.subr.mxu0 0.0
          %6117 = vmatpush1.msra.mxu0 0.0
          %6118 = vmatprep.subr.mxu0 0.0
          %6119 = vmatpush1.msra.mxu0 0.0
          %6120 = vmatprep.subr.mxu0 0.0
          %6121 = vmatpush1.msra.mxu0 0.0
          %6122 = vmatprep.subr.mxu0 0.0
          %6123 = vmatpush1.msra.mxu0 0.0
          %6124 = vmatprep.subr.mxu0 0.0
          %6125 = vmatpush1.msra.mxu0 0.0
          %6126 = vmatprep.subr.mxu0 0.0
          %6127 = vmatpush1.msra.mxu0 0.0
          %6128 = vmatprep.subr.mxu0 0.0
          %6129 = vmatpush1.msra.mxu0 0.0
          %6130 = vmatprep.subr.mxu0 0.0
          %6131 = vmatpush1.msra.mxu0 0.0
          %6132 = vmatprep.subr.mxu0 0.0
          %6133 = vmatpush1.msra.mxu0 0.0
          %6134 = vmatprep.subr.mxu0 0.0
          %6135 = vmatpush1.msra.mxu0 0.0
          %6136 = vmatprep.subr.mxu0 0.0
          %6137 = vmatpush1.msra.mxu0 0.0
          %6138 = vmatprep.subr.mxu0 0.0
          %6139 = vmatpush1.msra.mxu0 0.0
          %6140 = vmatprep.subr.mxu0 0.0
          %6141 = vmatpush1.msra.mxu0 0.0
          %6142 = vmatprep.subr.mxu0 0.0
          %6143 = vmatpush1.msra.mxu0 0.0
          %6144 = vmatprep.subr.mxu0 0.0
          %6145 = vmatpush1.msra.mxu0 0.0
          %6146 = vmatprep.subr.mxu0 0.0
          %6147 = vmatpush1.msra.mxu0 0.0
          %6148 = vmatprep.subr.mxu0 0.0
          %6149 = vmatpush1.msra.mxu0 0.0
          %6150 = vmatprep.subr.mxu0 0.0
          %6151 = vmatpush1.msra.mxu0 0.0
          %6152 = vmatprep.subr.mxu0 0.0
          %6153 = vmatpush1.msra.mxu0 0.0
          %6154 = vmatprep.subr.mxu0 0.0
          %6155 = vmatpush1.msra.mxu0 0.0
          %6156 = vmatprep.subr.mxu0 0.0
          %6157 = vmatpush1.msra.mxu0 0.0
          %6158 = vmatprep.subr.mxu0 0.0
          %6159 = vmatpush1.msra.mxu0 0.0
          %6160 = vmatprep.subr.mxu0 0.0
          %6161 = vmatpush1.msra.mxu0 0.0
          %6162 = vmatprep.subr.mxu0 0.0
          %6163 = vmatpush1.msra.mxu0 0.0
          %6164 = vmatprep.mubr.f32.mxu0 0.0
          %6165 = vmatmul.mubr.f32.gmra.mrb[0].mxu0 %v6015
          %v6166 = vpop.f32.mrb[0].mxu0
          %v6167 = vadd.f32 %v6098, %v6166
          %v6168 = vpop.f32.mrb[0].mxu0
          %6169 = vdwg.mxu0
          %vm6170 = vcmask 1024
          %6171 = vst.msk [vmem:[%s63] sm:$0x3] %vm6170, %v6167
        $region148: #{tpu_custom_call.1} parent=139 // pred_fallthru
          _
        // Predicated region
        $region149: #{tpu_custom_call.1} parent=139 // pred_check
          %p6172 = pneg %p781
        $region150: #{tpu_custom_call.1} parent=139 // pred_check_branch
          %6174 = sbr.rel (%p6172) target = $region152
        $region151: #{tpu_custom_call.1} parent=139 // pred_region
          %s6176 = ssub.s32 32, 32
          %6177 = vsyncadd [#allocation5], %s6176
          %s6179 = sshll.u32 [#allocation4], 4
          %s6180 = int_to_ptr.vmem [resolvable:$true] %s6179
          %6182 = dma.vmem_to_hbm [thread:$0]  %s6180, 32, %s61, [#allocation5]
        $region152: #{tpu_custom_call.1} parent=139 // pred_fallthru
          _
        // Predicated region
        $region153: #{tpu_custom_call.1} parent=139 // pred_check
          %p6183 = pneg %p802
        $region154: #{tpu_custom_call.1} parent=139 // pred_check_branch
          %6185 = sbr.rel (%p6183) target = $region156
        $region155: #{tpu_custom_call.1} parent=139 // pred_region
          _
        $region156: #{tpu_custom_call.1} parent=139 // pred_fallthru
          _
        // Predicated region
        $region157: #{tpu_custom_call.1} parent=139 // pred_check
          %p6186 = pneg %p781
        $region158: #{tpu_custom_call.1} parent=139 // pred_check_branch
          %6188 = sbr.rel (%p6186) target = $region160
        $region159: #{tpu_custom_call.1} parent=139 // pred_region
          %6189 = dma.done [#allocation5], 32
        $region160: #{tpu_custom_call.1} parent=139 // pred_fallthru
          _
        // Predicated region
        $region161: #{tpu_custom_call.1} parent=139 // pred_check
          %p6190 = pneg %p802
        $region162: #{tpu_custom_call.1} parent=139 // pred_check_branch
          %6192 = sbr.rel (%p6190) target = $region164
        $region163: #{tpu_custom_call.1} parent=139 // pred_region
          _
        $region164: #{tpu_custom_call.1} parent=139 // pred_fallthru
          _
      $region140: #{tpu_custom_call.1} parent=5 // pred_fallthru
        _
      %p6193 = scmp.le.s32.totalorder 2, %s73
      // Predicated region
      $region165: #{tpu_custom_call.1} parent=5 // pred_check
        %p6194 = pneg %p6193
      $region166: #{tpu_custom_call.1} parent=5 // pred_check_branch
        %6196 = sbr.rel (%p6194) target = $region168
      $region167: #{tpu_custom_call.1} parent=5 // pred_region
        %s6197 = ssub.s32 %s73, 2
      $region168: #{tpu_custom_call.1} parent=5 // pred_fallthru
        _
    $region6: #{tpu_custom_call.1} parent=1 // loop_footer
      %s77 = sadd.s32 1, %s73
    $region7: #{tpu_custom_call.1} parent=1 // loop_footer_branch
      %72 = sbr.rel target = $region3
    $region8: #{tpu_custom_call.1} parent=1 // loop_exit
      _
    %6198 = vsyncpa [#allocation5], 1
    %s6199 = scalar_lea.sflag [#allocation5], 1
    %6200 = vsyncpa %s6199, 1

</llo_original>
